<compile_context>
chip_gen: v7x
topology: tpu7x:2x2x1
jax: 0.10.0
libtpu: 0.0.40
codegen_flags: <defaults>
</compile_context>

<pallas_src>
import jax
import jax.numpy as jnp
import numpy as np
from jax.experimental import pallas as pl
from jax.experimental.pallas import tpu as pltpu


# ------------------------------ fused kernel --------------------------------

def _cnn_fused_kernel(x_ref, t1_ref, b1_ref, t2_ref, b2_ref, wl_ref, bl_ref,
                      feat_ref, logits_ref):
    """conv1+ReLU+pool -> conv2+ReLU+pool -> linear for one batch tile.

    x_ref     : (TB, 28, 28)   f32  input images (Cin=1 squeezed; W in lanes)
    t1_ref    : (5, 32, 448)   bf16 conv1 Toeplitz rows: (w_in) x (w_out*16)
    b1_ref    : (1, 448)       f32  conv1 bias tiled over w_out
    t2_ref    : (5, 560, 448)  bf16 conv2 Toeplitz rows (uncompacted lanes)
    b2_ref    : (1, 448)       f32  conv2 bias tiled over w_out
    wl_ref    : (7, 416, 128)  bf16 linear weight per feature row h
    bl_ref    : (1, 128)       f32  linear bias (10 valid lanes, 128-padded)
    feat_ref  : (TB, 7, 416)   f32  pooled conv2 features (uncompacted lanes)
    logits_ref: (TB, 128)      f32  logits (first 10 lanes valid)
    """
    tb = x_ref.shape[0]

    # ---- conv1: 'same' pad folded in-kernel + 5 Toeplitz-row matmuls -------
    x = x_ref[...]
    zw = jnp.zeros((tb, 28, 2), jnp.float32)
    xp = jnp.concatenate([zw, x, zw], axis=2)               # (TB, 28, 32)
    zh = jnp.zeros((tb, 2, 32), jnp.float32)
    xp = jnp.concatenate([zh, xp, zh], axis=1)              # (TB, 32, 32)
    xp = xp.astype(jnp.bfloat16)

    acc1 = jnp.zeros((tb * 28, 448), jnp.float32)           # lanes = (w=28, c=16)
    for kh in range(5):                                     # static, unrolled
        lhs = xp[:, kh:kh + 28, :].reshape(tb * 28, 32)
        acc1 = acc1 + jnp.dot(lhs, t1_ref[kh],
                              preferred_element_type=jnp.float32)
    acc1 = jnp.maximum(acc1 + b1_ref[...], 0.0)             # bias + ReLU (f32)

    # ---- 2x2 max-pool #1 ----------------------------------------------------
    a1 = acc1.reshape(tb, 14, 2, 448)                       # leading-dim split
    h1 = jnp.maximum(a1[:, :, 0, :], a1[:, :, 1, :])        # pool H -> (TB,14,448)
    # pool W via a 16-lane-shifted max; result stays "uncompacted": pooled
    # column w lives in lane group 2*w, odd groups hold junk that is zeroed by
    # the zero rows of the conv2 Toeplitz slab.
    p1 = jnp.maximum(h1[:, :, :432], h1[:, :, 16:])         # (TB, 14, 432)

    # ---- conv2: 'same' pad + 5 Toeplitz-row matmuls (contraction 560) -------
    zw2 = jnp.zeros((tb, 14, 64), jnp.float32)              # 2 pooled cols/side
    xp2 = jnp.concatenate([zw2, p1, zw2], axis=2)           # (TB, 14, 560)
    zh2 = jnp.zeros((tb, 2, 560), jnp.float32)
    xp2 = jnp.concatenate([zh2, xp2, zh2], axis=1)          # (TB, 18, 560)
    xp2 = xp2.astype(jnp.bfloat16)

    acc2 = jnp.zeros((tb * 14, 448), jnp.float32)           # lanes = (w=14, c=32)
    for kh in range(5):
        lhs = xp2[:, kh:kh + 14, :].reshape(tb * 14, 560)
        acc2 = acc2 + jnp.dot(lhs, t2_ref[kh],
                              preferred_element_type=jnp.float32)
    acc2 = jnp.maximum(acc2 + b2_ref[...], 0.0)

    # ---- 2x2 max-pool #2 -> features ----------------------------------------
    a2 = acc2.reshape(tb, 7, 2, 448)
    h2 = jnp.maximum(a2[:, :, 0, :], a2[:, :, 1, :])        # (TB, 7, 448)
    p2 = jnp.maximum(h2[:, :, :416], h2[:, :, 32:])         # (TB, 7, 416)
    feat_ref[...] = p2                                      # lane-dense f32 store

    # ---- linear: logits = feat @ W^T + b (junk lanes hit zero weight rows) --
    p2b = p2.astype(jnp.bfloat16)
    logits = jnp.zeros((tb, 128), jnp.float32)
    for h in range(7):
        logits = logits + jnp.dot(p2b[:, h, :], wl_ref[h],
                                  preferred_element_type=jnp.float32)
    logits_ref[...] = logits + bl_ref[...]


# --------------------------- tiling / wrapper --------------------------------

def _vmem_capacity_bytes():
    try:
        return int(pltpu.get_tpu_info().vmem_capacity_bytes)
    except Exception:
        return 64 * 1024 * 1024          # conservative default (v7x-sized VMEM)


def _pick_tiling(batch):
    """Generation-aware batch tile.

    As large as the per-generation VMEM budget allows, >= 2 grid steps once
    the batch is big enough (so the v7x megacore can split the "parallel"
    axis), and a multiple of 8 so output blocks stay sublane-aligned.  For
    tiny batches (< 16) a single full-extent step is used.
    """
    vmem = _vmem_capacity_bytes()
    vmem_limit = min(int(vmem * 0.75), 100 * 1024 * 1024)  # ~48MiB v7x / ~96MiB v5e,v6e
    per_image = 384 * 1024        # rough in-kernel live bytes per image (f32 accs, etc.)
    cap = max(1, int(vmem * 0.4) // per_image)
    if batch < 16:
        tb = batch
    else:
        tb = min(cap, pl.cdiv(batch, 2), 256)
        tb = max(8, (tb // 8) * 8)
    return tb, vmem_limit


def _cnn_fused(x_sq, prep):
    """x_sq: (B, 28, 28) f32. Returns (feat_uncompacted (B,7,416), logits (B,128))."""
    batch = x_sq.shape[0]
    tb, vmem_limit = _pick_tiling(batch)
    grid = (pl.cdiv(batch, tb),)   # a trailing partial block is handled by Pallas
                                   # (garbage rows are computed and then dropped).

    flops_per_image = (2 * 28 * 32 * 448 * 5      # conv1 (Toeplitz form)
                       + 2 * 14 * 560 * 448 * 5   # conv2 (Toeplitz form)
                       + 2 * 7 * 416 * 128)       # linear
    weight_bytes = sum(int(v.size * v.dtype.itemsize) for v in prep.values())
    bytes_accessed = int(batch * (28 * 28 * 4 + 7 * 416 * 4 + 128 * 4)
                         + weight_bytes)

    feat_u, logits_p = pl.pallas_call(
        _cnn_fused_kernel,
        out_shape=(
            jax.ShapeDtypeStruct((batch, 7, 416), jnp.float32),
            jax.ShapeDtypeStruct((batch, 128), jnp.float32),
        ),
        grid=grid,
        in_specs=[
            pl.BlockSpec((tb, 28, 28), lambda i: (i, 0, 0)),     # images
            pl.BlockSpec((5, 32, 448), lambda i: (0, 0, 0)),     # conv1 Toeplitz
            pl.BlockSpec((1, 448), lambda i: (0, 0)),            # conv1 bias
            pl.BlockSpec((5, 560, 448), lambda i: (0, 0, 0)),    # conv2 Toeplitz
            pl.BlockSpec((1, 448), lambda i: (0, 0)),            # conv2 bias
            pl.BlockSpec((7, 416, 128), lambda i: (0, 0, 0)),    # linear weight
            pl.BlockSpec((1, 128), lambda i: (0, 0)),            # linear bias
        ],
        out_specs=(
            pl.BlockSpec((tb, 7, 416), lambda i: (i, 0, 0)),
            pl.BlockSpec((tb, 128), lambda i: (i, 0)),
        ),
        compiler_params=pltpu.CompilerParams(
            dimension_semantics=("parallel",),
            vmem_limit_bytes=vmem_limit,
        ),
        cost_estimate=pl.CostEstimate(
            flops=batch * flops_per_image,
            transcendentals=0,
            bytes_accessed=bytes_accessed,
        ),
    )(x_sq, prep["t1"], prep["b1"], prep["t2"], prep["b2"],
      prep["wl"], prep["bl"])
    return feat_u, logits_p


def cnn_forward(x_nchw, prep):
    """Matches CNN.forward: returns (logits, features flattened in NCHW order)."""
    batch, cin, hh, ww = x_nchw.shape
    assert (cin, hh, ww) == (1, 28, 28), "Linear(32*7*7, 10) pins the input to 1x28x28"
    x_sq = x_nchw.reshape(batch, 28, 28)            # squeeze Cin=1 (W lane-dense)

    feat_u, logits_p = _cnn_fused(x_sq, prep)

    # Un-sparsify the pooled-W lane layout and flatten in NCHW order — tiny XLA
    # ops, deliberately kept out of the kernel (lane-dense out_specs in-kernel).
    feat_nhwc = jnp.pad(feat_u, ((0, 0), (0, 0), (0, 32)))        # (B, 7, 448)
    feat_nhwc = feat_nhwc.reshape(batch, 7, 7, 2, 32)[:, :, :, 0, :]
    feat = jnp.transpose(feat_nhwc, (0, 3, 1, 2)).reshape(batch, 32 * 7 * 7)
    logits = logits_p[:, :10]
    return logits, feat


# ------------------- one-time parameter preprocessing ------------------------

def _conv1_toeplitz(w_oihw):
    """(16,1,5,5) -> (5, 32, 448): T[kh, w+kw, 16*w+co] = W[co,0,kh,kw]."""
    w = np.asarray(w_oihw, np.float32)
    t = np.zeros((5, 32, 448), np.float32)
    for kh in range(5):
        for kw in range(5):
            col = w[:, 0, kh, kw]                     # (16,)
            for wo in range(28):
                t[kh, wo + kw, 16 * wo:16 * wo + 16] = col
    return t


def _conv2_toeplitz(w_oihw):
    """(32,16,5,5) -> (5, 560, 448) over the *uncompacted* pooled-1 layout:
    T[kh, 32*(w+kw)+ci, 32*w+co] = W[co,ci,kh,kw]; rows 32*q+16 .. 32*q+31 are
    zero so the junk lanes left by the lane-shifted max-pool contribute 0."""
    w = np.asarray(w_oihw, np.float32)
    t = np.zeros((5, 560, 448), np.float32)
    for kh in range(5):
        for kw in range(5):
            blk = w[:, :, kh, kw].T                   # (Cin=16, Cout=32)
            for wo in range(14):
                q = wo + kw
                t[kh, 32 * q:32 * q + 16, 32 * wo:32 * wo + 32] = blk
    return t


def _linear_weight(w_out):
    """(10, 1568 NCHW-flat) -> (7, 416, 128) indexed by the uncompacted feature
    lane layout (lane = 64*w + c for feature row h); junk lanes and the 10->128
    logit padding stay zero."""
    w = np.asarray(w_out, np.float32)
    t = np.zeros((7, 416, 128), np.float32)
    for h in range(7):
        for wo in range(7):
            for c in range(32):
                t[h, 64 * wo + c, :10] = w[:, c * 49 + h * 7 + wo]
    return t


def prepare_params(params):
    """One-time (outside jit) weight prep: Toeplitz expansion, bias tiling,
    linear-weight permutation/padding, bf16 casts for the MXU operands."""
    return {
        "t1": jnp.asarray(_conv1_toeplitz(params["w1"]), jnp.bfloat16),
        "b1": jnp.asarray(np.tile(np.asarray(params["b1"], np.float32),
                                  28).reshape(1, 448)),
        "t2": jnp.asarray(_conv2_toeplitz(params["w2"]), jnp.bfloat16),
        "b2": jnp.asarray(np.tile(np.asarray(params["b2"], np.float32),
                                  14).reshape(1, 448)),
        "wl": jnp.asarray(_linear_weight(params["w_out"]), jnp.bfloat16),
        "bl": jnp.asarray(np.pad(np.asarray(params["b_out"], np.float32),
                                 (0, 118)).reshape(1, 128)),
    }


def init_params(key):
    k1, k2, k3 = jax.random.split(key, 3)
    scale = 0.05
    return {
        "w1": scale * jax.random.normal(k1, (16, 1, 5, 5), jnp.float32),
        "b1": jnp.zeros((16,), jnp.float32),
        "w2": scale * jax.random.normal(k2, (32, 16, 5, 5), jnp.float32),
        "b2": jnp.zeros((32,), jnp.float32),
        "w_out": scale * jax.random.normal(k3, (10, 32 * 7 * 7), jnp.float32),
        "b_out": jnp.zeros((10,), jnp.float32),
    }


# ------------------------------ reference ------------------------------------

def _reference_forward(x_nchw, params):
    """Pure-JAX float32 reference of CNN.forward (self-check only)."""
    def conv_relu_pool(x, w_oihw, b):
        w = jnp.transpose(w_oihw, (2, 3, 1, 0))               # HWIO
        y = jax.lax.conv_general_dilated(
            x, w, window_strides=(1, 1), padding="SAME",
            dimension_numbers=("NHWC", "HWIO", "NHWC"),
            precision=jax.lax.Precision.HIGHEST)
        y = jnp.maximum(y + b, 0.0)
        bsz, hh, ww, cc = y.shape
        return y.reshape(bsz, hh // 2, 2, ww // 2, 2, cc).max(axis=(2, 4))

    x = jnp.transpose(x_nchw, (0, 2, 3, 1))
    x = conv_relu_pool(x, params["w1"], params["b1"])
    x = conv_relu_pool(x, params["w2"], params["b2"])
    bsz = x.shape[0]
    feat = jnp.transpose(x, (0, 3, 1, 2)).reshape(bsz, -1)
    logits = feat @ params["w_out"].T + params["b_out"]
    return logits, feat


# --------------------------------- main ---------------------------------------

if __name__ == "__main__":
    key = jax.random.PRNGKey(0)
    pkey, xkey = jax.random.split(key)
    params = init_params(pkey)
    prep = prepare_params(params)

    # The Linear(32*7*7, 10) layer pins the spatial size to 28x28 (MNIST-like).
    x = jax.random.normal(xkey, (2, 1, 28, 28), jnp.float32)   # NCHW input

    logits, feat = jax.jit(cnn_forward)(x, prep)
    jax.block_until_ready((logits, feat))

    assert logits.shape == (2, 10), logits.shape
    assert feat.shape == (2, 32 * 7 * 7), feat.shape

    # Numerical self-check vs. a float32 JAX reference (bf16-MXU tolerance).
    ref_logits, ref_feat = _reference_forward(x, params)
    assert float(jnp.max(jnp.abs(feat - ref_feat))) < 5e-2
    assert float(jnp.max(jnp.abs(logits - ref_logits))) < 5e-2
    print("KERNEL_OK")
</pallas_src>

<mosaic_0001>
module attributes {stable_mosaic.version = 11 : i64} {
  func.func @_cnn_fused_kernel(%arg0: i32, %arg1: memref<2x28x28xf32, #tpu.memory_space<vmem>>, %arg2: memref<5x32x448xbf16, #tpu.memory_space<vmem>>, %arg3: memref<1x448xf32, #tpu.memory_space<vmem>>, %arg4: memref<5x560x448xbf16, #tpu.memory_space<vmem>>, %arg5: memref<1x448xf32, #tpu.memory_space<vmem>>, %arg6: memref<7x416x128xbf16, #tpu.memory_space<vmem>>, %arg7: memref<1x128xf32, #tpu.memory_space<vmem>>, %arg8: memref<2x7x416xf32, #tpu.memory_space<vmem>>, %arg9: memref<2x128xf32, #tpu.memory_space<vmem>>) attributes {dimension_semantics = [#tpu.dimension_semantics<parallel>], iteration_bounds = array<i64: 1>, scalar_prefetch = 0 : i64, scratch_operands = 0 : i64, tpu.core_type = #tpu.core_type<tc>, window_params = [{transform_indices = @transform_0, window_bounds = array<i64: 2, 28, 28>}, {pipeline_mode = #tpu.pipeline_mode<synchronous>, transform_indices = @transform_1, window_bounds = array<i64: 5, 32, 448>}, {pipeline_mode = #tpu.pipeline_mode<synchronous>, transform_indices = @transform_2, window_bounds = array<i64: 1, 448>}, {pipeline_mode = #tpu.pipeline_mode<synchronous>, transform_indices = @transform_3, window_bounds = array<i64: 5, 560, 448>}, {pipeline_mode = #tpu.pipeline_mode<synchronous>, transform_indices = @transform_4, window_bounds = array<i64: 1, 448>}, {pipeline_mode = #tpu.pipeline_mode<synchronous>, transform_indices = @transform_5, window_bounds = array<i64: 7, 416, 128>}, {pipeline_mode = #tpu.pipeline_mode<synchronous>, transform_indices = @transform_6, window_bounds = array<i64: 1, 128>}, {transform_indices = @transform_7, window_bounds = array<i64: 2, 7, 416>}, {transform_indices = @transform_8, window_bounds = array<i64: 2, 128>}]} {
    %c0 = arith.constant 0 : index
    %c0_0 = arith.constant 0 : index
    %c0_1 = arith.constant 0 : index
    %0 = vector.load %arg1[%c0, %c0_0, %c0_1] : memref<2x28x28xf32, #tpu.memory_space<vmem>>, vector<2x28x28xf32>
    %cst = arith.constant 0.000000e+00 : f32
    %1 = vector.broadcast %cst : f32 to vector<2x28x2xf32>
    %2 = tpu.concatenate %1, %0, %1 in 2 : vector<2x28x2xf32>, vector<2x28x28xf32>, vector<2x28x2xf32> -> vector<2x28x32xf32>
    %cst_2 = arith.constant 0.000000e+00 : f32
    %3 = vector.broadcast %cst_2 : f32 to vector<2x2x32xf32>
    %4 = tpu.concatenate %3, %2, %3 in 1 : vector<2x2x32xf32>, vector<2x28x32xf32>, vector<2x2x32xf32> -> vector<2x32x32xf32>
    %5 = arith.truncf %4 : vector<2x32x32xf32> to vector<2x32x32xbf16>
    %cst_3 = arith.constant 0.000000e+00 : f32
    %6 = vector.broadcast %cst_3 : f32 to vector<56x448xf32>
    %7 = vector.extract_strided_slice %5 {offsets = [0, 0, 0], sizes = [2, 28, 32], strides = [1, 1, 1]} : vector<2x32x32xbf16> to vector<2x28x32xbf16>
    %8 = vector.shape_cast %7 : vector<2x28x32xbf16> to vector<56x32xbf16>
    %c0_4 = arith.constant 0 : index
    %c0_5 = arith.constant 0 : index
    %c0_6 = arith.constant 0 : index
    %9 = vector.load %arg2[%c0_4, %c0_5, %c0_6] : memref<5x32x448xbf16, #tpu.memory_space<vmem>>, vector<1x32x448xbf16>
    %10 = vector.shape_cast %9 : vector<1x32x448xbf16> to vector<32x448xbf16>
    %cst_7 = arith.constant dense<0.000000e+00> : vector<56x448xf32>
    %11 = tpu.matmul %8, %10, %cst_7 {dimension_numbers = #tpu.dot_dimension_numbers<[1], [0], [0], [1], [0, 0, 1, 1], [], []>} : vector<56x32xbf16>, vector<32x448xbf16>, vector<56x448xf32> -> vector<56x448xf32>
    %12 = arith.addf %6, %11 : vector<56x448xf32>
    %13 = vector.extract_strided_slice %5 {offsets = [0, 1, 0], sizes = [2, 28, 32], strides = [1, 1, 1]} : vector<2x32x32xbf16> to vector<2x28x32xbf16>
    %14 = vector.shape_cast %13 : vector<2x28x32xbf16> to vector<56x32xbf16>
    %c1 = arith.constant 1 : index
    %c0_8 = arith.constant 0 : index
    %c0_9 = arith.constant 0 : index
    %15 = vector.load %arg2[%c1, %c0_8, %c0_9] : memref<5x32x448xbf16, #tpu.memory_space<vmem>>, vector<1x32x448xbf16>
    %16 = vector.shape_cast %15 : vector<1x32x448xbf16> to vector<32x448xbf16>
    %cst_10 = arith.constant dense<0.000000e+00> : vector<56x448xf32>
    %17 = tpu.matmul %14, %16, %cst_10 {dimension_numbers = #tpu.dot_dimension_numbers<[1], [0], [0], [1], [0, 0, 1, 1], [], []>} : vector<56x32xbf16>, vector<32x448xbf16>, vector<56x448xf32> -> vector<56x448xf32>
    %18 = arith.addf %12, %17 : vector<56x448xf32>
    %19 = vector.extract_strided_slice %5 {offsets = [0, 2, 0], sizes = [2, 28, 32], strides = [1, 1, 1]} : vector<2x32x32xbf16> to vector<2x28x32xbf16>
    %20 = vector.shape_cast %19 : vector<2x28x32xbf16> to vector<56x32xbf16>
    %c2 = arith.constant 2 : index
    %c0_11 = arith.constant 0 : index
    %c0_12 = arith.constant 0 : index
    %21 = vector.load %arg2[%c2, %c0_11, %c0_12] : memref<5x32x448xbf16, #tpu.memory_space<vmem>>, vector<1x32x448xbf16>
    %22 = vector.shape_cast %21 : vector<1x32x448xbf16> to vector<32x448xbf16>
    %cst_13 = arith.constant dense<0.000000e+00> : vector<56x448xf32>
    %23 = tpu.matmul %20, %22, %cst_13 {dimension_numbers = #tpu.dot_dimension_numbers<[1], [0], [0], [1], [0, 0, 1, 1], [], []>} : vector<56x32xbf16>, vector<32x448xbf16>, vector<56x448xf32> -> vector<56x448xf32>
    %24 = arith.addf %18, %23 : vector<56x448xf32>
    %25 = vector.extract_strided_slice %5 {offsets = [0, 3, 0], sizes = [2, 28, 32], strides = [1, 1, 1]} : vector<2x32x32xbf16> to vector<2x28x32xbf16>
    %26 = vector.shape_cast %25 : vector<2x28x32xbf16> to vector<56x32xbf16>
    %c3 = arith.constant 3 : index
    %c0_14 = arith.constant 0 : index
    %c0_15 = arith.constant 0 : index
    %27 = vector.load %arg2[%c3, %c0_14, %c0_15] : memref<5x32x448xbf16, #tpu.memory_space<vmem>>, vector<1x32x448xbf16>
    %28 = vector.shape_cast %27 : vector<1x32x448xbf16> to vector<32x448xbf16>
    %cst_16 = arith.constant dense<0.000000e+00> : vector<56x448xf32>
    %29 = tpu.matmul %26, %28, %cst_16 {dimension_numbers = #tpu.dot_dimension_numbers<[1], [0], [0], [1], [0, 0, 1, 1], [], []>} : vector<56x32xbf16>, vector<32x448xbf16>, vector<56x448xf32> -> vector<56x448xf32>
    %30 = arith.addf %24, %29 : vector<56x448xf32>
    %31 = vector.extract_strided_slice %5 {offsets = [0, 4, 0], sizes = [2, 28, 32], strides = [1, 1, 1]} : vector<2x32x32xbf16> to vector<2x28x32xbf16>
    %32 = vector.shape_cast %31 : vector<2x28x32xbf16> to vector<56x32xbf16>
    %c4 = arith.constant 4 : index
    %c0_17 = arith.constant 0 : index
    %c0_18 = arith.constant 0 : index
    %33 = vector.load %arg2[%c4, %c0_17, %c0_18] : memref<5x32x448xbf16, #tpu.memory_space<vmem>>, vector<1x32x448xbf16>
    %34 = vector.shape_cast %33 : vector<1x32x448xbf16> to vector<32x448xbf16>
    %cst_19 = arith.constant dense<0.000000e+00> : vector<56x448xf32>
    %35 = tpu.matmul %32, %34, %cst_19 {dimension_numbers = #tpu.dot_dimension_numbers<[1], [0], [0], [1], [0, 0, 1, 1], [], []>} : vector<56x32xbf16>, vector<32x448xbf16>, vector<56x448xf32> -> vector<56x448xf32>
    %36 = arith.addf %30, %35 : vector<56x448xf32>
    %c0_20 = arith.constant 0 : index
    %c0_21 = arith.constant 0 : index
    %37 = vector.load %arg3[%c0_20, %c0_21] : memref<1x448xf32, #tpu.memory_space<vmem>>, vector<1x448xf32>
    %38 = vector.broadcast %37 : vector<1x448xf32> to vector<56x448xf32>
    %39 = arith.addf %36, %38 : vector<56x448xf32>
    %cst_22 = arith.constant 0.000000e+00 : f32
    %40 = vector.broadcast %cst_22 : f32 to vector<56x448xf32>
    %41 = arith.maximumf %39, %40 : vector<56x448xf32>
    %42 = vector.shape_cast %41 : vector<56x448xf32> to vector<2x14x2x448xf32>
    %43 = vector.extract_strided_slice %42 {offsets = [0, 0, 0, 0], sizes = [2, 14, 1, 448], strides = [1, 1, 1, 1]} : vector<2x14x2x448xf32> to vector<2x14x1x448xf32>
    %44 = vector.shape_cast %43 : vector<2x14x1x448xf32> to vector<2x14x448xf32>
    %45 = vector.extract_strided_slice %42 {offsets = [0, 0, 1, 0], sizes = [2, 14, 1, 448], strides = [1, 1, 1, 1]} : vector<2x14x2x448xf32> to vector<2x14x1x448xf32>
    %46 = vector.shape_cast %45 : vector<2x14x1x448xf32> to vector<2x14x448xf32>
    %47 = arith.maximumf %44, %46 : vector<2x14x448xf32>
    %48 = vector.extract_strided_slice %47 {offsets = [0, 0, 0], sizes = [2, 14, 432], strides = [1, 1, 1]} : vector<2x14x448xf32> to vector<2x14x432xf32>
    %49 = vector.extract_strided_slice %47 {offsets = [0, 0, 16], sizes = [2, 14, 432], strides = [1, 1, 1]} : vector<2x14x448xf32> to vector<2x14x432xf32>
    %50 = arith.maximumf %48, %49 : vector<2x14x432xf32>
    %cst_23 = arith.constant 0.000000e+00 : f32
    %51 = vector.broadcast %cst_23 : f32 to vector<2x14x64xf32>
    %52 = tpu.concatenate %51, %50, %51 in 2 : vector<2x14x64xf32>, vector<2x14x432xf32>, vector<2x14x64xf32> -> vector<2x14x560xf32>
    %cst_24 = arith.constant 0.000000e+00 : f32
    %53 = vector.broadcast %cst_24 : f32 to vector<2x2x560xf32>
    %54 = tpu.concatenate %53, %52, %53 in 1 : vector<2x2x560xf32>, vector<2x14x560xf32>, vector<2x2x560xf32> -> vector<2x18x560xf32>
    %55 = arith.truncf %54 : vector<2x18x560xf32> to vector<2x18x560xbf16>
    %cst_25 = arith.constant 0.000000e+00 : f32
    %56 = vector.broadcast %cst_25 : f32 to vector<28x448xf32>
    %57 = vector.extract_strided_slice %55 {offsets = [0, 0, 0], sizes = [2, 14, 560], strides = [1, 1, 1]} : vector<2x18x560xbf16> to vector<2x14x560xbf16>
    %58 = vector.shape_cast %57 : vector<2x14x560xbf16> to vector<28x560xbf16>
    %c0_26 = arith.constant 0 : index
    %c0_27 = arith.constant 0 : index
    %c0_28 = arith.constant 0 : index
    %59 = vector.load %arg4[%c0_26, %c0_27, %c0_28] : memref<5x560x448xbf16, #tpu.memory_space<vmem>>, vector<1x560x448xbf16>
    %60 = vector.shape_cast %59 : vector<1x560x448xbf16> to vector<560x448xbf16>
    %cst_29 = arith.constant dense<0.000000e+00> : vector<28x448xf32>
    %61 = tpu.matmul %58, %60, %cst_29 {dimension_numbers = #tpu.dot_dimension_numbers<[1], [0], [0], [1], [0, 0, 1, 1], [], []>} : vector<28x560xbf16>, vector<560x448xbf16>, vector<28x448xf32> -> vector<28x448xf32>
    %62 = arith.addf %56, %61 : vector<28x448xf32>
    %63 = vector.extract_strided_slice %55 {offsets = [0, 1, 0], sizes = [2, 14, 560], strides = [1, 1, 1]} : vector<2x18x560xbf16> to vector<2x14x560xbf16>
    %64 = vector.shape_cast %63 : vector<2x14x560xbf16> to vector<28x560xbf16>
    %c1_30 = arith.constant 1 : index
    %c0_31 = arith.constant 0 : index
    %c0_32 = arith.constant 0 : index
    %65 = vector.load %arg4[%c1_30, %c0_31, %c0_32] : memref<5x560x448xbf16, #tpu.memory_space<vmem>>, vector<1x560x448xbf16>
    %66 = vector.shape_cast %65 : vector<1x560x448xbf16> to vector<560x448xbf16>
    %cst_33 = arith.constant dense<0.000000e+00> : vector<28x448xf32>
    %67 = tpu.matmul %64, %66, %cst_33 {dimension_numbers = #tpu.dot_dimension_numbers<[1], [0], [0], [1], [0, 0, 1, 1], [], []>} : vector<28x560xbf16>, vector<560x448xbf16>, vector<28x448xf32> -> vector<28x448xf32>
    %68 = arith.addf %62, %67 : vector<28x448xf32>
    %69 = vector.extract_strided_slice %55 {offsets = [0, 2, 0], sizes = [2, 14, 560], strides = [1, 1, 1]} : vector<2x18x560xbf16> to vector<2x14x560xbf16>
    %70 = vector.shape_cast %69 : vector<2x14x560xbf16> to vector<28x560xbf16>
    %c2_34 = arith.constant 2 : index
    %c0_35 = arith.constant 0 : index
    %c0_36 = arith.constant 0 : index
    %71 = vector.load %arg4[%c2_34, %c0_35, %c0_36] : memref<5x560x448xbf16, #tpu.memory_space<vmem>>, vector<1x560x448xbf16>
    %72 = vector.shape_cast %71 : vector<1x560x448xbf16> to vector<560x448xbf16>
    %cst_37 = arith.constant dense<0.000000e+00> : vector<28x448xf32>
    %73 = tpu.matmul %70, %72, %cst_37 {dimension_numbers = #tpu.dot_dimension_numbers<[1], [0], [0], [1], [0, 0, 1, 1], [], []>} : vector<28x560xbf16>, vector<560x448xbf16>, vector<28x448xf32> -> vector<28x448xf32>
    %74 = arith.addf %68, %73 : vector<28x448xf32>
    %75 = vector.extract_strided_slice %55 {offsets = [0, 3, 0], sizes = [2, 14, 560], strides = [1, 1, 1]} : vector<2x18x560xbf16> to vector<2x14x560xbf16>
    %76 = vector.shape_cast %75 : vector<2x14x560xbf16> to vector<28x560xbf16>
    %c3_38 = arith.constant 3 : index
    %c0_39 = arith.constant 0 : index
    %c0_40 = arith.constant 0 : index
    %77 = vector.load %arg4[%c3_38, %c0_39, %c0_40] : memref<5x560x448xbf16, #tpu.memory_space<vmem>>, vector<1x560x448xbf16>
    %78 = vector.shape_cast %77 : vector<1x560x448xbf16> to vector<560x448xbf16>
    %cst_41 = arith.constant dense<0.000000e+00> : vector<28x448xf32>
    %79 = tpu.matmul %76, %78, %cst_41 {dimension_numbers = #tpu.dot_dimension_numbers<[1], [0], [0], [1], [0, 0, 1, 1], [], []>} : vector<28x560xbf16>, vector<560x448xbf16>, vector<28x448xf32> -> vector<28x448xf32>
    %80 = arith.addf %74, %79 : vector<28x448xf32>
    %81 = vector.extract_strided_slice %55 {offsets = [0, 4, 0], sizes = [2, 14, 560], strides = [1, 1, 1]} : vector<2x18x560xbf16> to vector<2x14x560xbf16>
    %82 = vector.shape_cast %81 : vector<2x14x560xbf16> to vector<28x560xbf16>
    %c4_42 = arith.constant 4 : index
    %c0_43 = arith.constant 0 : index
    %c0_44 = arith.constant 0 : index
    %83 = vector.load %arg4[%c4_42, %c0_43, %c0_44] : memref<5x560x448xbf16, #tpu.memory_space<vmem>>, vector<1x560x448xbf16>
    %84 = vector.shape_cast %83 : vector<1x560x448xbf16> to vector<560x448xbf16>
    %cst_45 = arith.constant dense<0.000000e+00> : vector<28x448xf32>
    %85 = tpu.matmul %82, %84, %cst_45 {dimension_numbers = #tpu.dot_dimension_numbers<[1], [0], [0], [1], [0, 0, 1, 1], [], []>} : vector<28x560xbf16>, vector<560x448xbf16>, vector<28x448xf32> -> vector<28x448xf32>
    %86 = arith.addf %80, %85 : vector<28x448xf32>
    %c0_46 = arith.constant 0 : index
    %c0_47 = arith.constant 0 : index
    %87 = vector.load %arg5[%c0_46, %c0_47] : memref<1x448xf32, #tpu.memory_space<vmem>>, vector<1x448xf32>
    %88 = vector.broadcast %87 : vector<1x448xf32> to vector<28x448xf32>
    %89 = arith.addf %86, %88 : vector<28x448xf32>
    %cst_48 = arith.constant 0.000000e+00 : f32
    %90 = vector.broadcast %cst_48 : f32 to vector<28x448xf32>
    %91 = arith.maximumf %89, %90 : vector<28x448xf32>
    %92 = vector.shape_cast %91 : vector<28x448xf32> to vector<2x7x2x448xf32>
    %93 = vector.extract_strided_slice %92 {offsets = [0, 0, 0, 0], sizes = [2, 7, 1, 448], strides = [1, 1, 1, 1]} : vector<2x7x2x448xf32> to vector<2x7x1x448xf32>
    %94 = vector.shape_cast %93 : vector<2x7x1x448xf32> to vector<2x7x448xf32>
    %95 = vector.extract_strided_slice %92 {offsets = [0, 0, 1, 0], sizes = [2, 7, 1, 448], strides = [1, 1, 1, 1]} : vector<2x7x2x448xf32> to vector<2x7x1x448xf32>
    %96 = vector.shape_cast %95 : vector<2x7x1x448xf32> to vector<2x7x448xf32>
    %97 = arith.maximumf %94, %96 : vector<2x7x448xf32>
    %98 = vector.extract_strided_slice %97 {offsets = [0, 0, 0], sizes = [2, 7, 416], strides = [1, 1, 1]} : vector<2x7x448xf32> to vector<2x7x416xf32>
    %99 = vector.extract_strided_slice %97 {offsets = [0, 0, 32], sizes = [2, 7, 416], strides = [1, 1, 1]} : vector<2x7x448xf32> to vector<2x7x416xf32>
    %100 = arith.maximumf %98, %99 : vector<2x7x416xf32>
    %c0_49 = arith.constant 0 : index
    %c0_50 = arith.constant 0 : index
    %c0_51 = arith.constant 0 : index
    %101 = vector.load %arg8[%c0_49, %c0_50, %c0_51] : memref<2x7x416xf32, #tpu.memory_space<vmem>>, vector<2x7x416xf32>
    tpu.vector_store %arg8[%c0_49, %c0_50, %c0_51], %100 {strides = array<i32>} : memref<2x7x416xf32, #tpu.memory_space<vmem>>, vector<2x7x416xf32>,
    %102 = arith.truncf %100 : vector<2x7x416xf32> to vector<2x7x416xbf16>
    %cst_52 = arith.constant 0.000000e+00 : f32
    %103 = vector.broadcast %cst_52 : f32 to vector<2x128xf32>
    %104 = vector.extract_strided_slice %102 {offsets = [0, 0, 0], sizes = [2, 1, 416], strides = [1, 1, 1]} : vector<2x7x416xbf16> to vector<2x1x416xbf16>
    %105 = vector.shape_cast %104 : vector<2x1x416xbf16> to vector<2x416xbf16>
    %c0_53 = arith.constant 0 : index
    %c0_54 = arith.constant 0 : index
    %c0_55 = arith.constant 0 : index
    %106 = vector.load %arg6[%c0_53, %c0_54, %c0_55] : memref<7x416x128xbf16, #tpu.memory_space<vmem>>, vector<1x416x128xbf16>
    %107 = vector.shape_cast %106 : vector<1x416x128xbf16> to vector<416x128xbf16>
    %cst_56 = arith.constant dense<0.000000e+00> : vector<2x128xf32>
    %108 = tpu.matmul %105, %107, %cst_56 {dimension_numbers = #tpu.dot_dimension_numbers<[1], [0], [0], [1], [0, 0, 1, 1], [], []>} : vector<2x416xbf16>, vector<416x128xbf16>, vector<2x128xf32> -> vector<2x128xf32>
    %109 = arith.addf %103, %108 : vector<2x128xf32>
    %110 = vector.extract_strided_slice %102 {offsets = [0, 1, 0], sizes = [2, 1, 416], strides = [1, 1, 1]} : vector<2x7x416xbf16> to vector<2x1x416xbf16>
    %111 = vector.shape_cast %110 : vector<2x1x416xbf16> to vector<2x416xbf16>
    %c1_57 = arith.constant 1 : index
    %c0_58 = arith.constant 0 : index
    %c0_59 = arith.constant 0 : index
    %112 = vector.load %arg6[%c1_57, %c0_58, %c0_59] : memref<7x416x128xbf16, #tpu.memory_space<vmem>>, vector<1x416x128xbf16>
    %113 = vector.shape_cast %112 : vector<1x416x128xbf16> to vector<416x128xbf16>
    %cst_60 = arith.constant dense<0.000000e+00> : vector<2x128xf32>
    %114 = tpu.matmul %111, %113, %cst_60 {dimension_numbers = #tpu.dot_dimension_numbers<[1], [0], [0], [1], [0, 0, 1, 1], [], []>} : vector<2x416xbf16>, vector<416x128xbf16>, vector<2x128xf32> -> vector<2x128xf32>
    %115 = arith.addf %109, %114 : vector<2x128xf32>
    %116 = vector.extract_strided_slice %102 {offsets = [0, 2, 0], sizes = [2, 1, 416], strides = [1, 1, 1]} : vector<2x7x416xbf16> to vector<2x1x416xbf16>
    %117 = vector.shape_cast %116 : vector<2x1x416xbf16> to vector<2x416xbf16>
    %c2_61 = arith.constant 2 : index
    %c0_62 = arith.constant 0 : index
    %c0_63 = arith.constant 0 : index
    %118 = vector.load %arg6[%c2_61, %c0_62, %c0_63] : memref<7x416x128xbf16, #tpu.memory_space<vmem>>, vector<1x416x128xbf16>
    %119 = vector.shape_cast %118 : vector<1x416x128xbf16> to vector<416x128xbf16>
    %cst_64 = arith.constant dense<0.000000e+00> : vector<2x128xf32>
    %120 = tpu.matmul %117, %119, %cst_64 {dimension_numbers = #tpu.dot_dimension_numbers<[1], [0], [0], [1], [0, 0, 1, 1], [], []>} : vector<2x416xbf16>, vector<416x128xbf16>, vector<2x128xf32> -> vector<2x128xf32>
    %121 = arith.addf %115, %120 : vector<2x128xf32>
    %122 = vector.extract_strided_slice %102 {offsets = [0, 3, 0], sizes = [2, 1, 416], strides = [1, 1, 1]} : vector<2x7x416xbf16> to vector<2x1x416xbf16>
    %123 = vector.shape_cast %122 : vector<2x1x416xbf16> to vector<2x416xbf16>
    %c3_65 = arith.constant 3 : index
    %c0_66 = arith.constant 0 : index
    %c0_67 = arith.constant 0 : index
    %124 = vector.load %arg6[%c3_65, %c0_66, %c0_67] : memref<7x416x128xbf16, #tpu.memory_space<vmem>>, vector<1x416x128xbf16>
    %125 = vector.shape_cast %124 : vector<1x416x128xbf16> to vector<416x128xbf16>
    %cst_68 = arith.constant dense<0.000000e+00> : vector<2x128xf32>
    %126 = tpu.matmul %123, %125, %cst_68 {dimension_numbers = #tpu.dot_dimension_numbers<[1], [0], [0], [1], [0, 0, 1, 1], [], []>} : vector<2x416xbf16>, vector<416x128xbf16>, vector<2x128xf32> -> vector<2x128xf32>
    %127 = arith.addf %121, %126 : vector<2x128xf32>
    %128 = vector.extract_strided_slice %102 {offsets = [0, 4, 0], sizes = [2, 1, 416], strides = [1, 1, 1]} : vector<2x7x416xbf16> to vector<2x1x416xbf16>
    %129 = vector.shape_cast %128 : vector<2x1x416xbf16> to vector<2x416xbf16>
    %c4_69 = arith.constant 4 : index
    %c0_70 = arith.constant 0 : index
    %c0_71 = arith.constant 0 : index
    %130 = vector.load %arg6[%c4_69, %c0_70, %c0_71] : memref<7x416x128xbf16, #tpu.memory_space<vmem>>, vector<1x416x128xbf16>
    %131 = vector.shape_cast %130 : vector<1x416x128xbf16> to vector<416x128xbf16>
    %cst_72 = arith.constant dense<0.000000e+00> : vector<2x128xf32>
    %132 = tpu.matmul %129, %131, %cst_72 {dimension_numbers = #tpu.dot_dimension_numbers<[1], [0], [0], [1], [0, 0, 1, 1], [], []>} : vector<2x416xbf16>, vector<416x128xbf16>, vector<2x128xf32> -> vector<2x128xf32>
    %133 = arith.addf %127, %132 : vector<2x128xf32>
    %134 = vector.extract_strided_slice %102 {offsets = [0, 5, 0], sizes = [2, 1, 416], strides = [1, 1, 1]} : vector<2x7x416xbf16> to vector<2x1x416xbf16>
    %135 = vector.shape_cast %134 : vector<2x1x416xbf16> to vector<2x416xbf16>
    %c5 = arith.constant 5 : index
    %c0_73 = arith.constant 0 : index
    %c0_74 = arith.constant 0 : index
    %136 = vector.load %arg6[%c5, %c0_73, %c0_74] : memref<7x416x128xbf16, #tpu.memory_space<vmem>>, vector<1x416x128xbf16>
    %137 = vector.shape_cast %136 : vector<1x416x128xbf16> to vector<416x128xbf16>
    %cst_75 = arith.constant dense<0.000000e+00> : vector<2x128xf32>
    %138 = tpu.matmul %135, %137, %cst_75 {dimension_numbers = #tpu.dot_dimension_numbers<[1], [0], [0], [1], [0, 0, 1, 1], [], []>} : vector<2x416xbf16>, vector<416x128xbf16>, vector<2x128xf32> -> vector<2x128xf32>
    %139 = arith.addf %133, %138 : vector<2x128xf32>
    %140 = vector.extract_strided_slice %102 {offsets = [0, 6, 0], sizes = [2, 1, 416], strides = [1, 1, 1]} : vector<2x7x416xbf16> to vector<2x1x416xbf16>
    %141 = vector.shape_cast %140 : vector<2x1x416xbf16> to vector<2x416xbf16>
    %c6 = arith.constant 6 : index
    %c0_76 = arith.constant 0 : index
    %c0_77 = arith.constant 0 : index
    %142 = vector.load %arg6[%c6, %c0_76, %c0_77] : memref<7x416x128xbf16, #tpu.memory_space<vmem>>, vector<1x416x128xbf16>
    %143 = vector.shape_cast %142 : vector<1x416x128xbf16> to vector<416x128xbf16>
    %cst_78 = arith.constant dense<0.000000e+00> : vector<2x128xf32>
    %144 = tpu.matmul %141, %143, %cst_78 {dimension_numbers = #tpu.dot_dimension_numbers<[1], [0], [0], [1], [0, 0, 1, 1], [], []>} : vector<2x416xbf16>, vector<416x128xbf16>, vector<2x128xf32> -> vector<2x128xf32>
    %145 = arith.addf %139, %144 : vector<2x128xf32>
    %c0_79 = arith.constant 0 : index
    %c0_80 = arith.constant 0 : index
    %146 = vector.load %arg7[%c0_79, %c0_80] : memref<1x128xf32, #tpu.memory_space<vmem>>, vector<1x128xf32>
    %147 = vector.broadcast %146 : vector<1x128xf32> to vector<2x128xf32>
    %148 = arith.addf %145, %147 : vector<2x128xf32>
    %c0_81 = arith.constant 0 : index
    %c0_82 = arith.constant 0 : index
    %149 = vector.load %arg9[%c0_81, %c0_82] : memref<2x128xf32, #tpu.memory_space<vmem>>, vector<2x128xf32>
    tpu.vector_store %arg9[%c0_81, %c0_82], %148 {strides = array<i32>} : memref<2x128xf32, #tpu.memory_space<vmem>>, vector<2x128xf32>,
    return
  }
  func.func @transform_0(%arg0: i32) -> (i32, i32, i32) {
    %c0_i32 = arith.constant 0 : i32
    %c0_i32_0 = arith.constant 0 : i32
    %c0_i32_1 = arith.constant 0 : i32
    return %arg0, %c0_i32, %c0_i32_0 : i32, i32, i32
  }
  func.func @transform_1(%arg0: i32) -> (i32, i32, i32) {
    %c0_i32 = arith.constant 0 : i32
    %c0_i32_0 = arith.constant 0 : i32
    %c0_i32_1 = arith.constant 0 : i32
    %c0_i32_2 = arith.constant 0 : i32
    return %c0_i32, %c0_i32_0, %c0_i32_1 : i32, i32, i32
  }
  func.func @transform_2(%arg0: i32) -> (i32, i32) {
    %c0_i32 = arith.constant 0 : i32
    %c0_i32_0 = arith.constant 0 : i32
    %c0_i32_1 = arith.constant 0 : i32
    return %c0_i32, %c0_i32_0 : i32, i32
  }
  func.func @transform_3(%arg0: i32) -> (i32, i32, i32) {
    %c0_i32 = arith.constant 0 : i32
    %c0_i32_0 = arith.constant 0 : i32
    %c0_i32_1 = arith.constant 0 : i32
    %c0_i32_2 = arith.constant 0 : i32
    return %c0_i32, %c0_i32_0, %c0_i32_1 : i32, i32, i32
  }
  func.func @transform_4(%arg0: i32) -> (i32, i32) {
    %c0_i32 = arith.constant 0 : i32
    %c0_i32_0 = arith.constant 0 : i32
    %c0_i32_1 = arith.constant 0 : i32
    return %c0_i32, %c0_i32_0 : i32, i32
  }
  func.func @transform_5(%arg0: i32) -> (i32, i32, i32) {
    %c0_i32 = arith.constant 0 : i32
    %c0_i32_0 = arith.constant 0 : i32
    %c0_i32_1 = arith.constant 0 : i32
    %c0_i32_2 = arith.constant 0 : i32
    return %c0_i32, %c0_i32_0, %c0_i32_1 : i32, i32, i32
  }
  func.func @transform_6(%arg0: i32) -> (i32, i32) {
    %c0_i32 = arith.constant 0 : i32
    %c0_i32_0 = arith.constant 0 : i32
    %c0_i32_1 = arith.constant 0 : i32
    return %c0_i32, %c0_i32_0 : i32, i32
  }
  func.func @transform_7(%arg0: i32) -> (i32, i32, i32) {
    %c0_i32 = arith.constant 0 : i32
    %c0_i32_0 = arith.constant 0 : i32
    %c0_i32_1 = arith.constant 0 : i32
    return %arg0, %c0_i32, %c0_i32_0 : i32, i32, i32
  }
  func.func @transform_8(%arg0: i32) -> (i32, i32) {
    %c0_i32 = arith.constant 0 : i32
    %c0_i32_0 = arith.constant 0 : i32
    return %arg0, %c0_i32 : i32, i32
  }
}

</mosaic_0001>

<llo_original>
// kernel: cnn_forward.1
$region0: #{cnn_forward.1}
  #allocation0 [shape = 'u32[]', space=smem, size = 0x4, offset = 0x4, fixed_abs, tag = 'smem constant byte address 0x4 - core index']
  #allocation1 [shape = 'u32[144,128]{1,0:T(1,128)}', space=vmem, size = 0x12000, scoped, tag = 'internal scratch']
  %s0 = inlined_call_operand.vmem [shape: f32[2,28,28], index: 0, kind: input, shape index: {}]
  %s1 = inlined_call_operand.hbm [shape: bf16[5,32,448], index: 1, kind: input, shape index: {}]
  %s2 = inlined_call_operand.hbm [shape: f32[1,448], index: 2, kind: input, shape index: {}]
  %s3 = inlined_call_operand.hbm [shape: bf16[5,560,448], index: 3, kind: input, shape index: {}]
  %s4 = inlined_call_operand.hbm [shape: f32[1,448], index: 4, kind: input, shape index: {}]
  %s5 = inlined_call_operand.hbm [shape: bf16[7,416,128], index: 5, kind: input, shape index: {}]
  %s6 = inlined_call_operand.hbm [shape: f32[1,128], index: 6, kind: input, shape index: {}]
  %s7 = inlined_call_operand.vmem [shape: f32[2,7,416], index: 7, kind: output, shape index: {0}]
  %s8 = inlined_call_operand.hbm [shape: f32[2,128], index: 8, kind: output, shape index: {1}]
  %9 = xla_tuple %s7, %s8
  %s10 = sld [smem:[#allocation0]]
  $region70: #{cnn_forward.1} parent=0
    _
  %s12 = ssub.s32 1, %s10
  %s13 = scalar_select 0, %s12, %s10
  $region1: #{cnn_forward.1} parent=0
    #allocation2 [shape = 'u8[163840]{0}', space=vmem, size = 0x28000, scoped, tag = 'input window, operand 1, single buffered']
    #allocation3 [shape = 's32[1]{0}', space=sflag, size = 0x4, scoped, tag = 'scoped memory for cnn_forward.1']
    #allocation4 [shape = 's32[1]{0}', space=sflag, size = 0x4, scoped, tag = 'scoped memory for cnn_forward.1']
    #allocation5 [shape = 'u8[2048]{0}', space=vmem, size = 0x800, scoped, tag = 'input window, operand 2, single buffered']
    #allocation6 [shape = 's32[1]{0}', space=sflag, size = 0x4, scoped, tag = 'scoped memory for cnn_forward.1']
    #allocation7 [shape = 'u8[2867200]{0}', space=vmem, size = 0x2bc000, scoped, tag = 'input window, operand 3, single buffered']
    #allocation8 [shape = 'u8[2048]{0}', space=vmem, size = 0x800, scoped, tag = 'input window, operand 4, single buffered']
    #allocation9 [shape = 's32[1]{0}', space=sflag, size = 0x4, scoped, tag = 'scoped memory for cnn_forward.1']
    #allocation10 [shape = 'u8[745472]{0}', space=vmem, size = 0xb6000, scoped, tag = 'input window, operand 5, single buffered']
    #allocation11 [shape = 'u8[512]{0}', space=vmem, size = 0x400, scoped, tag = 'input window, operand 6, single buffered']
    #allocation12 [shape = 's32[1]{0}', space=sflag, size = 0x4, scoped, tag = 'scoped memory for cnn_forward.1']
    #allocation13 [shape = 'u8[1024]{0}', space=vmem, size = 0x400, scoped, tag = 'output window, operand 1, single buffered']
    %14 = vsyncpa [#allocation3], 0
    %15 = vsyncpa [#allocation6], 0
    %16 = vsyncpa [#allocation9], 0
    %17 = vsyncpa [#allocation12], 0
    %18 = vsyncpa [#allocation4], 0
    // Predicated region
    $region2: #{cnn_forward.1} parent=1 // pred_check
      _
    $region3: #{cnn_forward.1} parent=1 // pred_check_branch
      %20 = sbr.rel (0) target = $region5
    $region4: #{cnn_forward.1} parent=1 // pred_region
      _
    $region5: #{cnn_forward.1} parent=1 // pred_fallthru
      _
    // Predicated region
    $region6: #{cnn_forward.1} parent=1 // pred_check
      _
    $region7: #{cnn_forward.1} parent=1 // pred_check_branch
      %22 = sbr.rel (0) target = $region9
    $region8: #{cnn_forward.1} parent=1 // pred_region
      %s24 = ssub.s32 5120, 5120
      %25 = vsyncadd [#allocation3], %s24
      %s26 = sshll.u32 [#allocation2], 4
      %s27 = int_to_ptr.vmem [resolvable:$true] %s26
      %32 = dma.hbm_to_vmem [thread:$0]  %s1, 5120, %s27, [#allocation3], 256, 256, 16
    $region9: #{cnn_forward.1} parent=1 // pred_fallthru
      _
    // Predicated region
    $region10: #{cnn_forward.1} parent=1 // pred_check
      _
    $region11: #{cnn_forward.1} parent=1 // pred_check_branch
      %34 = sbr.rel (0) target = $region13
    $region12: #{cnn_forward.1} parent=1 // pred_region
      %s36 = ssub.s32 64, 64
      %37 = vsyncadd [#allocation6], %s36
      %s39 = sshll.u32 [#allocation5], 4
      %s40 = int_to_ptr.vmem [resolvable:$true] %s39
      %42 = dma.hbm_to_vmem [thread:$0]  %s2, 64, %s40, [#allocation6]
    $region13: #{cnn_forward.1} parent=1 // pred_fallthru
      _
    // Predicated region
    $region14: #{cnn_forward.1} parent=1 // pred_check
      _
    $region15: #{cnn_forward.1} parent=1 // pred_check_branch
      %44 = sbr.rel (0) target = $region17
    $region16: #{cnn_forward.1} parent=1 // pred_region
      %s46 = ssub.s32 89600, 89600
      %47 = vsyncadd [#allocation6], %s46
      %s48 = sshll.u32 [#allocation7], 4
      %s49 = int_to_ptr.vmem [resolvable:$true] %s48
      %54 = dma.hbm_to_vmem [thread:$0]  %s3, 89600, %s49, [#allocation6], 256, 256, 16
    $region17: #{cnn_forward.1} parent=1 // pred_fallthru
      _
    // Predicated region
    $region18: #{cnn_forward.1} parent=1 // pred_check
      _
    $region19: #{cnn_forward.1} parent=1 // pred_check_branch
      %56 = sbr.rel (0) target = $region21
    $region20: #{cnn_forward.1} parent=1 // pred_region
      %s58 = ssub.s32 64, 64
      %59 = vsyncadd [#allocation9], %s58
      %s61 = sshll.u32 [#allocation8], 4
      %s62 = int_to_ptr.vmem [resolvable:$true] %s61
      %64 = dma.hbm_to_vmem [thread:$0]  %s4, 64, %s62, [#allocation9]
    $region21: #{cnn_forward.1} parent=1 // pred_fallthru
      _
    // Predicated region
    $region22: #{cnn_forward.1} parent=1 // pred_check
      _
    $region23: #{cnn_forward.1} parent=1 // pred_check_branch
      %66 = sbr.rel (0) target = $region25
    $region24: #{cnn_forward.1} parent=1 // pred_region
      %s68 = ssub.s32 23296, 23296
      %69 = vsyncadd [#allocation9], %s68
      %s70 = sshll.u32 [#allocation10], 4
      %s71 = int_to_ptr.vmem [resolvable:$true] %s70
      %76 = dma.hbm_to_vmem [thread:$0]  %s5, 23296, %s71, [#allocation9], 64, 64, 4
    $region25: #{cnn_forward.1} parent=1 // pred_fallthru
      _
    // Predicated region
    $region26: #{cnn_forward.1} parent=1 // pred_check
      _
    $region27: #{cnn_forward.1} parent=1 // pred_check_branch
      %78 = sbr.rel (0) target = $region29
    $region28: #{cnn_forward.1} parent=1 // pred_region
      %s80 = ssub.s32 16, 16
      %81 = vsyncadd [#allocation12], %s80
      %s83 = sshll.u32 [#allocation11], 4
      %s84 = int_to_ptr.vmem [resolvable:$true] %s83
      %86 = dma.hbm_to_vmem [thread:$0]  %s6, 16, %s84, [#allocation12]
    $region29: #{cnn_forward.1} parent=1 // pred_fallthru
      _
    // Predicated region
    $region30: #{cnn_forward.1} parent=1 // pred_check
      _
    $region31: #{cnn_forward.1} parent=1 // pred_check_branch
      %88 = sbr.rel (0) target = $region33
    $region32: #{cnn_forward.1} parent=1 // pred_region
      %89 = dma.done [#allocation3], 5120
    $region33: #{cnn_forward.1} parent=1 // pred_fallthru
      _
    // Predicated region
    $region34: #{cnn_forward.1} parent=1 // pred_check
      _
    $region35: #{cnn_forward.1} parent=1 // pred_check_branch
      %91 = sbr.rel (0) target = $region37
    $region36: #{cnn_forward.1} parent=1 // pred_region
      %92 = dma.done [#allocation6], 64
    $region37: #{cnn_forward.1} parent=1 // pred_fallthru
      _
    // Predicated region
    $region38: #{cnn_forward.1} parent=1 // pred_check
      _
    $region39: #{cnn_forward.1} parent=1 // pred_check_branch
      %94 = sbr.rel (0) target = $region41
    $region40: #{cnn_forward.1} parent=1 // pred_region
      %95 = dma.done [#allocation6], 89600
    $region41: #{cnn_forward.1} parent=1 // pred_fallthru
      _
    // Predicated region
    $region42: #{cnn_forward.1} parent=1 // pred_check
      _
    $region43: #{cnn_forward.1} parent=1 // pred_check_branch
      %97 = sbr.rel (0) target = $region45
    $region44: #{cnn_forward.1} parent=1 // pred_region
      %98 = dma.done [#allocation9], 64
    $region45: #{cnn_forward.1} parent=1 // pred_fallthru
      _
    // Predicated region
    $region46: #{cnn_forward.1} parent=1 // pred_check
      _
    $region47: #{cnn_forward.1} parent=1 // pred_check_branch
      %100 = sbr.rel (0) target = $region49
    $region48: #{cnn_forward.1} parent=1 // pred_region
      %101 = dma.done [#allocation9], 23296
    $region49: #{cnn_forward.1} parent=1 // pred_fallthru
      _
    // Predicated region
    $region50: #{cnn_forward.1} parent=1 // pred_check
      _
    $region51: #{cnn_forward.1} parent=1 // pred_check_branch
      %103 = sbr.rel (0) target = $region53
    $region52: #{cnn_forward.1} parent=1 // pred_region
      %104 = dma.done [#allocation12], 16
    $region53: #{cnn_forward.1} parent=1 // pred_fallthru
      _
    %v106 = vld [vmem:[%s0] sm:$0xff]
    %v107 = vld [vmem:[%s0 + $0x8] sm:$0xff]
    %v108 = vld [vmem:[%s0 + $0x10] sm:$0xff]
    %v109 = vld [vmem:[%s0 + $0x18] sm:$0xf]
    %v110 = vld [vmem:[%s0 + $0x20] sm:$0xff]
    %v111 = vld [vmem:[%s0 + $0x28] sm:$0xff]
    %v112 = vld [vmem:[%s0 + $0x30] sm:$0xff]
    %v113 = vld [vmem:[%s0 + $0x38] sm:$0xf]
    %122 = vrot.lane.b32.xlu0 %v106, 2
    %v123 = vpop.permute.xlu0 %122
    %124 = vrot.lane.b32.xlu0 %v107, 2
    %v125 = vpop.permute.xlu0 %124
    %126 = vrot.lane.b32.xlu0 %v108, 2
    %v127 = vpop.permute.xlu0 %126
    %128 = vrot.lane.b32.xlu0 %v109, 2
    %v129 = vpop.permute.xlu0 %128
    %130 = vrot.lane.b32.xlu0 %v110, 2
    %v131 = vpop.permute.xlu0 %130
    %132 = vrot.lane.b32.xlu0 %v111, 2
    %v133 = vpop.permute.xlu0 %132
    %134 = vrot.lane.b32.xlu0 %v112, 2
    %v135 = vpop.permute.xlu0 %134
    %136 = vrot.lane.b32.xlu0 %v113, 2
    %v137 = vpop.permute.xlu0 %136
    %vm146 = vcmask 15360
    %v147 = vsel %vm146, 0.0, %v123
    %v148 = vsel %vm146, 0.0, %v125
    %v149 = vsel %vm146, 0.0, %v127
    %v150 = vsel %vm146, 0.0, %v129
    %v151 = vsel %vm146, 0.0, %v131
    %v152 = vsel %vm146, 0.0, %v133
    %v153 = vsel %vm146, 0.0, %v135
    %v154 = vsel %vm146, 0.0, %v137
    %vm155 = vcmask 244736
    %v156 = vsel %vm155, %v147, 0.0
    %v157 = vsel %vm155, %v148, 0.0
    %v158 = vsel %vm155, %v149, 0.0
    %v159 = vsel %vm155, %v150, 0.0
    %v160 = vsel %vm155, %v151, 0.0
    %v161 = vsel %vm155, %v152, 0.0
    %v162 = vsel %vm155, %v153, 0.0
    %v163 = vsel %vm155, %v154, 0.0
    %vm172 = vcmask 1041408
    %v173 = vrot.slane %v156, 6
    %v174 = vrot.slane %v157, 6
    %v175 = vsel %vm172, %v173, %v174
    %v176 = vrot.slane %v158, 6
    %v177 = vsel %vm172, %v174, %v176
    %v178 = vrot.slane %v159, 6
    %v179 = vsel %vm172, %v176, %v178
    %v180 = vrot.slane %v160, 6
    %v181 = vrot.slane %v161, 6
    %v182 = vsel %vm172, %v180, %v181
    %v183 = vrot.slane %v162, 6
    %v184 = vsel %vm172, %v181, %v183
    %v185 = vrot.slane %v163, 6
    %v186 = vsel %vm172, %v183, %v185
    %v195 = vsel %vm172, 0.0, %v173
    %v196 = vsel %vm172, 0.0, %v180
    %vm197 = vcmask 1045504
    %v198 = vsel %vm197, %v179, 0.0
    %v199 = vsel %vm197, %v186, 0.0
    %v200 = vpack.c.bf16 %v175, %v195
    %v201 = vpack.c.bf16 %v198, %v177
    %v202 = vpack.c.bf16 %v182, %v196
    %v203 = vpack.c.bf16 %v199, %v184
    %v208 = vcombine.high %v200, %v200
    %v210 = vunpack.c.l.s4 1983009808
    %v211 = vunpack.c.0.s8 %v210
    %v212 = vlaneseq
    %v213 = vshrl.u32 %v212, 7
    %v214 = vsub.s32 %v211, %v213
    %v215 = vrot.slane %v200, %v214
    %v217 = vunpack.c.l.s4 1983009808
    %v218 = vunpack.c.0.s8 %v217
    %v219 = vlaneseq
    %v220 = vshrl.u32 %v219, 7
    %v221 = vsub.s32 %v218, %v220
    %v222 = vrot.slane %v208, %v221
    %v223 = vcombine.high %v215, %v215
    %v224 = vcombine.high %v222, %v222
    %v225 = vcombine.high %v201, %v201
    %v227 = vunpack.c.l.s4 1983009808
    %v228 = vunpack.c.0.s8 %v227
    %v229 = vlaneseq
    %v230 = vshrl.u32 %v229, 7
    %v231 = vsub.s32 %v228, %v230
    %v232 = vrot.slane %v201, %v231
    %v234 = vunpack.c.l.s4 1983009808
    %v235 = vunpack.c.0.s8 %v234
    %v236 = vlaneseq
    %v237 = vshrl.u32 %v236, 7
    %v238 = vsub.s32 %v235, %v237
    %v239 = vrot.slane %v225, %v238
    %v240 = vcombine.high %v232, %v232
    %v241 = vcombine.high %v202, %v202
    %v243 = vunpack.c.l.s4 1983009808
    %v244 = vunpack.c.0.s8 %v243
    %v245 = vlaneseq
    %v246 = vshrl.u32 %v245, 7
    %v247 = vsub.s32 %v244, %v246
    %v248 = vrot.slane %v202, %v247
    %v250 = vunpack.c.l.s4 1983009808
    %v251 = vunpack.c.0.s8 %v250
    %v252 = vlaneseq
    %v253 = vshrl.u32 %v252, 7
    %v254 = vsub.s32 %v251, %v253
    %v255 = vrot.slane %v241, %v254
    %v256 = vcombine.high %v248, %v248
    %v257 = vcombine.high %v255, %v255
    %v258 = vcombine.high %v203, %v203
    %v260 = vunpack.c.l.s4 1983009808
    %v261 = vunpack.c.0.s8 %v260
    %v262 = vlaneseq
    %v263 = vshrl.u32 %v262, 7
    %v264 = vsub.s32 %v261, %v263
    %v265 = vrot.slane %v203, %v264
    %v267 = vunpack.c.l.s4 1983009808
    %v268 = vunpack.c.0.s8 %v267
    %v269 = vlaneseq
    %v270 = vshrl.u32 %v269, 7
    %v271 = vsub.s32 %v268, %v270
    %v272 = vrot.slane %v258, %v271
    %v273 = vcombine.high %v265, %v265
    %v274 = vld [vmem:[#allocation2] sm:$0xff]
    %v275 = vld [vmem:[#allocation2 + $0x8] sm:$0xff]
    %v276 = vld [vmem:[#allocation2 + $0x10] sm:$0xff]
    %v277 = vld [vmem:[#allocation2 + $0x18] sm:$0xff]
    %v278 = vld [vmem:[#allocation2 + $0x20] sm:$0xff]
    %v279 = vld [vmem:[#allocation2 + $0x28] sm:$0xff]
    %v280 = vld [vmem:[#allocation2 + $0x30] sm:$0xff]
    %v281 = vld [vmem:[#allocation2 + $0x38] sm:$0xff]
    %v282 = vcombine.high %v239, %v239
    %v283 = vcombine.high %v272, %v272
    %vm284 = vsmask.f32 1280
    %vm285 = vsmask.f32 3336
    %vm286 = vmor %vm284, %vm285
    %vm287 = vsmask.f32 5392
    %vm288 = vmor %vm286, %vm287
    %vm289 = vsmask.f32 7448
    %vm290 = vmor %vm288, %vm289
    %v292 = vshrl.u32 %v215, 16
    %v294 = vrot.slane %v292, 6
    %v295 = vshll.u32 %v215, 16
    %v297 = vrot.slane %v295, 7
    %v298 = vor.u32 %v294, %v297
    %v299 = vrot.slane %v298, 2
    %v301 = vshll.u32 %v223, 16
    %v303 = vrot.slane %v301, 7
    %v304 = vsel %vm290, %v299, %v303
    %v305 = vshrl.u32 %v223, 16
    %v307 = vrot.slane %v305, 6
    %v308 = vor.u32 %v307, %v303
    %v309 = vrot.slane %v308, 2
    %v311 = vshll.u32 %v222, 16
    %v313 = vrot.slane %v311, 7
    %v314 = vsel %vm290, %v309, %v313
    %v315 = vshrl.u32 %v222, 16
    %v317 = vrot.slane %v315, 6
    %v318 = vor.u32 %v317, %v313
    %v319 = vrot.slane %v318, 2
    %v321 = vshll.u32 %v224, 16
    %v323 = vrot.slane %v321, 7
    %v324 = vsel %vm290, %v319, %v323
    %v325 = vshrl.u32 %v224, 16
    %v327 = vrot.slane %v325, 6
    %v328 = vor.u32 %v327, %v323
    %v329 = vrot.slane %v328, 2
    %v331 = vshll.u32 %v232, 16
    %v333 = vrot.slane %v331, 7
    %v334 = vsel %vm290, %v329, %v333
    %v335 = vshrl.u32 %v232, 16
    %v337 = vrot.slane %v335, 6
    %v338 = vor.u32 %v337, %v333
    %v339 = vrot.slane %v338, 2
    %v341 = vshll.u32 %v240, 16
    %v343 = vrot.slane %v341, 7
    %v344 = vsel %vm290, %v339, %v343
    %v345 = vshrl.u32 %v240, 16
    %v347 = vrot.slane %v345, 6
    %v348 = vor.u32 %v347, %v343
    %v349 = vrot.slane %v348, 2
    %v351 = vshll.u32 %v239, 16
    %v353 = vrot.slane %v351, 7
    %v354 = vsel %vm290, %v349, %v353
    %v355 = vshrl.u32 %v239, 16
    %v357 = vrot.slane %v355, 6
    %v358 = vor.u32 %v357, %v353
    %v359 = vrot.slane %v358, 2
    %v361 = vshll.u32 %v282, 16
    %v363 = vrot.slane %v361, 7
    %v364 = vsel %vm290, %v359, %v363
    %v366 = vshrl.u32 %v248, 16
    %v368 = vrot.slane %v366, 6
    %v369 = vshll.u32 %v248, 16
    %v371 = vrot.slane %v369, 7
    %v372 = vor.u32 %v368, %v371
    %v373 = vrot.slane %v372, 2
    %v375 = vshll.u32 %v256, 16
    %v377 = vrot.slane %v375, 7
    %v378 = vsel %vm290, %v373, %v377
    %v379 = vshrl.u32 %v256, 16
    %v381 = vrot.slane %v379, 6
    %v382 = vor.u32 %v381, %v377
    %v383 = vrot.slane %v382, 2
    %v385 = vshll.u32 %v255, 16
    %v387 = vrot.slane %v385, 7
    %v388 = vsel %vm290, %v383, %v387
    %v389 = vshrl.u32 %v255, 16
    %v391 = vrot.slane %v389, 6
    %v392 = vor.u32 %v391, %v387
    %v393 = vrot.slane %v392, 2
    %v395 = vshll.u32 %v257, 16
    %v397 = vrot.slane %v395, 7
    %v398 = vsel %vm290, %v393, %v397
    %v399 = vshrl.u32 %v257, 16
    %v401 = vrot.slane %v399, 6
    %v402 = vor.u32 %v401, %v397
    %v403 = vrot.slane %v402, 2
    %v405 = vshll.u32 %v265, 16
    %v407 = vrot.slane %v405, 7
    %v408 = vsel %vm290, %v403, %v407
    %v409 = vshrl.u32 %v265, 16
    %v411 = vrot.slane %v409, 6
    %v412 = vor.u32 %v411, %v407
    %v413 = vrot.slane %v412, 2
    %v415 = vshll.u32 %v273, 16
    %v417 = vrot.slane %v415, 7
    %v418 = vsel %vm290, %v413, %v417
    %v419 = vshrl.u32 %v273, 16
    %v421 = vrot.slane %v419, 6
    %v422 = vor.u32 %v421, %v417
    %v423 = vrot.slane %v422, 2
    %v425 = vshll.u32 %v272, 16
    %v427 = vrot.slane %v425, 7
    %v428 = vsel %vm290, %v423, %v427
    %v429 = vshrl.u32 %v272, 16
    %v431 = vrot.slane %v429, 6
    %v432 = vor.u32 %v431, %v427
    %v433 = vrot.slane %v432, 2
    %v435 = vshll.u32 %v283, 16
    %v437 = vrot.slane %v435, 7
    %v438 = vsel %vm290, %v433, %v437
    %s439 = scalar_lea.vmem [#allocation2], 64
    %v440 = vld [vmem:[%s439] sm:$0xff]
    %v441 = vld [vmem:[%s439 + $0x8] sm:$0xff]
    %v442 = vld [vmem:[%s439 + $0x10] sm:$0xff]
    %v443 = vld [vmem:[%s439 + $0x18] sm:$0xff]
    %v444 = vld [vmem:[%s439 + $0x20] sm:$0xff]
    %v445 = vld [vmem:[%s439 + $0x28] sm:$0xff]
    %v446 = vld [vmem:[%s439 + $0x30] sm:$0xff]
    %v447 = vld [vmem:[%s439 + $0x38] sm:$0xff]
    %v448 = vcombine.low %v304, %v314
    %v449 = vcombine.low %v324, %v334
    %v451 = vunpack.c.l.s4 1983009808
    %v452 = vunpack.c.0.s8 %v451
    %v453 = vlaneseq
    %v454 = vshrl.u32 %v453, 7
    %v455 = vsub.s32 %v452, %v454
    %v456 = vrot.slane %v448, %v455
    %v458 = vunpack.c.l.s4 1983009808
    %v459 = vunpack.c.0.s8 %v458
    %v460 = vlaneseq
    %v461 = vshrl.u32 %v460, 7
    %v462 = vsub.s32 %v459, %v461
    %v463 = vrot.slane %v449, %v462
    %v464 = vcombine.low %v456, %v463
    %v465 = vcombine.low %v344, %v354
    %v466 = vcombine.low %v364, %v378
    %v468 = vunpack.c.l.s4 1983009808
    %v469 = vunpack.c.0.s8 %v468
    %v470 = vlaneseq
    %v471 = vshrl.u32 %v470, 7
    %v472 = vsub.s32 %v469, %v471
    %v473 = vrot.slane %v465, %v472
    %v475 = vunpack.c.l.s4 1983009808
    %v476 = vunpack.c.0.s8 %v475
    %v477 = vlaneseq
    %v478 = vshrl.u32 %v477, 7
    %v479 = vsub.s32 %v476, %v478
    %v480 = vrot.slane %v466, %v479
    %v481 = vcombine.low %v473, %v480
    %v482 = vcombine.low %v388, %v398
    %v483 = vcombine.low %v408, %v418
    %v485 = vunpack.c.l.s4 1983009808
    %v486 = vunpack.c.0.s8 %v485
    %v487 = vlaneseq
    %v488 = vshrl.u32 %v487, 7
    %v489 = vsub.s32 %v486, %v488
    %v490 = vrot.slane %v482, %v489
    %v492 = vunpack.c.l.s4 1983009808
    %v493 = vunpack.c.0.s8 %v492
    %v494 = vlaneseq
    %v495 = vshrl.u32 %v494, 7
    %v496 = vsub.s32 %v493, %v495
    %v497 = vrot.slane %v483, %v496
    %v498 = vcombine.low %v490, %v497
    %v499 = vcombine.low %v428, %v438
    %v501 = vunpack.c.l.s4 1983009808
    %v502 = vunpack.c.0.s8 %v501
    %v503 = vlaneseq
    %v504 = vshrl.u32 %v503, 7
    %v505 = vsub.s32 %v502, %v504
    %v506 = vrot.slane %v499, %v505
    %v515 = vunpack.c.l.b16 %v440
    %v516 = vunpack.c.h.b16 %v440
    %v517 = vunpack.c.l.b16 %v441
    %v518 = vunpack.c.h.b16 %v441
    %v519 = vunpack.c.l.b16 %v442
    %v520 = vunpack.c.h.b16 %v442
    %v521 = vunpack.c.l.b16 %v443
    %v522 = vunpack.c.h.b16 %v443
    %v523 = vunpack.c.l.b16 %v444
    %v524 = vunpack.c.h.b16 %v444
    %v525 = vunpack.c.l.b16 %v445
    %v526 = vunpack.c.h.b16 %v445
    %v527 = vunpack.c.l.b16 %v446
    %v528 = vunpack.c.h.b16 %v446
    %v529 = vunpack.c.l.b16 %v447
    %v530 = vunpack.c.h.b16 %v447
    %v531 = vpack.c.b16 %v519, %v515
    %v532 = vpack.c.b16 %v520, %v516
    %v533 = vpack.c.b16 %v521, %v517
    %v534 = vpack.c.b16 %v522, %v518
    %v535 = vpack.c.b16 %v527, %v523
    %v536 = vpack.c.b16 %v528, %v524
    %v537 = vpack.c.b16 %v529, %v525
    %v538 = vpack.c.b16 %v530, %v526
    %vm547 = vcmask 261120
    %v549 = vsel %vm547, %v464, 0
    %v552 = vsel %vm547, %v481, 0
    %v555 = vsel %vm547, %v498, 0
    %v558 = vsel %vm547, %v506, 0
    %560 = vmatprep.subr.bf16.mxu0 %v532
    %561 = vmatpush1.bf16.msra.mxu0 %v531
    %562 = vmatprep.subr.bf16.mxu0 %v536
    %563 = vmatpush1.bf16.msra.mxu0 %v535
    %564 = vmatprep.subr.bf16.mxu0 0
    %565 = vmatpush1.bf16.msra.mxu0 0
    %566 = vmatprep.subr.bf16.mxu0 0
    %567 = vmatpush1.bf16.msra.mxu0 0
    %568 = vmatprep.subr.bf16.mxu0 0
    %569 = vmatpush1.bf16.msra.mxu0 0
    %570 = vmatprep.subr.bf16.mxu0 0
    %571 = vmatpush1.bf16.msra.mxu0 0
    %572 = vmatprep.subr.bf16.mxu0 0
    %573 = vmatpush1.bf16.msra.mxu0 0
    %574 = vmatprep.subr.bf16.mxu0 0
    %575 = vmatpush1.bf16.msra.mxu0 0
    %576 = vmatprep.subr.bf16.mxu0 0
    %577 = vmatpush1.bf16.msra.mxu0 0
    %578 = vmatprep.subr.bf16.mxu0 0
    %579 = vmatpush1.bf16.msra.mxu0 0
    %580 = vmatprep.subr.bf16.mxu0 0
    %581 = vmatpush1.bf16.msra.mxu0 0
    %582 = vmatprep.subr.bf16.mxu0 0
    %583 = vmatpush1.bf16.msra.mxu0 0
    %584 = vmatprep.subr.bf16.mxu0 0
    %585 = vmatpush1.bf16.msra.mxu0 0
    %586 = vmatprep.subr.bf16.mxu0 0
    %587 = vmatpush1.bf16.msra.mxu0 0
    %588 = vmatprep.subr.bf16.mxu0 0
    %589 = vmatpush1.bf16.msra.mxu0 0
    %590 = vmatprep.subr.bf16.mxu0 0
    %591 = vmatpush1.bf16.msra.mxu0 0
    %592 = vmatprep.mubr.bf16.mxu0 0
    %593 = vmatmul.mubr.bf16.gmra.mrb[0].mxu0 %v549
    %v594 = vpop.f32.mrb[0].mxu0
    %v595 = vadd.f32 0.0, %v594
    %v596 = vpop.f32.mrb[0].mxu0
    %v597 = vadd.f32 0.0, %v596
    %v598 = vpop.f32.mrb[0].mxu0
    %v599 = vadd.f32 0.0, %v598
    %v600 = vpop.f32.mrb[0].mxu0
    %v601 = vadd.f32 0.0, %v600
    %602 = vmatprep.mubr.bf16.mxu0 0
    %603 = vmatmul.mubr.bf16.gmra.mrb[0].mxu0 %v552
    %v604 = vpop.f32.mrb[0].mxu0
    %v605 = vadd.f32 0.0, %v604
    %v606 = vpop.f32.mrb[0].mxu0
    %v607 = vadd.f32 0.0, %v606
    %v608 = vpop.f32.mrb[0].mxu0
    %v609 = vadd.f32 0.0, %v608
    %v610 = vpop.f32.mrb[0].mxu0
    %v611 = vadd.f32 0.0, %v610
    %612 = vmatprep.mubr.bf16.mxu0 0
    %613 = vmatmul.mubr.bf16.gmra.mrb[0].mxu0 %v555
    %v614 = vpop.f32.mrb[0].mxu0
    %v615 = vadd.f32 0.0, %v614
    %v616 = vpop.f32.mrb[0].mxu0
    %v617 = vadd.f32 0.0, %v616
    %v618 = vpop.f32.mrb[0].mxu0
    %v619 = vadd.f32 0.0, %v618
    %v620 = vpop.f32.mrb[0].mxu0
    %v621 = vadd.f32 0.0, %v620
    %622 = vmatprep.mubr.bf16.mxu0 0
    %623 = vmatmul.mubr.bf16.gmra.mrb[0].mxu0 %v558
    %v624 = vpop.f32.mrb[0].mxu0
    %v625 = vadd.f32 0.0, %v624
    %v626 = vpop.f32.mrb[0].mxu0
    %v627 = vadd.f32 0.0, %v626
    %v628 = vpop.f32.mrb[0].mxu0
    %v629 = vpop.f32.mrb[0].mxu0
    %630 = vdwg.mxu0
    %631 = vmatprep.subr.bf16.mxu0 %v534
    %632 = vmatpush1.bf16.msra.mxu0 %v533
    %633 = vmatprep.subr.bf16.mxu0 %v538
    %634 = vmatpush1.bf16.msra.mxu0 %v537
    %635 = vmatprep.subr.bf16.mxu0 0
    %636 = vmatpush1.bf16.msra.mxu0 0
    %637 = vmatprep.subr.bf16.mxu0 0
    %638 = vmatpush1.bf16.msra.mxu0 0
    %639 = vmatprep.subr.bf16.mxu0 0
    %640 = vmatpush1.bf16.msra.mxu0 0
    %641 = vmatprep.subr.bf16.mxu0 0
    %642 = vmatpush1.bf16.msra.mxu0 0
    %643 = vmatprep.subr.bf16.mxu0 0
    %644 = vmatpush1.bf16.msra.mxu0 0
    %645 = vmatprep.subr.bf16.mxu0 0
    %646 = vmatpush1.bf16.msra.mxu0 0
    %647 = vmatprep.subr.bf16.mxu0 0
    %648 = vmatpush1.bf16.msra.mxu0 0
    %649 = vmatprep.subr.bf16.mxu0 0
    %650 = vmatpush1.bf16.msra.mxu0 0
    %651 = vmatprep.subr.bf16.mxu0 0
    %652 = vmatpush1.bf16.msra.mxu0 0
    %653 = vmatprep.subr.bf16.mxu0 0
    %654 = vmatpush1.bf16.msra.mxu0 0
    %655 = vmatprep.subr.bf16.mxu0 0
    %656 = vmatpush1.bf16.msra.mxu0 0
    %657 = vmatprep.subr.bf16.mxu0 0
    %658 = vmatpush1.bf16.msra.mxu0 0
    %659 = vmatprep.subr.bf16.mxu0 0
    %660 = vmatpush1.bf16.msra.mxu0 0
    %661 = vmatprep.subr.bf16.mxu0 0
    %662 = vmatpush1.bf16.msra.mxu0 0
    %663 = vmatprep.mubr.bf16.mxu0 0
    %664 = vmatmul.mubr.bf16.gmra.mrb[0].mxu0 %v549
    %v665 = vpop.f32.mrb[0].mxu0
    %v666 = vadd.f32 0.0, %v665
    %v667 = vpop.f32.mrb[0].mxu0
    %v668 = vadd.f32 0.0, %v667
    %v669 = vpop.f32.mrb[0].mxu0
    %v670 = vadd.f32 0.0, %v669
    %v671 = vpop.f32.mrb[0].mxu0
    %v672 = vadd.f32 0.0, %v671
    %673 = vmatprep.mubr.bf16.mxu0 0
    %674 = vmatmul.mubr.bf16.gmra.mrb[0].mxu0 %v552
    %v675 = vpop.f32.mrb[0].mxu0
    %v676 = vadd.f32 0.0, %v675
    %v677 = vpop.f32.mrb[0].mxu0
    %v678 = vadd.f32 0.0, %v677
    %v679 = vpop.f32.mrb[0].mxu0
    %v680 = vadd.f32 0.0, %v679
    %v681 = vpop.f32.mrb[0].mxu0
    %v682 = vadd.f32 0.0, %v681
    %683 = vmatprep.mubr.bf16.mxu0 0
    %684 = vmatmul.mubr.bf16.gmra.mrb[0].mxu0 %v555
    %v685 = vpop.f32.mrb[0].mxu0
    %v686 = vadd.f32 0.0, %v685
    %v687 = vpop.f32.mrb[0].mxu0
    %v688 = vadd.f32 0.0, %v687
    %v689 = vpop.f32.mrb[0].mxu0
    %v690 = vadd.f32 0.0, %v689
    %v691 = vpop.f32.mrb[0].mxu0
    %v692 = vadd.f32 0.0, %v691
    %693 = vmatprep.mubr.bf16.mxu0 0
    %694 = vmatmul.mubr.bf16.gmra.mrb[0].mxu0 %v558
    %v695 = vpop.f32.mrb[0].mxu0
    %v696 = vadd.f32 0.0, %v695
    %v697 = vpop.f32.mrb[0].mxu0
    %v698 = vadd.f32 0.0, %v697
    %v699 = vpop.f32.mrb[0].mxu0
    %v700 = vpop.f32.mrb[0].mxu0
    %701 = vdwg.mxu0
    %v702 = vcombine.low %v215, %v223
    %v703 = vcombine.low %v222, %v224
    %v705 = vunpack.c.l.s4 1983009808
    %v706 = vunpack.c.0.s8 %v705
    %v707 = vlaneseq
    %v708 = vshrl.u32 %v707, 7
    %v709 = vsub.s32 %v706, %v708
    %v710 = vrot.slane %v702, %v709
    %v712 = vunpack.c.l.s4 1983009808
    %v713 = vunpack.c.0.s8 %v712
    %v714 = vlaneseq
    %v715 = vshrl.u32 %v714, 7
    %v716 = vsub.s32 %v713, %v715
    %v717 = vrot.slane %v703, %v716
    %v718 = vcombine.low %v710, %v717
    %v719 = vcombine.low %v232, %v240
    %v720 = vcombine.low %v239, %v248
    %v722 = vunpack.c.l.s4 1983009808
    %v723 = vunpack.c.0.s8 %v722
    %v724 = vlaneseq
    %v725 = vshrl.u32 %v724, 7
    %v726 = vsub.s32 %v723, %v725
    %v727 = vrot.slane %v719, %v726
    %v729 = vunpack.c.l.s4 1983009808
    %v730 = vunpack.c.0.s8 %v729
    %v731 = vlaneseq
    %v732 = vshrl.u32 %v731, 7
    %v733 = vsub.s32 %v730, %v732
    %v734 = vrot.slane %v720, %v733
    %v735 = vcombine.low %v727, %v734
    %v736 = vcombine.low %v256, %v255
    %v737 = vcombine.low %v257, %v265
    %v739 = vunpack.c.l.s4 1983009808
    %v740 = vunpack.c.0.s8 %v739
    %v741 = vlaneseq
    %v742 = vshrl.u32 %v741, 7
    %v743 = vsub.s32 %v740, %v742
    %v744 = vrot.slane %v736, %v743
    %v746 = vunpack.c.l.s4 1983009808
    %v747 = vunpack.c.0.s8 %v746
    %v748 = vlaneseq
    %v749 = vshrl.u32 %v748, 7
    %v750 = vsub.s32 %v747, %v749
    %v751 = vrot.slane %v737, %v750
    %v752 = vcombine.low %v744, %v751
    %v753 = vcombine.low %v273, %v272
    %v755 = vunpack.c.l.s4 1983009808
    %v756 = vunpack.c.0.s8 %v755
    %v757 = vlaneseq
    %v758 = vshrl.u32 %v757, 7
    %v759 = vsub.s32 %v756, %v758
    %v760 = vrot.slane %v753, %v759
    %v769 = vunpack.c.l.b16 %v274
    %v770 = vunpack.c.h.b16 %v274
    %v771 = vunpack.c.l.b16 %v275
    %v772 = vunpack.c.h.b16 %v275
    %v773 = vunpack.c.l.b16 %v276
    %v774 = vunpack.c.h.b16 %v276
    %v775 = vunpack.c.l.b16 %v277
    %v776 = vunpack.c.h.b16 %v277
    %v777 = vunpack.c.l.b16 %v278
    %v778 = vunpack.c.h.b16 %v278
    %v779 = vunpack.c.l.b16 %v279
    %v780 = vunpack.c.h.b16 %v279
    %v781 = vunpack.c.l.b16 %v280
    %v782 = vunpack.c.h.b16 %v280
    %v783 = vunpack.c.l.b16 %v281
    %v784 = vunpack.c.h.b16 %v281
    %v785 = vpack.c.b16 %v773, %v769
    %v786 = vpack.c.b16 %v774, %v770
    %v787 = vpack.c.b16 %v775, %v771
    %v788 = vpack.c.b16 %v776, %v772
    %v789 = vpack.c.b16 %v781, %v777
    %v790 = vpack.c.b16 %v782, %v778
    %v791 = vpack.c.b16 %v783, %v779
    %v792 = vpack.c.b16 %v784, %v780
    %v802 = vsel %vm547, %v718, 0
    %v805 = vsel %vm547, %v735, 0
    %v808 = vsel %vm547, %v752, 0
    %v811 = vsel %vm547, %v760, 0
    %813 = vmatprep.subr.bf16.mxu0 %v786
    %814 = vmatpush1.bf16.msra.mxu0 %v785
    %815 = vmatprep.subr.bf16.mxu0 %v790
    %816 = vmatpush1.bf16.msra.mxu0 %v789
    %817 = vmatprep.subr.bf16.mxu0 0
    %818 = vmatpush1.bf16.msra.mxu0 0
    %819 = vmatprep.subr.bf16.mxu0 0
    %820 = vmatpush1.bf16.msra.mxu0 0
    %821 = vmatprep.subr.bf16.mxu0 0
    %822 = vmatpush1.bf16.msra.mxu0 0
    %823 = vmatprep.subr.bf16.mxu0 0
    %824 = vmatpush1.bf16.msra.mxu0 0
    %825 = vmatprep.subr.bf16.mxu0 0
    %826 = vmatpush1.bf16.msra.mxu0 0
    %827 = vmatprep.subr.bf16.mxu0 0
    %828 = vmatpush1.bf16.msra.mxu0 0
    %829 = vmatprep.subr.bf16.mxu0 0
    %830 = vmatpush1.bf16.msra.mxu0 0
    %831 = vmatprep.subr.bf16.mxu0 0
    %832 = vmatpush1.bf16.msra.mxu0 0
    %833 = vmatprep.subr.bf16.mxu0 0
    %834 = vmatpush1.bf16.msra.mxu0 0
    %835 = vmatprep.subr.bf16.mxu0 0
    %836 = vmatpush1.bf16.msra.mxu0 0
    %837 = vmatprep.subr.bf16.mxu0 0
    %838 = vmatpush1.bf16.msra.mxu0 0
    %839 = vmatprep.subr.bf16.mxu0 0
    %840 = vmatpush1.bf16.msra.mxu0 0
    %841 = vmatprep.subr.bf16.mxu0 0
    %842 = vmatpush1.bf16.msra.mxu0 0
    %843 = vmatprep.subr.bf16.mxu0 0
    %844 = vmatpush1.bf16.msra.mxu0 0
    %845 = vmatprep.mubr.bf16.mxu0 0
    %846 = vmatmul.mubr.bf16.gmra.mrb[0].mxu0 %v802
    %v847 = vpop.f32.mrb[0].mxu0
    %v848 = vadd.f32 %v595, %v847
    %v849 = vpop.f32.mrb[0].mxu0
    %v850 = vadd.f32 %v597, %v849
    %v851 = vpop.f32.mrb[0].mxu0
    %v852 = vadd.f32 %v599, %v851
    %v853 = vpop.f32.mrb[0].mxu0
    %v854 = vadd.f32 %v601, %v853
    %855 = vmatprep.mubr.bf16.mxu0 0
    %856 = vmatmul.mubr.bf16.gmra.mrb[0].mxu0 %v805
    %v857 = vpop.f32.mrb[0].mxu0
    %v858 = vadd.f32 %v605, %v857
    %v859 = vpop.f32.mrb[0].mxu0
    %v860 = vadd.f32 %v607, %v859
    %v861 = vpop.f32.mrb[0].mxu0
    %v862 = vadd.f32 %v609, %v861
    %v863 = vpop.f32.mrb[0].mxu0
    %v864 = vadd.f32 %v611, %v863
    %865 = vmatprep.mubr.bf16.mxu0 0
    %866 = vmatmul.mubr.bf16.gmra.mrb[0].mxu0 %v808
    %v867 = vpop.f32.mrb[0].mxu0
    %v868 = vadd.f32 %v615, %v867
    %v869 = vpop.f32.mrb[0].mxu0
    %v870 = vadd.f32 %v617, %v869
    %v871 = vpop.f32.mrb[0].mxu0
    %v872 = vadd.f32 %v619, %v871
    %v873 = vpop.f32.mrb[0].mxu0
    %v874 = vadd.f32 %v621, %v873
    %875 = vmatprep.mubr.bf16.mxu0 0
    %876 = vmatmul.mubr.bf16.gmra.mrb[0].mxu0 %v811
    %v877 = vpop.f32.mrb[0].mxu0
    %v878 = vadd.f32 %v625, %v877
    %v879 = vpop.f32.mrb[0].mxu0
    %v880 = vadd.f32 %v627, %v879
    %v881 = vpop.f32.mrb[0].mxu0
    %v882 = vpop.f32.mrb[0].mxu0
    %883 = vdwg.mxu0
    %884 = vmatprep.subr.bf16.mxu0 %v788
    %885 = vmatpush1.bf16.msra.mxu0 %v787
    %886 = vmatprep.subr.bf16.mxu0 %v792
    %887 = vmatpush1.bf16.msra.mxu0 %v791
    %888 = vmatprep.subr.bf16.mxu0 0
    %889 = vmatpush1.bf16.msra.mxu0 0
    %890 = vmatprep.subr.bf16.mxu0 0
    %891 = vmatpush1.bf16.msra.mxu0 0
    %892 = vmatprep.subr.bf16.mxu0 0
    %893 = vmatpush1.bf16.msra.mxu0 0
    %894 = vmatprep.subr.bf16.mxu0 0
    %895 = vmatpush1.bf16.msra.mxu0 0
    %896 = vmatprep.subr.bf16.mxu0 0
    %897 = vmatpush1.bf16.msra.mxu0 0
    %898 = vmatprep.subr.bf16.mxu0 0
    %899 = vmatpush1.bf16.msra.mxu0 0
    %900 = vmatprep.subr.bf16.mxu0 0
    %901 = vmatpush1.bf16.msra.mxu0 0
    %902 = vmatprep.subr.bf16.mxu0 0
    %903 = vmatpush1.bf16.msra.mxu0 0
    %904 = vmatprep.subr.bf16.mxu0 0
    %905 = vmatpush1.bf16.msra.mxu0 0
    %906 = vmatprep.subr.bf16.mxu0 0
    %907 = vmatpush1.bf16.msra.mxu0 0
    %908 = vmatprep.subr.bf16.mxu0 0
    %909 = vmatpush1.bf16.msra.mxu0 0
    %910 = vmatprep.subr.bf16.mxu0 0
    %911 = vmatpush1.bf16.msra.mxu0 0
    %912 = vmatprep.subr.bf16.mxu0 0
    %913 = vmatpush1.bf16.msra.mxu0 0
    %914 = vmatprep.subr.bf16.mxu0 0
    %915 = vmatpush1.bf16.msra.mxu0 0
    %916 = vmatprep.mubr.bf16.mxu0 0
    %917 = vmatmul.mubr.bf16.gmra.mrb[0].mxu0 %v802
    %v918 = vpop.f32.mrb[0].mxu0
    %v919 = vadd.f32 %v666, %v918
    %v920 = vpop.f32.mrb[0].mxu0
    %v921 = vadd.f32 %v668, %v920
    %v922 = vpop.f32.mrb[0].mxu0
    %v923 = vadd.f32 %v670, %v922
    %v924 = vpop.f32.mrb[0].mxu0
    %v925 = vadd.f32 %v672, %v924
    %926 = vmatprep.mubr.bf16.mxu0 0
    %927 = vmatmul.mubr.bf16.gmra.mrb[0].mxu0 %v805
    %v928 = vpop.f32.mrb[0].mxu0
    %v929 = vadd.f32 %v676, %v928
    %v930 = vpop.f32.mrb[0].mxu0
    %v931 = vadd.f32 %v678, %v930
    %v932 = vpop.f32.mrb[0].mxu0
    %v933 = vadd.f32 %v680, %v932
    %v934 = vpop.f32.mrb[0].mxu0
    %v935 = vadd.f32 %v682, %v934
    %936 = vmatprep.mubr.bf16.mxu0 0
    %937 = vmatmul.mubr.bf16.gmra.mrb[0].mxu0 %v808
    %v938 = vpop.f32.mrb[0].mxu0
    %v939 = vadd.f32 %v686, %v938
    %v940 = vpop.f32.mrb[0].mxu0
    %v941 = vadd.f32 %v688, %v940
    %v942 = vpop.f32.mrb[0].mxu0
    %v943 = vadd.f32 %v690, %v942
    %v944 = vpop.f32.mrb[0].mxu0
    %v945 = vadd.f32 %v692, %v944
    %946 = vmatprep.mubr.bf16.mxu0 0
    %947 = vmatmul.mubr.bf16.gmra.mrb[0].mxu0 %v811
    %v948 = vpop.f32.mrb[0].mxu0
    %v949 = vadd.f32 %v696, %v948
    %v950 = vpop.f32.mrb[0].mxu0
    %v951 = vadd.f32 %v698, %v950
    %v952 = vpop.f32.mrb[0].mxu0
    %v953 = vpop.f32.mrb[0].mxu0
    %954 = vdwg.mxu0
    %vm955 = vcmask 1040384
    %vm956 = vcmask 1042434
    %vm957 = vmor %vm955, %vm956
    %vm958 = vcmask 1044484
    %vm959 = vmor %vm957, %vm958
    %vm960 = vcmask 1046534
    %vm961 = vmor %vm959, %vm960
    %v962 = vrot.slane %v215, 7
    %v963 = vrot.slane %v962, 2
    %v964 = vrot.slane %v223, 7
    %v965 = vsel %vm961, %v963, %v964
    %v966 = vrot.slane %v964, 2
    %v967 = vrot.slane %v222, 7
    %v968 = vsel %vm961, %v966, %v967
    %v969 = vrot.slane %v967, 2
    %v970 = vrot.slane %v224, 7
    %v971 = vsel %vm961, %v969, %v970
    %v972 = vrot.slane %v970, 2
    %v973 = vrot.slane %v232, 7
    %v974 = vsel %vm961, %v972, %v973
    %v975 = vrot.slane %v973, 2
    %v976 = vrot.slane %v240, 7
    %v977 = vsel %vm961, %v975, %v976
    %v978 = vrot.slane %v976, 2
    %v979 = vrot.slane %v239, 7
    %v980 = vsel %vm961, %v978, %v979
    %v981 = vrot.slane %v979, 2
    %v982 = vrot.slane %v282, 7
    %v983 = vsel %vm961, %v981, %v982
    %v984 = vrot.slane %v248, 7
    %v985 = vrot.slane %v984, 2
    %v986 = vrot.slane %v256, 7
    %v987 = vsel %vm961, %v985, %v986
    %v988 = vrot.slane %v986, 2
    %v989 = vrot.slane %v255, 7
    %v990 = vsel %vm961, %v988, %v989
    %v991 = vrot.slane %v989, 2
    %v992 = vrot.slane %v257, 7
    %v993 = vsel %vm961, %v991, %v992
    %v994 = vrot.slane %v992, 2
    %v995 = vrot.slane %v265, 7
    %v996 = vsel %vm961, %v994, %v995
    %v997 = vrot.slane %v995, 2
    %v998 = vrot.slane %v273, 7
    %v999 = vsel %vm961, %v997, %v998
    %v1000 = vrot.slane %v998, 2
    %v1001 = vrot.slane %v272, 7
    %v1002 = vsel %vm961, %v1000, %v1001
    %v1003 = vrot.slane %v1001, 2
    %v1004 = vrot.slane %v283, 7
    %v1005 = vsel %vm961, %v1003, %v1004
    %s1006 = scalar_lea.vmem [#allocation2], 128
    %v1007 = vld [vmem:[%s1006] sm:$0xff]
    %v1008 = vld [vmem:[%s1006 + $0x8] sm:$0xff]
    %v1009 = vld [vmem:[%s1006 + $0x10] sm:$0xff]
    %v1010 = vld [vmem:[%s1006 + $0x18] sm:$0xff]
    %v1011 = vld [vmem:[%s1006 + $0x20] sm:$0xff]
    %v1012 = vld [vmem:[%s1006 + $0x28] sm:$0xff]
    %v1013 = vld [vmem:[%s1006 + $0x30] sm:$0xff]
    %v1014 = vld [vmem:[%s1006 + $0x38] sm:$0xff]
    %v1015 = vcombine.low %v965, %v968
    %v1016 = vcombine.low %v971, %v974
    %v1018 = vunpack.c.l.s4 1983009808
    %v1019 = vunpack.c.0.s8 %v1018
    %v1020 = vlaneseq
    %v1021 = vshrl.u32 %v1020, 7
    %v1022 = vsub.s32 %v1019, %v1021
    %v1023 = vrot.slane %v1015, %v1022
    %v1025 = vunpack.c.l.s4 1983009808
    %v1026 = vunpack.c.0.s8 %v1025
    %v1027 = vlaneseq
    %v1028 = vshrl.u32 %v1027, 7
    %v1029 = vsub.s32 %v1026, %v1028
    %v1030 = vrot.slane %v1016, %v1029
    %v1031 = vcombine.low %v1023, %v1030
    %v1032 = vcombine.low %v977, %v980
    %v1033 = vcombine.low %v983, %v987
    %v1035 = vunpack.c.l.s4 1983009808
    %v1036 = vunpack.c.0.s8 %v1035
    %v1037 = vlaneseq
    %v1038 = vshrl.u32 %v1037, 7
    %v1039 = vsub.s32 %v1036, %v1038
    %v1040 = vrot.slane %v1032, %v1039
    %v1042 = vunpack.c.l.s4 1983009808
    %v1043 = vunpack.c.0.s8 %v1042
    %v1044 = vlaneseq
    %v1045 = vshrl.u32 %v1044, 7
    %v1046 = vsub.s32 %v1043, %v1045
    %v1047 = vrot.slane %v1033, %v1046
    %v1048 = vcombine.low %v1040, %v1047
    %v1049 = vcombine.low %v990, %v993
    %v1050 = vcombine.low %v996, %v999
    %v1052 = vunpack.c.l.s4 1983009808
    %v1053 = vunpack.c.0.s8 %v1052
    %v1054 = vlaneseq
    %v1055 = vshrl.u32 %v1054, 7
    %v1056 = vsub.s32 %v1053, %v1055
    %v1057 = vrot.slane %v1049, %v1056
    %v1059 = vunpack.c.l.s4 1983009808
    %v1060 = vunpack.c.0.s8 %v1059
    %v1061 = vlaneseq
    %v1062 = vshrl.u32 %v1061, 7
    %v1063 = vsub.s32 %v1060, %v1062
    %v1064 = vrot.slane %v1050, %v1063
    %v1065 = vcombine.low %v1057, %v1064
    %v1066 = vcombine.low %v1002, %v1005
    %v1068 = vunpack.c.l.s4 1983009808
    %v1069 = vunpack.c.0.s8 %v1068
    %v1070 = vlaneseq
    %v1071 = vshrl.u32 %v1070, 7
    %v1072 = vsub.s32 %v1069, %v1071
    %v1073 = vrot.slane %v1066, %v1072
    %v1082 = vunpack.c.l.b16 %v1007
    %v1083 = vunpack.c.h.b16 %v1007
    %v1084 = vunpack.c.l.b16 %v1008
    %v1085 = vunpack.c.h.b16 %v1008
    %v1086 = vunpack.c.l.b16 %v1009
    %v1087 = vunpack.c.h.b16 %v1009
    %v1088 = vunpack.c.l.b16 %v1010
    %v1089 = vunpack.c.h.b16 %v1010
    %v1090 = vunpack.c.l.b16 %v1011
    %v1091 = vunpack.c.h.b16 %v1011
    %v1092 = vunpack.c.l.b16 %v1012
    %v1093 = vunpack.c.h.b16 %v1012
    %v1094 = vunpack.c.l.b16 %v1013
    %v1095 = vunpack.c.h.b16 %v1013
    %v1096 = vunpack.c.l.b16 %v1014
    %v1097 = vunpack.c.h.b16 %v1014
    %v1098 = vpack.c.b16 %v1086, %v1082
    %v1099 = vpack.c.b16 %v1087, %v1083
    %v1100 = vpack.c.b16 %v1088, %v1084
    %v1101 = vpack.c.b16 %v1089, %v1085
    %v1102 = vpack.c.b16 %v1094, %v1090
    %v1103 = vpack.c.b16 %v1095, %v1091
    %v1104 = vpack.c.b16 %v1096, %v1092
    %v1105 = vpack.c.b16 %v1097, %v1093
    %v1115 = vsel %vm547, %v1031, 0
    %v1118 = vsel %vm547, %v1048, 0
    %v1121 = vsel %vm547, %v1065, 0
    %v1124 = vsel %vm547, %v1073, 0
    %1126 = vmatprep.subr.bf16.mxu0 %v1099
    %1127 = vmatpush1.bf16.msra.mxu0 %v1098
    %1128 = vmatprep.subr.bf16.mxu0 %v1103
    %1129 = vmatpush1.bf16.msra.mxu0 %v1102
    %1130 = vmatprep.subr.bf16.mxu0 0
    %1131 = vmatpush1.bf16.msra.mxu0 0
    %1132 = vmatprep.subr.bf16.mxu0 0
    %1133 = vmatpush1.bf16.msra.mxu0 0
    %1134 = vmatprep.subr.bf16.mxu0 0
    %1135 = vmatpush1.bf16.msra.mxu0 0
    %1136 = vmatprep.subr.bf16.mxu0 0
    %1137 = vmatpush1.bf16.msra.mxu0 0
    %1138 = vmatprep.subr.bf16.mxu0 0
    %1139 = vmatpush1.bf16.msra.mxu0 0
    %1140 = vmatprep.subr.bf16.mxu0 0
    %1141 = vmatpush1.bf16.msra.mxu0 0
    %1142 = vmatprep.subr.bf16.mxu0 0
    %1143 = vmatpush1.bf16.msra.mxu0 0
    %1144 = vmatprep.subr.bf16.mxu0 0
    %1145 = vmatpush1.bf16.msra.mxu0 0
    %1146 = vmatprep.subr.bf16.mxu0 0
    %1147 = vmatpush1.bf16.msra.mxu0 0
    %1148 = vmatprep.subr.bf16.mxu0 0
    %1149 = vmatpush1.bf16.msra.mxu0 0
    %1150 = vmatprep.subr.bf16.mxu0 0
    %1151 = vmatpush1.bf16.msra.mxu0 0
    %1152 = vmatprep.subr.bf16.mxu0 0
    %1153 = vmatpush1.bf16.msra.mxu0 0
    %1154 = vmatprep.subr.bf16.mxu0 0
    %1155 = vmatpush1.bf16.msra.mxu0 0
    %1156 = vmatprep.subr.bf16.mxu0 0
    %1157 = vmatpush1.bf16.msra.mxu0 0
    %1158 = vmatprep.mubr.bf16.mxu0 0
    %1159 = vmatmul.mubr.bf16.gmra.mrb[0].mxu0 %v1115
    %v1160 = vpop.f32.mrb[0].mxu0
    %v1161 = vadd.f32 0.0, %v1160
    %v1162 = vpop.f32.mrb[0].mxu0
    %v1163 = vadd.f32 0.0, %v1162
    %v1164 = vpop.f32.mrb[0].mxu0
    %v1165 = vadd.f32 0.0, %v1164
    %v1166 = vpop.f32.mrb[0].mxu0
    %v1167 = vadd.f32 0.0, %v1166
    %1168 = vmatprep.mubr.bf16.mxu0 0
    %1169 = vmatmul.mubr.bf16.gmra.mrb[0].mxu0 %v1118
    %v1170 = vpop.f32.mrb[0].mxu0
    %v1171 = vadd.f32 0.0, %v1170
    %v1172 = vpop.f32.mrb[0].mxu0
    %v1173 = vadd.f32 0.0, %v1172
    %v1174 = vpop.f32.mrb[0].mxu0
    %v1175 = vadd.f32 0.0, %v1174
    %v1176 = vpop.f32.mrb[0].mxu0
    %v1177 = vadd.f32 0.0, %v1176
    %1178 = vmatprep.mubr.bf16.mxu0 0
    %1179 = vmatmul.mubr.bf16.gmra.mrb[0].mxu0 %v1121
    %v1180 = vpop.f32.mrb[0].mxu0
    %v1181 = vadd.f32 0.0, %v1180
    %v1182 = vpop.f32.mrb[0].mxu0
    %v1183 = vadd.f32 0.0, %v1182
    %v1184 = vpop.f32.mrb[0].mxu0
    %v1185 = vadd.f32 0.0, %v1184
    %v1186 = vpop.f32.mrb[0].mxu0
    %v1187 = vadd.f32 0.0, %v1186
    %1188 = vmatprep.mubr.bf16.mxu0 0
    %1189 = vmatmul.mubr.bf16.gmra.mrb[0].mxu0 %v1124
    %v1190 = vpop.f32.mrb[0].mxu0
    %v1191 = vadd.f32 0.0, %v1190
    %v1192 = vpop.f32.mrb[0].mxu0
    %v1193 = vadd.f32 0.0, %v1192
    %v1194 = vpop.f32.mrb[0].mxu0
    %v1195 = vpop.f32.mrb[0].mxu0
    %1196 = vdwg.mxu0
    %1197 = vmatprep.subr.bf16.mxu0 %v1101
    %1198 = vmatpush1.bf16.msra.mxu0 %v1100
    %1199 = vmatprep.subr.bf16.mxu0 %v1105
    %1200 = vmatpush1.bf16.msra.mxu0 %v1104
    %1201 = vmatprep.subr.bf16.mxu0 0
    %1202 = vmatpush1.bf16.msra.mxu0 0
    %1203 = vmatprep.subr.bf16.mxu0 0
    %1204 = vmatpush1.bf16.msra.mxu0 0
    %1205 = vmatprep.subr.bf16.mxu0 0
    %1206 = vmatpush1.bf16.msra.mxu0 0
    %1207 = vmatprep.subr.bf16.mxu0 0
    %1208 = vmatpush1.bf16.msra.mxu0 0
    %1209 = vmatprep.subr.bf16.mxu0 0
    %1210 = vmatpush1.bf16.msra.mxu0 0
    %1211 = vmatprep.subr.bf16.mxu0 0
    %1212 = vmatpush1.bf16.msra.mxu0 0
    %1213 = vmatprep.subr.bf16.mxu0 0
    %1214 = vmatpush1.bf16.msra.mxu0 0
    %1215 = vmatprep.subr.bf16.mxu0 0
    %1216 = vmatpush1.bf16.msra.mxu0 0
    %1217 = vmatprep.subr.bf16.mxu0 0
    %1218 = vmatpush1.bf16.msra.mxu0 0
    %1219 = vmatprep.subr.bf16.mxu0 0
    %1220 = vmatpush1.bf16.msra.mxu0 0
    %1221 = vmatprep.subr.bf16.mxu0 0
    %1222 = vmatpush1.bf16.msra.mxu0 0
    %1223 = vmatprep.subr.bf16.mxu0 0
    %1224 = vmatpush1.bf16.msra.mxu0 0
    %1225 = vmatprep.subr.bf16.mxu0 0
    %1226 = vmatpush1.bf16.msra.mxu0 0
    %1227 = vmatprep.subr.bf16.mxu0 0
    %1228 = vmatpush1.bf16.msra.mxu0 0
    %1229 = vmatprep.mubr.bf16.mxu0 0
    %1230 = vmatmul.mubr.bf16.gmra.mrb[0].mxu0 %v1115
    %v1231 = vpop.f32.mrb[0].mxu0
    %v1232 = vadd.f32 0.0, %v1231
    %v1233 = vpop.f32.mrb[0].mxu0
    %v1234 = vadd.f32 0.0, %v1233
    %v1235 = vpop.f32.mrb[0].mxu0
    %v1236 = vadd.f32 0.0, %v1235
    %v1237 = vpop.f32.mrb[0].mxu0
    %v1238 = vadd.f32 0.0, %v1237
    %1239 = vmatprep.mubr.bf16.mxu0 0
    %1240 = vmatmul.mubr.bf16.gmra.mrb[0].mxu0 %v1118
    %v1241 = vpop.f32.mrb[0].mxu0
    %v1242 = vadd.f32 0.0, %v1241
    %v1243 = vpop.f32.mrb[0].mxu0
    %v1244 = vadd.f32 0.0, %v1243
    %v1245 = vpop.f32.mrb[0].mxu0
    %v1246 = vadd.f32 0.0, %v1245
    %v1247 = vpop.f32.mrb[0].mxu0
    %v1248 = vadd.f32 0.0, %v1247
    %1249 = vmatprep.mubr.bf16.mxu0 0
    %1250 = vmatmul.mubr.bf16.gmra.mrb[0].mxu0 %v1121
    %v1251 = vpop.f32.mrb[0].mxu0
    %v1252 = vadd.f32 0.0, %v1251
    %v1253 = vpop.f32.mrb[0].mxu0
    %v1254 = vadd.f32 0.0, %v1253
    %v1255 = vpop.f32.mrb[0].mxu0
    %v1256 = vadd.f32 0.0, %v1255
    %v1257 = vpop.f32.mrb[0].mxu0
    %v1258 = vadd.f32 0.0, %v1257
    %1259 = vmatprep.mubr.bf16.mxu0 0
    %1260 = vmatmul.mubr.bf16.gmra.mrb[0].mxu0 %v1124
    %v1261 = vpop.f32.mrb[0].mxu0
    %v1262 = vadd.f32 0.0, %v1261
    %v1263 = vpop.f32.mrb[0].mxu0
    %v1264 = vadd.f32 0.0, %v1263
    %v1265 = vpop.f32.mrb[0].mxu0
    %v1266 = vpop.f32.mrb[0].mxu0
    %1267 = vdwg.mxu0
    %v1268 = vadd.f32 %v848, %v1161
    %v1269 = vadd.f32 %v850, %v1163
    %v1270 = vadd.f32 %v919, %v1232
    %v1271 = vadd.f32 %v921, %v1234
    %v1272 = vadd.f32 %v852, %v1165
    %v1273 = vadd.f32 %v854, %v1167
    %v1274 = vadd.f32 %v923, %v1236
    %v1275 = vadd.f32 %v925, %v1238
    %v1276 = vadd.f32 %v858, %v1171
    %v1277 = vadd.f32 %v860, %v1173
    %v1278 = vadd.f32 %v929, %v1242
    %v1279 = vadd.f32 %v931, %v1244
    %v1280 = vadd.f32 %v862, %v1175
    %v1281 = vadd.f32 %v864, %v1177
    %v1282 = vadd.f32 %v933, %v1246
    %v1283 = vadd.f32 %v935, %v1248
    %v1284 = vadd.f32 %v868, %v1181
    %v1285 = vadd.f32 %v870, %v1183
    %v1286 = vadd.f32 %v939, %v1252
    %v1287 = vadd.f32 %v941, %v1254
    %v1288 = vadd.f32 %v872, %v1185
    %v1289 = vadd.f32 %v874, %v1187
    %v1290 = vadd.f32 %v943, %v1256
    %v1291 = vadd.f32 %v945, %v1258
    %v1292 = vadd.f32 %v878, %v1191
    %v1293 = vadd.f32 %v880, %v1193
    %v1294 = vadd.f32 %v949, %v1262
    %v1295 = vadd.f32 %v951, %v1264
    %vm1296 = vsmask.f32 256
    %vm1297 = vsmask.f32 2312
    %vm1298 = vmor %vm1296, %vm1297
    %vm1299 = vsmask.f32 4368
    %vm1300 = vmor %vm1298, %vm1299
    %vm1301 = vsmask.f32 6424
    %vm1302 = vmor %vm1300, %vm1301
    %v1303 = vrot.slane %v292, 7
    %v1304 = vrot.slane %v1303, 2
    %v1305 = vrot.slane %v305, 7
    %v1306 = vor.u32 %v1305, %v301
    %v1307 = vsel %vm1302, %v1304, %v1306
    %v1308 = vrot.slane %v1305, 2
    %v1309 = vrot.slane %v315, 7
    %v1310 = vor.u32 %v1309, %v311
    %v1311 = vsel %vm1302, %v1308, %v1310
    %v1312 = vrot.slane %v1309, 2
    %v1313 = vrot.slane %v325, 7
    %v1314 = vor.u32 %v1313, %v321
    %v1315 = vsel %vm1302, %v1312, %v1314
    %v1316 = vrot.slane %v1313, 2
    %v1317 = vrot.slane %v335, 7
    %v1318 = vor.u32 %v1317, %v331
    %v1319 = vsel %vm1302, %v1316, %v1318
    %v1320 = vrot.slane %v1317, 2
    %v1321 = vrot.slane %v345, 7
    %v1322 = vor.u32 %v1321, %v341
    %v1323 = vsel %vm1302, %v1320, %v1322
    %v1324 = vrot.slane %v1321, 2
    %v1325 = vrot.slane %v355, 7
    %v1326 = vor.u32 %v1325, %v351
    %v1327 = vsel %vm1302, %v1324, %v1326
    %v1328 = vrot.slane %v1325, 2
    %v1329 = vshrl.u32 %v282, 16
    %v1331 = vrot.slane %v1329, 7
    %v1332 = vor.u32 %v1331, %v361
    %v1333 = vsel %vm1302, %v1328, %v1332
    %v1334 = vrot.slane %v366, 7
    %v1335 = vrot.slane %v1334, 2
    %v1336 = vrot.slane %v379, 7
    %v1337 = vor.u32 %v1336, %v375
    %v1338 = vsel %vm1302, %v1335, %v1337
    %v1339 = vrot.slane %v1336, 2
    %v1340 = vrot.slane %v389, 7
    %v1341 = vor.u32 %v1340, %v385
    %v1342 = vsel %vm1302, %v1339, %v1341
    %v1343 = vrot.slane %v1340, 2
    %v1344 = vrot.slane %v399, 7
    %v1345 = vor.u32 %v1344, %v395
    %v1346 = vsel %vm1302, %v1343, %v1345
    %v1347 = vrot.slane %v1344, 2
    %v1348 = vrot.slane %v409, 7
    %v1349 = vor.u32 %v1348, %v405
    %v1350 = vsel %vm1302, %v1347, %v1349
    %v1351 = vrot.slane %v1348, 2
    %v1352 = vrot.slane %v419, 7
    %v1353 = vor.u32 %v1352, %v415
    %v1354 = vsel %vm1302, %v1351, %v1353
    %v1355 = vrot.slane %v1352, 2
    %v1356 = vrot.slane %v429, 7
    %v1357 = vor.u32 %v1356, %v425
    %v1358 = vsel %vm1302, %v1355, %v1357
    %v1359 = vrot.slane %v1356, 2
    %v1360 = vshrl.u32 %v283, 16
    %v1362 = vrot.slane %v1360, 7
    %v1363 = vor.u32 %v1362, %v435
    %v1364 = vsel %vm1302, %v1359, %v1363
    %s1365 = scalar_lea.vmem [#allocation2], 192
    %v1366 = vld [vmem:[%s1365] sm:$0xff]
    %v1367 = vld [vmem:[%s1365 + $0x8] sm:$0xff]
    %v1368 = vld [vmem:[%s1365 + $0x10] sm:$0xff]
    %v1369 = vld [vmem:[%s1365 + $0x18] sm:$0xff]
    %v1370 = vld [vmem:[%s1365 + $0x20] sm:$0xff]
    %v1371 = vld [vmem:[%s1365 + $0x28] sm:$0xff]
    %v1372 = vld [vmem:[%s1365 + $0x30] sm:$0xff]
    %v1373 = vld [vmem:[%s1365 + $0x38] sm:$0xff]
    %v1374 = vcombine.low %v1307, %v1311
    %v1375 = vcombine.low %v1315, %v1319
    %v1377 = vunpack.c.l.s4 1983009808
    %v1378 = vunpack.c.0.s8 %v1377
    %v1379 = vlaneseq
    %v1380 = vshrl.u32 %v1379, 7
    %v1381 = vsub.s32 %v1378, %v1380
    %v1382 = vrot.slane %v1374, %v1381
    %v1384 = vunpack.c.l.s4 1983009808
    %v1385 = vunpack.c.0.s8 %v1384
    %v1386 = vlaneseq
    %v1387 = vshrl.u32 %v1386, 7
    %v1388 = vsub.s32 %v1385, %v1387
    %v1389 = vrot.slane %v1375, %v1388
    %v1390 = vcombine.low %v1382, %v1389
    %v1391 = vcombine.low %v1323, %v1327
    %v1392 = vcombine.low %v1333, %v1338
    %v1394 = vunpack.c.l.s4 1983009808
    %v1395 = vunpack.c.0.s8 %v1394
    %v1396 = vlaneseq
    %v1397 = vshrl.u32 %v1396, 7
    %v1398 = vsub.s32 %v1395, %v1397
    %v1399 = vrot.slane %v1391, %v1398
    %v1401 = vunpack.c.l.s4 1983009808
    %v1402 = vunpack.c.0.s8 %v1401
    %v1403 = vlaneseq
    %v1404 = vshrl.u32 %v1403, 7
    %v1405 = vsub.s32 %v1402, %v1404
    %v1406 = vrot.slane %v1392, %v1405
    %v1407 = vcombine.low %v1399, %v1406
    %v1408 = vcombine.low %v1342, %v1346
    %v1409 = vcombine.low %v1350, %v1354
    %v1411 = vunpack.c.l.s4 1983009808
    %v1412 = vunpack.c.0.s8 %v1411
    %v1413 = vlaneseq
    %v1414 = vshrl.u32 %v1413, 7
    %v1415 = vsub.s32 %v1412, %v1414
    %v1416 = vrot.slane %v1408, %v1415
    %v1418 = vunpack.c.l.s4 1983009808
    %v1419 = vunpack.c.0.s8 %v1418
    %v1420 = vlaneseq
    %v1421 = vshrl.u32 %v1420, 7
    %v1422 = vsub.s32 %v1419, %v1421
    %v1423 = vrot.slane %v1409, %v1422
    %v1424 = vcombine.low %v1416, %v1423
    %v1425 = vcombine.low %v1358, %v1364
    %v1427 = vunpack.c.l.s4 1983009808
    %v1428 = vunpack.c.0.s8 %v1427
    %v1429 = vlaneseq
    %v1430 = vshrl.u32 %v1429, 7
    %v1431 = vsub.s32 %v1428, %v1430
    %v1432 = vrot.slane %v1425, %v1431
    %v1441 = vunpack.c.l.b16 %v1366
    %v1442 = vunpack.c.h.b16 %v1366
    %v1443 = vunpack.c.l.b16 %v1367
    %v1444 = vunpack.c.h.b16 %v1367
    %v1445 = vunpack.c.l.b16 %v1368
    %v1446 = vunpack.c.h.b16 %v1368
    %v1447 = vunpack.c.l.b16 %v1369
    %v1448 = vunpack.c.h.b16 %v1369
    %v1449 = vunpack.c.l.b16 %v1370
    %v1450 = vunpack.c.h.b16 %v1370
    %v1451 = vunpack.c.l.b16 %v1371
    %v1452 = vunpack.c.h.b16 %v1371
    %v1453 = vunpack.c.l.b16 %v1372
    %v1454 = vunpack.c.h.b16 %v1372
    %v1455 = vunpack.c.l.b16 %v1373
    %v1456 = vunpack.c.h.b16 %v1373
    %v1457 = vpack.c.b16 %v1445, %v1441
    %v1458 = vpack.c.b16 %v1446, %v1442
    %v1459 = vpack.c.b16 %v1447, %v1443
    %v1460 = vpack.c.b16 %v1448, %v1444
    %v1461 = vpack.c.b16 %v1453, %v1449
    %v1462 = vpack.c.b16 %v1454, %v1450
    %v1463 = vpack.c.b16 %v1455, %v1451
    %v1464 = vpack.c.b16 %v1456, %v1452
    %v1474 = vsel %vm547, %v1390, 0
    %v1477 = vsel %vm547, %v1407, 0
    %v1480 = vsel %vm547, %v1424, 0
    %v1483 = vsel %vm547, %v1432, 0
    %1485 = vmatprep.subr.bf16.mxu0 %v1458
    %1486 = vmatpush1.bf16.msra.mxu0 %v1457
    %1487 = vmatprep.subr.bf16.mxu0 %v1462
    %1488 = vmatpush1.bf16.msra.mxu0 %v1461
    %1489 = vmatprep.subr.bf16.mxu0 0
    %1490 = vmatpush1.bf16.msra.mxu0 0
    %1491 = vmatprep.subr.bf16.mxu0 0
    %1492 = vmatpush1.bf16.msra.mxu0 0
    %1493 = vmatprep.subr.bf16.mxu0 0
    %1494 = vmatpush1.bf16.msra.mxu0 0
    %1495 = vmatprep.subr.bf16.mxu0 0
    %1496 = vmatpush1.bf16.msra.mxu0 0
    %1497 = vmatprep.subr.bf16.mxu0 0
    %1498 = vmatpush1.bf16.msra.mxu0 0
    %1499 = vmatprep.subr.bf16.mxu0 0
    %1500 = vmatpush1.bf16.msra.mxu0 0
    %1501 = vmatprep.subr.bf16.mxu0 0
    %1502 = vmatpush1.bf16.msra.mxu0 0
    %1503 = vmatprep.subr.bf16.mxu0 0
    %1504 = vmatpush1.bf16.msra.mxu0 0
    %1505 = vmatprep.subr.bf16.mxu0 0
    %1506 = vmatpush1.bf16.msra.mxu0 0
    %1507 = vmatprep.subr.bf16.mxu0 0
    %1508 = vmatpush1.bf16.msra.mxu0 0
    %1509 = vmatprep.subr.bf16.mxu0 0
    %1510 = vmatpush1.bf16.msra.mxu0 0
    %1511 = vmatprep.subr.bf16.mxu0 0
    %1512 = vmatpush1.bf16.msra.mxu0 0
    %1513 = vmatprep.subr.bf16.mxu0 0
    %1514 = vmatpush1.bf16.msra.mxu0 0
    %1515 = vmatprep.subr.bf16.mxu0 0
    %1516 = vmatpush1.bf16.msra.mxu0 0
    %1517 = vmatprep.mubr.bf16.mxu0 0
    %1518 = vmatmul.mubr.bf16.gmra.mrb[0].mxu0 %v1474
    %v1519 = vpop.f32.mrb[0].mxu0
    %v1520 = vadd.f32 0.0, %v1519
    %v1521 = vpop.f32.mrb[0].mxu0
    %v1522 = vadd.f32 0.0, %v1521
    %v1523 = vpop.f32.mrb[0].mxu0
    %v1524 = vadd.f32 0.0, %v1523
    %v1525 = vpop.f32.mrb[0].mxu0
    %v1526 = vadd.f32 0.0, %v1525
    %1527 = vmatprep.mubr.bf16.mxu0 0
    %1528 = vmatmul.mubr.bf16.gmra.mrb[0].mxu0 %v1477
    %v1529 = vpop.f32.mrb[0].mxu0
    %v1530 = vadd.f32 0.0, %v1529
    %v1531 = vpop.f32.mrb[0].mxu0
    %v1532 = vadd.f32 0.0, %v1531
    %v1533 = vpop.f32.mrb[0].mxu0
    %v1534 = vadd.f32 0.0, %v1533
    %v1535 = vpop.f32.mrb[0].mxu0
    %v1536 = vadd.f32 0.0, %v1535
    %1537 = vmatprep.mubr.bf16.mxu0 0
    %1538 = vmatmul.mubr.bf16.gmra.mrb[0].mxu0 %v1480
    %v1539 = vpop.f32.mrb[0].mxu0
    %v1540 = vadd.f32 0.0, %v1539
    %v1541 = vpop.f32.mrb[0].mxu0
    %v1542 = vadd.f32 0.0, %v1541
    %v1543 = vpop.f32.mrb[0].mxu0
    %v1544 = vadd.f32 0.0, %v1543
    %v1545 = vpop.f32.mrb[0].mxu0
    %v1546 = vadd.f32 0.0, %v1545
    %1547 = vmatprep.mubr.bf16.mxu0 0
    %1548 = vmatmul.mubr.bf16.gmra.mrb[0].mxu0 %v1483
    %v1549 = vpop.f32.mrb[0].mxu0
    %v1550 = vadd.f32 0.0, %v1549
    %v1551 = vpop.f32.mrb[0].mxu0
    %v1552 = vadd.f32 0.0, %v1551
    %v1553 = vpop.f32.mrb[0].mxu0
    %v1554 = vpop.f32.mrb[0].mxu0
    %1555 = vdwg.mxu0
    %1556 = vmatprep.subr.bf16.mxu0 %v1460
    %1557 = vmatpush1.bf16.msra.mxu0 %v1459
    %1558 = vmatprep.subr.bf16.mxu0 %v1464
    %1559 = vmatpush1.bf16.msra.mxu0 %v1463
    %1560 = vmatprep.subr.bf16.mxu0 0
    %1561 = vmatpush1.bf16.msra.mxu0 0
    %1562 = vmatprep.subr.bf16.mxu0 0
    %1563 = vmatpush1.bf16.msra.mxu0 0
    %1564 = vmatprep.subr.bf16.mxu0 0
    %1565 = vmatpush1.bf16.msra.mxu0 0
    %1566 = vmatprep.subr.bf16.mxu0 0
    %1567 = vmatpush1.bf16.msra.mxu0 0
    %1568 = vmatprep.subr.bf16.mxu0 0
    %1569 = vmatpush1.bf16.msra.mxu0 0
    %1570 = vmatprep.subr.bf16.mxu0 0
    %1571 = vmatpush1.bf16.msra.mxu0 0
    %1572 = vmatprep.subr.bf16.mxu0 0
    %1573 = vmatpush1.bf16.msra.mxu0 0
    %1574 = vmatprep.subr.bf16.mxu0 0
    %1575 = vmatpush1.bf16.msra.mxu0 0
    %1576 = vmatprep.subr.bf16.mxu0 0
    %1577 = vmatpush1.bf16.msra.mxu0 0
    %1578 = vmatprep.subr.bf16.mxu0 0
    %1579 = vmatpush1.bf16.msra.mxu0 0
    %1580 = vmatprep.subr.bf16.mxu0 0
    %1581 = vmatpush1.bf16.msra.mxu0 0
    %1582 = vmatprep.subr.bf16.mxu0 0
    %1583 = vmatpush1.bf16.msra.mxu0 0
    %1584 = vmatprep.subr.bf16.mxu0 0
    %1585 = vmatpush1.bf16.msra.mxu0 0
    %1586 = vmatprep.subr.bf16.mxu0 0
    %1587 = vmatpush1.bf16.msra.mxu0 0
    %1588 = vmatprep.mubr.bf16.mxu0 0
    %1589 = vmatmul.mubr.bf16.gmra.mrb[0].mxu0 %v1474
    %v1590 = vpop.f32.mrb[0].mxu0
    %v1591 = vadd.f32 0.0, %v1590
    %v1592 = vpop.f32.mrb[0].mxu0
    %v1593 = vadd.f32 0.0, %v1592
    %v1594 = vpop.f32.mrb[0].mxu0
    %v1595 = vadd.f32 0.0, %v1594
    %v1596 = vpop.f32.mrb[0].mxu0
    %v1597 = vadd.f32 0.0, %v1596
    %1598 = vmatprep.mubr.bf16.mxu0 0
    %1599 = vmatmul.mubr.bf16.gmra.mrb[0].mxu0 %v1477
    %v1600 = vpop.f32.mrb[0].mxu0
    %v1601 = vadd.f32 0.0, %v1600
    %v1602 = vpop.f32.mrb[0].mxu0
    %v1603 = vadd.f32 0.0, %v1602
    %v1604 = vpop.f32.mrb[0].mxu0
    %v1605 = vadd.f32 0.0, %v1604
    %v1606 = vpop.f32.mrb[0].mxu0
    %v1607 = vadd.f32 0.0, %v1606
    %1608 = vmatprep.mubr.bf16.mxu0 0
    %1609 = vmatmul.mubr.bf16.gmra.mrb[0].mxu0 %v1480
    %v1610 = vpop.f32.mrb[0].mxu0
    %v1611 = vadd.f32 0.0, %v1610
    %v1612 = vpop.f32.mrb[0].mxu0
    %v1613 = vadd.f32 0.0, %v1612
    %v1614 = vpop.f32.mrb[0].mxu0
    %v1615 = vadd.f32 0.0, %v1614
    %v1616 = vpop.f32.mrb[0].mxu0
    %v1617 = vadd.f32 0.0, %v1616
    %1618 = vmatprep.mubr.bf16.mxu0 0
    %1619 = vmatmul.mubr.bf16.gmra.mrb[0].mxu0 %v1483
    %v1620 = vpop.f32.mrb[0].mxu0
    %v1621 = vadd.f32 0.0, %v1620
    %v1622 = vpop.f32.mrb[0].mxu0
    %v1623 = vadd.f32 0.0, %v1622
    %v1624 = vpop.f32.mrb[0].mxu0
    %v1625 = vpop.f32.mrb[0].mxu0
    %1626 = vdwg.mxu0
    %v1627 = vadd.f32 %v1268, %v1520
    %v1628 = vadd.f32 %v1269, %v1522
    %v1629 = vadd.f32 %v1270, %v1591
    %v1630 = vadd.f32 %v1271, %v1593
    %v1631 = vadd.f32 %v1272, %v1524
    %v1632 = vadd.f32 %v1273, %v1526
    %v1633 = vadd.f32 %v1274, %v1595
    %v1634 = vadd.f32 %v1275, %v1597
    %v1635 = vadd.f32 %v1276, %v1530
    %v1636 = vadd.f32 %v1277, %v1532
    %v1637 = vadd.f32 %v1278, %v1601
    %v1638 = vadd.f32 %v1279, %v1603
    %v1639 = vadd.f32 %v1280, %v1534
    %v1640 = vadd.f32 %v1281, %v1536
    %v1641 = vadd.f32 %v1282, %v1605
    %v1642 = vadd.f32 %v1283, %v1607
    %v1643 = vadd.f32 %v1284, %v1540
    %v1644 = vadd.f32 %v1285, %v1542
    %v1645 = vadd.f32 %v1286, %v1611
    %v1646 = vadd.f32 %v1287, %v1613
    %v1647 = vadd.f32 %v1288, %v1544
    %v1648 = vadd.f32 %v1289, %v1546
    %v1649 = vadd.f32 %v1290, %v1615
    %v1650 = vadd.f32 %v1291, %v1617
    %v1651 = vadd.f32 %v1292, %v1550
    %v1652 = vadd.f32 %v1293, %v1552
    %v1653 = vadd.f32 %v1294, %v1621
    %v1654 = vadd.f32 %v1295, %v1623
    %s1655 = scalar_lea.vmem [#allocation2], 256
    %v1656 = vld [vmem:[%s1655] sm:$0xff]
    %v1657 = vld [vmem:[%s1655 + $0x8] sm:$0xff]
    %v1658 = vld [vmem:[%s1655 + $0x10] sm:$0xff]
    %v1659 = vld [vmem:[%s1655 + $0x18] sm:$0xff]
    %v1660 = vld [vmem:[%s1655 + $0x20] sm:$0xff]
    %v1661 = vld [vmem:[%s1655 + $0x28] sm:$0xff]
    %v1662 = vld [vmem:[%s1655 + $0x30] sm:$0xff]
    %v1663 = vld [vmem:[%s1655 + $0x38] sm:$0xff]
    %v1664 = vcombine.low %v223, %v222
    %v1665 = vcombine.low %v224, %v232
    %v1667 = vunpack.c.l.s4 1983009808
    %v1668 = vunpack.c.0.s8 %v1667
    %v1669 = vlaneseq
    %v1670 = vshrl.u32 %v1669, 7
    %v1671 = vsub.s32 %v1668, %v1670
    %v1672 = vrot.slane %v1664, %v1671
    %v1674 = vunpack.c.l.s4 1983009808
    %v1675 = vunpack.c.0.s8 %v1674
    %v1676 = vlaneseq
    %v1677 = vshrl.u32 %v1676, 7
    %v1678 = vsub.s32 %v1675, %v1677
    %v1679 = vrot.slane %v1665, %v1678
    %v1680 = vcombine.low %v1672, %v1679
    %v1681 = vcombine.low %v240, %v239
    %v1682 = vcombine.low %v282, %v256
    %v1684 = vunpack.c.l.s4 1983009808
    %v1685 = vunpack.c.0.s8 %v1684
    %v1686 = vlaneseq
    %v1687 = vshrl.u32 %v1686, 7
    %v1688 = vsub.s32 %v1685, %v1687
    %v1689 = vrot.slane %v1681, %v1688
    %v1691 = vunpack.c.l.s4 1983009808
    %v1692 = vunpack.c.0.s8 %v1691
    %v1693 = vlaneseq
    %v1694 = vshrl.u32 %v1693, 7
    %v1695 = vsub.s32 %v1692, %v1694
    %v1696 = vrot.slane %v1682, %v1695
    %v1697 = vcombine.low %v1689, %v1696
    %v1698 = vcombine.low %v255, %v257
    %v1699 = vcombine.low %v265, %v273
    %v1701 = vunpack.c.l.s4 1983009808
    %v1702 = vunpack.c.0.s8 %v1701
    %v1703 = vlaneseq
    %v1704 = vshrl.u32 %v1703, 7
    %v1705 = vsub.s32 %v1702, %v1704
    %v1706 = vrot.slane %v1698, %v1705
    %v1708 = vunpack.c.l.s4 1983009808
    %v1709 = vunpack.c.0.s8 %v1708
    %v1710 = vlaneseq
    %v1711 = vshrl.u32 %v1710, 7
    %v1712 = vsub.s32 %v1709, %v1711
    %v1713 = vrot.slane %v1699, %v1712
    %v1714 = vcombine.low %v1706, %v1713
    %v1715 = vcombine.low %v272, %v283
    %v1717 = vunpack.c.l.s4 1983009808
    %v1718 = vunpack.c.0.s8 %v1717
    %v1719 = vlaneseq
    %v1720 = vshrl.u32 %v1719, 7
    %v1721 = vsub.s32 %v1718, %v1720
    %v1722 = vrot.slane %v1715, %v1721
    %v1731 = vunpack.c.l.b16 %v1656
    %v1732 = vunpack.c.h.b16 %v1656
    %v1733 = vunpack.c.l.b16 %v1657
    %v1734 = vunpack.c.h.b16 %v1657
    %v1735 = vunpack.c.l.b16 %v1658
    %v1736 = vunpack.c.h.b16 %v1658
    %v1737 = vunpack.c.l.b16 %v1659
    %v1738 = vunpack.c.h.b16 %v1659
    %v1739 = vunpack.c.l.b16 %v1660
    %v1740 = vunpack.c.h.b16 %v1660
    %v1741 = vunpack.c.l.b16 %v1661
    %v1742 = vunpack.c.h.b16 %v1661
    %v1743 = vunpack.c.l.b16 %v1662
    %v1744 = vunpack.c.h.b16 %v1662
    %v1745 = vunpack.c.l.b16 %v1663
    %v1746 = vunpack.c.h.b16 %v1663
    %v1747 = vpack.c.b16 %v1735, %v1731
    %v1748 = vpack.c.b16 %v1736, %v1732
    %v1749 = vpack.c.b16 %v1737, %v1733
    %v1750 = vpack.c.b16 %v1738, %v1734
    %v1751 = vpack.c.b16 %v1743, %v1739
    %v1752 = vpack.c.b16 %v1744, %v1740
    %v1753 = vpack.c.b16 %v1745, %v1741
    %v1754 = vpack.c.b16 %v1746, %v1742
    %v1764 = vsel %vm547, %v1680, 0
    %v1767 = vsel %vm547, %v1697, 0
    %v1770 = vsel %vm547, %v1714, 0
    %v1773 = vsel %vm547, %v1722, 0
    %1775 = vmatprep.subr.bf16.mxu0 %v1748
    %1776 = vmatpush1.bf16.msra.mxu0 %v1747
    %1777 = vmatprep.subr.bf16.mxu0 %v1752
    %1778 = vmatpush1.bf16.msra.mxu0 %v1751
    %1779 = vmatprep.subr.bf16.mxu0 0
    %1780 = vmatpush1.bf16.msra.mxu0 0
    %1781 = vmatprep.subr.bf16.mxu0 0
    %1782 = vmatpush1.bf16.msra.mxu0 0
    %1783 = vmatprep.subr.bf16.mxu0 0
    %1784 = vmatpush1.bf16.msra.mxu0 0
    %1785 = vmatprep.subr.bf16.mxu0 0
    %1786 = vmatpush1.bf16.msra.mxu0 0
    %1787 = vmatprep.subr.bf16.mxu0 0
    %1788 = vmatpush1.bf16.msra.mxu0 0
    %1789 = vmatprep.subr.bf16.mxu0 0
    %1790 = vmatpush1.bf16.msra.mxu0 0
    %1791 = vmatprep.subr.bf16.mxu0 0
    %1792 = vmatpush1.bf16.msra.mxu0 0
    %1793 = vmatprep.subr.bf16.mxu0 0
    %1794 = vmatpush1.bf16.msra.mxu0 0
    %1795 = vmatprep.subr.bf16.mxu0 0
    %1796 = vmatpush1.bf16.msra.mxu0 0
    %1797 = vmatprep.subr.bf16.mxu0 0
    %1798 = vmatpush1.bf16.msra.mxu0 0
    %1799 = vmatprep.subr.bf16.mxu0 0
    %1800 = vmatpush1.bf16.msra.mxu0 0
    %1801 = vmatprep.subr.bf16.mxu0 0
    %1802 = vmatpush1.bf16.msra.mxu0 0
    %1803 = vmatprep.subr.bf16.mxu0 0
    %1804 = vmatpush1.bf16.msra.mxu0 0
    %1805 = vmatprep.subr.bf16.mxu0 0
    %1806 = vmatpush1.bf16.msra.mxu0 0
    %1807 = vmatprep.mubr.bf16.mxu0 0
    %1808 = vmatmul.mubr.bf16.gmra.mrb[0].mxu0 %v1764
    %v1809 = vpop.f32.mrb[0].mxu0
    %v1810 = vadd.f32 0.0, %v1809
    %v1811 = vpop.f32.mrb[0].mxu0
    %v1812 = vadd.f32 0.0, %v1811
    %v1813 = vpop.f32.mrb[0].mxu0
    %v1814 = vadd.f32 0.0, %v1813
    %v1815 = vpop.f32.mrb[0].mxu0
    %v1816 = vadd.f32 0.0, %v1815
    %1817 = vmatprep.mubr.bf16.mxu0 0
    %1818 = vmatmul.mubr.bf16.gmra.mrb[0].mxu0 %v1767
    %v1819 = vpop.f32.mrb[0].mxu0
    %v1820 = vadd.f32 0.0, %v1819
    %v1821 = vpop.f32.mrb[0].mxu0
    %v1822 = vadd.f32 0.0, %v1821
    %v1823 = vpop.f32.mrb[0].mxu0
    %v1824 = vadd.f32 0.0, %v1823
    %v1825 = vpop.f32.mrb[0].mxu0
    %v1826 = vadd.f32 0.0, %v1825
    %1827 = vmatprep.mubr.bf16.mxu0 0
    %1828 = vmatmul.mubr.bf16.gmra.mrb[0].mxu0 %v1770
    %v1829 = vpop.f32.mrb[0].mxu0
    %v1830 = vadd.f32 0.0, %v1829
    %v1831 = vpop.f32.mrb[0].mxu0
    %v1832 = vadd.f32 0.0, %v1831
    %v1833 = vpop.f32.mrb[0].mxu0
    %v1834 = vadd.f32 0.0, %v1833
    %v1835 = vpop.f32.mrb[0].mxu0
    %v1836 = vadd.f32 0.0, %v1835
    %1837 = vmatprep.mubr.bf16.mxu0 0
    %1838 = vmatmul.mubr.bf16.gmra.mrb[0].mxu0 %v1773
    %v1839 = vpop.f32.mrb[0].mxu0
    %v1840 = vadd.f32 0.0, %v1839
    %v1841 = vpop.f32.mrb[0].mxu0
    %v1842 = vadd.f32 0.0, %v1841
    %v1843 = vpop.f32.mrb[0].mxu0
    %v1844 = vpop.f32.mrb[0].mxu0
    %1845 = vdwg.mxu0
    %1846 = vmatprep.subr.bf16.mxu0 %v1750
    %1847 = vmatpush1.bf16.msra.mxu0 %v1749
    %1848 = vmatprep.subr.bf16.mxu0 %v1754
    %1849 = vmatpush1.bf16.msra.mxu0 %v1753
    %1850 = vmatprep.subr.bf16.mxu0 0
    %1851 = vmatpush1.bf16.msra.mxu0 0
    %1852 = vmatprep.subr.bf16.mxu0 0
    %1853 = vmatpush1.bf16.msra.mxu0 0
    %1854 = vmatprep.subr.bf16.mxu0 0
    %1855 = vmatpush1.bf16.msra.mxu0 0
    %1856 = vmatprep.subr.bf16.mxu0 0
    %1857 = vmatpush1.bf16.msra.mxu0 0
    %1858 = vmatprep.subr.bf16.mxu0 0
    %1859 = vmatpush1.bf16.msra.mxu0 0
    %1860 = vmatprep.subr.bf16.mxu0 0
    %1861 = vmatpush1.bf16.msra.mxu0 0
    %1862 = vmatprep.subr.bf16.mxu0 0
    %1863 = vmatpush1.bf16.msra.mxu0 0
    %1864 = vmatprep.subr.bf16.mxu0 0
    %1865 = vmatpush1.bf16.msra.mxu0 0
    %1866 = vmatprep.subr.bf16.mxu0 0
    %1867 = vmatpush1.bf16.msra.mxu0 0
    %1868 = vmatprep.subr.bf16.mxu0 0
    %1869 = vmatpush1.bf16.msra.mxu0 0
    %1870 = vmatprep.subr.bf16.mxu0 0
    %1871 = vmatpush1.bf16.msra.mxu0 0
    %1872 = vmatprep.subr.bf16.mxu0 0
    %1873 = vmatpush1.bf16.msra.mxu0 0
    %1874 = vmatprep.subr.bf16.mxu0 0
    %1875 = vmatpush1.bf16.msra.mxu0 0
    %1876 = vmatprep.subr.bf16.mxu0 0
    %1877 = vmatpush1.bf16.msra.mxu0 0
    %1878 = vmatprep.mubr.bf16.mxu0 0
    %1879 = vmatmul.mubr.bf16.gmra.mrb[0].mxu0 %v1764
    %v1880 = vpop.f32.mrb[0].mxu0
    %v1881 = vadd.f32 0.0, %v1880
    %v1882 = vpop.f32.mrb[0].mxu0
    %v1883 = vadd.f32 0.0, %v1882
    %v1884 = vpop.f32.mrb[0].mxu0
    %v1885 = vadd.f32 0.0, %v1884
    %v1886 = vpop.f32.mrb[0].mxu0
    %v1887 = vadd.f32 0.0, %v1886
    %1888 = vmatprep.mubr.bf16.mxu0 0
    %1889 = vmatmul.mubr.bf16.gmra.mrb[0].mxu0 %v1767
    %v1890 = vpop.f32.mrb[0].mxu0
    %v1891 = vadd.f32 0.0, %v1890
    %v1892 = vpop.f32.mrb[0].mxu0
    %v1893 = vadd.f32 0.0, %v1892
    %v1894 = vpop.f32.mrb[0].mxu0
    %v1895 = vadd.f32 0.0, %v1894
    %v1896 = vpop.f32.mrb[0].mxu0
    %v1897 = vadd.f32 0.0, %v1896
    %1898 = vmatprep.mubr.bf16.mxu0 0
    %1899 = vmatmul.mubr.bf16.gmra.mrb[0].mxu0 %v1770
    %v1900 = vpop.f32.mrb[0].mxu0
    %v1901 = vadd.f32 0.0, %v1900
    %v1902 = vpop.f32.mrb[0].mxu0
    %v1903 = vadd.f32 0.0, %v1902
    %v1904 = vpop.f32.mrb[0].mxu0
    %v1905 = vadd.f32 0.0, %v1904
    %v1906 = vpop.f32.mrb[0].mxu0
    %v1907 = vadd.f32 0.0, %v1906
    %1908 = vmatprep.mubr.bf16.mxu0 0
    %1909 = vmatmul.mubr.bf16.gmra.mrb[0].mxu0 %v1773
    %v1910 = vpop.f32.mrb[0].mxu0
    %v1911 = vadd.f32 0.0, %v1910
    %v1912 = vpop.f32.mrb[0].mxu0
    %v1913 = vadd.f32 0.0, %v1912
    %v1914 = vpop.f32.mrb[0].mxu0
    %v1915 = vpop.f32.mrb[0].mxu0
    %1916 = vdwg.mxu0
    %v1917 = vadd.f32 %v1627, %v1810
    %v1918 = vadd.f32 %v1628, %v1812
    %v1919 = vadd.f32 %v1629, %v1881
    %v1920 = vadd.f32 %v1630, %v1883
    %v1921 = vadd.f32 %v1631, %v1814
    %v1922 = vadd.f32 %v1632, %v1816
    %v1923 = vadd.f32 %v1633, %v1885
    %v1924 = vadd.f32 %v1634, %v1887
    %v1925 = vadd.f32 %v1635, %v1820
    %v1926 = vadd.f32 %v1636, %v1822
    %v1927 = vadd.f32 %v1637, %v1891
    %v1928 = vadd.f32 %v1638, %v1893
    %v1929 = vadd.f32 %v1639, %v1824
    %v1930 = vadd.f32 %v1640, %v1826
    %v1931 = vadd.f32 %v1641, %v1895
    %v1932 = vadd.f32 %v1642, %v1897
    %v1933 = vadd.f32 %v1643, %v1830
    %v1934 = vadd.f32 %v1644, %v1832
    %v1935 = vadd.f32 %v1645, %v1901
    %v1936 = vadd.f32 %v1646, %v1903
    %v1937 = vadd.f32 %v1647, %v1834
    %v1938 = vadd.f32 %v1648, %v1836
    %v1939 = vadd.f32 %v1649, %v1905
    %v1940 = vadd.f32 %v1650, %v1907
    %v1941 = vadd.f32 %v1651, %v1840
    %v1942 = vadd.f32 %v1652, %v1842
    %v1943 = vadd.f32 %v1653, %v1911
    %v1944 = vadd.f32 %v1654, %v1913
    %v1945 = vld [vmem:[#allocation5] sm:$0xf]
    %v1947 = vlaneseq
    %v1948 = vshrl.u32 %v1947, 7
    %v1949 = vsub.s32 0, %v1948
    %v1950 = vrot.slane %v1945, %v1949
    %v1951 = vlaneseq
    %v1952 = vshrl.u32 %v1951, 7
    %v1953 = vsub.s32 1, %v1952
    %v1954 = vrot.slane %v1945, %v1953
    %v1955 = vlaneseq
    %v1956 = vshrl.u32 %v1955, 7
    %v1957 = vsub.s32 2, %v1956
    %v1958 = vrot.slane %v1945, %v1957
    %v1959 = vlaneseq
    %v1960 = vshrl.u32 %v1959, 7
    %v1961 = vsub.s32 3, %v1960
    %v1962 = vrot.slane %v1945, %v1961
    %v1967 = vadd.f32 %v1917, %v1950
    %v1968 = vadd.f32 %v1918, %v1954
    %v1969 = vadd.f32 %v1919, %v1958
    %v1970 = vadd.f32 %v1920, %v1962
    %v1971 = vadd.f32 %v1921, %v1950
    %v1972 = vadd.f32 %v1922, %v1954
    %v1973 = vadd.f32 %v1923, %v1958
    %v1974 = vadd.f32 %v1924, %v1962
    %v1975 = vadd.f32 %v1925, %v1950
    %v1976 = vadd.f32 %v1926, %v1954
    %v1977 = vadd.f32 %v1927, %v1958
    %v1978 = vadd.f32 %v1928, %v1962
    %v1979 = vadd.f32 %v1929, %v1950
    %v1980 = vadd.f32 %v1930, %v1954
    %v1981 = vadd.f32 %v1931, %v1958
    %v1982 = vadd.f32 %v1932, %v1962
    %v1983 = vadd.f32 %v1933, %v1950
    %v1984 = vadd.f32 %v1934, %v1954
    %v1985 = vadd.f32 %v1935, %v1958
    %v1986 = vadd.f32 %v1936, %v1962
    %v1987 = vadd.f32 %v1937, %v1950
    %v1988 = vadd.f32 %v1938, %v1954
    %v1989 = vadd.f32 %v1939, %v1958
    %v1990 = vadd.f32 %v1940, %v1962
    %v1991 = vadd.f32 %v1941, %v1950
    %v1992 = vadd.f32 %v1942, %v1954
    %v1993 = vadd.f32 %v1943, %v1958
    %v1994 = vadd.f32 %v1944, %v1962
    %v1995 = vmax.f32 %v1967, 0.0
    %v1996 = vmax.f32 %v1968, 0.0
    %v1997 = vmax.f32 %v1969, 0.0
    %v1998 = vmax.f32 %v1970, 0.0
    %v1999 = vmax.f32 %v1971, 0.0
    %v2000 = vmax.f32 %v1972, 0.0
    %v2001 = vmax.f32 %v1973, 0.0
    %v2002 = vmax.f32 %v1974, 0.0
    %v2003 = vmax.f32 %v1975, 0.0
    %v2004 = vmax.f32 %v1976, 0.0
    %v2005 = vmax.f32 %v1977, 0.0
    %v2006 = vmax.f32 %v1978, 0.0
    %v2007 = vmax.f32 %v1979, 0.0
    %v2008 = vmax.f32 %v1980, 0.0
    %v2009 = vmax.f32 %v1981, 0.0
    %v2010 = vmax.f32 %v1982, 0.0
    %v2011 = vmax.f32 %v1983, 0.0
    %v2012 = vmax.f32 %v1984, 0.0
    %v2013 = vmax.f32 %v1985, 0.0
    %v2014 = vmax.f32 %v1986, 0.0
    %v2015 = vmax.f32 %v1987, 0.0
    %v2016 = vmax.f32 %v1988, 0.0
    %v2017 = vmax.f32 %v1989, 0.0
    %v2018 = vmax.f32 %v1990, 0.0
    %v2019 = vmax.f32 %v1991, 0.0
    %v2020 = vmax.f32 %v1992, 0.0
    %v2021 = vmax.f32 %v1993, 0.0
    %v2022 = vmax.f32 %v1994, 0.0
    %v2051 = vcombine.low %v1995, %v1996
    %v2052 = vcombine.high %v1995, %v1996
    %v2053 = vcombine.low %v1997, %v1998
    %v2054 = vcombine.high %v1997, %v1998
    %v2056 = vunpack.c.l.s4 1983009808
    %v2057 = vunpack.c.0.s8 %v2056
    %v2058 = vlaneseq
    %v2059 = vshrl.u32 %v2058, 7
    %v2060 = vsub.s32 %v2057, %v2059
    %v2061 = vrot.slane %v2051, %v2060
    %v2063 = vunpack.c.l.s4 1983009808
    %v2064 = vunpack.c.0.s8 %v2063
    %v2065 = vlaneseq
    %v2066 = vshrl.u32 %v2065, 7
    %v2067 = vsub.s32 %v2064, %v2066
    %v2068 = vrot.slane %v2052, %v2067
    %v2070 = vunpack.c.l.s4 1983009808
    %v2071 = vunpack.c.0.s8 %v2070
    %v2072 = vlaneseq
    %v2073 = vshrl.u32 %v2072, 7
    %v2074 = vsub.s32 %v2071, %v2073
    %v2075 = vrot.slane %v2053, %v2074
    %v2077 = vunpack.c.l.s4 1983009808
    %v2078 = vunpack.c.0.s8 %v2077
    %v2079 = vlaneseq
    %v2080 = vshrl.u32 %v2079, 7
    %v2081 = vsub.s32 %v2078, %v2080
    %v2082 = vrot.slane %v2054, %v2081
    %v2083 = vcombine.low %v2061, %v2075
    %v2084 = vcombine.high %v2061, %v2075
    %v2085 = vcombine.low %v2068, %v2082
    %v2086 = vcombine.high %v2068, %v2082
    %v2087 = vcombine.low %v1999, %v2000
    %v2088 = vcombine.high %v1999, %v2000
    %v2089 = vcombine.low %v2001, %v2002
    %v2090 = vcombine.high %v2001, %v2002
    %v2092 = vunpack.c.l.s4 1983009808
    %v2093 = vunpack.c.0.s8 %v2092
    %v2094 = vlaneseq
    %v2095 = vshrl.u32 %v2094, 7
    %v2096 = vsub.s32 %v2093, %v2095
    %v2097 = vrot.slane %v2087, %v2096
    %v2099 = vunpack.c.l.s4 1983009808
    %v2100 = vunpack.c.0.s8 %v2099
    %v2101 = vlaneseq
    %v2102 = vshrl.u32 %v2101, 7
    %v2103 = vsub.s32 %v2100, %v2102
    %v2104 = vrot.slane %v2088, %v2103
    %v2106 = vunpack.c.l.s4 1983009808
    %v2107 = vunpack.c.0.s8 %v2106
    %v2108 = vlaneseq
    %v2109 = vshrl.u32 %v2108, 7
    %v2110 = vsub.s32 %v2107, %v2109
    %v2111 = vrot.slane %v2089, %v2110
    %v2113 = vunpack.c.l.s4 1983009808
    %v2114 = vunpack.c.0.s8 %v2113
    %v2115 = vlaneseq
    %v2116 = vshrl.u32 %v2115, 7
    %v2117 = vsub.s32 %v2114, %v2116
    %v2118 = vrot.slane %v2090, %v2117
    %v2119 = vcombine.low %v2097, %v2111
    %v2120 = vcombine.high %v2097, %v2111
    %v2121 = vcombine.low %v2104, %v2118
    %v2122 = vcombine.high %v2104, %v2118
    %v2123 = vcombine.low %v2003, %v2004
    %v2124 = vcombine.high %v2003, %v2004
    %v2125 = vcombine.low %v2005, %v2006
    %v2126 = vcombine.high %v2005, %v2006
    %v2128 = vunpack.c.l.s4 1983009808
    %v2129 = vunpack.c.0.s8 %v2128
    %v2130 = vlaneseq
    %v2131 = vshrl.u32 %v2130, 7
    %v2132 = vsub.s32 %v2129, %v2131
    %v2133 = vrot.slane %v2123, %v2132
    %v2135 = vunpack.c.l.s4 1983009808
    %v2136 = vunpack.c.0.s8 %v2135
    %v2137 = vlaneseq
    %v2138 = vshrl.u32 %v2137, 7
    %v2139 = vsub.s32 %v2136, %v2138
    %v2140 = vrot.slane %v2124, %v2139
    %v2142 = vunpack.c.l.s4 1983009808
    %v2143 = vunpack.c.0.s8 %v2142
    %v2144 = vlaneseq
    %v2145 = vshrl.u32 %v2144, 7
    %v2146 = vsub.s32 %v2143, %v2145
    %v2147 = vrot.slane %v2125, %v2146
    %v2149 = vunpack.c.l.s4 1983009808
    %v2150 = vunpack.c.0.s8 %v2149
    %v2151 = vlaneseq
    %v2152 = vshrl.u32 %v2151, 7
    %v2153 = vsub.s32 %v2150, %v2152
    %v2154 = vrot.slane %v2126, %v2153
    %v2155 = vcombine.low %v2133, %v2147
    %v2156 = vcombine.high %v2133, %v2147
    %v2157 = vcombine.low %v2140, %v2154
    %v2158 = vcombine.high %v2140, %v2154
    %v2159 = vcombine.low %v2007, %v2008
    %v2160 = vcombine.high %v2007, %v2008
    %v2161 = vcombine.low %v2009, %v2010
    %v2162 = vcombine.high %v2009, %v2010
    %v2164 = vunpack.c.l.s4 1983009808
    %v2165 = vunpack.c.0.s8 %v2164
    %v2166 = vlaneseq
    %v2167 = vshrl.u32 %v2166, 7
    %v2168 = vsub.s32 %v2165, %v2167
    %v2169 = vrot.slane %v2159, %v2168
    %v2171 = vunpack.c.l.s4 1983009808
    %v2172 = vunpack.c.0.s8 %v2171
    %v2173 = vlaneseq
    %v2174 = vshrl.u32 %v2173, 7
    %v2175 = vsub.s32 %v2172, %v2174
    %v2176 = vrot.slane %v2160, %v2175
    %v2178 = vunpack.c.l.s4 1983009808
    %v2179 = vunpack.c.0.s8 %v2178
    %v2180 = vlaneseq
    %v2181 = vshrl.u32 %v2180, 7
    %v2182 = vsub.s32 %v2179, %v2181
    %v2183 = vrot.slane %v2161, %v2182
    %v2185 = vunpack.c.l.s4 1983009808
    %v2186 = vunpack.c.0.s8 %v2185
    %v2187 = vlaneseq
    %v2188 = vshrl.u32 %v2187, 7
    %v2189 = vsub.s32 %v2186, %v2188
    %v2190 = vrot.slane %v2162, %v2189
    %v2191 = vcombine.low %v2169, %v2183
    %v2192 = vcombine.high %v2169, %v2183
    %v2193 = vcombine.low %v2176, %v2190
    %v2194 = vcombine.high %v2176, %v2190
    %v2195 = vcombine.low %v2011, %v2012
    %v2196 = vcombine.high %v2011, %v2012
    %v2197 = vcombine.low %v2013, %v2014
    %v2198 = vcombine.high %v2013, %v2014
    %v2200 = vunpack.c.l.s4 1983009808
    %v2201 = vunpack.c.0.s8 %v2200
    %v2202 = vlaneseq
    %v2203 = vshrl.u32 %v2202, 7
    %v2204 = vsub.s32 %v2201, %v2203
    %v2205 = vrot.slane %v2195, %v2204
    %v2207 = vunpack.c.l.s4 1983009808
    %v2208 = vunpack.c.0.s8 %v2207
    %v2209 = vlaneseq
    %v2210 = vshrl.u32 %v2209, 7
    %v2211 = vsub.s32 %v2208, %v2210
    %v2212 = vrot.slane %v2196, %v2211
    %v2214 = vunpack.c.l.s4 1983009808
    %v2215 = vunpack.c.0.s8 %v2214
    %v2216 = vlaneseq
    %v2217 = vshrl.u32 %v2216, 7
    %v2218 = vsub.s32 %v2215, %v2217
    %v2219 = vrot.slane %v2197, %v2218
    %v2221 = vunpack.c.l.s4 1983009808
    %v2222 = vunpack.c.0.s8 %v2221
    %v2223 = vlaneseq
    %v2224 = vshrl.u32 %v2223, 7
    %v2225 = vsub.s32 %v2222, %v2224
    %v2226 = vrot.slane %v2198, %v2225
    %v2227 = vcombine.low %v2205, %v2219
    %v2228 = vcombine.high %v2205, %v2219
    %v2229 = vcombine.low %v2212, %v2226
    %v2230 = vcombine.high %v2212, %v2226
    %v2231 = vcombine.low %v2015, %v2016
    %v2232 = vcombine.high %v2015, %v2016
    %v2233 = vcombine.low %v2017, %v2018
    %v2234 = vcombine.high %v2017, %v2018
    %v2236 = vunpack.c.l.s4 1983009808
    %v2237 = vunpack.c.0.s8 %v2236
    %v2238 = vlaneseq
    %v2239 = vshrl.u32 %v2238, 7
    %v2240 = vsub.s32 %v2237, %v2239
    %v2241 = vrot.slane %v2231, %v2240
    %v2243 = vunpack.c.l.s4 1983009808
    %v2244 = vunpack.c.0.s8 %v2243
    %v2245 = vlaneseq
    %v2246 = vshrl.u32 %v2245, 7
    %v2247 = vsub.s32 %v2244, %v2246
    %v2248 = vrot.slane %v2232, %v2247
    %v2250 = vunpack.c.l.s4 1983009808
    %v2251 = vunpack.c.0.s8 %v2250
    %v2252 = vlaneseq
    %v2253 = vshrl.u32 %v2252, 7
    %v2254 = vsub.s32 %v2251, %v2253
    %v2255 = vrot.slane %v2233, %v2254
    %v2257 = vunpack.c.l.s4 1983009808
    %v2258 = vunpack.c.0.s8 %v2257
    %v2259 = vlaneseq
    %v2260 = vshrl.u32 %v2259, 7
    %v2261 = vsub.s32 %v2258, %v2260
    %v2262 = vrot.slane %v2234, %v2261
    %v2263 = vcombine.low %v2241, %v2255
    %v2264 = vcombine.high %v2241, %v2255
    %v2265 = vcombine.low %v2248, %v2262
    %v2266 = vcombine.high %v2248, %v2262
    %v2267 = vcombine.low %v2019, %v2020
    %v2268 = vcombine.high %v2019, %v2020
    %v2269 = vcombine.low %v2021, %v2022
    %v2270 = vcombine.high %v2021, %v2022
    %v2272 = vunpack.c.l.s4 1983009808
    %v2273 = vunpack.c.0.s8 %v2272
    %v2274 = vlaneseq
    %v2275 = vshrl.u32 %v2274, 7
    %v2276 = vsub.s32 %v2273, %v2275
    %v2277 = vrot.slane %v2267, %v2276
    %v2279 = vunpack.c.l.s4 1983009808
    %v2280 = vunpack.c.0.s8 %v2279
    %v2281 = vlaneseq
    %v2282 = vshrl.u32 %v2281, 7
    %v2283 = vsub.s32 %v2280, %v2282
    %v2284 = vrot.slane %v2268, %v2283
    %v2286 = vunpack.c.l.s4 1983009808
    %v2287 = vunpack.c.0.s8 %v2286
    %v2288 = vlaneseq
    %v2289 = vshrl.u32 %v2288, 7
    %v2290 = vsub.s32 %v2287, %v2289
    %v2291 = vrot.slane %v2269, %v2290
    %v2293 = vunpack.c.l.s4 1983009808
    %v2294 = vunpack.c.0.s8 %v2293
    %v2295 = vlaneseq
    %v2296 = vshrl.u32 %v2295, 7
    %v2297 = vsub.s32 %v2294, %v2296
    %v2298 = vrot.slane %v2270, %v2297
    %v2299 = vcombine.low %v2277, %v2291
    %v2300 = vcombine.high %v2277, %v2291
    %v2301 = vcombine.low %v2284, %v2298
    %v2302 = vcombine.high %v2284, %v2298
    %v2331 = vrot.slane %v2083, 7
    %v2332 = vrot.slane %v2331, 2
    %v2333 = vrot.slane %v2084, 7
    %v2334 = vrot.slane %v2333, 2
    %v2335 = vrot.slane %v2085, 7
    %v2336 = vrot.slane %v2335, 2
    %v2337 = vrot.slane %v2086, 7
    %v2338 = vrot.slane %v2337, 2
    %v2339 = vrot.slane %v2119, 7
    %v2340 = vrot.slane %v2339, 2
    %v2341 = vrot.slane %v2120, 7
    %v2342 = vrot.slane %v2341, 2
    %v2343 = vrot.slane %v2121, 7
    %v2344 = vrot.slane %v2343, 2
    %v2345 = vrot.slane %v2122, 7
    %v2346 = vrot.slane %v2345, 2
    %v2347 = vrot.slane %v2155, 7
    %v2348 = vrot.slane %v2347, 2
    %v2349 = vrot.slane %v2156, 7
    %v2350 = vrot.slane %v2349, 2
    %v2351 = vrot.slane %v2157, 7
    %v2352 = vrot.slane %v2351, 2
    %v2353 = vrot.slane %v2158, 7
    %v2354 = vrot.slane %v2353, 2
    %v2355 = vrot.slane %v2191, 7
    %v2356 = vrot.slane %v2355, 2
    %v2357 = vrot.slane %v2192, 7
    %v2358 = vrot.slane %v2357, 2
    %v2359 = vrot.slane %v2193, 7
    %v2360 = vrot.slane %v2359, 2
    %v2361 = vrot.slane %v2194, 7
    %v2362 = vrot.slane %v2361, 2
    %v2363 = vrot.slane %v2227, 7
    %v2364 = vrot.slane %v2363, 2
    %v2365 = vrot.slane %v2228, 7
    %v2366 = vrot.slane %v2365, 2
    %v2367 = vrot.slane %v2229, 7
    %v2368 = vrot.slane %v2367, 2
    %v2369 = vrot.slane %v2230, 7
    %v2370 = vrot.slane %v2369, 2
    %v2371 = vrot.slane %v2263, 7
    %v2372 = vrot.slane %v2371, 2
    %v2373 = vrot.slane %v2264, 7
    %v2374 = vrot.slane %v2373, 2
    %v2375 = vrot.slane %v2265, 7
    %v2376 = vrot.slane %v2375, 2
    %v2377 = vrot.slane %v2266, 7
    %v2378 = vrot.slane %v2377, 2
    %v2379 = vrot.slane %v2299, 7
    %v2380 = vrot.slane %v2379, 2
    %v2381 = vrot.slane %v2300, 7
    %v2382 = vrot.slane %v2381, 2
    %v2383 = vrot.slane %v2301, 7
    %v2384 = vrot.slane %v2383, 2
    %v2385 = vrot.slane %v2302, 7
    %v2386 = vrot.slane %v2385, 2
    %v2415 = vmax.f32 %v2083, %v2332
    %v2416 = vmax.f32 %v2084, %v2334
    %v2417 = vmax.f32 %v2085, %v2336
    %v2418 = vmax.f32 %v2086, %v2338
    %v2419 = vmax.f32 %v2119, %v2340
    %v2420 = vmax.f32 %v2120, %v2342
    %v2421 = vmax.f32 %v2121, %v2344
    %v2422 = vmax.f32 %v2122, %v2346
    %v2423 = vmax.f32 %v2155, %v2348
    %v2424 = vmax.f32 %v2156, %v2350
    %v2425 = vmax.f32 %v2157, %v2352
    %v2426 = vmax.f32 %v2158, %v2354
    %v2427 = vmax.f32 %v2191, %v2356
    %v2428 = vmax.f32 %v2192, %v2358
    %v2429 = vmax.f32 %v2193, %v2360
    %v2430 = vmax.f32 %v2194, %v2362
    %v2431 = vmax.f32 %v2227, %v2364
    %v2432 = vmax.f32 %v2228, %v2366
    %v2433 = vmax.f32 %v2229, %v2368
    %v2434 = vmax.f32 %v2230, %v2370
    %v2435 = vmax.f32 %v2263, %v2372
    %v2436 = vmax.f32 %v2264, %v2374
    %v2437 = vmax.f32 %v2265, %v2376
    %v2438 = vmax.f32 %v2266, %v2378
    %v2439 = vmax.f32 %v2299, %v2380
    %v2440 = vmax.f32 %v2300, %v2382
    %v2441 = vmax.f32 %v2301, %v2384
    %v2442 = vmax.f32 %v2302, %v2386
    %2471 = vrot.lane.b32.xlu0 %v2415, 112
    %v2472 = vpop.permute.xlu0 %2471
    %2473 = vrot.lane.b32.xlu0 %v2416, 112
    %v2474 = vpop.permute.xlu0 %2473
    %2475 = vrot.lane.b32.xlu0 %v2417, 112
    %v2476 = vpop.permute.xlu0 %2475
    %2477 = vrot.lane.b32.xlu0 %v2418, 112
    %v2478 = vpop.permute.xlu0 %2477
    %2479 = vrot.lane.b32.xlu0 %v2419, 112
    %v2480 = vpop.permute.xlu0 %2479
    %2481 = vrot.lane.b32.xlu0 %v2420, 112
    %v2482 = vpop.permute.xlu0 %2481
    %2483 = vrot.lane.b32.xlu0 %v2421, 112
    %v2484 = vpop.permute.xlu0 %2483
    %2485 = vrot.lane.b32.xlu0 %v2422, 112
    %v2486 = vpop.permute.xlu0 %2485
    %2487 = vrot.lane.b32.xlu0 %v2423, 112
    %v2488 = vpop.permute.xlu0 %2487
    %2489 = vrot.lane.b32.xlu0 %v2424, 112
    %v2490 = vpop.permute.xlu0 %2489
    %2491 = vrot.lane.b32.xlu0 %v2425, 112
    %v2492 = vpop.permute.xlu0 %2491
    %2493 = vrot.lane.b32.xlu0 %v2426, 112
    %v2494 = vpop.permute.xlu0 %2493
    %2495 = vrot.lane.b32.xlu0 %v2427, 112
    %v2496 = vpop.permute.xlu0 %2495
    %2497 = vrot.lane.b32.xlu0 %v2428, 112
    %v2498 = vpop.permute.xlu0 %2497
    %2499 = vrot.lane.b32.xlu0 %v2429, 112
    %v2500 = vpop.permute.xlu0 %2499
    %2501 = vrot.lane.b32.xlu0 %v2430, 112
    %v2502 = vpop.permute.xlu0 %2501
    %2503 = vrot.lane.b32.xlu0 %v2431, 112
    %v2504 = vpop.permute.xlu0 %2503
    %2505 = vrot.lane.b32.xlu0 %v2432, 112
    %v2506 = vpop.permute.xlu0 %2505
    %2507 = vrot.lane.b32.xlu0 %v2433, 112
    %v2508 = vpop.permute.xlu0 %2507
    %2509 = vrot.lane.b32.xlu0 %v2434, 112
    %v2510 = vpop.permute.xlu0 %2509
    %2511 = vrot.lane.b32.xlu0 %v2435, 112
    %v2512 = vpop.permute.xlu0 %2511
    %2513 = vrot.lane.b32.xlu0 %v2436, 112
    %v2514 = vpop.permute.xlu0 %2513
    %2515 = vrot.lane.b32.xlu0 %v2437, 112
    %v2516 = vpop.permute.xlu0 %2515
    %2517 = vrot.lane.b32.xlu0 %v2438, 112
    %v2518 = vpop.permute.xlu0 %2517
    %2519 = vrot.lane.b32.xlu0 %v2439, 112
    %v2520 = vpop.permute.xlu0 %2519
    %2521 = vrot.lane.b32.xlu0 %v2440, 112
    %v2522 = vpop.permute.xlu0 %2521
    %2523 = vrot.lane.b32.xlu0 %v2441, 112
    %v2524 = vpop.permute.xlu0 %2523
    %2525 = vrot.lane.b32.xlu0 %v2442, 112
    %v2526 = vpop.permute.xlu0 %2525
    %v2527 = vrot.slane %v2472, 2
    %v2528 = vrot.slane %v2474, 2
    %v2529 = vrot.slane %v2476, 2
    %v2530 = vrot.slane %v2478, 2
    %v2531 = vrot.slane %v2480, 2
    %v2532 = vrot.slane %v2482, 2
    %v2533 = vrot.slane %v2484, 2
    %v2534 = vrot.slane %v2486, 2
    %v2535 = vrot.slane %v2488, 2
    %v2536 = vrot.slane %v2490, 2
    %v2537 = vrot.slane %v2492, 2
    %v2538 = vrot.slane %v2494, 2
    %v2539 = vrot.slane %v2496, 2
    %v2540 = vrot.slane %v2498, 2
    %v2541 = vrot.slane %v2500, 2
    %v2542 = vrot.slane %v2502, 2
    %v2543 = vrot.slane %v2504, 2
    %v2544 = vrot.slane %v2506, 2
    %v2545 = vrot.slane %v2508, 2
    %v2546 = vrot.slane %v2510, 2
    %v2547 = vrot.slane %v2512, 2
    %v2548 = vrot.slane %v2514, 2
    %v2549 = vrot.slane %v2516, 2
    %v2550 = vrot.slane %v2518, 2
    %v2551 = vrot.slane %v2520, 2
    %v2552 = vrot.slane %v2522, 2
    %v2553 = vrot.slane %v2524, 2
    %v2554 = vrot.slane %v2526, 2
    %vm2555 = vcmask 916480
    %v2556 = vsel %vm2555, %v2472, %v2527
    %v2557 = vsel %vm2555, %v2474, %v2528
    %v2558 = vsel %vm2555, %v2476, %v2529
    %v2559 = vsel %vm2555, %v2478, %v2530
    %v2560 = vsel %vm2555, %v2480, %v2531
    %v2561 = vsel %vm2555, %v2482, %v2532
    %v2562 = vsel %vm2555, %v2484, %v2533
    %v2563 = vsel %vm2555, %v2486, %v2534
    %v2564 = vsel %vm2555, %v2488, %v2535
    %v2565 = vsel %vm2555, %v2490, %v2536
    %v2566 = vsel %vm2555, %v2492, %v2537
    %v2567 = vsel %vm2555, %v2494, %v2538
    %v2568 = vsel %vm2555, %v2496, %v2539
    %v2569 = vsel %vm2555, %v2498, %v2540
    %v2570 = vsel %vm2555, %v2500, %v2541
    %v2571 = vsel %vm2555, %v2502, %v2542
    %v2572 = vsel %vm2555, %v2504, %v2543
    %v2573 = vsel %vm2555, %v2506, %v2544
    %v2574 = vsel %vm2555, %v2508, %v2545
    %v2575 = vsel %vm2555, %v2510, %v2546
    %v2576 = vsel %vm2555, %v2512, %v2547
    %v2577 = vsel %vm2555, %v2514, %v2548
    %v2578 = vsel %vm2555, %v2516, %v2549
    %v2579 = vsel %vm2555, %v2518, %v2550
    %v2580 = vsel %vm2555, %v2520, %v2551
    %v2581 = vsel %vm2555, %v2522, %v2552
    %v2582 = vsel %vm2555, %v2524, %v2553
    %v2583 = vsel %vm2555, %v2526, %v2554
    %v2612 = vmax.f32 %v2415, %v2556
    %v2613 = vmax.f32 %v2416, %v2557
    %v2614 = vmax.f32 %v2417, %v2558
    %v2615 = vmax.f32 %v2418, %v2559
    %v2616 = vmax.f32 %v2419, %v2560
    %v2617 = vmax.f32 %v2420, %v2561
    %v2618 = vmax.f32 %v2421, %v2562
    %v2619 = vmax.f32 %v2422, %v2563
    %v2620 = vmax.f32 %v2423, %v2564
    %v2621 = vmax.f32 %v2424, %v2565
    %v2622 = vmax.f32 %v2425, %v2566
    %v2623 = vmax.f32 %v2426, %v2567
    %v2624 = vmax.f32 %v2427, %v2568
    %v2625 = vmax.f32 %v2428, %v2569
    %v2626 = vmax.f32 %v2429, %v2570
    %v2627 = vmax.f32 %v2430, %v2571
    %v2628 = vmax.f32 %v2431, %v2572
    %v2629 = vmax.f32 %v2432, %v2573
    %v2630 = vmax.f32 %v2433, %v2574
    %v2631 = vmax.f32 %v2434, %v2575
    %v2632 = vmax.f32 %v2435, %v2576
    %v2633 = vmax.f32 %v2436, %v2577
    %v2634 = vmax.f32 %v2437, %v2578
    %v2635 = vmax.f32 %v2438, %v2579
    %v2636 = vmax.f32 %v2439, %v2580
    %v2637 = vmax.f32 %v2440, %v2581
    %v2638 = vmax.f32 %v2441, %v2582
    %v2639 = vmax.f32 %v2442, %v2583
    %v2668 = vlaneseq
    %v2669 = vshrl.u32 %v2668, 7
    %v2670 = vsub.s32 0, %v2669
    %v2671 = vrot.slane %v2612, %v2670
    %v2672 = vlaneseq
    %v2673 = vshrl.u32 %v2672, 7
    %v2674 = vsub.s32 2, %v2673
    %v2675 = vrot.slane %v2612, %v2674
    %v2676 = vlaneseq
    %v2677 = vshrl.u32 %v2676, 7
    %v2678 = vsub.s32 4, %v2677
    %v2679 = vrot.slane %v2612, %v2678
    %v2680 = vlaneseq
    %v2681 = vshrl.u32 %v2680, 7
    %v2682 = vsub.s32 6, %v2681
    %v2683 = vrot.slane %v2612, %v2682
    %v2684 = vlaneseq
    %v2685 = vshrl.u32 %v2684, 7
    %v2686 = vsub.s32 0, %v2685
    %v2687 = vrot.slane %v2613, %v2686
    %v2688 = vlaneseq
    %v2689 = vshrl.u32 %v2688, 7
    %v2690 = vsub.s32 2, %v2689
    %v2691 = vrot.slane %v2613, %v2690
    %v2692 = vlaneseq
    %v2693 = vshrl.u32 %v2692, 7
    %v2694 = vsub.s32 4, %v2693
    %v2695 = vrot.slane %v2613, %v2694
    %v2696 = vlaneseq
    %v2697 = vshrl.u32 %v2696, 7
    %v2698 = vsub.s32 6, %v2697
    %v2699 = vrot.slane %v2613, %v2698
    %v2700 = vlaneseq
    %v2701 = vshrl.u32 %v2700, 7
    %v2702 = vsub.s32 0, %v2701
    %v2703 = vrot.slane %v2614, %v2702
    %v2704 = vlaneseq
    %v2705 = vshrl.u32 %v2704, 7
    %v2706 = vsub.s32 2, %v2705
    %v2707 = vrot.slane %v2614, %v2706
    %v2708 = vlaneseq
    %v2709 = vshrl.u32 %v2708, 7
    %v2710 = vsub.s32 4, %v2709
    %v2711 = vrot.slane %v2614, %v2710
    %v2712 = vlaneseq
    %v2713 = vshrl.u32 %v2712, 7
    %v2714 = vsub.s32 6, %v2713
    %v2715 = vrot.slane %v2614, %v2714
    %v2716 = vlaneseq
    %v2717 = vshrl.u32 %v2716, 7
    %v2718 = vsub.s32 0, %v2717
    %v2719 = vrot.slane %v2615, %v2718
    %v2720 = vlaneseq
    %v2721 = vshrl.u32 %v2720, 7
    %v2722 = vsub.s32 2, %v2721
    %v2723 = vrot.slane %v2615, %v2722
    %v2724 = vlaneseq
    %v2725 = vshrl.u32 %v2724, 7
    %v2726 = vsub.s32 4, %v2725
    %v2727 = vrot.slane %v2615, %v2726
    %v2728 = vlaneseq
    %v2729 = vshrl.u32 %v2728, 7
    %v2730 = vsub.s32 6, %v2729
    %v2731 = vrot.slane %v2615, %v2730
    %v2732 = vlaneseq
    %v2733 = vshrl.u32 %v2732, 7
    %v2734 = vsub.s32 0, %v2733
    %v2735 = vrot.slane %v2616, %v2734
    %v2736 = vlaneseq
    %v2737 = vshrl.u32 %v2736, 7
    %v2738 = vsub.s32 2, %v2737
    %v2739 = vrot.slane %v2616, %v2738
    %v2740 = vlaneseq
    %v2741 = vshrl.u32 %v2740, 7
    %v2742 = vsub.s32 4, %v2741
    %v2743 = vrot.slane %v2616, %v2742
    %v2744 = vlaneseq
    %v2745 = vshrl.u32 %v2744, 7
    %v2746 = vsub.s32 6, %v2745
    %v2747 = vrot.slane %v2616, %v2746
    %v2748 = vlaneseq
    %v2749 = vshrl.u32 %v2748, 7
    %v2750 = vsub.s32 0, %v2749
    %v2751 = vrot.slane %v2617, %v2750
    %v2752 = vlaneseq
    %v2753 = vshrl.u32 %v2752, 7
    %v2754 = vsub.s32 2, %v2753
    %v2755 = vrot.slane %v2617, %v2754
    %v2756 = vlaneseq
    %v2757 = vshrl.u32 %v2756, 7
    %v2758 = vsub.s32 4, %v2757
    %v2759 = vrot.slane %v2617, %v2758
    %v2760 = vlaneseq
    %v2761 = vshrl.u32 %v2760, 7
    %v2762 = vsub.s32 6, %v2761
    %v2763 = vrot.slane %v2617, %v2762
    %v2764 = vlaneseq
    %v2765 = vshrl.u32 %v2764, 7
    %v2766 = vsub.s32 0, %v2765
    %v2767 = vrot.slane %v2618, %v2766
    %v2768 = vlaneseq
    %v2769 = vshrl.u32 %v2768, 7
    %v2770 = vsub.s32 2, %v2769
    %v2771 = vrot.slane %v2618, %v2770
    %v2772 = vlaneseq
    %v2773 = vshrl.u32 %v2772, 7
    %v2774 = vsub.s32 4, %v2773
    %v2775 = vrot.slane %v2618, %v2774
    %v2776 = vlaneseq
    %v2777 = vshrl.u32 %v2776, 7
    %v2778 = vsub.s32 6, %v2777
    %v2779 = vrot.slane %v2618, %v2778
    %v2780 = vlaneseq
    %v2781 = vshrl.u32 %v2780, 7
    %v2782 = vsub.s32 0, %v2781
    %v2783 = vrot.slane %v2619, %v2782
    %v2784 = vlaneseq
    %v2785 = vshrl.u32 %v2784, 7
    %v2786 = vsub.s32 2, %v2785
    %v2787 = vrot.slane %v2619, %v2786
    %v2788 = vlaneseq
    %v2789 = vshrl.u32 %v2788, 7
    %v2790 = vsub.s32 4, %v2789
    %v2791 = vrot.slane %v2619, %v2790
    %v2792 = vlaneseq
    %v2793 = vshrl.u32 %v2792, 7
    %v2794 = vsub.s32 6, %v2793
    %v2795 = vrot.slane %v2619, %v2794
    %v2796 = vlaneseq
    %v2797 = vshrl.u32 %v2796, 7
    %v2798 = vsub.s32 0, %v2797
    %v2799 = vrot.slane %v2620, %v2798
    %v2800 = vlaneseq
    %v2801 = vshrl.u32 %v2800, 7
    %v2802 = vsub.s32 2, %v2801
    %v2803 = vrot.slane %v2620, %v2802
    %v2804 = vlaneseq
    %v2805 = vshrl.u32 %v2804, 7
    %v2806 = vsub.s32 4, %v2805
    %v2807 = vrot.slane %v2620, %v2806
    %v2808 = vlaneseq
    %v2809 = vshrl.u32 %v2808, 7
    %v2810 = vsub.s32 6, %v2809
    %v2811 = vrot.slane %v2620, %v2810
    %v2812 = vlaneseq
    %v2813 = vshrl.u32 %v2812, 7
    %v2814 = vsub.s32 0, %v2813
    %v2815 = vrot.slane %v2621, %v2814
    %v2816 = vlaneseq
    %v2817 = vshrl.u32 %v2816, 7
    %v2818 = vsub.s32 2, %v2817
    %v2819 = vrot.slane %v2621, %v2818
    %v2820 = vlaneseq
    %v2821 = vshrl.u32 %v2820, 7
    %v2822 = vsub.s32 4, %v2821
    %v2823 = vrot.slane %v2621, %v2822
    %v2824 = vlaneseq
    %v2825 = vshrl.u32 %v2824, 7
    %v2826 = vsub.s32 6, %v2825
    %v2827 = vrot.slane %v2621, %v2826
    %v2828 = vlaneseq
    %v2829 = vshrl.u32 %v2828, 7
    %v2830 = vsub.s32 0, %v2829
    %v2831 = vrot.slane %v2622, %v2830
    %v2832 = vlaneseq
    %v2833 = vshrl.u32 %v2832, 7
    %v2834 = vsub.s32 2, %v2833
    %v2835 = vrot.slane %v2622, %v2834
    %v2836 = vlaneseq
    %v2837 = vshrl.u32 %v2836, 7
    %v2838 = vsub.s32 4, %v2837
    %v2839 = vrot.slane %v2622, %v2838
    %v2840 = vlaneseq
    %v2841 = vshrl.u32 %v2840, 7
    %v2842 = vsub.s32 6, %v2841
    %v2843 = vrot.slane %v2622, %v2842
    %v2844 = vlaneseq
    %v2845 = vshrl.u32 %v2844, 7
    %v2846 = vsub.s32 0, %v2845
    %v2847 = vrot.slane %v2623, %v2846
    %v2848 = vlaneseq
    %v2849 = vshrl.u32 %v2848, 7
    %v2850 = vsub.s32 2, %v2849
    %v2851 = vrot.slane %v2623, %v2850
    %v2852 = vlaneseq
    %v2853 = vshrl.u32 %v2852, 7
    %v2854 = vsub.s32 4, %v2853
    %v2855 = vrot.slane %v2623, %v2854
    %v2856 = vlaneseq
    %v2857 = vshrl.u32 %v2856, 7
    %v2858 = vsub.s32 6, %v2857
    %v2859 = vrot.slane %v2623, %v2858
    %v2860 = vlaneseq
    %v2861 = vshrl.u32 %v2860, 7
    %v2862 = vsub.s32 0, %v2861
    %v2863 = vrot.slane %v2624, %v2862
    %v2864 = vlaneseq
    %v2865 = vshrl.u32 %v2864, 7
    %v2866 = vsub.s32 2, %v2865
    %v2867 = vrot.slane %v2624, %v2866
    %v2868 = vlaneseq
    %v2869 = vshrl.u32 %v2868, 7
    %v2870 = vsub.s32 4, %v2869
    %v2871 = vrot.slane %v2624, %v2870
    %v2872 = vlaneseq
    %v2873 = vshrl.u32 %v2872, 7
    %v2874 = vsub.s32 6, %v2873
    %v2875 = vrot.slane %v2624, %v2874
    %v2876 = vlaneseq
    %v2877 = vshrl.u32 %v2876, 7
    %v2878 = vsub.s32 0, %v2877
    %v2879 = vrot.slane %v2625, %v2878
    %v2880 = vlaneseq
    %v2881 = vshrl.u32 %v2880, 7
    %v2882 = vsub.s32 2, %v2881
    %v2883 = vrot.slane %v2625, %v2882
    %v2884 = vlaneseq
    %v2885 = vshrl.u32 %v2884, 7
    %v2886 = vsub.s32 4, %v2885
    %v2887 = vrot.slane %v2625, %v2886
    %v2888 = vlaneseq
    %v2889 = vshrl.u32 %v2888, 7
    %v2890 = vsub.s32 6, %v2889
    %v2891 = vrot.slane %v2625, %v2890
    %v2892 = vlaneseq
    %v2893 = vshrl.u32 %v2892, 7
    %v2894 = vsub.s32 0, %v2893
    %v2895 = vrot.slane %v2626, %v2894
    %v2896 = vlaneseq
    %v2897 = vshrl.u32 %v2896, 7
    %v2898 = vsub.s32 2, %v2897
    %v2899 = vrot.slane %v2626, %v2898
    %v2900 = vlaneseq
    %v2901 = vshrl.u32 %v2900, 7
    %v2902 = vsub.s32 4, %v2901
    %v2903 = vrot.slane %v2626, %v2902
    %v2904 = vlaneseq
    %v2905 = vshrl.u32 %v2904, 7
    %v2906 = vsub.s32 6, %v2905
    %v2907 = vrot.slane %v2626, %v2906
    %v2908 = vlaneseq
    %v2909 = vshrl.u32 %v2908, 7
    %v2910 = vsub.s32 0, %v2909
    %v2911 = vrot.slane %v2627, %v2910
    %v2912 = vlaneseq
    %v2913 = vshrl.u32 %v2912, 7
    %v2914 = vsub.s32 2, %v2913
    %v2915 = vrot.slane %v2627, %v2914
    %v2916 = vlaneseq
    %v2917 = vshrl.u32 %v2916, 7
    %v2918 = vsub.s32 4, %v2917
    %v2919 = vrot.slane %v2627, %v2918
    %v2920 = vlaneseq
    %v2921 = vshrl.u32 %v2920, 7
    %v2922 = vsub.s32 6, %v2921
    %v2923 = vrot.slane %v2627, %v2922
    %v2924 = vlaneseq
    %v2925 = vshrl.u32 %v2924, 7
    %v2926 = vsub.s32 0, %v2925
    %v2927 = vrot.slane %v2628, %v2926
    %v2928 = vlaneseq
    %v2929 = vshrl.u32 %v2928, 7
    %v2930 = vsub.s32 2, %v2929
    %v2931 = vrot.slane %v2628, %v2930
    %v2932 = vlaneseq
    %v2933 = vshrl.u32 %v2932, 7
    %v2934 = vsub.s32 4, %v2933
    %v2935 = vrot.slane %v2628, %v2934
    %v2936 = vlaneseq
    %v2937 = vshrl.u32 %v2936, 7
    %v2938 = vsub.s32 6, %v2937
    %v2939 = vrot.slane %v2628, %v2938
    %v2940 = vlaneseq
    %v2941 = vshrl.u32 %v2940, 7
    %v2942 = vsub.s32 0, %v2941
    %v2943 = vrot.slane %v2629, %v2942
    %v2944 = vlaneseq
    %v2945 = vshrl.u32 %v2944, 7
    %v2946 = vsub.s32 2, %v2945
    %v2947 = vrot.slane %v2629, %v2946
    %v2948 = vlaneseq
    %v2949 = vshrl.u32 %v2948, 7
    %v2950 = vsub.s32 4, %v2949
    %v2951 = vrot.slane %v2629, %v2950
    %v2952 = vlaneseq
    %v2953 = vshrl.u32 %v2952, 7
    %v2954 = vsub.s32 6, %v2953
    %v2955 = vrot.slane %v2629, %v2954
    %v2956 = vlaneseq
    %v2957 = vshrl.u32 %v2956, 7
    %v2958 = vsub.s32 0, %v2957
    %v2959 = vrot.slane %v2630, %v2958
    %v2960 = vlaneseq
    %v2961 = vshrl.u32 %v2960, 7
    %v2962 = vsub.s32 2, %v2961
    %v2963 = vrot.slane %v2630, %v2962
    %v2964 = vlaneseq
    %v2965 = vshrl.u32 %v2964, 7
    %v2966 = vsub.s32 4, %v2965
    %v2967 = vrot.slane %v2630, %v2966
    %v2968 = vlaneseq
    %v2969 = vshrl.u32 %v2968, 7
    %v2970 = vsub.s32 6, %v2969
    %v2971 = vrot.slane %v2630, %v2970
    %v2972 = vlaneseq
    %v2973 = vshrl.u32 %v2972, 7
    %v2974 = vsub.s32 0, %v2973
    %v2975 = vrot.slane %v2631, %v2974
    %v2976 = vlaneseq
    %v2977 = vshrl.u32 %v2976, 7
    %v2978 = vsub.s32 2, %v2977
    %v2979 = vrot.slane %v2631, %v2978
    %v2980 = vlaneseq
    %v2981 = vshrl.u32 %v2980, 7
    %v2982 = vsub.s32 4, %v2981
    %v2983 = vrot.slane %v2631, %v2982
    %v2984 = vlaneseq
    %v2985 = vshrl.u32 %v2984, 7
    %v2986 = vsub.s32 6, %v2985
    %v2987 = vrot.slane %v2631, %v2986
    %v2988 = vlaneseq
    %v2989 = vshrl.u32 %v2988, 7
    %v2990 = vsub.s32 0, %v2989
    %v2991 = vrot.slane %v2632, %v2990
    %v2992 = vlaneseq
    %v2993 = vshrl.u32 %v2992, 7
    %v2994 = vsub.s32 2, %v2993
    %v2995 = vrot.slane %v2632, %v2994
    %v2996 = vlaneseq
    %v2997 = vshrl.u32 %v2996, 7
    %v2998 = vsub.s32 4, %v2997
    %v2999 = vrot.slane %v2632, %v2998
    %v3000 = vlaneseq
    %v3001 = vshrl.u32 %v3000, 7
    %v3002 = vsub.s32 6, %v3001
    %v3003 = vrot.slane %v2632, %v3002
    %v3004 = vlaneseq
    %v3005 = vshrl.u32 %v3004, 7
    %v3006 = vsub.s32 0, %v3005
    %v3007 = vrot.slane %v2633, %v3006
    %v3008 = vlaneseq
    %v3009 = vshrl.u32 %v3008, 7
    %v3010 = vsub.s32 2, %v3009
    %v3011 = vrot.slane %v2633, %v3010
    %v3012 = vlaneseq
    %v3013 = vshrl.u32 %v3012, 7
    %v3014 = vsub.s32 4, %v3013
    %v3015 = vrot.slane %v2633, %v3014
    %v3016 = vlaneseq
    %v3017 = vshrl.u32 %v3016, 7
    %v3018 = vsub.s32 6, %v3017
    %v3019 = vrot.slane %v2633, %v3018
    %v3020 = vlaneseq
    %v3021 = vshrl.u32 %v3020, 7
    %v3022 = vsub.s32 0, %v3021
    %v3023 = vrot.slane %v2634, %v3022
    %v3024 = vlaneseq
    %v3025 = vshrl.u32 %v3024, 7
    %v3026 = vsub.s32 2, %v3025
    %v3027 = vrot.slane %v2634, %v3026
    %v3028 = vlaneseq
    %v3029 = vshrl.u32 %v3028, 7
    %v3030 = vsub.s32 4, %v3029
    %v3031 = vrot.slane %v2634, %v3030
    %v3032 = vlaneseq
    %v3033 = vshrl.u32 %v3032, 7
    %v3034 = vsub.s32 6, %v3033
    %v3035 = vrot.slane %v2634, %v3034
    %v3036 = vlaneseq
    %v3037 = vshrl.u32 %v3036, 7
    %v3038 = vsub.s32 0, %v3037
    %v3039 = vrot.slane %v2635, %v3038
    %v3040 = vlaneseq
    %v3041 = vshrl.u32 %v3040, 7
    %v3042 = vsub.s32 2, %v3041
    %v3043 = vrot.slane %v2635, %v3042
    %v3044 = vlaneseq
    %v3045 = vshrl.u32 %v3044, 7
    %v3046 = vsub.s32 4, %v3045
    %v3047 = vrot.slane %v2635, %v3046
    %v3048 = vlaneseq
    %v3049 = vshrl.u32 %v3048, 7
    %v3050 = vsub.s32 6, %v3049
    %v3051 = vrot.slane %v2635, %v3050
    %v3052 = vlaneseq
    %v3053 = vshrl.u32 %v3052, 7
    %v3054 = vsub.s32 0, %v3053
    %v3055 = vrot.slane %v2636, %v3054
    %v3056 = vlaneseq
    %v3057 = vshrl.u32 %v3056, 7
    %v3058 = vsub.s32 2, %v3057
    %v3059 = vrot.slane %v2636, %v3058
    %v3060 = vlaneseq
    %v3061 = vshrl.u32 %v3060, 7
    %v3062 = vsub.s32 4, %v3061
    %v3063 = vrot.slane %v2636, %v3062
    %v3064 = vlaneseq
    %v3065 = vshrl.u32 %v3064, 7
    %v3066 = vsub.s32 6, %v3065
    %v3067 = vrot.slane %v2636, %v3066
    %v3068 = vlaneseq
    %v3069 = vshrl.u32 %v3068, 7
    %v3070 = vsub.s32 0, %v3069
    %v3071 = vrot.slane %v2637, %v3070
    %v3072 = vlaneseq
    %v3073 = vshrl.u32 %v3072, 7
    %v3074 = vsub.s32 2, %v3073
    %v3075 = vrot.slane %v2637, %v3074
    %v3076 = vlaneseq
    %v3077 = vshrl.u32 %v3076, 7
    %v3078 = vsub.s32 4, %v3077
    %v3079 = vrot.slane %v2637, %v3078
    %v3080 = vlaneseq
    %v3081 = vshrl.u32 %v3080, 7
    %v3082 = vsub.s32 6, %v3081
    %v3083 = vrot.slane %v2637, %v3082
    %v3084 = vlaneseq
    %v3085 = vshrl.u32 %v3084, 7
    %v3086 = vsub.s32 0, %v3085
    %v3087 = vrot.slane %v2638, %v3086
    %v3088 = vlaneseq
    %v3089 = vshrl.u32 %v3088, 7
    %v3090 = vsub.s32 2, %v3089
    %v3091 = vrot.slane %v2638, %v3090
    %v3092 = vlaneseq
    %v3093 = vshrl.u32 %v3092, 7
    %v3094 = vsub.s32 4, %v3093
    %v3095 = vrot.slane %v2638, %v3094
    %v3096 = vlaneseq
    %v3097 = vshrl.u32 %v3096, 7
    %v3098 = vsub.s32 6, %v3097
    %v3099 = vrot.slane %v2638, %v3098
    %v3100 = vlaneseq
    %v3101 = vshrl.u32 %v3100, 7
    %v3102 = vsub.s32 0, %v3101
    %v3103 = vrot.slane %v2639, %v3102
    %v3104 = vlaneseq
    %v3105 = vshrl.u32 %v3104, 7
    %v3106 = vsub.s32 2, %v3105
    %v3107 = vrot.slane %v2639, %v3106
    %v3108 = vlaneseq
    %v3109 = vshrl.u32 %v3108, 7
    %v3110 = vsub.s32 4, %v3109
    %v3111 = vrot.slane %v2639, %v3110
    %v3112 = vlaneseq
    %v3113 = vshrl.u32 %v3112, 7
    %v3114 = vsub.s32 6, %v3113
    %v3115 = vrot.slane %v2639, %v3114
    %vm3116 = vcmask 1041409
    %v3117 = vsel %vm3116, %v2687, %v2671
    %vm3118 = vcmask 1042434
    %v3119 = vsel %vm3118, %v2703, %v3117
    %vm3120 = vcmask 1043459
    %v3121 = vsel %vm3120, %v2719, %v3119
    %vm3122 = vcmask 1044484
    %v3123 = vsel %vm3122, %v2735, %v3121
    %vm3124 = vcmask 1045509
    %v3125 = vsel %vm3124, %v2751, %v3123
    %vm3126 = vcmask 1046534
    %v3127 = vsel %vm3126, %v2767, %v3125
    %vm3128 = vcmask 1047559
    %v3129 = vsel %vm3128, %v2783, %v3127
    %v3130 = vsel %vm3116, %v2691, %v2675
    %v3131 = vsel %vm3118, %v2707, %v3130
    %v3132 = vsel %vm3120, %v2723, %v3131
    %v3133 = vsel %vm3122, %v2739, %v3132
    %v3134 = vsel %vm3124, %v2755, %v3133
    %v3135 = vsel %vm3126, %v2771, %v3134
    %v3136 = vsel %vm3128, %v2787, %v3135
    %v3137 = vsel %vm3116, %v2695, %v2679
    %v3138 = vsel %vm3118, %v2711, %v3137
    %v3139 = vsel %vm3120, %v2727, %v3138
    %v3140 = vsel %vm3122, %v2743, %v3139
    %v3141 = vsel %vm3124, %v2759, %v3140
    %v3142 = vsel %vm3126, %v2775, %v3141
    %v3143 = vsel %vm3128, %v2791, %v3142
    %v3144 = vsel %vm3116, %v2699, %v2683
    %v3145 = vsel %vm3118, %v2715, %v3144
    %v3146 = vsel %vm3120, %v2731, %v3145
    %v3147 = vsel %vm3122, %v2747, %v3146
    %v3148 = vsel %vm3124, %v2763, %v3147
    %v3149 = vsel %vm3126, %v2779, %v3148
    %v3150 = vsel %vm3128, %v2795, %v3149
    %v3151 = vsel %vm3116, %v2815, %v2799
    %v3152 = vsel %vm3118, %v2831, %v3151
    %v3153 = vsel %vm3120, %v2847, %v3152
    %v3154 = vsel %vm3122, %v2863, %v3153
    %v3155 = vsel %vm3124, %v2879, %v3154
    %v3156 = vsel %vm3116, %v2819, %v2803
    %v3157 = vsel %vm3118, %v2835, %v3156
    %v3158 = vsel %vm3120, %v2851, %v3157
    %v3159 = vsel %vm3122, %v2867, %v3158
    %v3160 = vsel %vm3124, %v2883, %v3159
    %v3161 = vsel %vm3116, %v2823, %v2807
    %v3162 = vsel %vm3118, %v2839, %v3161
    %v3163 = vsel %vm3120, %v2855, %v3162
    %v3164 = vsel %vm3122, %v2871, %v3163
    %v3165 = vsel %vm3124, %v2887, %v3164
    %v3166 = vsel %vm3116, %v2827, %v2811
    %v3167 = vsel %vm3118, %v2843, %v3166
    %v3168 = vsel %vm3120, %v2859, %v3167
    %v3169 = vsel %vm3122, %v2875, %v3168
    %v3170 = vsel %vm3124, %v2891, %v3169
    %v3171 = vsel %vm3116, %v2911, %v2895
    %v3172 = vsel %vm3118, %v2927, %v3171
    %v3173 = vsel %vm3120, %v2943, %v3172
    %v3174 = vsel %vm3122, %v2959, %v3173
    %v3175 = vsel %vm3124, %v2975, %v3174
    %v3176 = vsel %vm3126, %v2991, %v3175
    %v3177 = vsel %vm3128, %v3007, %v3176
    %v3178 = vsel %vm3116, %v2915, %v2899
    %v3179 = vsel %vm3118, %v2931, %v3178
    %v3180 = vsel %vm3120, %v2947, %v3179
    %v3181 = vsel %vm3122, %v2963, %v3180
    %v3182 = vsel %vm3124, %v2979, %v3181
    %v3183 = vsel %vm3126, %v2995, %v3182
    %v3184 = vsel %vm3128, %v3011, %v3183
    %v3185 = vsel %vm3116, %v2919, %v2903
    %v3186 = vsel %vm3118, %v2935, %v3185
    %v3187 = vsel %vm3120, %v2951, %v3186
    %v3188 = vsel %vm3122, %v2967, %v3187
    %v3189 = vsel %vm3124, %v2983, %v3188
    %v3190 = vsel %vm3126, %v2999, %v3189
    %v3191 = vsel %vm3128, %v3015, %v3190
    %v3192 = vsel %vm3116, %v2923, %v2907
    %v3193 = vsel %vm3118, %v2939, %v3192
    %v3194 = vsel %vm3120, %v2955, %v3193
    %v3195 = vsel %vm3122, %v2971, %v3194
    %v3196 = vsel %vm3124, %v2987, %v3195
    %v3197 = vsel %vm3126, %v3003, %v3196
    %v3198 = vsel %vm3128, %v3019, %v3197
    %v3199 = vsel %vm3116, %v3039, %v3023
    %v3200 = vsel %vm3118, %v3055, %v3199
    %v3201 = vsel %vm3120, %v3071, %v3200
    %v3202 = vsel %vm3122, %v3087, %v3201
    %v3203 = vsel %vm3124, %v3103, %v3202
    %v3204 = vsel %vm3116, %v3043, %v3027
    %v3205 = vsel %vm3118, %v3059, %v3204
    %v3206 = vsel %vm3120, %v3075, %v3205
    %v3207 = vsel %vm3122, %v3091, %v3206
    %v3208 = vsel %vm3124, %v3107, %v3207
    %v3209 = vsel %vm3116, %v3047, %v3031
    %v3210 = vsel %vm3118, %v3063, %v3209
    %v3211 = vsel %vm3120, %v3079, %v3210
    %v3212 = vsel %vm3122, %v3095, %v3211
    %v3213 = vsel %vm3124, %v3111, %v3212
    %v3214 = vsel %vm3116, %v3051, %v3035
    %v3215 = vsel %vm3118, %v3067, %v3214
    %v3216 = vsel %vm3120, %v3083, %v3215
    %v3217 = vsel %vm3122, %v3099, %v3216
    %v3218 = vsel %vm3124, %v3115, %v3217
    %3219 = vrot.lane.b32.xlu0 %v3129, 64
    %v3220 = vpop.permute.xlu0 %3219
    %3221 = vrot.lane.b32.xlu0 %v3136, 64
    %v3222 = vpop.permute.xlu0 %3221
    %3223 = vrot.lane.b32.xlu0 %v3143, 64
    %v3224 = vpop.permute.xlu0 %3223
    %3225 = vrot.lane.b32.xlu0 %v3150, 64
    %v3226 = vpop.permute.xlu0 %3225
    %3227 = vrot.lane.b32.xlu0 %v3155, 64
    %v3228 = vpop.permute.xlu0 %3227
    %3229 = vrot.lane.b32.xlu0 %v3160, 64
    %v3230 = vpop.permute.xlu0 %3229
    %3231 = vrot.lane.b32.xlu0 %v3165, 64
    %v3232 = vpop.permute.xlu0 %3231
    %3233 = vrot.lane.b32.xlu0 %v3170, 64
    %v3234 = vpop.permute.xlu0 %3233
    %3235 = vrot.lane.b32.xlu0 %v3177, 64
    %v3236 = vpop.permute.xlu0 %3235
    %3237 = vrot.lane.b32.xlu0 %v3184, 64
    %v3238 = vpop.permute.xlu0 %3237
    %3239 = vrot.lane.b32.xlu0 %v3191, 64
    %v3240 = vpop.permute.xlu0 %3239
    %3241 = vrot.lane.b32.xlu0 %v3198, 64
    %v3242 = vpop.permute.xlu0 %3241
    %3243 = vrot.lane.b32.xlu0 %v3203, 64
    %v3244 = vpop.permute.xlu0 %3243
    %3245 = vrot.lane.b32.xlu0 %v3208, 64
    %v3246 = vpop.permute.xlu0 %3245
    %3247 = vrot.lane.b32.xlu0 %v3213, 64
    %v3248 = vpop.permute.xlu0 %3247
    %3249 = vrot.lane.b32.xlu0 %v3218, 64
    %v3250 = vpop.permute.xlu0 %3249
    %vm3251 = vcmask 523264
    %v3252 = vsel %vm3251, %v3220, %v3222
    %v3253 = vsel %vm3251, %v3222, %v3224
    %v3254 = vsel %vm3251, %v3224, %v3226
    %v3255 = vsel %vm3251, %v3228, %v3230
    %v3256 = vsel %vm3251, %v3230, %v3232
    %v3257 = vsel %vm3251, %v3232, %v3234
    %v3258 = vsel %vm3251, %v3236, %v3238
    %v3259 = vsel %vm3251, %v3238, %v3240
    %v3260 = vsel %vm3251, %v3240, %v3242
    %v3261 = vsel %vm3251, %v3244, %v3246
    %v3262 = vsel %vm3251, %v3246, %v3248
    %v3263 = vsel %vm3251, %v3248, %v3250
    %v3272 = vsel %vm3251, 0.0, %v3220
    %v3273 = vsel %vm3251, 0.0, %v3228
    %v3274 = vsel %vm3251, 0.0, %v3236
    %v3275 = vsel %vm3251, 0.0, %v3244
    %v3276 = vsel %vm2555, %v3254, 0.0
    %v3277 = vsel %vm2555, %v3257, 0.0
    %v3278 = vsel %vm2555, %v3260, 0.0
    %v3279 = vsel %vm2555, %v3263, 0.0
    %v3289 = vrot.slane %v3272, 6
    %v3290 = vrot.slane %v3252, 6
    %v3291 = vrot.slane %v3253, 6
    %v3292 = vrot.slane %v3276, 6
    %v3293 = vrot.slane 0.0, 6
    %v3294 = vrot.slane %v3273, 6
    %v3295 = vsel %vm172, %v3289, %v3294
    %v3296 = vrot.slane %v3255, 6
    %v3297 = vsel %vm172, %v3290, %v3296
    %v3298 = vrot.slane %v3256, 6
    %v3299 = vsel %vm172, %v3291, %v3298
    %v3300 = vrot.slane %v3277, 6
    %v3301 = vsel %vm172, %v3292, %v3300
    %v3302 = vsel %vm172, %v3293, %v3293
    %v3303 = vrot.slane %v3274, 6
    %v3304 = vrot.slane %v3258, 6
    %v3305 = vrot.slane %v3259, 6
    %v3306 = vrot.slane %v3278, 6
    %v3307 = vrot.slane %v3275, 6
    %v3308 = vsel %vm172, %v3303, %v3307
    %v3309 = vrot.slane %v3261, 6
    %v3310 = vsel %vm172, %v3304, %v3309
    %v3311 = vrot.slane %v3262, 6
    %v3312 = vsel %vm172, %v3305, %v3311
    %v3313 = vrot.slane %v3279, 6
    %v3314 = vsel %vm172, %v3306, %v3313
    %v3333 = vsel %vm172, 0.0, %v3289
    %v3334 = vsel %vm172, 0.0, %v3290
    %v3335 = vsel %vm172, 0.0, %v3291
    %v3336 = vsel %vm172, 0.0, %v3292
    %v3337 = vsel %vm172, 0.0, %v3293
    %v3338 = vsel %vm172, 0.0, %v3303
    %v3339 = vsel %vm172, 0.0, %v3304
    %v3340 = vsel %vm172, 0.0, %v3305
    %v3341 = vsel %vm172, 0.0, %v3306
    %v3342 = vpack.c.bf16 %v3295, %v3333
    %v3343 = vpack.c.bf16 %v3297, %v3334
    %v3344 = vpack.c.bf16 %v3299, %v3335
    %v3345 = vpack.c.bf16 %v3301, %v3336
    %v3346 = vpack.c.bf16 %v3302, %v3337
    %v3347 = vpack.c.bf16 0.0, 0.0
    %v3348 = vpack.c.bf16 %v3308, %v3338
    %v3349 = vpack.c.bf16 %v3310, %v3339
    %v3350 = vpack.c.bf16 %v3312, %v3340
    %v3351 = vpack.c.bf16 %v3314, %v3341
    %v3361 = vcombine.low %v3342, %v3343
    %v3362 = vcombine.high %v3342, %v3343
    %v3363 = vcombine.low %v3344, %v3345
    %v3364 = vcombine.high %v3344, %v3345
    %v3365 = vcombine.high %v3346, %v3346
    %v3367 = vunpack.c.l.s4 1966171168
    %v3368 = vunpack.c.0.s8 %v3367
    %v3369 = vlaneseq
    %v3370 = vshrl.u32 %v3369, 7
    %v3371 = vsub.s32 %v3368, %v3370
    %v3372 = vrot.slane %v3361, %v3371
    %v3374 = vunpack.c.l.s4 1966171168
    %v3375 = vunpack.c.0.s8 %v3374
    %v3376 = vlaneseq
    %v3377 = vshrl.u32 %v3376, 7
    %v3378 = vsub.s32 %v3375, %v3377
    %v3379 = vrot.slane %v3362, %v3378
    %v3381 = vunpack.c.l.s4 1966171168
    %v3382 = vunpack.c.0.s8 %v3381
    %v3383 = vlaneseq
    %v3384 = vshrl.u32 %v3383, 7
    %v3385 = vsub.s32 %v3382, %v3384
    %v3386 = vrot.slane %v3363, %v3385
    %v3388 = vunpack.c.l.s4 1966171168
    %v3389 = vunpack.c.0.s8 %v3388
    %v3390 = vlaneseq
    %v3391 = vshrl.u32 %v3390, 7
    %v3392 = vsub.s32 %v3389, %v3391
    %v3393 = vrot.slane %v3364, %v3392
    %v3395 = vunpack.c.l.s4 1966171168
    %v3396 = vunpack.c.0.s8 %v3395
    %v3397 = vlaneseq
    %v3398 = vshrl.u32 %v3397, 7
    %v3399 = vsub.s32 %v3396, %v3398
    %v3400 = vrot.slane %v3346, %v3399
    %v3402 = vunpack.c.l.s4 1966171168
    %v3403 = vunpack.c.0.s8 %v3402
    %v3404 = vlaneseq
    %v3405 = vshrl.u32 %v3404, 7
    %v3406 = vsub.s32 %v3403, %v3405
    %v3407 = vrot.slane %v3365, %v3406
    %v3408 = vcombine.low %v3372, %v3386
    %v3409 = vcombine.high %v3372, %v3386
    %v3410 = vcombine.low %v3379, %v3393
    %v3411 = vcombine.high %v3379, %v3393
    %v3412 = vcombine.high %v3400, %v3400
    %v3413 = vcombine.high %v3407, %v3407
    %v3415 = vunpack.c.l.s4 1966171168
    %v3416 = vunpack.c.0.s8 %v3415
    %v3417 = vlaneseq
    %v3418 = vshrl.u32 %v3417, 7
    %v3419 = vsub.s32 %v3416, %v3418
    %v3420 = vrot.slane %v3408, %v3419
    %v3422 = vunpack.c.l.s4 1966171168
    %v3423 = vunpack.c.0.s8 %v3422
    %v3424 = vlaneseq
    %v3425 = vshrl.u32 %v3424, 7
    %v3426 = vsub.s32 %v3423, %v3425
    %v3427 = vrot.slane %v3410, %v3426
    %v3429 = vunpack.c.l.s4 1966171168
    %v3430 = vunpack.c.0.s8 %v3429
    %v3431 = vlaneseq
    %v3432 = vshrl.u32 %v3431, 7
    %v3433 = vsub.s32 %v3430, %v3432
    %v3434 = vrot.slane %v3409, %v3433
    %v3436 = vunpack.c.l.s4 1966171168
    %v3437 = vunpack.c.0.s8 %v3436
    %v3438 = vlaneseq
    %v3439 = vshrl.u32 %v3438, 7
    %v3440 = vsub.s32 %v3437, %v3439
    %v3441 = vrot.slane %v3411, %v3440
    %v3443 = vunpack.c.l.s4 1966171168
    %v3444 = vunpack.c.0.s8 %v3443
    %v3445 = vlaneseq
    %v3446 = vshrl.u32 %v3445, 7
    %v3447 = vsub.s32 %v3444, %v3446
    %v3448 = vrot.slane %v3400, %v3447
    %v3450 = vunpack.c.l.s4 1966171168
    %v3451 = vunpack.c.0.s8 %v3450
    %v3452 = vlaneseq
    %v3453 = vshrl.u32 %v3452, 7
    %v3454 = vsub.s32 %v3451, %v3453
    %v3455 = vrot.slane %v3407, %v3454
    %v3457 = vunpack.c.l.s4 1966171168
    %v3458 = vunpack.c.0.s8 %v3457
    %v3459 = vlaneseq
    %v3460 = vshrl.u32 %v3459, 7
    %v3461 = vsub.s32 %v3458, %v3460
    %v3462 = vrot.slane %v3412, %v3461
    %v3464 = vunpack.c.l.s4 1966171168
    %v3465 = vunpack.c.0.s8 %v3464
    %v3466 = vlaneseq
    %v3467 = vshrl.u32 %v3466, 7
    %v3468 = vsub.s32 %v3465, %v3467
    %v3469 = vrot.slane %v3413, %v3468
    %v3470 = vcombine.low %v3420, %v3448
    %v3471 = vcombine.high %v3420, %v3448
    %v3472 = vcombine.low %v3427, %v3455
    %v3473 = vcombine.high %v3427, %v3455
    %v3474 = vcombine.low %v3434, %v3462
    %v3475 = vcombine.high %v3434, %v3462
    %v3476 = vcombine.low %v3441, %v3469
    %v3477 = vcombine.low %v3348, %v3349
    %v3478 = vcombine.high %v3348, %v3349
    %v3479 = vcombine.low %v3350, %v3351
    %v3480 = vcombine.high %v3350, %v3351
    %v3482 = vunpack.c.l.s4 1966171168
    %v3483 = vunpack.c.0.s8 %v3482
    %v3484 = vlaneseq
    %v3485 = vshrl.u32 %v3484, 7
    %v3486 = vsub.s32 %v3483, %v3485
    %v3487 = vrot.slane %v3477, %v3486
    %v3489 = vunpack.c.l.s4 1966171168
    %v3490 = vunpack.c.0.s8 %v3489
    %v3491 = vlaneseq
    %v3492 = vshrl.u32 %v3491, 7
    %v3493 = vsub.s32 %v3490, %v3492
    %v3494 = vrot.slane %v3478, %v3493
    %v3496 = vunpack.c.l.s4 1966171168
    %v3497 = vunpack.c.0.s8 %v3496
    %v3498 = vlaneseq
    %v3499 = vshrl.u32 %v3498, 7
    %v3500 = vsub.s32 %v3497, %v3499
    %v3501 = vrot.slane %v3479, %v3500
    %v3503 = vunpack.c.l.s4 1966171168
    %v3504 = vunpack.c.0.s8 %v3503
    %v3505 = vlaneseq
    %v3506 = vshrl.u32 %v3505, 7
    %v3507 = vsub.s32 %v3504, %v3506
    %v3508 = vrot.slane %v3480, %v3507
    %v3509 = vcombine.low %v3487, %v3501
    %v3510 = vcombine.high %v3487, %v3501
    %v3511 = vcombine.low %v3494, %v3508
    %v3512 = vcombine.high %v3494, %v3508
    %v3514 = vunpack.c.l.s4 1966171168
    %v3515 = vunpack.c.0.s8 %v3514
    %v3516 = vlaneseq
    %v3517 = vshrl.u32 %v3516, 7
    %v3518 = vsub.s32 %v3515, %v3517
    %v3519 = vrot.slane %v3509, %v3518
    %v3521 = vunpack.c.l.s4 1966171168
    %v3522 = vunpack.c.0.s8 %v3521
    %v3523 = vlaneseq
    %v3524 = vshrl.u32 %v3523, 7
    %v3525 = vsub.s32 %v3522, %v3524
    %v3526 = vrot.slane %v3511, %v3525
    %v3528 = vunpack.c.l.s4 1966171168
    %v3529 = vunpack.c.0.s8 %v3528
    %v3530 = vlaneseq
    %v3531 = vshrl.u32 %v3530, 7
    %v3532 = vsub.s32 %v3529, %v3531
    %v3533 = vrot.slane %v3510, %v3532
    %v3535 = vunpack.c.l.s4 1966171168
    %v3536 = vunpack.c.0.s8 %v3535
    %v3537 = vlaneseq
    %v3538 = vshrl.u32 %v3537, 7
    %v3539 = vsub.s32 %v3536, %v3538
    %v3540 = vrot.slane %v3512, %v3539
    %v3541 = vcombine.low %v3519, %v3448
    %v3542 = vcombine.high %v3519, %v3448
    %v3543 = vcombine.low %v3526, %v3455
    %v3544 = vcombine.high %v3526, %v3455
    %v3545 = vcombine.low %v3533, %v3462
    %v3546 = vcombine.high %v3533, %v3462
    %v3547 = vcombine.low %v3540, %v3469
    %v3548 = vld [vmem:[#allocation7] sm:$0xff]
    %v3549 = vld [vmem:[#allocation7 + $0x8] sm:$0xff]
    %v3550 = vld [vmem:[#allocation7 + $0x10] sm:$0xff]
    %v3551 = vld [vmem:[#allocation7 + $0x18] sm:$0xff]
    %v3552 = vld [vmem:[#allocation7 + $0x20] sm:$0xff]
    %v3553 = vld [vmem:[#allocation7 + $0x28] sm:$0xff]
    %v3554 = vld [vmem:[#allocation7 + $0x30] sm:$0xff]
    %v3555 = vld [vmem:[#allocation7 + $0x38] sm:$0xff]
    %v3556 = vld [vmem:[#allocation7 + $0x40] sm:$0xff]
    %v3557 = vld [vmem:[#allocation7 + $0x48] sm:$0xff]
    %v3558 = vld [vmem:[#allocation7 + $0x50] sm:$0xff]
    %v3559 = vld [vmem:[#allocation7 + $0x58] sm:$0xff]
    %v3560 = vld [vmem:[#allocation7 + $0x60] sm:$0xff]
    %v3561 = vld [vmem:[#allocation7 + $0x68] sm:$0xff]
    %v3562 = vld [vmem:[#allocation7 + $0x70] sm:$0xff]
    %v3563 = vld [vmem:[#allocation7 + $0x78] sm:$0xff]
    %v3564 = vld [vmem:[#allocation7 + $0x80] sm:$0xff]
    %v3565 = vld [vmem:[#allocation7 + $0x88] sm:$0xff]
    %v3566 = vld [vmem:[#allocation7 + $0x90] sm:$0xff]
    %v3567 = vld [vmem:[#allocation7 + $0x98] sm:$0xff]
    %v3568 = vld [vmem:[#allocation7 + $0xa0] sm:$0xff]
    %v3569 = vld [vmem:[#allocation7 + $0xa8] sm:$0xff]
    %v3570 = vld [vmem:[#allocation7 + $0xb0] sm:$0xff]
    %v3571 = vld [vmem:[#allocation7 + $0xb8] sm:$0xff]
    %v3572 = vld [vmem:[#allocation7 + $0xc0] sm:$0xff]
    %v3573 = vld [vmem:[#allocation7 + $0xc8] sm:$0xff]
    %v3574 = vld [vmem:[#allocation7 + $0xd0] sm:$0xff]
    %v3575 = vld [vmem:[#allocation7 + $0xd8] sm:$0xff]
    %v3576 = vld [vmem:[#allocation7 + $0xe0] sm:$0xff]
    %v3577 = vld [vmem:[#allocation7 + $0xe8] sm:$0xff]
    %v3578 = vld [vmem:[#allocation7 + $0xf0] sm:$0xff]
    %v3579 = vld [vmem:[#allocation7 + $0xf8] sm:$0xff]
    %v3580 = vld [vmem:[#allocation7 + $0x100] sm:$0xff]
    %v3581 = vld [vmem:[#allocation7 + $0x108] sm:$0xff]
    %v3582 = vld [vmem:[#allocation7 + $0x110] sm:$0xff]
    %v3583 = vld [vmem:[#allocation7 + $0x118] sm:$0xff]
    %v3584 = vld [vmem:[#allocation7 + $0x120] sm:$0xff]
    %v3585 = vld [vmem:[#allocation7 + $0x128] sm:$0xff]
    %v3586 = vld [vmem:[#allocation7 + $0x130] sm:$0xff]
    %v3587 = vld [vmem:[#allocation7 + $0x138] sm:$0xff]
    %v3588 = vld [vmem:[#allocation7 + $0x140] sm:$0xff]
    %v3589 = vld [vmem:[#allocation7 + $0x148] sm:$0xff]
    %v3590 = vld [vmem:[#allocation7 + $0x150] sm:$0xff]
    %v3591 = vld [vmem:[#allocation7 + $0x158] sm:$0xff]
    %v3592 = vld [vmem:[#allocation7 + $0x160] sm:$0xff]
    %v3593 = vld [vmem:[#allocation7 + $0x168] sm:$0xff]
    %v3594 = vld [vmem:[#allocation7 + $0x170] sm:$0xff]
    %v3595 = vld [vmem:[#allocation7 + $0x178] sm:$0xff]
    %v3596 = vld [vmem:[#allocation7 + $0x180] sm:$0xff]
    %v3597 = vld [vmem:[#allocation7 + $0x188] sm:$0xff]
    %v3598 = vld [vmem:[#allocation7 + $0x190] sm:$0xff]
    %v3599 = vld [vmem:[#allocation7 + $0x198] sm:$0xff]
    %v3600 = vld [vmem:[#allocation7 + $0x1a0] sm:$0xff]
    %v3601 = vld [vmem:[#allocation7 + $0x1a8] sm:$0xff]
    %v3602 = vld [vmem:[#allocation7 + $0x1b0] sm:$0xff]
    %v3603 = vld [vmem:[#allocation7 + $0x1b8] sm:$0xff]
    %v3604 = vld [vmem:[#allocation7 + $0x1c0] sm:$0xff]
    %v3605 = vld [vmem:[#allocation7 + $0x1c8] sm:$0xff]
    %v3606 = vld [vmem:[#allocation7 + $0x1d0] sm:$0xff]
    %v3607 = vld [vmem:[#allocation7 + $0x1d8] sm:$0xff]
    %v3608 = vld [vmem:[#allocation7 + $0x1e0] sm:$0xff]
    %v3609 = vld [vmem:[#allocation7 + $0x1e8] sm:$0xff]
    %v3610 = vld [vmem:[#allocation7 + $0x1f0] sm:$0xff]
    %v3611 = vld [vmem:[#allocation7 + $0x1f8] sm:$0xff]
    %v3612 = vld [vmem:[#allocation7 + $0x200] sm:$0xff]
    %v3613 = vld [vmem:[#allocation7 + $0x208] sm:$0xff]
    %v3614 = vld [vmem:[#allocation7 + $0x210] sm:$0xff]
    %v3615 = vld [vmem:[#allocation7 + $0x218] sm:$0xff]
    %v3616 = vld [vmem:[#allocation7 + $0x220] sm:$0xff]
    %v3617 = vld [vmem:[#allocation7 + $0x228] sm:$0xff]
    %v3618 = vld [vmem:[#allocation7 + $0x230] sm:$0xff]
    %v3619 = vld [vmem:[#allocation7 + $0x238] sm:$0xff]
    %v3620 = vld [vmem:[#allocation7 + $0x240] sm:$0xff]
    %v3621 = vld [vmem:[#allocation7 + $0x248] sm:$0xff]
    %v3622 = vld [vmem:[#allocation7 + $0x250] sm:$0xff]
    %v3623 = vld [vmem:[#allocation7 + $0x258] sm:$0xff]
    %v3624 = vld [vmem:[#allocation7 + $0x260] sm:$0xff]
    %v3625 = vld [vmem:[#allocation7 + $0x268] sm:$0xff]
    %v3626 = vld [vmem:[#allocation7 + $0x270] sm:$0xff]
    %v3627 = vld [vmem:[#allocation7 + $0x278] sm:$0xff]
    %v3628 = vld [vmem:[#allocation7 + $0x280] sm:$0xff]
    %v3629 = vld [vmem:[#allocation7 + $0x288] sm:$0xff]
    %v3630 = vld [vmem:[#allocation7 + $0x290] sm:$0xff]
    %v3631 = vld [vmem:[#allocation7 + $0x298] sm:$0xff]
    %v3632 = vld [vmem:[#allocation7 + $0x2a0] sm:$0xff]
    %v3633 = vld [vmem:[#allocation7 + $0x2a8] sm:$0xff]
    %v3634 = vld [vmem:[#allocation7 + $0x2b0] sm:$0xff]
    %v3635 = vld [vmem:[#allocation7 + $0x2b8] sm:$0xff]
    %v3636 = vld [vmem:[#allocation7 + $0x2c0] sm:$0xff]
    %v3637 = vld [vmem:[#allocation7 + $0x2c8] sm:$0xff]
    %v3638 = vld [vmem:[#allocation7 + $0x2d0] sm:$0xff]
    %v3639 = vld [vmem:[#allocation7 + $0x2d8] sm:$0xff]
    %v3640 = vld [vmem:[#allocation7 + $0x2e0] sm:$0xff]
    %v3641 = vld [vmem:[#allocation7 + $0x2e8] sm:$0xff]
    %v3642 = vld [vmem:[#allocation7 + $0x2f0] sm:$0xff]
    %v3643 = vld [vmem:[#allocation7 + $0x2f8] sm:$0xff]
    %v3644 = vld [vmem:[#allocation7 + $0x300] sm:$0xff]
    %v3645 = vld [vmem:[#allocation7 + $0x308] sm:$0xff]
    %v3646 = vld [vmem:[#allocation7 + $0x310] sm:$0xff]
    %v3647 = vld [vmem:[#allocation7 + $0x318] sm:$0xff]
    %v3648 = vld [vmem:[#allocation7 + $0x320] sm:$0xff]
    %v3649 = vld [vmem:[#allocation7 + $0x328] sm:$0xff]
    %v3650 = vld [vmem:[#allocation7 + $0x330] sm:$0xff]
    %v3651 = vld [vmem:[#allocation7 + $0x338] sm:$0xff]
    %v3652 = vld [vmem:[#allocation7 + $0x340] sm:$0xff]
    %v3653 = vld [vmem:[#allocation7 + $0x348] sm:$0xff]
    %v3654 = vld [vmem:[#allocation7 + $0x350] sm:$0xff]
    %v3655 = vld [vmem:[#allocation7 + $0x358] sm:$0xff]
    %v3656 = vld [vmem:[#allocation7 + $0x360] sm:$0xff]
    %v3657 = vld [vmem:[#allocation7 + $0x368] sm:$0xff]
    %v3658 = vld [vmem:[#allocation7 + $0x370] sm:$0xff]
    %v3659 = vld [vmem:[#allocation7 + $0x378] sm:$0xff]
    %v3660 = vld [vmem:[#allocation7 + $0x380] sm:$0xff]
    %v3661 = vld [vmem:[#allocation7 + $0x388] sm:$0xff]
    %v3662 = vld [vmem:[#allocation7 + $0x390] sm:$0xff]
    %v3663 = vld [vmem:[#allocation7 + $0x398] sm:$0xff]
    %v3664 = vld [vmem:[#allocation7 + $0x3a0] sm:$0xff]
    %v3665 = vld [vmem:[#allocation7 + $0x3a8] sm:$0xff]
    %v3666 = vld [vmem:[#allocation7 + $0x3b0] sm:$0xff]
    %v3667 = vld [vmem:[#allocation7 + $0x3b8] sm:$0xff]
    %v3668 = vld [vmem:[#allocation7 + $0x3c0] sm:$0xff]
    %v3669 = vld [vmem:[#allocation7 + $0x3c8] sm:$0xff]
    %v3670 = vld [vmem:[#allocation7 + $0x3d0] sm:$0xff]
    %v3671 = vld [vmem:[#allocation7 + $0x3d8] sm:$0xff]
    %v3672 = vld [vmem:[#allocation7 + $0x3e0] sm:$0xff]
    %v3673 = vld [vmem:[#allocation7 + $0x3e8] sm:$0xff]
    %v3674 = vld [vmem:[#allocation7 + $0x3f0] sm:$0xff]
    %v3675 = vld [vmem:[#allocation7 + $0x3f8] sm:$0xff]
    %v3676 = vld [vmem:[#allocation7 + $0x400] sm:$0xff]
    %v3677 = vld [vmem:[#allocation7 + $0x408] sm:$0xff]
    %v3678 = vld [vmem:[#allocation7 + $0x410] sm:$0xff]
    %v3679 = vld [vmem:[#allocation7 + $0x418] sm:$0xff]
    %v3680 = vld [vmem:[#allocation7 + $0x420] sm:$0xff]
    %v3681 = vld [vmem:[#allocation7 + $0x428] sm:$0xff]
    %v3682 = vld [vmem:[#allocation7 + $0x430] sm:$0xff]
    %v3683 = vld [vmem:[#allocation7 + $0x438] sm:$0xff]
    %v3684 = vld [vmem:[#allocation7 + $0x440] sm:$0xff]
    %v3685 = vld [vmem:[#allocation7 + $0x448] sm:$0xff]
    %v3686 = vld [vmem:[#allocation7 + $0x450] sm:$0xff]
    %v3687 = vld [vmem:[#allocation7 + $0x458] sm:$0xff]
    %v3688 = vcombine.high %v3441, %v3469
    %v3689 = vcombine.high %v3540, %v3469
    %vm3690 = vsmask.f32 1284
    %vm3691 = vmor %vm1296, %vm3690
    %vm3692 = vmor %vm3691, %vm1297
    %vm3693 = vsmask.f32 3340
    %vm3694 = vmor %vm3692, %vm3693
    %vm3695 = vmor %vm3694, %vm1299
    %vm3696 = vsmask.f32 5396
    %vm3697 = vmor %vm3695, %vm3696
    %vm3698 = vmor %vm3697, %vm1301
    %vm3699 = vsmask.f32 7452
    %vm3700 = vmor %vm3698, %vm3699
    %v3702 = vshrl.u32 %v3470, 16
    %v3704 = vrot.slane %v3702, 7
    %v3705 = vrot.slane %v3704, 1
    %v3707 = vshll.u32 %v3474, 16
    %v3709 = vsel %vm3700, %v3705, %v3707
    %v3710 = vshrl.u32 %v3474, 16
    %v3712 = vrot.slane %v3710, 7
    %v3713 = vrot.slane %v3712, 1
    %v3715 = vshll.u32 %v3471, 16
    %v3717 = vsel %vm3700, %v3713, %v3715
    %v3718 = vshrl.u32 %v3471, 16
    %v3720 = vrot.slane %v3718, 7
    %v3721 = vrot.slane %v3720, 1
    %v3723 = vshll.u32 %v3475, 16
    %v3725 = vsel %vm3700, %v3721, %v3723
    %v3726 = vshrl.u32 %v3475, 16
    %v3728 = vrot.slane %v3726, 7
    %v3729 = vrot.slane %v3728, 1
    %v3731 = vshll.u32 %v3472, 16
    %v3733 = vsel %vm3700, %v3729, %v3731
    %v3734 = vshrl.u32 %v3472, 16
    %v3736 = vrot.slane %v3734, 7
    %v3737 = vrot.slane %v3736, 1
    %v3739 = vshll.u32 %v3476, 16
    %v3741 = vsel %vm3700, %v3737, %v3739
    %v3742 = vshrl.u32 %v3476, 16
    %v3744 = vrot.slane %v3742, 7
    %v3745 = vrot.slane %v3744, 1
    %v3747 = vshll.u32 %v3473, 16
    %v3749 = vsel %vm3700, %v3745, %v3747
    %v3750 = vshrl.u32 %v3473, 16
    %v3752 = vrot.slane %v3750, 7
    %v3753 = vrot.slane %v3752, 1
    %v3755 = vshll.u32 %v3688, 16
    %v3757 = vsel %vm3700, %v3753, %v3755
    %v3759 = vshrl.u32 %v3541, 16
    %v3761 = vrot.slane %v3759, 7
    %v3762 = vrot.slane %v3761, 1
    %v3764 = vshll.u32 %v3545, 16
    %v3766 = vsel %vm3700, %v3762, %v3764
    %v3767 = vshrl.u32 %v3545, 16
    %v3769 = vrot.slane %v3767, 7
    %v3770 = vrot.slane %v3769, 1
    %v3772 = vshll.u32 %v3542, 16
    %v3774 = vsel %vm3700, %v3770, %v3772
    %v3775 = vshrl.u32 %v3542, 16
    %v3777 = vrot.slane %v3775, 7
    %v3778 = vrot.slane %v3777, 1
    %v3780 = vshll.u32 %v3546, 16
    %v3782 = vsel %vm3700, %v3778, %v3780
    %v3783 = vshrl.u32 %v3546, 16
    %v3785 = vrot.slane %v3783, 7
    %v3786 = vrot.slane %v3785, 1
    %v3788 = vshll.u32 %v3543, 16
    %v3790 = vsel %vm3700, %v3786, %v3788
    %v3791 = vshrl.u32 %v3543, 16
    %v3793 = vrot.slane %v3791, 7
    %v3794 = vrot.slane %v3793, 1
    %v3796 = vshll.u32 %v3547, 16
    %v3798 = vsel %vm3700, %v3794, %v3796
    %v3799 = vshrl.u32 %v3547, 16
    %v3801 = vrot.slane %v3799, 7
    %v3802 = vrot.slane %v3801, 1
    %v3804 = vshll.u32 %v3544, 16
    %v3806 = vsel %vm3700, %v3802, %v3804
    %v3807 = vshrl.u32 %v3544, 16
    %v3809 = vrot.slane %v3807, 7
    %v3810 = vrot.slane %v3809, 1
    %v3812 = vshll.u32 %v3689, 16
    %v3814 = vsel %vm3700, %v3810, %v3812
    %s3815 = scalar_lea.vmem [#allocation7], 1120
    %v3816 = vld [vmem:[%s3815] sm:$0xff]
    %v3817 = vld [vmem:[%s3815 + $0x8] sm:$0xff]
    %v3818 = vld [vmem:[%s3815 + $0x10] sm:$0xff]
    %v3819 = vld [vmem:[%s3815 + $0x18] sm:$0xff]
    %v3820 = vld [vmem:[%s3815 + $0x20] sm:$0xff]
    %v3821 = vld [vmem:[%s3815 + $0x28] sm:$0xff]
    %v3822 = vld [vmem:[%s3815 + $0x30] sm:$0xff]
    %v3823 = vld [vmem:[%s3815 + $0x38] sm:$0xff]
    %v3824 = vld [vmem:[%s3815 + $0x40] sm:$0xff]
    %v3825 = vld [vmem:[%s3815 + $0x48] sm:$0xff]
    %v3826 = vld [vmem:[%s3815 + $0x50] sm:$0xff]
    %v3827 = vld [vmem:[%s3815 + $0x58] sm:$0xff]
    %v3828 = vld [vmem:[%s3815 + $0x60] sm:$0xff]
    %v3829 = vld [vmem:[%s3815 + $0x68] sm:$0xff]
    %v3830 = vld [vmem:[%s3815 + $0x70] sm:$0xff]
    %v3831 = vld [vmem:[%s3815 + $0x78] sm:$0xff]
    %v3832 = vld [vmem:[%s3815 + $0x80] sm:$0xff]
    %v3833 = vld [vmem:[%s3815 + $0x88] sm:$0xff]
    %v3834 = vld [vmem:[%s3815 + $0x90] sm:$0xff]
    %v3835 = vld [vmem:[%s3815 + $0x98] sm:$0xff]
    %v3836 = vld [vmem:[%s3815 + $0xa0] sm:$0xff]
    %v3837 = vld [vmem:[%s3815 + $0xa8] sm:$0xff]
    %v3838 = vld [vmem:[%s3815 + $0xb0] sm:$0xff]
    %v3839 = vld [vmem:[%s3815 + $0xb8] sm:$0xff]
    %v3840 = vld [vmem:[%s3815 + $0xc0] sm:$0xff]
    %v3841 = vld [vmem:[%s3815 + $0xc8] sm:$0xff]
    %v3842 = vld [vmem:[%s3815 + $0xd0] sm:$0xff]
    %v3843 = vld [vmem:[%s3815 + $0xd8] sm:$0xff]
    %v3844 = vld [vmem:[%s3815 + $0xe0] sm:$0xff]
    %v3845 = vld [vmem:[%s3815 + $0xe8] sm:$0xff]
    %v3846 = vld [vmem:[%s3815 + $0xf0] sm:$0xff]
    %v3847 = vld [vmem:[%s3815 + $0xf8] sm:$0xff]
    %v3848 = vld [vmem:[%s3815 + $0x100] sm:$0xff]
    %v3849 = vld [vmem:[%s3815 + $0x108] sm:$0xff]
    %v3850 = vld [vmem:[%s3815 + $0x110] sm:$0xff]
    %v3851 = vld [vmem:[%s3815 + $0x118] sm:$0xff]
    %v3852 = vld [vmem:[%s3815 + $0x120] sm:$0xff]
    %v3853 = vld [vmem:[%s3815 + $0x128] sm:$0xff]
    %v3854 = vld [vmem:[%s3815 + $0x130] sm:$0xff]
    %v3855 = vld [vmem:[%s3815 + $0x138] sm:$0xff]
    %v3856 = vld [vmem:[%s3815 + $0x140] sm:$0xff]
    %v3857 = vld [vmem:[%s3815 + $0x148] sm:$0xff]
    %v3858 = vld [vmem:[%s3815 + $0x150] sm:$0xff]
    %v3859 = vld [vmem:[%s3815 + $0x158] sm:$0xff]
    %v3860 = vld [vmem:[%s3815 + $0x160] sm:$0xff]
    %v3861 = vld [vmem:[%s3815 + $0x168] sm:$0xff]
    %v3862 = vld [vmem:[%s3815 + $0x170] sm:$0xff]
    %v3863 = vld [vmem:[%s3815 + $0x178] sm:$0xff]
    %v3864 = vld [vmem:[%s3815 + $0x180] sm:$0xff]
    %v3865 = vld [vmem:[%s3815 + $0x188] sm:$0xff]
    %v3866 = vld [vmem:[%s3815 + $0x190] sm:$0xff]
    %v3867 = vld [vmem:[%s3815 + $0x198] sm:$0xff]
    %v3868 = vld [vmem:[%s3815 + $0x1a0] sm:$0xff]
    %v3869 = vld [vmem:[%s3815 + $0x1a8] sm:$0xff]
    %v3870 = vld [vmem:[%s3815 + $0x1b0] sm:$0xff]
    %v3871 = vld [vmem:[%s3815 + $0x1b8] sm:$0xff]
    %v3872 = vld [vmem:[%s3815 + $0x1c0] sm:$0xff]
    %v3873 = vld [vmem:[%s3815 + $0x1c8] sm:$0xff]
    %v3874 = vld [vmem:[%s3815 + $0x1d0] sm:$0xff]
    %v3875 = vld [vmem:[%s3815 + $0x1d8] sm:$0xff]
    %v3876 = vld [vmem:[%s3815 + $0x1e0] sm:$0xff]
    %v3877 = vld [vmem:[%s3815 + $0x1e8] sm:$0xff]
    %v3878 = vld [vmem:[%s3815 + $0x1f0] sm:$0xff]
    %v3879 = vld [vmem:[%s3815 + $0x1f8] sm:$0xff]
    %v3880 = vld [vmem:[%s3815 + $0x200] sm:$0xff]
    %v3881 = vld [vmem:[%s3815 + $0x208] sm:$0xff]
    %v3882 = vld [vmem:[%s3815 + $0x210] sm:$0xff]
    %v3883 = vld [vmem:[%s3815 + $0x218] sm:$0xff]
    %v3884 = vld [vmem:[%s3815 + $0x220] sm:$0xff]
    %v3885 = vld [vmem:[%s3815 + $0x228] sm:$0xff]
    %v3886 = vld [vmem:[%s3815 + $0x230] sm:$0xff]
    %v3887 = vld [vmem:[%s3815 + $0x238] sm:$0xff]
    %v3888 = vld [vmem:[%s3815 + $0x240] sm:$0xff]
    %v3889 = vld [vmem:[%s3815 + $0x248] sm:$0xff]
    %v3890 = vld [vmem:[%s3815 + $0x250] sm:$0xff]
    %v3891 = vld [vmem:[%s3815 + $0x258] sm:$0xff]
    %v3892 = vld [vmem:[%s3815 + $0x260] sm:$0xff]
    %v3893 = vld [vmem:[%s3815 + $0x268] sm:$0xff]
    %v3894 = vld [vmem:[%s3815 + $0x270] sm:$0xff]
    %v3895 = vld [vmem:[%s3815 + $0x278] sm:$0xff]
    %v3896 = vld [vmem:[%s3815 + $0x280] sm:$0xff]
    %v3897 = vld [vmem:[%s3815 + $0x288] sm:$0xff]
    %v3898 = vld [vmem:[%s3815 + $0x290] sm:$0xff]
    %v3899 = vld [vmem:[%s3815 + $0x298] sm:$0xff]
    %v3900 = vld [vmem:[%s3815 + $0x2a0] sm:$0xff]
    %v3901 = vld [vmem:[%s3815 + $0x2a8] sm:$0xff]
    %v3902 = vld [vmem:[%s3815 + $0x2b0] sm:$0xff]
    %v3903 = vld [vmem:[%s3815 + $0x2b8] sm:$0xff]
    %v3904 = vld [vmem:[%s3815 + $0x2c0] sm:$0xff]
    %v3905 = vld [vmem:[%s3815 + $0x2c8] sm:$0xff]
    %v3906 = vld [vmem:[%s3815 + $0x2d0] sm:$0xff]
    %v3907 = vld [vmem:[%s3815 + $0x2d8] sm:$0xff]
    %v3908 = vld [vmem:[%s3815 + $0x2e0] sm:$0xff]
    %v3909 = vld [vmem:[%s3815 + $0x2e8] sm:$0xff]
    %v3910 = vld [vmem:[%s3815 + $0x2f0] sm:$0xff]
    %v3911 = vld [vmem:[%s3815 + $0x2f8] sm:$0xff]
    %v3912 = vld [vmem:[%s3815 + $0x300] sm:$0xff]
    %v3913 = vld [vmem:[%s3815 + $0x308] sm:$0xff]
    %v3914 = vld [vmem:[%s3815 + $0x310] sm:$0xff]
    %v3915 = vld [vmem:[%s3815 + $0x318] sm:$0xff]
    %v3916 = vld [vmem:[%s3815 + $0x320] sm:$0xff]
    %v3917 = vld [vmem:[%s3815 + $0x328] sm:$0xff]
    %v3918 = vld [vmem:[%s3815 + $0x330] sm:$0xff]
    %v3919 = vld [vmem:[%s3815 + $0x338] sm:$0xff]
    %v3920 = vld [vmem:[%s3815 + $0x340] sm:$0xff]
    %v3921 = vld [vmem:[%s3815 + $0x348] sm:$0xff]
    %v3922 = vld [vmem:[%s3815 + $0x350] sm:$0xff]
    %v3923 = vld [vmem:[%s3815 + $0x358] sm:$0xff]
    %v3924 = vld [vmem:[%s3815 + $0x360] sm:$0xff]
    %v3925 = vld [vmem:[%s3815 + $0x368] sm:$0xff]
    %v3926 = vld [vmem:[%s3815 + $0x370] sm:$0xff]
    %v3927 = vld [vmem:[%s3815 + $0x378] sm:$0xff]
    %v3928 = vld [vmem:[%s3815 + $0x380] sm:$0xff]
    %v3929 = vld [vmem:[%s3815 + $0x388] sm:$0xff]
    %v3930 = vld [vmem:[%s3815 + $0x390] sm:$0xff]
    %v3931 = vld [vmem:[%s3815 + $0x398] sm:$0xff]
    %v3932 = vld [vmem:[%s3815 + $0x3a0] sm:$0xff]
    %v3933 = vld [vmem:[%s3815 + $0x3a8] sm:$0xff]
    %v3934 = vld [vmem:[%s3815 + $0x3b0] sm:$0xff]
    %v3935 = vld [vmem:[%s3815 + $0x3b8] sm:$0xff]
    %v3936 = vld [vmem:[%s3815 + $0x3c0] sm:$0xff]
    %v3937 = vld [vmem:[%s3815 + $0x3c8] sm:$0xff]
    %v3938 = vld [vmem:[%s3815 + $0x3d0] sm:$0xff]
    %v3939 = vld [vmem:[%s3815 + $0x3d8] sm:$0xff]
    %v3940 = vld [vmem:[%s3815 + $0x3e0] sm:$0xff]
    %v3941 = vld [vmem:[%s3815 + $0x3e8] sm:$0xff]
    %v3942 = vld [vmem:[%s3815 + $0x3f0] sm:$0xff]
    %v3943 = vld [vmem:[%s3815 + $0x3f8] sm:$0xff]
    %v3944 = vld [vmem:[%s3815 + $0x400] sm:$0xff]
    %v3945 = vld [vmem:[%s3815 + $0x408] sm:$0xff]
    %v3946 = vld [vmem:[%s3815 + $0x410] sm:$0xff]
    %v3947 = vld [vmem:[%s3815 + $0x418] sm:$0xff]
    %v3948 = vld [vmem:[%s3815 + $0x420] sm:$0xff]
    %v3949 = vld [vmem:[%s3815 + $0x428] sm:$0xff]
    %v3950 = vld [vmem:[%s3815 + $0x430] sm:$0xff]
    %v3951 = vld [vmem:[%s3815 + $0x438] sm:$0xff]
    %v3952 = vld [vmem:[%s3815 + $0x440] sm:$0xff]
    %v3953 = vld [vmem:[%s3815 + $0x448] sm:$0xff]
    %v3954 = vld [vmem:[%s3815 + $0x450] sm:$0xff]
    %v3955 = vld [vmem:[%s3815 + $0x458] sm:$0xff]
    %v3956 = vcombine.low %v3709, %v3717
    %v3957 = vcombine.high %v3709, %v3717
    %v3958 = vcombine.low %v3725, %v3733
    %v3959 = vcombine.high %v3725, %v3733
    %v3960 = vcombine.low %v3741, %v3749
    %v3961 = vcombine.high %v3741, %v3749
    %v3962 = vcombine.low %v3757, %v3766
    %v3963 = vcombine.high %v3757, %v3766
    %v3965 = vunpack.c.l.s4 1966171168
    %v3966 = vunpack.c.0.s8 %v3965
    %v3967 = vlaneseq
    %v3968 = vshrl.u32 %v3967, 7
    %v3969 = vsub.s32 %v3966, %v3968
    %v3970 = vrot.slane %v3956, %v3969
    %v3972 = vunpack.c.l.s4 1966171168
    %v3973 = vunpack.c.0.s8 %v3972
    %v3974 = vlaneseq
    %v3975 = vshrl.u32 %v3974, 7
    %v3976 = vsub.s32 %v3973, %v3975
    %v3977 = vrot.slane %v3957, %v3976
    %v3979 = vunpack.c.l.s4 1966171168
    %v3980 = vunpack.c.0.s8 %v3979
    %v3981 = vlaneseq
    %v3982 = vshrl.u32 %v3981, 7
    %v3983 = vsub.s32 %v3980, %v3982
    %v3984 = vrot.slane %v3958, %v3983
    %v3986 = vunpack.c.l.s4 1966171168
    %v3987 = vunpack.c.0.s8 %v3986
    %v3988 = vlaneseq
    %v3989 = vshrl.u32 %v3988, 7
    %v3990 = vsub.s32 %v3987, %v3989
    %v3991 = vrot.slane %v3959, %v3990
    %v3993 = vunpack.c.l.s4 1966171168
    %v3994 = vunpack.c.0.s8 %v3993
    %v3995 = vlaneseq
    %v3996 = vshrl.u32 %v3995, 7
    %v3997 = vsub.s32 %v3994, %v3996
    %v3998 = vrot.slane %v3960, %v3997
    %v4000 = vunpack.c.l.s4 1966171168
    %v4001 = vunpack.c.0.s8 %v4000
    %v4002 = vlaneseq
    %v4003 = vshrl.u32 %v4002, 7
    %v4004 = vsub.s32 %v4001, %v4003
    %v4005 = vrot.slane %v3961, %v4004
    %v4007 = vunpack.c.l.s4 1966171168
    %v4008 = vunpack.c.0.s8 %v4007
    %v4009 = vlaneseq
    %v4010 = vshrl.u32 %v4009, 7
    %v4011 = vsub.s32 %v4008, %v4010
    %v4012 = vrot.slane %v3962, %v4011
    %v4014 = vunpack.c.l.s4 1966171168
    %v4015 = vunpack.c.0.s8 %v4014
    %v4016 = vlaneseq
    %v4017 = vshrl.u32 %v4016, 7
    %v4018 = vsub.s32 %v4015, %v4017
    %v4019 = vrot.slane %v3963, %v4018
    %v4020 = vcombine.low %v3970, %v3984
    %v4021 = vcombine.high %v3970, %v3984
    %v4022 = vcombine.low %v3977, %v3991
    %v4023 = vcombine.low %v3998, %v4012
    %v4024 = vcombine.high %v3998, %v4012
    %v4025 = vcombine.low %v4005, %v4019
    %v4027 = vunpack.c.l.s4 1966171168
    %v4028 = vunpack.c.0.s8 %v4027
    %v4029 = vlaneseq
    %v4030 = vshrl.u32 %v4029, 7
    %v4031 = vsub.s32 %v4028, %v4030
    %v4032 = vrot.slane %v4020, %v4031
    %v4034 = vunpack.c.l.s4 1966171168
    %v4035 = vunpack.c.0.s8 %v4034
    %v4036 = vlaneseq
    %v4037 = vshrl.u32 %v4036, 7
    %v4038 = vsub.s32 %v4035, %v4037
    %v4039 = vrot.slane %v4022, %v4038
    %v4041 = vunpack.c.l.s4 1966171168
    %v4042 = vunpack.c.0.s8 %v4041
    %v4043 = vlaneseq
    %v4044 = vshrl.u32 %v4043, 7
    %v4045 = vsub.s32 %v4042, %v4044
    %v4046 = vrot.slane %v4021, %v4045
    %v4048 = vunpack.c.l.s4 1966171168
    %v4049 = vunpack.c.0.s8 %v4048
    %v4050 = vlaneseq
    %v4051 = vshrl.u32 %v4050, 7
    %v4052 = vsub.s32 %v4049, %v4051
    %v4053 = vrot.slane %v4023, %v4052
    %v4055 = vunpack.c.l.s4 1966171168
    %v4056 = vunpack.c.0.s8 %v4055
    %v4057 = vlaneseq
    %v4058 = vshrl.u32 %v4057, 7
    %v4059 = vsub.s32 %v4056, %v4058
    %v4060 = vrot.slane %v4025, %v4059
    %v4062 = vunpack.c.l.s4 1966171168
    %v4063 = vunpack.c.0.s8 %v4062
    %v4064 = vlaneseq
    %v4065 = vshrl.u32 %v4064, 7
    %v4066 = vsub.s32 %v4063, %v4065
    %v4067 = vrot.slane %v4024, %v4066
    %v4068 = vcombine.low %v4032, %v4053
    %v4069 = vcombine.high %v4032, %v4053
    %v4070 = vcombine.low %v4039, %v4060
    %v4071 = vcombine.low %v4046, %v4067
    %v4072 = vcombine.high %v4046, %v4067
    %v4073 = vcombine.low %v3774, %v3782
    %v4074 = vcombine.high %v3774, %v3782
    %v4075 = vcombine.low %v3790, %v3798
    %v4076 = vcombine.high %v3790, %v3798
    %v4077 = vcombine.low %v3806, %v3814
    %v4078 = vcombine.high %v3806, %v3814
    %v4080 = vunpack.c.l.s4 1966171168
    %v4081 = vunpack.c.0.s8 %v4080
    %v4082 = vlaneseq
    %v4083 = vshrl.u32 %v4082, 7
    %v4084 = vsub.s32 %v4081, %v4083
    %v4085 = vrot.slane %v4073, %v4084
    %v4087 = vunpack.c.l.s4 1966171168
    %v4088 = vunpack.c.0.s8 %v4087
    %v4089 = vlaneseq
    %v4090 = vshrl.u32 %v4089, 7
    %v4091 = vsub.s32 %v4088, %v4090
    %v4092 = vrot.slane %v4074, %v4091
    %v4094 = vunpack.c.l.s4 1966171168
    %v4095 = vunpack.c.0.s8 %v4094
    %v4096 = vlaneseq
    %v4097 = vshrl.u32 %v4096, 7
    %v4098 = vsub.s32 %v4095, %v4097
    %v4099 = vrot.slane %v4075, %v4098
    %v4101 = vunpack.c.l.s4 1966171168
    %v4102 = vunpack.c.0.s8 %v4101
    %v4103 = vlaneseq
    %v4104 = vshrl.u32 %v4103, 7
    %v4105 = vsub.s32 %v4102, %v4104
    %v4106 = vrot.slane %v4076, %v4105
    %v4108 = vunpack.c.l.s4 1966171168
    %v4109 = vunpack.c.0.s8 %v4108
    %v4110 = vlaneseq
    %v4111 = vshrl.u32 %v4110, 7
    %v4112 = vsub.s32 %v4109, %v4111
    %v4113 = vrot.slane %v4077, %v4112
    %v4115 = vunpack.c.l.s4 1966171168
    %v4116 = vunpack.c.0.s8 %v4115
    %v4117 = vlaneseq
    %v4118 = vshrl.u32 %v4117, 7
    %v4119 = vsub.s32 %v4116, %v4118
    %v4120 = vrot.slane %v4078, %v4119
    %v4121 = vcombine.low %v4085, %v4099
    %v4122 = vcombine.high %v4085, %v4099
    %v4123 = vcombine.low %v4092, %v4106
    %v4124 = vcombine.high %v4113, %v4113
    %v4126 = vunpack.c.l.s4 1966171168
    %v4127 = vunpack.c.0.s8 %v4126
    %v4128 = vlaneseq
    %v4129 = vshrl.u32 %v4128, 7
    %v4130 = vsub.s32 %v4127, %v4129
    %v4131 = vrot.slane %v4121, %v4130
    %v4133 = vunpack.c.l.s4 1966171168
    %v4134 = vunpack.c.0.s8 %v4133
    %v4135 = vlaneseq
    %v4136 = vshrl.u32 %v4135, 7
    %v4137 = vsub.s32 %v4134, %v4136
    %v4138 = vrot.slane %v4123, %v4137
    %v4140 = vunpack.c.l.s4 1966171168
    %v4141 = vunpack.c.0.s8 %v4140
    %v4142 = vlaneseq
    %v4143 = vshrl.u32 %v4142, 7
    %v4144 = vsub.s32 %v4141, %v4143
    %v4145 = vrot.slane %v4122, %v4144
    %v4147 = vunpack.c.l.s4 1966171168
    %v4148 = vunpack.c.0.s8 %v4147
    %v4149 = vlaneseq
    %v4150 = vshrl.u32 %v4149, 7
    %v4151 = vsub.s32 %v4148, %v4150
    %v4152 = vrot.slane %v4113, %v4151
    %v4154 = vunpack.c.l.s4 1966171168
    %v4155 = vunpack.c.0.s8 %v4154
    %v4156 = vlaneseq
    %v4157 = vshrl.u32 %v4156, 7
    %v4158 = vsub.s32 %v4155, %v4157
    %v4159 = vrot.slane %v4120, %v4158
    %v4161 = vunpack.c.l.s4 1966171168
    %v4162 = vunpack.c.0.s8 %v4161
    %v4163 = vlaneseq
    %v4164 = vshrl.u32 %v4163, 7
    %v4165 = vsub.s32 %v4162, %v4164
    %v4166 = vrot.slane %v4124, %v4165
    %v4167 = vcombine.low %v4131, %v4152
    %v4168 = vcombine.high %v4131, %v4152
    %v4169 = vcombine.low %v4138, %v4159
    %v4170 = vcombine.low %v4145, %v4166
    %v4171 = vcombine.high %v4145, %v4166
    %v4320 = vunpack.c.l.b16 %v3816
    %v4321 = vunpack.c.h.b16 %v3816
    %v4322 = vunpack.c.l.b16 %v3817
    %v4323 = vunpack.c.h.b16 %v3817
    %v4324 = vunpack.c.l.b16 %v3818
    %v4325 = vunpack.c.h.b16 %v3818
    %v4326 = vunpack.c.l.b16 %v3819
    %v4327 = vunpack.c.h.b16 %v3819
    %v4328 = vunpack.c.l.b16 %v3820
    %v4329 = vunpack.c.h.b16 %v3820
    %v4330 = vunpack.c.l.b16 %v3821
    %v4331 = vunpack.c.h.b16 %v3821
    %v4332 = vunpack.c.l.b16 %v3822
    %v4333 = vunpack.c.h.b16 %v3822
    %v4334 = vunpack.c.l.b16 %v3823
    %v4335 = vunpack.c.h.b16 %v3823
    %v4336 = vunpack.c.l.b16 %v3824
    %v4337 = vunpack.c.h.b16 %v3824
    %v4338 = vunpack.c.l.b16 %v3825
    %v4339 = vunpack.c.h.b16 %v3825
    %v4340 = vunpack.c.l.b16 %v3826
    %v4341 = vunpack.c.h.b16 %v3826
    %v4342 = vunpack.c.l.b16 %v3827
    %v4343 = vunpack.c.h.b16 %v3827
    %v4344 = vunpack.c.l.b16 %v3828
    %v4345 = vunpack.c.h.b16 %v3828
    %v4346 = vunpack.c.l.b16 %v3829
    %v4347 = vunpack.c.h.b16 %v3829
    %v4348 = vunpack.c.l.b16 %v3830
    %v4349 = vunpack.c.h.b16 %v3830
    %v4350 = vunpack.c.l.b16 %v3831
    %v4351 = vunpack.c.h.b16 %v3831
    %v4352 = vunpack.c.l.b16 %v3832
    %v4353 = vunpack.c.h.b16 %v3832
    %v4354 = vunpack.c.l.b16 %v3833
    %v4355 = vunpack.c.h.b16 %v3833
    %v4356 = vunpack.c.l.b16 %v3834
    %v4357 = vunpack.c.h.b16 %v3834
    %v4358 = vunpack.c.l.b16 %v3835
    %v4359 = vunpack.c.h.b16 %v3835
    %v4360 = vunpack.c.l.b16 %v3836
    %v4361 = vunpack.c.h.b16 %v3836
    %v4362 = vunpack.c.l.b16 %v3837
    %v4363 = vunpack.c.h.b16 %v3837
    %v4364 = vunpack.c.l.b16 %v3838
    %v4365 = vunpack.c.h.b16 %v3838
    %v4366 = vunpack.c.l.b16 %v3839
    %v4367 = vunpack.c.h.b16 %v3839
    %v4368 = vunpack.c.l.b16 %v3840
    %v4369 = vunpack.c.h.b16 %v3840
    %v4370 = vunpack.c.l.b16 %v3841
    %v4371 = vunpack.c.h.b16 %v3841
    %v4372 = vunpack.c.l.b16 %v3842
    %v4373 = vunpack.c.h.b16 %v3842
    %v4374 = vunpack.c.l.b16 %v3843
    %v4375 = vunpack.c.h.b16 %v3843
    %v4376 = vunpack.c.l.b16 %v3844
    %v4377 = vunpack.c.h.b16 %v3844
    %v4378 = vunpack.c.l.b16 %v3845
    %v4379 = vunpack.c.h.b16 %v3845
    %v4380 = vunpack.c.l.b16 %v3846
    %v4381 = vunpack.c.h.b16 %v3846
    %v4382 = vunpack.c.l.b16 %v3847
    %v4383 = vunpack.c.h.b16 %v3847
    %v4384 = vunpack.c.l.b16 %v3848
    %v4385 = vunpack.c.h.b16 %v3848
    %v4386 = vunpack.c.l.b16 %v3849
    %v4387 = vunpack.c.h.b16 %v3849
    %v4388 = vunpack.c.l.b16 %v3850
    %v4389 = vunpack.c.h.b16 %v3850
    %v4390 = vunpack.c.l.b16 %v3851
    %v4391 = vunpack.c.h.b16 %v3851
    %v4392 = vunpack.c.l.b16 %v3852
    %v4393 = vunpack.c.h.b16 %v3852
    %v4394 = vunpack.c.l.b16 %v3853
    %v4395 = vunpack.c.h.b16 %v3853
    %v4396 = vunpack.c.l.b16 %v3854
    %v4397 = vunpack.c.h.b16 %v3854
    %v4398 = vunpack.c.l.b16 %v3855
    %v4399 = vunpack.c.h.b16 %v3855
    %v4400 = vunpack.c.l.b16 %v3856
    %v4401 = vunpack.c.h.b16 %v3856
    %v4402 = vunpack.c.l.b16 %v3857
    %v4403 = vunpack.c.h.b16 %v3857
    %v4404 = vunpack.c.l.b16 %v3858
    %v4405 = vunpack.c.h.b16 %v3858
    %v4406 = vunpack.c.l.b16 %v3859
    %v4407 = vunpack.c.h.b16 %v3859
    %v4408 = vunpack.c.l.b16 %v3860
    %v4409 = vunpack.c.h.b16 %v3860
    %v4410 = vunpack.c.l.b16 %v3861
    %v4411 = vunpack.c.h.b16 %v3861
    %v4412 = vunpack.c.l.b16 %v3862
    %v4413 = vunpack.c.h.b16 %v3862
    %v4414 = vunpack.c.l.b16 %v3863
    %v4415 = vunpack.c.h.b16 %v3863
    %v4416 = vunpack.c.l.b16 %v3864
    %v4417 = vunpack.c.h.b16 %v3864
    %v4418 = vunpack.c.l.b16 %v3865
    %v4419 = vunpack.c.h.b16 %v3865
    %v4420 = vunpack.c.l.b16 %v3866
    %v4421 = vunpack.c.h.b16 %v3866
    %v4422 = vunpack.c.l.b16 %v3867
    %v4423 = vunpack.c.h.b16 %v3867
    %v4424 = vunpack.c.l.b16 %v3868
    %v4425 = vunpack.c.h.b16 %v3868
    %v4426 = vunpack.c.l.b16 %v3869
    %v4427 = vunpack.c.h.b16 %v3869
    %v4428 = vunpack.c.l.b16 %v3870
    %v4429 = vunpack.c.h.b16 %v3870
    %v4430 = vunpack.c.l.b16 %v3871
    %v4431 = vunpack.c.h.b16 %v3871
    %v4432 = vunpack.c.l.b16 %v3872
    %v4433 = vunpack.c.h.b16 %v3872
    %v4434 = vunpack.c.l.b16 %v3873
    %v4435 = vunpack.c.h.b16 %v3873
    %v4436 = vunpack.c.l.b16 %v3874
    %v4437 = vunpack.c.h.b16 %v3874
    %v4438 = vunpack.c.l.b16 %v3875
    %v4439 = vunpack.c.h.b16 %v3875
    %v4440 = vunpack.c.l.b16 %v3876
    %v4441 = vunpack.c.h.b16 %v3876
    %v4442 = vunpack.c.l.b16 %v3877
    %v4443 = vunpack.c.h.b16 %v3877
    %v4444 = vunpack.c.l.b16 %v3878
    %v4445 = vunpack.c.h.b16 %v3878
    %v4446 = vunpack.c.l.b16 %v3879
    %v4447 = vunpack.c.h.b16 %v3879
    %v4448 = vunpack.c.l.b16 %v3880
    %v4449 = vunpack.c.h.b16 %v3880
    %v4450 = vunpack.c.l.b16 %v3881
    %v4451 = vunpack.c.h.b16 %v3881
    %v4452 = vunpack.c.l.b16 %v3882
    %v4453 = vunpack.c.h.b16 %v3882
    %v4454 = vunpack.c.l.b16 %v3883
    %v4455 = vunpack.c.h.b16 %v3883
    %v4456 = vunpack.c.l.b16 %v3884
    %v4457 = vunpack.c.h.b16 %v3884
    %v4458 = vunpack.c.l.b16 %v3885
    %v4459 = vunpack.c.h.b16 %v3885
    %v4460 = vunpack.c.l.b16 %v3886
    %v4461 = vunpack.c.h.b16 %v3886
    %v4462 = vunpack.c.l.b16 %v3887
    %v4463 = vunpack.c.h.b16 %v3887
    %v4464 = vunpack.c.l.b16 %v3888
    %v4465 = vunpack.c.h.b16 %v3888
    %v4466 = vunpack.c.l.b16 %v3889
    %v4467 = vunpack.c.h.b16 %v3889
    %v4468 = vunpack.c.l.b16 %v3890
    %v4469 = vunpack.c.h.b16 %v3890
    %v4470 = vunpack.c.l.b16 %v3891
    %v4471 = vunpack.c.h.b16 %v3891
    %v4472 = vunpack.c.l.b16 %v3892
    %v4473 = vunpack.c.h.b16 %v3892
    %v4474 = vunpack.c.l.b16 %v3893
    %v4475 = vunpack.c.h.b16 %v3893
    %v4476 = vunpack.c.l.b16 %v3894
    %v4477 = vunpack.c.h.b16 %v3894
    %v4478 = vunpack.c.l.b16 %v3895
    %v4479 = vunpack.c.h.b16 %v3895
    %v4480 = vunpack.c.l.b16 %v3896
    %v4481 = vunpack.c.h.b16 %v3896
    %v4482 = vunpack.c.l.b16 %v3897
    %v4483 = vunpack.c.h.b16 %v3897
    %v4484 = vunpack.c.l.b16 %v3898
    %v4485 = vunpack.c.h.b16 %v3898
    %v4486 = vunpack.c.l.b16 %v3899
    %v4487 = vunpack.c.h.b16 %v3899
    %v4488 = vunpack.c.l.b16 %v3900
    %v4489 = vunpack.c.h.b16 %v3900
    %v4490 = vunpack.c.l.b16 %v3901
    %v4491 = vunpack.c.h.b16 %v3901
    %v4492 = vunpack.c.l.b16 %v3902
    %v4493 = vunpack.c.h.b16 %v3902
    %v4494 = vunpack.c.l.b16 %v3903
    %v4495 = vunpack.c.h.b16 %v3903
    %v4496 = vunpack.c.l.b16 %v3904
    %v4497 = vunpack.c.h.b16 %v3904
    %v4498 = vunpack.c.l.b16 %v3905
    %v4499 = vunpack.c.h.b16 %v3905
    %v4500 = vunpack.c.l.b16 %v3906
    %v4501 = vunpack.c.h.b16 %v3906
    %v4502 = vunpack.c.l.b16 %v3907
    %v4503 = vunpack.c.h.b16 %v3907
    %v4504 = vunpack.c.l.b16 %v3908
    %v4505 = vunpack.c.h.b16 %v3908
    %v4506 = vunpack.c.l.b16 %v3909
    %v4507 = vunpack.c.h.b16 %v3909
    %v4508 = vunpack.c.l.b16 %v3910
    %v4509 = vunpack.c.h.b16 %v3910
    %v4510 = vunpack.c.l.b16 %v3911
    %v4511 = vunpack.c.h.b16 %v3911
    %v4512 = vunpack.c.l.b16 %v3912
    %v4513 = vunpack.c.h.b16 %v3912
    %v4514 = vunpack.c.l.b16 %v3913
    %v4515 = vunpack.c.h.b16 %v3913
    %v4516 = vunpack.c.l.b16 %v3914
    %v4517 = vunpack.c.h.b16 %v3914
    %v4518 = vunpack.c.l.b16 %v3915
    %v4519 = vunpack.c.h.b16 %v3915
    %v4520 = vunpack.c.l.b16 %v3916
    %v4521 = vunpack.c.h.b16 %v3916
    %v4522 = vunpack.c.l.b16 %v3917
    %v4523 = vunpack.c.h.b16 %v3917
    %v4524 = vunpack.c.l.b16 %v3918
    %v4525 = vunpack.c.h.b16 %v3918
    %v4526 = vunpack.c.l.b16 %v3919
    %v4527 = vunpack.c.h.b16 %v3919
    %v4528 = vunpack.c.l.b16 %v3920
    %v4529 = vunpack.c.h.b16 %v3920
    %v4530 = vunpack.c.l.b16 %v3921
    %v4531 = vunpack.c.h.b16 %v3921
    %v4532 = vunpack.c.l.b16 %v3922
    %v4533 = vunpack.c.h.b16 %v3922
    %v4534 = vunpack.c.l.b16 %v3923
    %v4535 = vunpack.c.h.b16 %v3923
    %v4536 = vunpack.c.l.b16 %v3924
    %v4537 = vunpack.c.h.b16 %v3924
    %v4538 = vunpack.c.l.b16 %v3925
    %v4539 = vunpack.c.h.b16 %v3925
    %v4540 = vunpack.c.l.b16 %v3926
    %v4541 = vunpack.c.h.b16 %v3926
    %v4542 = vunpack.c.l.b16 %v3927
    %v4543 = vunpack.c.h.b16 %v3927
    %v4544 = vunpack.c.l.b16 %v3928
    %v4545 = vunpack.c.h.b16 %v3928
    %v4546 = vunpack.c.l.b16 %v3929
    %v4547 = vunpack.c.h.b16 %v3929
    %v4548 = vunpack.c.l.b16 %v3930
    %v4549 = vunpack.c.h.b16 %v3930
    %v4550 = vunpack.c.l.b16 %v3931
    %v4551 = vunpack.c.h.b16 %v3931
    %v4552 = vunpack.c.l.b16 %v3932
    %v4553 = vunpack.c.h.b16 %v3932
    %v4554 = vunpack.c.l.b16 %v3933
    %v4555 = vunpack.c.h.b16 %v3933
    %v4556 = vunpack.c.l.b16 %v3934
    %v4557 = vunpack.c.h.b16 %v3934
    %v4558 = vunpack.c.l.b16 %v3935
    %v4559 = vunpack.c.h.b16 %v3935
    %v4560 = vunpack.c.l.b16 %v3936
    %v4561 = vunpack.c.h.b16 %v3936
    %v4562 = vunpack.c.l.b16 %v3937
    %v4563 = vunpack.c.h.b16 %v3937
    %v4564 = vunpack.c.l.b16 %v3938
    %v4565 = vunpack.c.h.b16 %v3938
    %v4566 = vunpack.c.l.b16 %v3939
    %v4567 = vunpack.c.h.b16 %v3939
    %v4568 = vunpack.c.l.b16 %v3940
    %v4569 = vunpack.c.h.b16 %v3940
    %v4570 = vunpack.c.l.b16 %v3941
    %v4571 = vunpack.c.h.b16 %v3941
    %v4572 = vunpack.c.l.b16 %v3942
    %v4573 = vunpack.c.h.b16 %v3942
    %v4574 = vunpack.c.l.b16 %v3943
    %v4575 = vunpack.c.h.b16 %v3943
    %v4576 = vunpack.c.l.b16 %v3944
    %v4577 = vunpack.c.h.b16 %v3944
    %v4578 = vunpack.c.l.b16 %v3945
    %v4579 = vunpack.c.h.b16 %v3945
    %v4580 = vunpack.c.l.b16 %v3946
    %v4581 = vunpack.c.h.b16 %v3946
    %v4582 = vunpack.c.l.b16 %v3947
    %v4583 = vunpack.c.h.b16 %v3947
    %v4584 = vunpack.c.l.b16 %v3948
    %v4585 = vunpack.c.h.b16 %v3948
    %v4586 = vunpack.c.l.b16 %v3949
    %v4587 = vunpack.c.h.b16 %v3949
    %v4588 = vunpack.c.l.b16 %v3950
    %v4589 = vunpack.c.h.b16 %v3950
    %v4590 = vunpack.c.l.b16 %v3951
    %v4591 = vunpack.c.h.b16 %v3951
    %v4592 = vunpack.c.l.b16 %v3952
    %v4593 = vunpack.c.h.b16 %v3952
    %v4594 = vunpack.c.l.b16 %v3953
    %v4595 = vunpack.c.h.b16 %v3953
    %v4596 = vunpack.c.l.b16 %v3954
    %v4597 = vunpack.c.h.b16 %v3954
    %v4598 = vunpack.c.l.b16 %v3955
    %v4599 = vunpack.c.h.b16 %v3955
    %v4600 = vpack.c.b16 %v4324, %v4320
    %v4601 = vpack.c.b16 %v4325, %v4321
    %v4602 = vpack.c.b16 %v4326, %v4322
    %v4603 = vpack.c.b16 %v4327, %v4323
    %v4604 = vpack.c.b16 %v4332, %v4328
    %v4605 = vpack.c.b16 %v4333, %v4329
    %v4606 = vpack.c.b16 %v4334, %v4330
    %v4607 = vpack.c.b16 %v4335, %v4331
    %v4608 = vpack.c.b16 %v4340, %v4336
    %v4609 = vpack.c.b16 %v4341, %v4337
    %v4610 = vpack.c.b16 %v4342, %v4338
    %v4611 = vpack.c.b16 %v4343, %v4339
    %v4612 = vpack.c.b16 %v4348, %v4344
    %v4613 = vpack.c.b16 %v4349, %v4345
    %v4614 = vpack.c.b16 %v4350, %v4346
    %v4615 = vpack.c.b16 %v4351, %v4347
    %v4616 = vpack.c.b16 %v4356, %v4352
    %v4617 = vpack.c.b16 %v4357, %v4353
    %v4618 = vpack.c.b16 %v4358, %v4354
    %v4619 = vpack.c.b16 %v4359, %v4355
    %v4620 = vpack.c.b16 %v4364, %v4360
    %v4621 = vpack.c.b16 %v4365, %v4361
    %v4622 = vpack.c.b16 %v4366, %v4362
    %v4623 = vpack.c.b16 %v4367, %v4363
    %v4624 = vpack.c.b16 %v4372, %v4368
    %v4625 = vpack.c.b16 %v4373, %v4369
    %v4626 = vpack.c.b16 %v4374, %v4370
    %v4627 = vpack.c.b16 %v4375, %v4371
    %v4628 = vpack.c.b16 %v4380, %v4376
    %v4629 = vpack.c.b16 %v4381, %v4377
    %v4630 = vpack.c.b16 %v4382, %v4378
    %v4631 = vpack.c.b16 %v4383, %v4379
    %v4632 = vpack.c.b16 %v4388, %v4384
    %v4633 = vpack.c.b16 %v4389, %v4385
    %v4634 = vpack.c.b16 %v4390, %v4386
    %v4635 = vpack.c.b16 %v4391, %v4387
    %v4636 = vpack.c.b16 %v4396, %v4392
    %v4637 = vpack.c.b16 %v4397, %v4393
    %v4638 = vpack.c.b16 %v4398, %v4394
    %v4639 = vpack.c.b16 %v4399, %v4395
    %v4640 = vpack.c.b16 %v4404, %v4400
    %v4641 = vpack.c.b16 %v4405, %v4401
    %v4642 = vpack.c.b16 %v4406, %v4402
    %v4643 = vpack.c.b16 %v4407, %v4403
    %v4644 = vpack.c.b16 %v4412, %v4408
    %v4645 = vpack.c.b16 %v4413, %v4409
    %v4646 = vpack.c.b16 %v4414, %v4410
    %v4647 = vpack.c.b16 %v4415, %v4411
    %v4648 = vpack.c.b16 %v4420, %v4416
    %v4649 = vpack.c.b16 %v4421, %v4417
    %v4650 = vpack.c.b16 %v4422, %v4418
    %v4651 = vpack.c.b16 %v4423, %v4419
    %v4652 = vpack.c.b16 %v4428, %v4424
    %v4653 = vpack.c.b16 %v4429, %v4425
    %v4654 = vpack.c.b16 %v4430, %v4426
    %v4655 = vpack.c.b16 %v4431, %v4427
    %v4656 = vpack.c.b16 %v4436, %v4432
    %v4657 = vpack.c.b16 %v4437, %v4433
    %v4658 = vpack.c.b16 %v4438, %v4434
    %v4659 = vpack.c.b16 %v4439, %v4435
    %v4660 = vpack.c.b16 %v4444, %v4440
    %v4661 = vpack.c.b16 %v4445, %v4441
    %v4662 = vpack.c.b16 %v4446, %v4442
    %v4663 = vpack.c.b16 %v4447, %v4443
    %v4664 = vpack.c.b16 %v4452, %v4448
    %v4665 = vpack.c.b16 %v4453, %v4449
    %v4666 = vpack.c.b16 %v4454, %v4450
    %v4667 = vpack.c.b16 %v4455, %v4451
    %v4668 = vpack.c.b16 %v4460, %v4456
    %v4669 = vpack.c.b16 %v4461, %v4457
    %v4670 = vpack.c.b16 %v4462, %v4458
    %v4671 = vpack.c.b16 %v4463, %v4459
    %v4672 = vpack.c.b16 %v4468, %v4464
    %v4673 = vpack.c.b16 %v4469, %v4465
    %v4674 = vpack.c.b16 %v4470, %v4466
    %v4675 = vpack.c.b16 %v4471, %v4467
    %v4676 = vpack.c.b16 %v4476, %v4472
    %v4677 = vpack.c.b16 %v4477, %v4473
    %v4678 = vpack.c.b16 %v4478, %v4474
    %v4679 = vpack.c.b16 %v4479, %v4475
    %v4680 = vpack.c.b16 %v4484, %v4480
    %v4681 = vpack.c.b16 %v4485, %v4481
    %v4682 = vpack.c.b16 %v4486, %v4482
    %v4683 = vpack.c.b16 %v4487, %v4483
    %v4684 = vpack.c.b16 %v4492, %v4488
    %v4685 = vpack.c.b16 %v4493, %v4489
    %v4686 = vpack.c.b16 %v4494, %v4490
    %v4687 = vpack.c.b16 %v4495, %v4491
    %v4688 = vpack.c.b16 %v4500, %v4496
    %v4689 = vpack.c.b16 %v4501, %v4497
    %v4690 = vpack.c.b16 %v4502, %v4498
    %v4691 = vpack.c.b16 %v4503, %v4499
    %v4692 = vpack.c.b16 %v4508, %v4504
    %v4693 = vpack.c.b16 %v4509, %v4505
    %v4694 = vpack.c.b16 %v4510, %v4506
    %v4695 = vpack.c.b16 %v4511, %v4507
    %v4696 = vpack.c.b16 %v4516, %v4512
    %v4697 = vpack.c.b16 %v4517, %v4513
    %v4698 = vpack.c.b16 %v4518, %v4514
    %v4699 = vpack.c.b16 %v4519, %v4515
    %v4700 = vpack.c.b16 %v4524, %v4520
    %v4701 = vpack.c.b16 %v4525, %v4521
    %v4702 = vpack.c.b16 %v4526, %v4522
    %v4703 = vpack.c.b16 %v4527, %v4523
    %v4704 = vpack.c.b16 %v4532, %v4528
    %v4705 = vpack.c.b16 %v4533, %v4529
    %v4706 = vpack.c.b16 %v4534, %v4530
    %v4707 = vpack.c.b16 %v4535, %v4531
    %v4708 = vpack.c.b16 %v4540, %v4536
    %v4709 = vpack.c.b16 %v4541, %v4537
    %v4710 = vpack.c.b16 %v4542, %v4538
    %v4711 = vpack.c.b16 %v4543, %v4539
    %v4712 = vpack.c.b16 %v4548, %v4544
    %v4713 = vpack.c.b16 %v4549, %v4545
    %v4714 = vpack.c.b16 %v4550, %v4546
    %v4715 = vpack.c.b16 %v4551, %v4547
    %v4716 = vpack.c.b16 %v4556, %v4552
    %v4717 = vpack.c.b16 %v4557, %v4553
    %v4718 = vpack.c.b16 %v4558, %v4554
    %v4719 = vpack.c.b16 %v4559, %v4555
    %v4720 = vpack.c.b16 %v4564, %v4560
    %v4721 = vpack.c.b16 %v4565, %v4561
    %v4722 = vpack.c.b16 %v4566, %v4562
    %v4723 = vpack.c.b16 %v4567, %v4563
    %v4724 = vpack.c.b16 %v4572, %v4568
    %v4725 = vpack.c.b16 %v4573, %v4569
    %v4726 = vpack.c.b16 %v4574, %v4570
    %v4727 = vpack.c.b16 %v4575, %v4571
    %v4728 = vpack.c.b16 %v4580, %v4576
    %v4729 = vpack.c.b16 %v4581, %v4577
    %v4730 = vpack.c.b16 %v4582, %v4578
    %v4731 = vpack.c.b16 %v4583, %v4579
    %v4732 = vpack.c.b16 %v4588, %v4584
    %v4733 = vpack.c.b16 %v4589, %v4585
    %v4734 = vpack.c.b16 %v4590, %v4586
    %v4735 = vpack.c.b16 %v4591, %v4587
    %v4736 = vpack.c.b16 %v4596, %v4592
    %v4737 = vpack.c.b16 %v4597, %v4593
    %v4738 = vpack.c.b16 %v4598, %v4594
    %v4739 = vpack.c.b16 %v4599, %v4595
    %vm4880 = vcmask 392192
    %v4882 = vsel %vm4880, %v4070, 0
    %v4885 = vsel %vm4880, %v4169, 0
    %4887 = vmatprep.subr.bf16.mxu0 %v4601
    %4888 = vmatpush1.bf16.msra.mxu0 %v4600
    %4889 = vmatprep.subr.bf16.mxu0 %v4605
    %4890 = vmatpush1.bf16.msra.mxu0 %v4604
    %4891 = vmatprep.subr.bf16.mxu0 %v4609
    %4892 = vmatpush1.bf16.msra.mxu0 %v4608
    %4893 = vmatprep.subr.bf16.mxu0 %v4613
    %4894 = vmatpush1.bf16.msra.mxu0 %v4612
    %4895 = vmatprep.subr.bf16.mxu0 %v4617
    %4896 = vmatpush1.bf16.msra.mxu0 %v4616
    %4897 = vmatprep.subr.bf16.mxu0 %v4621
    %4898 = vmatpush1.bf16.msra.mxu0 %v4620
    %4899 = vmatprep.subr.bf16.mxu0 %v4625
    %4900 = vmatpush1.bf16.msra.mxu0 %v4624
    %4901 = vmatprep.subr.bf16.mxu0 %v4629
    %4902 = vmatpush1.bf16.msra.mxu0 %v4628
    %4903 = vmatprep.subr.bf16.mxu0 %v4633
    %4904 = vmatpush1.bf16.msra.mxu0 %v4632
    %4905 = vmatprep.subr.bf16.mxu0 %v4637
    %4906 = vmatpush1.bf16.msra.mxu0 %v4636
    %4907 = vmatprep.subr.bf16.mxu0 %v4641
    %4908 = vmatpush1.bf16.msra.mxu0 %v4640
    %4909 = vmatprep.subr.bf16.mxu0 %v4645
    %4910 = vmatpush1.bf16.msra.mxu0 %v4644
    %4911 = vmatprep.subr.bf16.mxu0 %v4649
    %4912 = vmatpush1.bf16.msra.mxu0 %v4648
    %4913 = vmatprep.subr.bf16.mxu0 %v4653
    %4914 = vmatpush1.bf16.msra.mxu0 %v4652
    %4915 = vmatprep.subr.bf16.mxu0 %v4657
    %4916 = vmatpush1.bf16.msra.mxu0 %v4656
    %4917 = vmatprep.subr.bf16.mxu0 %v4661
    %4918 = vmatpush1.bf16.msra.mxu0 %v4660
    %4919 = vmatprep.mubr.bf16.mxu0 %v4071
    %4920 = vmatmul.mubr.bf16.gmra.mrb[0].mxu0 %v4068
    %v4921 = vpop.f32.mrb[0].mxu0
    %v4922 = vadd.f32 0.0, %v4921
    %v4923 = vpop.f32.mrb[0].mxu0
    %v4924 = vadd.f32 0.0, %v4923
    %v4925 = vpop.f32.mrb[0].mxu0
    %v4926 = vadd.f32 0.0, %v4925
    %v4927 = vpop.f32.mrb[0].mxu0
    %v4928 = vadd.f32 0.0, %v4927
    %4929 = vmatprep.mubr.bf16.mxu0 %v4170
    %4930 = vmatmul.mubr.bf16.gmra.mrb[0].mxu0 %v4167
    %v4931 = vpop.f32.mrb[0].mxu0
    %v4932 = vadd.f32 0.0, %v4931
    %v4933 = vpop.f32.mrb[0].mxu0
    %v4934 = vadd.f32 0.0, %v4933
    %v4935 = vpop.f32.mrb[0].mxu0
    %v4936 = vadd.f32 0.0, %v4935
    %v4937 = vpop.f32.mrb[0].mxu0
    %v4938 = vadd.f32 0.0, %v4937
    %4939 = vdwg.mxu0
    %4940 = vmatprep.subr.bf16.mxu0 %v4665
    %4941 = vmatpush1.bf16.msra.mxu0 %v4664
    %4942 = vmatprep.subr.bf16.mxu0 %v4669
    %4943 = vmatpush1.bf16.msra.mxu0 %v4668
    %4944 = vmatprep.subr.bf16.mxu0 %v4673
    %4945 = vmatpush1.bf16.msra.mxu0 %v4672
    %4946 = vmatprep.subr.bf16.mxu0 %v4677
    %4947 = vmatpush1.bf16.msra.mxu0 %v4676
    %4948 = vmatprep.subr.bf16.mxu0 %v4681
    %4949 = vmatpush1.bf16.msra.mxu0 %v4680
    %4950 = vmatprep.subr.bf16.mxu0 %v4685
    %4951 = vmatpush1.bf16.msra.mxu0 %v4684
    %4952 = vmatprep.subr.bf16.mxu0 %v4689
    %4953 = vmatpush1.bf16.msra.mxu0 %v4688
    %4954 = vmatprep.subr.bf16.mxu0 %v4693
    %4955 = vmatpush1.bf16.msra.mxu0 %v4692
    %4956 = vmatprep.subr.bf16.mxu0 %v4697
    %4957 = vmatpush1.bf16.msra.mxu0 %v4696
    %4958 = vmatprep.subr.bf16.mxu0 %v4701
    %4959 = vmatpush1.bf16.msra.mxu0 %v4700
    %4960 = vmatprep.subr.bf16.mxu0 %v4705
    %4961 = vmatpush1.bf16.msra.mxu0 %v4704
    %4962 = vmatprep.subr.bf16.mxu0 %v4709
    %4963 = vmatpush1.bf16.msra.mxu0 %v4708
    %4964 = vmatprep.subr.bf16.mxu0 %v4713
    %4965 = vmatpush1.bf16.msra.mxu0 %v4712
    %4966 = vmatprep.subr.bf16.mxu0 %v4717
    %4967 = vmatpush1.bf16.msra.mxu0 %v4716
    %4968 = vmatprep.subr.bf16.mxu0 %v4721
    %4969 = vmatpush1.bf16.msra.mxu0 %v4720
    %4970 = vmatprep.subr.bf16.mxu0 %v4725
    %4971 = vmatpush1.bf16.msra.mxu0 %v4724
    %4972 = vmatprep.mubr.bf16.mxu0 %v4072
    %4973 = vmatmul.mubr.bf16.gmra.mrb[0].mxu0 %v4069
    %v4974 = vpop.f32.mrb[0].mxu0
    %v4975 = vadd.f32 %v4922, %v4974
    %v4976 = vpop.f32.mrb[0].mxu0
    %v4977 = vadd.f32 %v4924, %v4976
    %v4978 = vpop.f32.mrb[0].mxu0
    %v4979 = vadd.f32 %v4926, %v4978
    %v4980 = vpop.f32.mrb[0].mxu0
    %v4981 = vadd.f32 %v4928, %v4980
    %4982 = vmatprep.mubr.bf16.mxu0 %v4171
    %4983 = vmatmul.mubr.bf16.gmra.mrb[0].mxu0 %v4168
    %v4984 = vpop.f32.mrb[0].mxu0
    %v4985 = vadd.f32 %v4932, %v4984
    %v4986 = vpop.f32.mrb[0].mxu0
    %v4987 = vadd.f32 %v4934, %v4986
    %v4988 = vpop.f32.mrb[0].mxu0
    %v4989 = vadd.f32 %v4936, %v4988
    %v4990 = vpop.f32.mrb[0].mxu0
    %v4991 = vadd.f32 %v4938, %v4990
    %4992 = vdwg.mxu0
    %4993 = vmatprep.subr.bf16.mxu0 %v4729
    %4994 = vmatpush1.bf16.msra.mxu0 %v4728
    %4995 = vmatprep.subr.bf16.mxu0 %v4733
    %4996 = vmatpush1.bf16.msra.mxu0 %v4732
    %4997 = vmatprep.subr.bf16.mxu0 %v4737
    %4998 = vmatpush1.bf16.msra.mxu0 %v4736
    %4999 = vmatprep.subr.bf16.mxu0 0
    %5000 = vmatpush1.bf16.msra.mxu0 0
    %5001 = vmatprep.subr.bf16.mxu0 0
    %5002 = vmatpush1.bf16.msra.mxu0 0
    %5003 = vmatprep.subr.bf16.mxu0 0
    %5004 = vmatpush1.bf16.msra.mxu0 0
    %5005 = vmatprep.subr.bf16.mxu0 0
    %5006 = vmatpush1.bf16.msra.mxu0 0
    %5007 = vmatprep.subr.bf16.mxu0 0
    %5008 = vmatpush1.bf16.msra.mxu0 0
    %5009 = vmatprep.subr.bf16.mxu0 0
    %5010 = vmatpush1.bf16.msra.mxu0 0
    %5011 = vmatprep.subr.bf16.mxu0 0
    %5012 = vmatpush1.bf16.msra.mxu0 0
    %5013 = vmatprep.subr.bf16.mxu0 0
    %5014 = vmatpush1.bf16.msra.mxu0 0
    %5015 = vmatprep.subr.bf16.mxu0 0
    %5016 = vmatpush1.bf16.msra.mxu0 0
    %5017 = vmatprep.subr.bf16.mxu0 0
    %5018 = vmatpush1.bf16.msra.mxu0 0
    %5019 = vmatprep.subr.bf16.mxu0 0
    %5020 = vmatpush1.bf16.msra.mxu0 0
    %5021 = vmatprep.subr.bf16.mxu0 0
    %5022 = vmatpush1.bf16.msra.mxu0 0
    %5023 = vmatprep.subr.bf16.mxu0 0
    %5024 = vmatpush1.bf16.msra.mxu0 0
    %5025 = vmatprep.mubr.bf16.mxu0 0
    %5026 = vmatmul.mubr.bf16.gmra.mrb[0].mxu0 %v4882
    %v5027 = vpop.f32.mrb[0].mxu0
    %v5028 = vadd.f32 %v4975, %v5027
    %v5029 = vpop.f32.mrb[0].mxu0
    %v5030 = vadd.f32 %v4977, %v5029
    %v5031 = vpop.f32.mrb[0].mxu0
    %v5032 = vadd.f32 %v4979, %v5031
    %v5033 = vpop.f32.mrb[0].mxu0
    %v5034 = vadd.f32 %v4981, %v5033
    %5035 = vmatprep.mubr.bf16.mxu0 0
    %5036 = vmatmul.mubr.bf16.gmra.mrb[0].mxu0 %v4885
    %v5037 = vpop.f32.mrb[0].mxu0
    %v5038 = vadd.f32 %v4985, %v5037
    %v5039 = vpop.f32.mrb[0].mxu0
    %v5040 = vadd.f32 %v4987, %v5039
    %v5041 = vpop.f32.mrb[0].mxu0
    %v5042 = vadd.f32 %v4989, %v5041
    %v5043 = vpop.f32.mrb[0].mxu0
    %v5044 = vadd.f32 %v4991, %v5043
    %5045 = vdwg.mxu0
    %5046 = vmatprep.subr.bf16.mxu0 %v4603
    %5047 = vmatpush1.bf16.msra.mxu0 %v4602
    %5048 = vmatprep.subr.bf16.mxu0 %v4607
    %5049 = vmatpush1.bf16.msra.mxu0 %v4606
    %5050 = vmatprep.subr.bf16.mxu0 %v4611
    %5051 = vmatpush1.bf16.msra.mxu0 %v4610
    %5052 = vmatprep.subr.bf16.mxu0 %v4615
    %5053 = vmatpush1.bf16.msra.mxu0 %v4614
    %5054 = vmatprep.subr.bf16.mxu0 %v4619
    %5055 = vmatpush1.bf16.msra.mxu0 %v4618
    %5056 = vmatprep.subr.bf16.mxu0 %v4623
    %5057 = vmatpush1.bf16.msra.mxu0 %v4622
    %5058 = vmatprep.subr.bf16.mxu0 %v4627
    %5059 = vmatpush1.bf16.msra.mxu0 %v4626
    %5060 = vmatprep.subr.bf16.mxu0 %v4631
    %5061 = vmatpush1.bf16.msra.mxu0 %v4630
    %5062 = vmatprep.subr.bf16.mxu0 %v4635
    %5063 = vmatpush1.bf16.msra.mxu0 %v4634
    %5064 = vmatprep.subr.bf16.mxu0 %v4639
    %5065 = vmatpush1.bf16.msra.mxu0 %v4638
    %5066 = vmatprep.subr.bf16.mxu0 %v4643
    %5067 = vmatpush1.bf16.msra.mxu0 %v4642
    %5068 = vmatprep.subr.bf16.mxu0 %v4647
    %5069 = vmatpush1.bf16.msra.mxu0 %v4646
    %5070 = vmatprep.subr.bf16.mxu0 %v4651
    %5071 = vmatpush1.bf16.msra.mxu0 %v4650
    %5072 = vmatprep.subr.bf16.mxu0 %v4655
    %5073 = vmatpush1.bf16.msra.mxu0 %v4654
    %5074 = vmatprep.subr.bf16.mxu0 %v4659
    %5075 = vmatpush1.bf16.msra.mxu0 %v4658
    %5076 = vmatprep.subr.bf16.mxu0 %v4663
    %5077 = vmatpush1.bf16.msra.mxu0 %v4662
    %5078 = vmatprep.mubr.bf16.mxu0 %v4071
    %5079 = vmatmul.mubr.bf16.gmra.mrb[0].mxu0 %v4068
    %v5080 = vpop.f32.mrb[0].mxu0
    %v5081 = vadd.f32 0.0, %v5080
    %v5082 = vpop.f32.mrb[0].mxu0
    %v5083 = vadd.f32 0.0, %v5082
    %v5084 = vpop.f32.mrb[0].mxu0
    %v5085 = vadd.f32 0.0, %v5084
    %v5086 = vpop.f32.mrb[0].mxu0
    %v5087 = vadd.f32 0.0, %v5086
    %5088 = vmatprep.mubr.bf16.mxu0 %v4170
    %5089 = vmatmul.mubr.bf16.gmra.mrb[0].mxu0 %v4167
    %v5090 = vpop.f32.mrb[0].mxu0
    %v5091 = vadd.f32 0.0, %v5090
    %v5092 = vpop.f32.mrb[0].mxu0
    %v5093 = vadd.f32 0.0, %v5092
    %v5094 = vpop.f32.mrb[0].mxu0
    %v5095 = vadd.f32 0.0, %v5094
    %v5096 = vpop.f32.mrb[0].mxu0
    %v5097 = vadd.f32 0.0, %v5096
    %5098 = vdwg.mxu0
    %5099 = vmatprep.subr.bf16.mxu0 %v4667
    %5100 = vmatpush1.bf16.msra.mxu0 %v4666
    %5101 = vmatprep.subr.bf16.mxu0 %v4671
    %5102 = vmatpush1.bf16.msra.mxu0 %v4670
    %5103 = vmatprep.subr.bf16.mxu0 %v4675
    %5104 = vmatpush1.bf16.msra.mxu0 %v4674
    %5105 = vmatprep.subr.bf16.mxu0 %v4679
    %5106 = vmatpush1.bf16.msra.mxu0 %v4678
    %5107 = vmatprep.subr.bf16.mxu0 %v4683
    %5108 = vmatpush1.bf16.msra.mxu0 %v4682
    %5109 = vmatprep.subr.bf16.mxu0 %v4687
    %5110 = vmatpush1.bf16.msra.mxu0 %v4686
    %5111 = vmatprep.subr.bf16.mxu0 %v4691
    %5112 = vmatpush1.bf16.msra.mxu0 %v4690
    %5113 = vmatprep.subr.bf16.mxu0 %v4695
    %5114 = vmatpush1.bf16.msra.mxu0 %v4694
    %5115 = vmatprep.subr.bf16.mxu0 %v4699
    %5116 = vmatpush1.bf16.msra.mxu0 %v4698
    %5117 = vmatprep.subr.bf16.mxu0 %v4703
    %5118 = vmatpush1.bf16.msra.mxu0 %v4702
    %5119 = vmatprep.subr.bf16.mxu0 %v4707
    %5120 = vmatpush1.bf16.msra.mxu0 %v4706
    %5121 = vmatprep.subr.bf16.mxu0 %v4711
    %5122 = vmatpush1.bf16.msra.mxu0 %v4710
    %5123 = vmatprep.subr.bf16.mxu0 %v4715
    %5124 = vmatpush1.bf16.msra.mxu0 %v4714
    %5125 = vmatprep.subr.bf16.mxu0 %v4719
    %5126 = vmatpush1.bf16.msra.mxu0 %v4718
    %5127 = vmatprep.subr.bf16.mxu0 %v4723
    %5128 = vmatpush1.bf16.msra.mxu0 %v4722
    %5129 = vmatprep.subr.bf16.mxu0 %v4727
    %5130 = vmatpush1.bf16.msra.mxu0 %v4726
    %5131 = vmatprep.mubr.bf16.mxu0 %v4072
    %5132 = vmatmul.mubr.bf16.gmra.mrb[0].mxu0 %v4069
    %v5133 = vpop.f32.mrb[0].mxu0
    %v5134 = vadd.f32 %v5081, %v5133
    %v5135 = vpop.f32.mrb[0].mxu0
    %v5136 = vadd.f32 %v5083, %v5135
    %v5137 = vpop.f32.mrb[0].mxu0
    %v5138 = vadd.f32 %v5085, %v5137
    %v5139 = vpop.f32.mrb[0].mxu0
    %v5140 = vadd.f32 %v5087, %v5139
    %5141 = vmatprep.mubr.bf16.mxu0 %v4171
    %5142 = vmatmul.mubr.bf16.gmra.mrb[0].mxu0 %v4168
    %v5143 = vpop.f32.mrb[0].mxu0
    %v5144 = vadd.f32 %v5091, %v5143
    %v5145 = vpop.f32.mrb[0].mxu0
    %v5146 = vadd.f32 %v5093, %v5145
    %v5147 = vpop.f32.mrb[0].mxu0
    %v5148 = vadd.f32 %v5095, %v5147
    %v5149 = vpop.f32.mrb[0].mxu0
    %v5150 = vadd.f32 %v5097, %v5149
    %5151 = vdwg.mxu0
    %5152 = vmatprep.subr.bf16.mxu0 %v4731
    %5153 = vmatpush1.bf16.msra.mxu0 %v4730
    %5154 = vmatprep.subr.bf16.mxu0 %v4735
    %5155 = vmatpush1.bf16.msra.mxu0 %v4734
    %5156 = vmatprep.subr.bf16.mxu0 %v4739
    %5157 = vmatpush1.bf16.msra.mxu0 %v4738
    %5158 = vmatprep.subr.bf16.mxu0 0
    %5159 = vmatpush1.bf16.msra.mxu0 0
    %5160 = vmatprep.subr.bf16.mxu0 0
    %5161 = vmatpush1.bf16.msra.mxu0 0
    %5162 = vmatprep.subr.bf16.mxu0 0
    %5163 = vmatpush1.bf16.msra.mxu0 0
    %5164 = vmatprep.subr.bf16.mxu0 0
    %5165 = vmatpush1.bf16.msra.mxu0 0
    %5166 = vmatprep.subr.bf16.mxu0 0
    %5167 = vmatpush1.bf16.msra.mxu0 0
    %5168 = vmatprep.subr.bf16.mxu0 0
    %5169 = vmatpush1.bf16.msra.mxu0 0
    %5170 = vmatprep.subr.bf16.mxu0 0
    %5171 = vmatpush1.bf16.msra.mxu0 0
    %5172 = vmatprep.subr.bf16.mxu0 0
    %5173 = vmatpush1.bf16.msra.mxu0 0
    %5174 = vmatprep.subr.bf16.mxu0 0
    %5175 = vmatpush1.bf16.msra.mxu0 0
    %5176 = vmatprep.subr.bf16.mxu0 0
    %5177 = vmatpush1.bf16.msra.mxu0 0
    %5178 = vmatprep.subr.bf16.mxu0 0
    %5179 = vmatpush1.bf16.msra.mxu0 0
    %5180 = vmatprep.subr.bf16.mxu0 0
    %5181 = vmatpush1.bf16.msra.mxu0 0
    %5182 = vmatprep.subr.bf16.mxu0 0
    %5183 = vmatpush1.bf16.msra.mxu0 0
    %5184 = vmatprep.mubr.bf16.mxu0 0
    %5185 = vmatmul.mubr.bf16.gmra.mrb[0].mxu0 %v4882
    %v5186 = vpop.f32.mrb[0].mxu0
    %v5187 = vadd.f32 %v5134, %v5186
    %v5188 = vpop.f32.mrb[0].mxu0
    %v5189 = vadd.f32 %v5136, %v5188
    %v5190 = vpop.f32.mrb[0].mxu0
    %v5191 = vadd.f32 %v5138, %v5190
    %v5192 = vpop.f32.mrb[0].mxu0
    %v5193 = vadd.f32 %v5140, %v5192
    %5194 = vmatprep.mubr.bf16.mxu0 0
    %5195 = vmatmul.mubr.bf16.gmra.mrb[0].mxu0 %v4885
    %v5196 = vpop.f32.mrb[0].mxu0
    %v5197 = vadd.f32 %v5144, %v5196
    %v5198 = vpop.f32.mrb[0].mxu0
    %v5199 = vadd.f32 %v5146, %v5198
    %v5200 = vpop.f32.mrb[0].mxu0
    %v5201 = vadd.f32 %v5148, %v5200
    %v5202 = vpop.f32.mrb[0].mxu0
    %v5203 = vadd.f32 %v5150, %v5202
    %5204 = vdwg.mxu0
    %v5205 = vcombine.low %v3470, %v3474
    %v5206 = vcombine.high %v3470, %v3474
    %v5207 = vcombine.low %v3471, %v3475
    %v5208 = vcombine.high %v3471, %v3475
    %v5209 = vcombine.low %v3472, %v3476
    %v5210 = vcombine.high %v3472, %v3476
    %v5211 = vcombine.low %v3473, %v3541
    %v5212 = vcombine.high %v3473, %v3541
    %v5214 = vunpack.c.l.s4 1966171168
    %v5215 = vunpack.c.0.s8 %v5214
    %v5216 = vlaneseq
    %v5217 = vshrl.u32 %v5216, 7
    %v5218 = vsub.s32 %v5215, %v5217
    %v5219 = vrot.slane %v5205, %v5218
    %v5221 = vunpack.c.l.s4 1966171168
    %v5222 = vunpack.c.0.s8 %v5221
    %v5223 = vlaneseq
    %v5224 = vshrl.u32 %v5223, 7
    %v5225 = vsub.s32 %v5222, %v5224
    %v5226 = vrot.slane %v5206, %v5225
    %v5228 = vunpack.c.l.s4 1966171168
    %v5229 = vunpack.c.0.s8 %v5228
    %v5230 = vlaneseq
    %v5231 = vshrl.u32 %v5230, 7
    %v5232 = vsub.s32 %v5229, %v5231
    %v5233 = vrot.slane %v5207, %v5232
    %v5235 = vunpack.c.l.s4 1966171168
    %v5236 = vunpack.c.0.s8 %v5235
    %v5237 = vlaneseq
    %v5238 = vshrl.u32 %v5237, 7
    %v5239 = vsub.s32 %v5236, %v5238
    %v5240 = vrot.slane %v5208, %v5239
    %v5242 = vunpack.c.l.s4 1966171168
    %v5243 = vunpack.c.0.s8 %v5242
    %v5244 = vlaneseq
    %v5245 = vshrl.u32 %v5244, 7
    %v5246 = vsub.s32 %v5243, %v5245
    %v5247 = vrot.slane %v5209, %v5246
    %v5249 = vunpack.c.l.s4 1966171168
    %v5250 = vunpack.c.0.s8 %v5249
    %v5251 = vlaneseq
    %v5252 = vshrl.u32 %v5251, 7
    %v5253 = vsub.s32 %v5250, %v5252
    %v5254 = vrot.slane %v5210, %v5253
    %v5256 = vunpack.c.l.s4 1966171168
    %v5257 = vunpack.c.0.s8 %v5256
    %v5258 = vlaneseq
    %v5259 = vshrl.u32 %v5258, 7
    %v5260 = vsub.s32 %v5257, %v5259
    %v5261 = vrot.slane %v5211, %v5260
    %v5263 = vunpack.c.l.s4 1966171168
    %v5264 = vunpack.c.0.s8 %v5263
    %v5265 = vlaneseq
    %v5266 = vshrl.u32 %v5265, 7
    %v5267 = vsub.s32 %v5264, %v5266
    %v5268 = vrot.slane %v5212, %v5267
    %v5269 = vcombine.low %v5219, %v5233
    %v5270 = vcombine.high %v5219, %v5233
    %v5271 = vcombine.low %v5226, %v5240
    %v5272 = vcombine.low %v5247, %v5261
    %v5273 = vcombine.high %v5247, %v5261
    %v5274 = vcombine.low %v5254, %v5268
    %v5276 = vunpack.c.l.s4 1966171168
    %v5277 = vunpack.c.0.s8 %v5276
    %v5278 = vlaneseq
    %v5279 = vshrl.u32 %v5278, 7
    %v5280 = vsub.s32 %v5277, %v5279
    %v5281 = vrot.slane %v5269, %v5280
    %v5283 = vunpack.c.l.s4 1966171168
    %v5284 = vunpack.c.0.s8 %v5283
    %v5285 = vlaneseq
    %v5286 = vshrl.u32 %v5285, 7
    %v5287 = vsub.s32 %v5284, %v5286
    %v5288 = vrot.slane %v5271, %v5287
    %v5290 = vunpack.c.l.s4 1966171168
    %v5291 = vunpack.c.0.s8 %v5290
    %v5292 = vlaneseq
    %v5293 = vshrl.u32 %v5292, 7
    %v5294 = vsub.s32 %v5291, %v5293
    %v5295 = vrot.slane %v5270, %v5294
    %v5297 = vunpack.c.l.s4 1966171168
    %v5298 = vunpack.c.0.s8 %v5297
    %v5299 = vlaneseq
    %v5300 = vshrl.u32 %v5299, 7
    %v5301 = vsub.s32 %v5298, %v5300
    %v5302 = vrot.slane %v5272, %v5301
    %v5304 = vunpack.c.l.s4 1966171168
    %v5305 = vunpack.c.0.s8 %v5304
    %v5306 = vlaneseq
    %v5307 = vshrl.u32 %v5306, 7
    %v5308 = vsub.s32 %v5305, %v5307
    %v5309 = vrot.slane %v5274, %v5308
    %v5311 = vunpack.c.l.s4 1966171168
    %v5312 = vunpack.c.0.s8 %v5311
    %v5313 = vlaneseq
    %v5314 = vshrl.u32 %v5313, 7
    %v5315 = vsub.s32 %v5312, %v5314
    %v5316 = vrot.slane %v5273, %v5315
    %v5317 = vcombine.low %v5281, %v5302
    %v5318 = vcombine.high %v5281, %v5302
    %v5319 = vcombine.low %v5288, %v5309
    %v5320 = vcombine.low %v5295, %v5316
    %v5321 = vcombine.high %v5295, %v5316
    %v5322 = vcombine.low %v3545, %v3542
    %v5323 = vcombine.high %v3545, %v3542
    %v5324 = vcombine.low %v3546, %v3543
    %v5325 = vcombine.high %v3546, %v3543
    %v5326 = vcombine.low %v3547, %v3544
    %v5327 = vcombine.high %v3547, %v3544
    %v5329 = vunpack.c.l.s4 1966171168
    %v5330 = vunpack.c.0.s8 %v5329
    %v5331 = vlaneseq
    %v5332 = vshrl.u32 %v5331, 7
    %v5333 = vsub.s32 %v5330, %v5332
    %v5334 = vrot.slane %v5322, %v5333
    %v5336 = vunpack.c.l.s4 1966171168
    %v5337 = vunpack.c.0.s8 %v5336
    %v5338 = vlaneseq
    %v5339 = vshrl.u32 %v5338, 7
    %v5340 = vsub.s32 %v5337, %v5339
    %v5341 = vrot.slane %v5323, %v5340
    %v5343 = vunpack.c.l.s4 1966171168
    %v5344 = vunpack.c.0.s8 %v5343
    %v5345 = vlaneseq
    %v5346 = vshrl.u32 %v5345, 7
    %v5347 = vsub.s32 %v5344, %v5346
    %v5348 = vrot.slane %v5324, %v5347
    %v5350 = vunpack.c.l.s4 1966171168
    %v5351 = vunpack.c.0.s8 %v5350
    %v5352 = vlaneseq
    %v5353 = vshrl.u32 %v5352, 7
    %v5354 = vsub.s32 %v5351, %v5353
    %v5355 = vrot.slane %v5325, %v5354
    %v5357 = vunpack.c.l.s4 1966171168
    %v5358 = vunpack.c.0.s8 %v5357
    %v5359 = vlaneseq
    %v5360 = vshrl.u32 %v5359, 7
    %v5361 = vsub.s32 %v5358, %v5360
    %v5362 = vrot.slane %v5326, %v5361
    %v5364 = vunpack.c.l.s4 1966171168
    %v5365 = vunpack.c.0.s8 %v5364
    %v5366 = vlaneseq
    %v5367 = vshrl.u32 %v5366, 7
    %v5368 = vsub.s32 %v5365, %v5367
    %v5369 = vrot.slane %v5327, %v5368
    %v5370 = vcombine.low %v5334, %v5348
    %v5371 = vcombine.high %v5334, %v5348
    %v5372 = vcombine.low %v5341, %v5355
    %v5373 = vcombine.high %v5362, %v5362
    %v5375 = vunpack.c.l.s4 1966171168
    %v5376 = vunpack.c.0.s8 %v5375
    %v5377 = vlaneseq
    %v5378 = vshrl.u32 %v5377, 7
    %v5379 = vsub.s32 %v5376, %v5378
    %v5380 = vrot.slane %v5370, %v5379
    %v5382 = vunpack.c.l.s4 1966171168
    %v5383 = vunpack.c.0.s8 %v5382
    %v5384 = vlaneseq
    %v5385 = vshrl.u32 %v5384, 7
    %v5386 = vsub.s32 %v5383, %v5385
    %v5387 = vrot.slane %v5372, %v5386
    %v5389 = vunpack.c.l.s4 1966171168
    %v5390 = vunpack.c.0.s8 %v5389
    %v5391 = vlaneseq
    %v5392 = vshrl.u32 %v5391, 7
    %v5393 = vsub.s32 %v5390, %v5392
    %v5394 = vrot.slane %v5371, %v5393
    %v5396 = vunpack.c.l.s4 1966171168
    %v5397 = vunpack.c.0.s8 %v5396
    %v5398 = vlaneseq
    %v5399 = vshrl.u32 %v5398, 7
    %v5400 = vsub.s32 %v5397, %v5399
    %v5401 = vrot.slane %v5362, %v5400
    %v5403 = vunpack.c.l.s4 1966171168
    %v5404 = vunpack.c.0.s8 %v5403
    %v5405 = vlaneseq
    %v5406 = vshrl.u32 %v5405, 7
    %v5407 = vsub.s32 %v5404, %v5406
    %v5408 = vrot.slane %v5369, %v5407
    %v5410 = vunpack.c.l.s4 1966171168
    %v5411 = vunpack.c.0.s8 %v5410
    %v5412 = vlaneseq
    %v5413 = vshrl.u32 %v5412, 7
    %v5414 = vsub.s32 %v5411, %v5413
    %v5415 = vrot.slane %v5373, %v5414
    %v5416 = vcombine.low %v5380, %v5401
    %v5417 = vcombine.high %v5380, %v5401
    %v5418 = vcombine.low %v5387, %v5408
    %v5419 = vcombine.low %v5394, %v5415
    %v5420 = vcombine.high %v5394, %v5415
    %v5569 = vunpack.c.l.b16 %v3548
    %v5570 = vunpack.c.h.b16 %v3548
    %v5571 = vunpack.c.l.b16 %v3549
    %v5572 = vunpack.c.h.b16 %v3549
    %v5573 = vunpack.c.l.b16 %v3550
    %v5574 = vunpack.c.h.b16 %v3550
    %v5575 = vunpack.c.l.b16 %v3551
    %v5576 = vunpack.c.h.b16 %v3551
    %v5577 = vunpack.c.l.b16 %v3552
    %v5578 = vunpack.c.h.b16 %v3552
    %v5579 = vunpack.c.l.b16 %v3553
    %v5580 = vunpack.c.h.b16 %v3553
    %v5581 = vunpack.c.l.b16 %v3554
    %v5582 = vunpack.c.h.b16 %v3554
    %v5583 = vunpack.c.l.b16 %v3555
    %v5584 = vunpack.c.h.b16 %v3555
    %v5585 = vunpack.c.l.b16 %v3556
    %v5586 = vunpack.c.h.b16 %v3556
    %v5587 = vunpack.c.l.b16 %v3557
    %v5588 = vunpack.c.h.b16 %v3557
    %v5589 = vunpack.c.l.b16 %v3558
    %v5590 = vunpack.c.h.b16 %v3558
    %v5591 = vunpack.c.l.b16 %v3559
    %v5592 = vunpack.c.h.b16 %v3559
    %v5593 = vunpack.c.l.b16 %v3560
    %v5594 = vunpack.c.h.b16 %v3560
    %v5595 = vunpack.c.l.b16 %v3561
    %v5596 = vunpack.c.h.b16 %v3561
    %v5597 = vunpack.c.l.b16 %v3562
    %v5598 = vunpack.c.h.b16 %v3562
    %v5599 = vunpack.c.l.b16 %v3563
    %v5600 = vunpack.c.h.b16 %v3563
    %v5601 = vunpack.c.l.b16 %v3564
    %v5602 = vunpack.c.h.b16 %v3564
    %v5603 = vunpack.c.l.b16 %v3565
    %v5604 = vunpack.c.h.b16 %v3565
    %v5605 = vunpack.c.l.b16 %v3566
    %v5606 = vunpack.c.h.b16 %v3566
    %v5607 = vunpack.c.l.b16 %v3567
    %v5608 = vunpack.c.h.b16 %v3567
    %v5609 = vunpack.c.l.b16 %v3568
    %v5610 = vunpack.c.h.b16 %v3568
    %v5611 = vunpack.c.l.b16 %v3569
    %v5612 = vunpack.c.h.b16 %v3569
    %v5613 = vunpack.c.l.b16 %v3570
    %v5614 = vunpack.c.h.b16 %v3570
    %v5615 = vunpack.c.l.b16 %v3571
    %v5616 = vunpack.c.h.b16 %v3571
    %v5617 = vunpack.c.l.b16 %v3572
    %v5618 = vunpack.c.h.b16 %v3572
    %v5619 = vunpack.c.l.b16 %v3573
    %v5620 = vunpack.c.h.b16 %v3573
    %v5621 = vunpack.c.l.b16 %v3574
    %v5622 = vunpack.c.h.b16 %v3574
    %v5623 = vunpack.c.l.b16 %v3575
    %v5624 = vunpack.c.h.b16 %v3575
    %v5625 = vunpack.c.l.b16 %v3576
    %v5626 = vunpack.c.h.b16 %v3576
    %v5627 = vunpack.c.l.b16 %v3577
    %v5628 = vunpack.c.h.b16 %v3577
    %v5629 = vunpack.c.l.b16 %v3578
    %v5630 = vunpack.c.h.b16 %v3578
    %v5631 = vunpack.c.l.b16 %v3579
    %v5632 = vunpack.c.h.b16 %v3579
    %v5633 = vunpack.c.l.b16 %v3580
    %v5634 = vunpack.c.h.b16 %v3580
    %v5635 = vunpack.c.l.b16 %v3581
    %v5636 = vunpack.c.h.b16 %v3581
    %v5637 = vunpack.c.l.b16 %v3582
    %v5638 = vunpack.c.h.b16 %v3582
    %v5639 = vunpack.c.l.b16 %v3583
    %v5640 = vunpack.c.h.b16 %v3583
    %v5641 = vunpack.c.l.b16 %v3584
    %v5642 = vunpack.c.h.b16 %v3584
    %v5643 = vunpack.c.l.b16 %v3585
    %v5644 = vunpack.c.h.b16 %v3585
    %v5645 = vunpack.c.l.b16 %v3586
    %v5646 = vunpack.c.h.b16 %v3586
    %v5647 = vunpack.c.l.b16 %v3587
    %v5648 = vunpack.c.h.b16 %v3587
    %v5649 = vunpack.c.l.b16 %v3588
    %v5650 = vunpack.c.h.b16 %v3588
    %v5651 = vunpack.c.l.b16 %v3589
    %v5652 = vunpack.c.h.b16 %v3589
    %v5653 = vunpack.c.l.b16 %v3590
    %v5654 = vunpack.c.h.b16 %v3590
    %v5655 = vunpack.c.l.b16 %v3591
    %v5656 = vunpack.c.h.b16 %v3591
    %v5657 = vunpack.c.l.b16 %v3592
    %v5658 = vunpack.c.h.b16 %v3592
    %v5659 = vunpack.c.l.b16 %v3593
    %v5660 = vunpack.c.h.b16 %v3593
    %v5661 = vunpack.c.l.b16 %v3594
    %v5662 = vunpack.c.h.b16 %v3594
    %v5663 = vunpack.c.l.b16 %v3595
    %v5664 = vunpack.c.h.b16 %v3595
    %v5665 = vunpack.c.l.b16 %v3596
    %v5666 = vunpack.c.h.b16 %v3596
    %v5667 = vunpack.c.l.b16 %v3597
    %v5668 = vunpack.c.h.b16 %v3597
    %v5669 = vunpack.c.l.b16 %v3598
    %v5670 = vunpack.c.h.b16 %v3598
    %v5671 = vunpack.c.l.b16 %v3599
    %v5672 = vunpack.c.h.b16 %v3599
    %v5673 = vunpack.c.l.b16 %v3600
    %v5674 = vunpack.c.h.b16 %v3600
    %v5675 = vunpack.c.l.b16 %v3601
    %v5676 = vunpack.c.h.b16 %v3601
    %v5677 = vunpack.c.l.b16 %v3602
    %v5678 = vunpack.c.h.b16 %v3602
    %v5679 = vunpack.c.l.b16 %v3603
    %v5680 = vunpack.c.h.b16 %v3603
    %v5681 = vunpack.c.l.b16 %v3604
    %v5682 = vunpack.c.h.b16 %v3604
    %v5683 = vunpack.c.l.b16 %v3605
    %v5684 = vunpack.c.h.b16 %v3605
    %v5685 = vunpack.c.l.b16 %v3606
    %v5686 = vunpack.c.h.b16 %v3606
    %v5687 = vunpack.c.l.b16 %v3607
    %v5688 = vunpack.c.h.b16 %v3607
    %v5689 = vunpack.c.l.b16 %v3608
    %v5690 = vunpack.c.h.b16 %v3608
    %v5691 = vunpack.c.l.b16 %v3609
    %v5692 = vunpack.c.h.b16 %v3609
    %v5693 = vunpack.c.l.b16 %v3610
    %v5694 = vunpack.c.h.b16 %v3610
    %v5695 = vunpack.c.l.b16 %v3611
    %v5696 = vunpack.c.h.b16 %v3611
    %v5697 = vunpack.c.l.b16 %v3612
    %v5698 = vunpack.c.h.b16 %v3612
    %v5699 = vunpack.c.l.b16 %v3613
    %v5700 = vunpack.c.h.b16 %v3613
    %v5701 = vunpack.c.l.b16 %v3614
    %v5702 = vunpack.c.h.b16 %v3614
    %v5703 = vunpack.c.l.b16 %v3615
    %v5704 = vunpack.c.h.b16 %v3615
    %v5705 = vunpack.c.l.b16 %v3616
    %v5706 = vunpack.c.h.b16 %v3616
    %v5707 = vunpack.c.l.b16 %v3617
    %v5708 = vunpack.c.h.b16 %v3617
    %v5709 = vunpack.c.l.b16 %v3618
    %v5710 = vunpack.c.h.b16 %v3618
    %v5711 = vunpack.c.l.b16 %v3619
    %v5712 = vunpack.c.h.b16 %v3619
    %v5713 = vunpack.c.l.b16 %v3620
    %v5714 = vunpack.c.h.b16 %v3620
    %v5715 = vunpack.c.l.b16 %v3621
    %v5716 = vunpack.c.h.b16 %v3621
    %v5717 = vunpack.c.l.b16 %v3622
    %v5718 = vunpack.c.h.b16 %v3622
    %v5719 = vunpack.c.l.b16 %v3623
    %v5720 = vunpack.c.h.b16 %v3623
    %v5721 = vunpack.c.l.b16 %v3624
    %v5722 = vunpack.c.h.b16 %v3624
    %v5723 = vunpack.c.l.b16 %v3625
    %v5724 = vunpack.c.h.b16 %v3625
    %v5725 = vunpack.c.l.b16 %v3626
    %v5726 = vunpack.c.h.b16 %v3626
    %v5727 = vunpack.c.l.b16 %v3627
    %v5728 = vunpack.c.h.b16 %v3627
    %v5729 = vunpack.c.l.b16 %v3628
    %v5730 = vunpack.c.h.b16 %v3628
    %v5731 = vunpack.c.l.b16 %v3629
    %v5732 = vunpack.c.h.b16 %v3629
    %v5733 = vunpack.c.l.b16 %v3630
    %v5734 = vunpack.c.h.b16 %v3630
    %v5735 = vunpack.c.l.b16 %v3631
    %v5736 = vunpack.c.h.b16 %v3631
    %v5737 = vunpack.c.l.b16 %v3632
    %v5738 = vunpack.c.h.b16 %v3632
    %v5739 = vunpack.c.l.b16 %v3633
    %v5740 = vunpack.c.h.b16 %v3633
    %v5741 = vunpack.c.l.b16 %v3634
    %v5742 = vunpack.c.h.b16 %v3634
    %v5743 = vunpack.c.l.b16 %v3635
    %v5744 = vunpack.c.h.b16 %v3635
    %v5745 = vunpack.c.l.b16 %v3636
    %v5746 = vunpack.c.h.b16 %v3636
    %v5747 = vunpack.c.l.b16 %v3637
    %v5748 = vunpack.c.h.b16 %v3637
    %v5749 = vunpack.c.l.b16 %v3638
    %v5750 = vunpack.c.h.b16 %v3638
    %v5751 = vunpack.c.l.b16 %v3639
    %v5752 = vunpack.c.h.b16 %v3639
    %v5753 = vunpack.c.l.b16 %v3640
    %v5754 = vunpack.c.h.b16 %v3640
    %v5755 = vunpack.c.l.b16 %v3641
    %v5756 = vunpack.c.h.b16 %v3641
    %v5757 = vunpack.c.l.b16 %v3642
    %v5758 = vunpack.c.h.b16 %v3642
    %v5759 = vunpack.c.l.b16 %v3643
    %v5760 = vunpack.c.h.b16 %v3643
    %v5761 = vunpack.c.l.b16 %v3644
    %v5762 = vunpack.c.h.b16 %v3644
    %v5763 = vunpack.c.l.b16 %v3645
    %v5764 = vunpack.c.h.b16 %v3645
    %v5765 = vunpack.c.l.b16 %v3646
    %v5766 = vunpack.c.h.b16 %v3646
    %v5767 = vunpack.c.l.b16 %v3647
    %v5768 = vunpack.c.h.b16 %v3647
    %v5769 = vunpack.c.l.b16 %v3648
    %v5770 = vunpack.c.h.b16 %v3648
    %v5771 = vunpack.c.l.b16 %v3649
    %v5772 = vunpack.c.h.b16 %v3649
    %v5773 = vunpack.c.l.b16 %v3650
    %v5774 = vunpack.c.h.b16 %v3650
    %v5775 = vunpack.c.l.b16 %v3651
    %v5776 = vunpack.c.h.b16 %v3651
    %v5777 = vunpack.c.l.b16 %v3652
    %v5778 = vunpack.c.h.b16 %v3652
    %v5779 = vunpack.c.l.b16 %v3653
    %v5780 = vunpack.c.h.b16 %v3653
    %v5781 = vunpack.c.l.b16 %v3654
    %v5782 = vunpack.c.h.b16 %v3654
    %v5783 = vunpack.c.l.b16 %v3655
    %v5784 = vunpack.c.h.b16 %v3655
    %v5785 = vunpack.c.l.b16 %v3656
    %v5786 = vunpack.c.h.b16 %v3656
    %v5787 = vunpack.c.l.b16 %v3657
    %v5788 = vunpack.c.h.b16 %v3657
    %v5789 = vunpack.c.l.b16 %v3658
    %v5790 = vunpack.c.h.b16 %v3658
    %v5791 = vunpack.c.l.b16 %v3659
    %v5792 = vunpack.c.h.b16 %v3659
    %v5793 = vunpack.c.l.b16 %v3660
    %v5794 = vunpack.c.h.b16 %v3660
    %v5795 = vunpack.c.l.b16 %v3661
    %v5796 = vunpack.c.h.b16 %v3661
    %v5797 = vunpack.c.l.b16 %v3662
    %v5798 = vunpack.c.h.b16 %v3662
    %v5799 = vunpack.c.l.b16 %v3663
    %v5800 = vunpack.c.h.b16 %v3663
    %v5801 = vunpack.c.l.b16 %v3664
    %v5802 = vunpack.c.h.b16 %v3664
    %v5803 = vunpack.c.l.b16 %v3665
    %v5804 = vunpack.c.h.b16 %v3665
    %v5805 = vunpack.c.l.b16 %v3666
    %v5806 = vunpack.c.h.b16 %v3666
    %v5807 = vunpack.c.l.b16 %v3667
    %v5808 = vunpack.c.h.b16 %v3667
    %v5809 = vunpack.c.l.b16 %v3668
    %v5810 = vunpack.c.h.b16 %v3668
    %v5811 = vunpack.c.l.b16 %v3669
    %v5812 = vunpack.c.h.b16 %v3669
    %v5813 = vunpack.c.l.b16 %v3670
    %v5814 = vunpack.c.h.b16 %v3670
    %v5815 = vunpack.c.l.b16 %v3671
    %v5816 = vunpack.c.h.b16 %v3671
    %v5817 = vunpack.c.l.b16 %v3672
    %v5818 = vunpack.c.h.b16 %v3672
    %v5819 = vunpack.c.l.b16 %v3673
    %v5820 = vunpack.c.h.b16 %v3673
    %v5821 = vunpack.c.l.b16 %v3674
    %v5822 = vunpack.c.h.b16 %v3674
    %v5823 = vunpack.c.l.b16 %v3675
    %v5824 = vunpack.c.h.b16 %v3675
    %v5825 = vunpack.c.l.b16 %v3676
    %v5826 = vunpack.c.h.b16 %v3676
    %v5827 = vunpack.c.l.b16 %v3677
    %v5828 = vunpack.c.h.b16 %v3677
    %v5829 = vunpack.c.l.b16 %v3678
    %v5830 = vunpack.c.h.b16 %v3678
    %v5831 = vunpack.c.l.b16 %v3679
    %v5832 = vunpack.c.h.b16 %v3679
    %v5833 = vunpack.c.l.b16 %v3680
    %v5834 = vunpack.c.h.b16 %v3680
    %v5835 = vunpack.c.l.b16 %v3681
    %v5836 = vunpack.c.h.b16 %v3681
    %v5837 = vunpack.c.l.b16 %v3682
    %v5838 = vunpack.c.h.b16 %v3682
    %v5839 = vunpack.c.l.b16 %v3683
    %v5840 = vunpack.c.h.b16 %v3683
    %v5841 = vunpack.c.l.b16 %v3684
    %v5842 = vunpack.c.h.b16 %v3684
    %v5843 = vunpack.c.l.b16 %v3685
    %v5844 = vunpack.c.h.b16 %v3685
    %v5845 = vunpack.c.l.b16 %v3686
    %v5846 = vunpack.c.h.b16 %v3686
    %v5847 = vunpack.c.l.b16 %v3687
    %v5848 = vunpack.c.h.b16 %v3687
    %v5849 = vpack.c.b16 %v5573, %v5569
    %v5850 = vpack.c.b16 %v5574, %v5570
    %v5851 = vpack.c.b16 %v5575, %v5571
    %v5852 = vpack.c.b16 %v5576, %v5572
    %v5853 = vpack.c.b16 %v5581, %v5577
    %v5854 = vpack.c.b16 %v5582, %v5578
    %v5855 = vpack.c.b16 %v5583, %v5579
    %v5856 = vpack.c.b16 %v5584, %v5580
    %v5857 = vpack.c.b16 %v5589, %v5585
    %v5858 = vpack.c.b16 %v5590, %v5586
    %v5859 = vpack.c.b16 %v5591, %v5587
    %v5860 = vpack.c.b16 %v5592, %v5588
    %v5861 = vpack.c.b16 %v5597, %v5593
    %v5862 = vpack.c.b16 %v5598, %v5594
    %v5863 = vpack.c.b16 %v5599, %v5595
    %v5864 = vpack.c.b16 %v5600, %v5596
    %v5865 = vpack.c.b16 %v5605, %v5601
    %v5866 = vpack.c.b16 %v5606, %v5602
    %v5867 = vpack.c.b16 %v5607, %v5603
    %v5868 = vpack.c.b16 %v5608, %v5604
    %v5869 = vpack.c.b16 %v5613, %v5609
    %v5870 = vpack.c.b16 %v5614, %v5610
    %v5871 = vpack.c.b16 %v5615, %v5611
    %v5872 = vpack.c.b16 %v5616, %v5612
    %v5873 = vpack.c.b16 %v5621, %v5617
    %v5874 = vpack.c.b16 %v5622, %v5618
    %v5875 = vpack.c.b16 %v5623, %v5619
    %v5876 = vpack.c.b16 %v5624, %v5620
    %v5877 = vpack.c.b16 %v5629, %v5625
    %v5878 = vpack.c.b16 %v5630, %v5626
    %v5879 = vpack.c.b16 %v5631, %v5627
    %v5880 = vpack.c.b16 %v5632, %v5628
    %v5881 = vpack.c.b16 %v5637, %v5633
    %v5882 = vpack.c.b16 %v5638, %v5634
    %v5883 = vpack.c.b16 %v5639, %v5635
    %v5884 = vpack.c.b16 %v5640, %v5636
    %v5885 = vpack.c.b16 %v5645, %v5641
    %v5886 = vpack.c.b16 %v5646, %v5642
    %v5887 = vpack.c.b16 %v5647, %v5643
    %v5888 = vpack.c.b16 %v5648, %v5644
    %v5889 = vpack.c.b16 %v5653, %v5649
    %v5890 = vpack.c.b16 %v5654, %v5650
    %v5891 = vpack.c.b16 %v5655, %v5651
    %v5892 = vpack.c.b16 %v5656, %v5652
    %v5893 = vpack.c.b16 %v5661, %v5657
    %v5894 = vpack.c.b16 %v5662, %v5658
    %v5895 = vpack.c.b16 %v5663, %v5659
    %v5896 = vpack.c.b16 %v5664, %v5660
    %v5897 = vpack.c.b16 %v5669, %v5665
    %v5898 = vpack.c.b16 %v5670, %v5666
    %v5899 = vpack.c.b16 %v5671, %v5667
    %v5900 = vpack.c.b16 %v5672, %v5668
    %v5901 = vpack.c.b16 %v5677, %v5673
    %v5902 = vpack.c.b16 %v5678, %v5674
    %v5903 = vpack.c.b16 %v5679, %v5675
    %v5904 = vpack.c.b16 %v5680, %v5676
    %v5905 = vpack.c.b16 %v5685, %v5681
    %v5906 = vpack.c.b16 %v5686, %v5682
    %v5907 = vpack.c.b16 %v5687, %v5683
    %v5908 = vpack.c.b16 %v5688, %v5684
    %v5909 = vpack.c.b16 %v5693, %v5689
    %v5910 = vpack.c.b16 %v5694, %v5690
    %v5911 = vpack.c.b16 %v5695, %v5691
    %v5912 = vpack.c.b16 %v5696, %v5692
    %v5913 = vpack.c.b16 %v5701, %v5697
    %v5914 = vpack.c.b16 %v5702, %v5698
    %v5915 = vpack.c.b16 %v5703, %v5699
    %v5916 = vpack.c.b16 %v5704, %v5700
    %v5917 = vpack.c.b16 %v5709, %v5705
    %v5918 = vpack.c.b16 %v5710, %v5706
    %v5919 = vpack.c.b16 %v5711, %v5707
    %v5920 = vpack.c.b16 %v5712, %v5708
    %v5921 = vpack.c.b16 %v5717, %v5713
    %v5922 = vpack.c.b16 %v5718, %v5714
    %v5923 = vpack.c.b16 %v5719, %v5715
    %v5924 = vpack.c.b16 %v5720, %v5716
    %v5925 = vpack.c.b16 %v5725, %v5721
    %v5926 = vpack.c.b16 %v5726, %v5722
    %v5927 = vpack.c.b16 %v5727, %v5723
    %v5928 = vpack.c.b16 %v5728, %v5724
    %v5929 = vpack.c.b16 %v5733, %v5729
    %v5930 = vpack.c.b16 %v5734, %v5730
    %v5931 = vpack.c.b16 %v5735, %v5731
    %v5932 = vpack.c.b16 %v5736, %v5732
    %v5933 = vpack.c.b16 %v5741, %v5737
    %v5934 = vpack.c.b16 %v5742, %v5738
    %v5935 = vpack.c.b16 %v5743, %v5739
    %v5936 = vpack.c.b16 %v5744, %v5740
    %v5937 = vpack.c.b16 %v5749, %v5745
    %v5938 = vpack.c.b16 %v5750, %v5746
    %v5939 = vpack.c.b16 %v5751, %v5747
    %v5940 = vpack.c.b16 %v5752, %v5748
    %v5941 = vpack.c.b16 %v5757, %v5753
    %v5942 = vpack.c.b16 %v5758, %v5754
    %v5943 = vpack.c.b16 %v5759, %v5755
    %v5944 = vpack.c.b16 %v5760, %v5756
    %v5945 = vpack.c.b16 %v5765, %v5761
    %v5946 = vpack.c.b16 %v5766, %v5762
    %v5947 = vpack.c.b16 %v5767, %v5763
    %v5948 = vpack.c.b16 %v5768, %v5764
    %v5949 = vpack.c.b16 %v5773, %v5769
    %v5950 = vpack.c.b16 %v5774, %v5770
    %v5951 = vpack.c.b16 %v5775, %v5771
    %v5952 = vpack.c.b16 %v5776, %v5772
    %v5953 = vpack.c.b16 %v5781, %v5777
    %v5954 = vpack.c.b16 %v5782, %v5778
    %v5955 = vpack.c.b16 %v5783, %v5779
    %v5956 = vpack.c.b16 %v5784, %v5780
    %v5957 = vpack.c.b16 %v5789, %v5785
    %v5958 = vpack.c.b16 %v5790, %v5786
    %v5959 = vpack.c.b16 %v5791, %v5787
    %v5960 = vpack.c.b16 %v5792, %v5788
    %v5961 = vpack.c.b16 %v5797, %v5793
    %v5962 = vpack.c.b16 %v5798, %v5794
    %v5963 = vpack.c.b16 %v5799, %v5795
    %v5964 = vpack.c.b16 %v5800, %v5796
    %v5965 = vpack.c.b16 %v5805, %v5801
    %v5966 = vpack.c.b16 %v5806, %v5802
    %v5967 = vpack.c.b16 %v5807, %v5803
    %v5968 = vpack.c.b16 %v5808, %v5804
    %v5969 = vpack.c.b16 %v5813, %v5809
    %v5970 = vpack.c.b16 %v5814, %v5810
    %v5971 = vpack.c.b16 %v5815, %v5811
    %v5972 = vpack.c.b16 %v5816, %v5812
    %v5973 = vpack.c.b16 %v5821, %v5817
    %v5974 = vpack.c.b16 %v5822, %v5818
    %v5975 = vpack.c.b16 %v5823, %v5819
    %v5976 = vpack.c.b16 %v5824, %v5820
    %v5977 = vpack.c.b16 %v5829, %v5825
    %v5978 = vpack.c.b16 %v5830, %v5826
    %v5979 = vpack.c.b16 %v5831, %v5827
    %v5980 = vpack.c.b16 %v5832, %v5828
    %v5981 = vpack.c.b16 %v5837, %v5833
    %v5982 = vpack.c.b16 %v5838, %v5834
    %v5983 = vpack.c.b16 %v5839, %v5835
    %v5984 = vpack.c.b16 %v5840, %v5836
    %v5985 = vpack.c.b16 %v5845, %v5841
    %v5986 = vpack.c.b16 %v5846, %v5842
    %v5987 = vpack.c.b16 %v5847, %v5843
    %v5988 = vpack.c.b16 %v5848, %v5844
    %v6130 = vsel %vm4880, %v5319, 0
    %v6133 = vsel %vm4880, %v5418, 0
    %6135 = vmatprep.subr.bf16.mxu0 %v5850
    %6136 = vmatpush1.bf16.msra.mxu0 %v5849
    %6137 = vmatprep.subr.bf16.mxu0 %v5854
    %6138 = vmatpush1.bf16.msra.mxu0 %v5853
    %6139 = vmatprep.subr.bf16.mxu0 %v5858
    %6140 = vmatpush1.bf16.msra.mxu0 %v5857
    %6141 = vmatprep.subr.bf16.mxu0 %v5862
    %6142 = vmatpush1.bf16.msra.mxu0 %v5861
    %6143 = vmatprep.subr.bf16.mxu0 %v5866
    %6144 = vmatpush1.bf16.msra.mxu0 %v5865
    %6145 = vmatprep.subr.bf16.mxu0 %v5870
    %6146 = vmatpush1.bf16.msra.mxu0 %v5869
    %6147 = vmatprep.subr.bf16.mxu0 %v5874
    %6148 = vmatpush1.bf16.msra.mxu0 %v5873
    %6149 = vmatprep.subr.bf16.mxu0 %v5878
    %6150 = vmatpush1.bf16.msra.mxu0 %v5877
    %6151 = vmatprep.subr.bf16.mxu0 %v5882
    %6152 = vmatpush1.bf16.msra.mxu0 %v5881
    %6153 = vmatprep.subr.bf16.mxu0 %v5886
    %6154 = vmatpush1.bf16.msra.mxu0 %v5885
    %6155 = vmatprep.subr.bf16.mxu0 %v5890
    %6156 = vmatpush1.bf16.msra.mxu0 %v5889
    %6157 = vmatprep.subr.bf16.mxu0 %v5894
    %6158 = vmatpush1.bf16.msra.mxu0 %v5893
    %6159 = vmatprep.subr.bf16.mxu0 %v5898
    %6160 = vmatpush1.bf16.msra.mxu0 %v5897
    %6161 = vmatprep.subr.bf16.mxu0 %v5902
    %6162 = vmatpush1.bf16.msra.mxu0 %v5901
    %6163 = vmatprep.subr.bf16.mxu0 %v5906
    %6164 = vmatpush1.bf16.msra.mxu0 %v5905
    %6165 = vmatprep.subr.bf16.mxu0 %v5910
    %6166 = vmatpush1.bf16.msra.mxu0 %v5909
    %6167 = vmatprep.mubr.bf16.mxu0 %v5320
    %6168 = vmatmul.mubr.bf16.gmra.mrb[0].mxu0 %v5317
    %v6169 = vpop.f32.mrb[0].mxu0
    %v6170 = vadd.f32 %v5028, %v6169
    %v6171 = vpop.f32.mrb[0].mxu0
    %v6172 = vadd.f32 %v5030, %v6171
    %v6173 = vpop.f32.mrb[0].mxu0
    %v6174 = vadd.f32 %v5032, %v6173
    %v6175 = vpop.f32.mrb[0].mxu0
    %v6176 = vadd.f32 %v5034, %v6175
    %6177 = vmatprep.mubr.bf16.mxu0 %v5419
    %6178 = vmatmul.mubr.bf16.gmra.mrb[0].mxu0 %v5416
    %v6179 = vpop.f32.mrb[0].mxu0
    %v6180 = vadd.f32 %v5038, %v6179
    %v6181 = vpop.f32.mrb[0].mxu0
    %v6182 = vadd.f32 %v5040, %v6181
    %v6183 = vpop.f32.mrb[0].mxu0
    %v6184 = vadd.f32 %v5042, %v6183
    %v6185 = vpop.f32.mrb[0].mxu0
    %v6186 = vadd.f32 %v5044, %v6185
    %6187 = vdwg.mxu0
    %6188 = vmatprep.subr.bf16.mxu0 %v5914
    %6189 = vmatpush1.bf16.msra.mxu0 %v5913
    %6190 = vmatprep.subr.bf16.mxu0 %v5918
    %6191 = vmatpush1.bf16.msra.mxu0 %v5917
    %6192 = vmatprep.subr.bf16.mxu0 %v5922
    %6193 = vmatpush1.bf16.msra.mxu0 %v5921
    %6194 = vmatprep.subr.bf16.mxu0 %v5926
    %6195 = vmatpush1.bf16.msra.mxu0 %v5925
    %6196 = vmatprep.subr.bf16.mxu0 %v5930
    %6197 = vmatpush1.bf16.msra.mxu0 %v5929
    %6198 = vmatprep.subr.bf16.mxu0 %v5934
    %6199 = vmatpush1.bf16.msra.mxu0 %v5933
    %6200 = vmatprep.subr.bf16.mxu0 %v5938
    %6201 = vmatpush1.bf16.msra.mxu0 %v5937
    %6202 = vmatprep.subr.bf16.mxu0 %v5942
    %6203 = vmatpush1.bf16.msra.mxu0 %v5941
    %6204 = vmatprep.subr.bf16.mxu0 %v5946
    %6205 = vmatpush1.bf16.msra.mxu0 %v5945
    %6206 = vmatprep.subr.bf16.mxu0 %v5950
    %6207 = vmatpush1.bf16.msra.mxu0 %v5949
    %6208 = vmatprep.subr.bf16.mxu0 %v5954
    %6209 = vmatpush1.bf16.msra.mxu0 %v5953
    %6210 = vmatprep.subr.bf16.mxu0 %v5958
    %6211 = vmatpush1.bf16.msra.mxu0 %v5957
    %6212 = vmatprep.subr.bf16.mxu0 %v5962
    %6213 = vmatpush1.bf16.msra.mxu0 %v5961
    %6214 = vmatprep.subr.bf16.mxu0 %v5966
    %6215 = vmatpush1.bf16.msra.mxu0 %v5965
    %6216 = vmatprep.subr.bf16.mxu0 %v5970
    %6217 = vmatpush1.bf16.msra.mxu0 %v5969
    %6218 = vmatprep.subr.bf16.mxu0 %v5974
    %6219 = vmatpush1.bf16.msra.mxu0 %v5973
    %6220 = vmatprep.mubr.bf16.mxu0 %v5321
    %6221 = vmatmul.mubr.bf16.gmra.mrb[0].mxu0 %v5318
    %v6222 = vpop.f32.mrb[0].mxu0
    %v6223 = vadd.f32 %v6170, %v6222
    %v6224 = vpop.f32.mrb[0].mxu0
    %v6225 = vadd.f32 %v6172, %v6224
    %v6226 = vpop.f32.mrb[0].mxu0
    %v6227 = vadd.f32 %v6174, %v6226
    %v6228 = vpop.f32.mrb[0].mxu0
    %v6229 = vadd.f32 %v6176, %v6228
    %6230 = vmatprep.mubr.bf16.mxu0 %v5420
    %6231 = vmatmul.mubr.bf16.gmra.mrb[0].mxu0 %v5417
    %v6232 = vpop.f32.mrb[0].mxu0
    %v6233 = vadd.f32 %v6180, %v6232
    %v6234 = vpop.f32.mrb[0].mxu0
    %v6235 = vadd.f32 %v6182, %v6234
    %v6236 = vpop.f32.mrb[0].mxu0
    %v6237 = vadd.f32 %v6184, %v6236
    %v6238 = vpop.f32.mrb[0].mxu0
    %v6239 = vadd.f32 %v6186, %v6238
    %6240 = vdwg.mxu0
    %6241 = vmatprep.subr.bf16.mxu0 %v5978
    %6242 = vmatpush1.bf16.msra.mxu0 %v5977
    %6243 = vmatprep.subr.bf16.mxu0 %v5982
    %6244 = vmatpush1.bf16.msra.mxu0 %v5981
    %6245 = vmatprep.subr.bf16.mxu0 %v5986
    %6246 = vmatpush1.bf16.msra.mxu0 %v5985
    %6247 = vmatprep.subr.bf16.mxu0 0
    %6248 = vmatpush1.bf16.msra.mxu0 0
    %6249 = vmatprep.subr.bf16.mxu0 0
    %6250 = vmatpush1.bf16.msra.mxu0 0
    %6251 = vmatprep.subr.bf16.mxu0 0
    %6252 = vmatpush1.bf16.msra.mxu0 0
    %6253 = vmatprep.subr.bf16.mxu0 0
    %6254 = vmatpush1.bf16.msra.mxu0 0
    %6255 = vmatprep.subr.bf16.mxu0 0
    %6256 = vmatpush1.bf16.msra.mxu0 0
    %6257 = vmatprep.subr.bf16.mxu0 0
    %6258 = vmatpush1.bf16.msra.mxu0 0
    %6259 = vmatprep.subr.bf16.mxu0 0
    %6260 = vmatpush1.bf16.msra.mxu0 0
    %6261 = vmatprep.subr.bf16.mxu0 0
    %6262 = vmatpush1.bf16.msra.mxu0 0
    %6263 = vmatprep.subr.bf16.mxu0 0
    %6264 = vmatpush1.bf16.msra.mxu0 0
    %6265 = vmatprep.subr.bf16.mxu0 0
    %6266 = vmatpush1.bf16.msra.mxu0 0
    %6267 = vmatprep.subr.bf16.mxu0 0
    %6268 = vmatpush1.bf16.msra.mxu0 0
    %6269 = vmatprep.subr.bf16.mxu0 0
    %6270 = vmatpush1.bf16.msra.mxu0 0
    %6271 = vmatprep.subr.bf16.mxu0 0
    %6272 = vmatpush1.bf16.msra.mxu0 0
    %6273 = vmatprep.mubr.bf16.mxu0 0
    %6274 = vmatmul.mubr.bf16.gmra.mrb[0].mxu0 %v6130
    %v6275 = vpop.f32.mrb[0].mxu0
    %v6276 = vadd.f32 %v6223, %v6275
    %v6277 = vpop.f32.mrb[0].mxu0
    %v6278 = vadd.f32 %v6225, %v6277
    %v6279 = vpop.f32.mrb[0].mxu0
    %v6280 = vadd.f32 %v6227, %v6279
    %v6281 = vpop.f32.mrb[0].mxu0
    %v6282 = vadd.f32 %v6229, %v6281
    %6283 = vmatprep.mubr.bf16.mxu0 0
    %6284 = vmatmul.mubr.bf16.gmra.mrb[0].mxu0 %v6133
    %v6285 = vpop.f32.mrb[0].mxu0
    %v6286 = vadd.f32 %v6233, %v6285
    %v6287 = vpop.f32.mrb[0].mxu0
    %v6288 = vadd.f32 %v6235, %v6287
    %v6289 = vpop.f32.mrb[0].mxu0
    %v6290 = vadd.f32 %v6237, %v6289
    %v6291 = vpop.f32.mrb[0].mxu0
    %v6292 = vadd.f32 %v6239, %v6291
    %6293 = vdwg.mxu0
    %6294 = vmatprep.subr.bf16.mxu0 %v5852
    %6295 = vmatpush1.bf16.msra.mxu0 %v5851
    %6296 = vmatprep.subr.bf16.mxu0 %v5856
    %6297 = vmatpush1.bf16.msra.mxu0 %v5855
    %6298 = vmatprep.subr.bf16.mxu0 %v5860
    %6299 = vmatpush1.bf16.msra.mxu0 %v5859
    %6300 = vmatprep.subr.bf16.mxu0 %v5864
    %6301 = vmatpush1.bf16.msra.mxu0 %v5863
    %6302 = vmatprep.subr.bf16.mxu0 %v5868
    %6303 = vmatpush1.bf16.msra.mxu0 %v5867
    %6304 = vmatprep.subr.bf16.mxu0 %v5872
    %6305 = vmatpush1.bf16.msra.mxu0 %v5871
    %6306 = vmatprep.subr.bf16.mxu0 %v5876
    %6307 = vmatpush1.bf16.msra.mxu0 %v5875
    %6308 = vmatprep.subr.bf16.mxu0 %v5880
    %6309 = vmatpush1.bf16.msra.mxu0 %v5879
    %6310 = vmatprep.subr.bf16.mxu0 %v5884
    %6311 = vmatpush1.bf16.msra.mxu0 %v5883
    %6312 = vmatprep.subr.bf16.mxu0 %v5888
    %6313 = vmatpush1.bf16.msra.mxu0 %v5887
    %6314 = vmatprep.subr.bf16.mxu0 %v5892
    %6315 = vmatpush1.bf16.msra.mxu0 %v5891
    %6316 = vmatprep.subr.bf16.mxu0 %v5896
    %6317 = vmatpush1.bf16.msra.mxu0 %v5895
    %6318 = vmatprep.subr.bf16.mxu0 %v5900
    %6319 = vmatpush1.bf16.msra.mxu0 %v5899
    %6320 = vmatprep.subr.bf16.mxu0 %v5904
    %6321 = vmatpush1.bf16.msra.mxu0 %v5903
    %6322 = vmatprep.subr.bf16.mxu0 %v5908
    %6323 = vmatpush1.bf16.msra.mxu0 %v5907
    %6324 = vmatprep.subr.bf16.mxu0 %v5912
    %6325 = vmatpush1.bf16.msra.mxu0 %v5911
    %6326 = vmatprep.mubr.bf16.mxu0 %v5320
    %6327 = vmatmul.mubr.bf16.gmra.mrb[0].mxu0 %v5317
    %v6328 = vpop.f32.mrb[0].mxu0
    %v6329 = vadd.f32 %v5187, %v6328
    %v6330 = vpop.f32.mrb[0].mxu0
    %v6331 = vadd.f32 %v5189, %v6330
    %v6332 = vpop.f32.mrb[0].mxu0
    %v6333 = vadd.f32 %v5191, %v6332
    %v6334 = vpop.f32.mrb[0].mxu0
    %v6335 = vadd.f32 %v5193, %v6334
    %6336 = vmatprep.mubr.bf16.mxu0 %v5419
    %6337 = vmatmul.mubr.bf16.gmra.mrb[0].mxu0 %v5416
    %v6338 = vpop.f32.mrb[0].mxu0
    %v6339 = vadd.f32 %v5197, %v6338
    %v6340 = vpop.f32.mrb[0].mxu0
    %v6341 = vadd.f32 %v5199, %v6340
    %v6342 = vpop.f32.mrb[0].mxu0
    %v6343 = vadd.f32 %v5201, %v6342
    %v6344 = vpop.f32.mrb[0].mxu0
    %v6345 = vadd.f32 %v5203, %v6344
    %6346 = vdwg.mxu0
    %6347 = vmatprep.subr.bf16.mxu0 %v5916
    %6348 = vmatpush1.bf16.msra.mxu0 %v5915
    %6349 = vmatprep.subr.bf16.mxu0 %v5920
    %6350 = vmatpush1.bf16.msra.mxu0 %v5919
    %6351 = vmatprep.subr.bf16.mxu0 %v5924
    %6352 = vmatpush1.bf16.msra.mxu0 %v5923
    %6353 = vmatprep.subr.bf16.mxu0 %v5928
    %6354 = vmatpush1.bf16.msra.mxu0 %v5927
    %6355 = vmatprep.subr.bf16.mxu0 %v5932
    %6356 = vmatpush1.bf16.msra.mxu0 %v5931
    %6357 = vmatprep.subr.bf16.mxu0 %v5936
    %6358 = vmatpush1.bf16.msra.mxu0 %v5935
    %6359 = vmatprep.subr.bf16.mxu0 %v5940
    %6360 = vmatpush1.bf16.msra.mxu0 %v5939
    %6361 = vmatprep.subr.bf16.mxu0 %v5944
    %6362 = vmatpush1.bf16.msra.mxu0 %v5943
    %6363 = vmatprep.subr.bf16.mxu0 %v5948
    %6364 = vmatpush1.bf16.msra.mxu0 %v5947
    %6365 = vmatprep.subr.bf16.mxu0 %v5952
    %6366 = vmatpush1.bf16.msra.mxu0 %v5951
    %6367 = vmatprep.subr.bf16.mxu0 %v5956
    %6368 = vmatpush1.bf16.msra.mxu0 %v5955
    %6369 = vmatprep.subr.bf16.mxu0 %v5960
    %6370 = vmatpush1.bf16.msra.mxu0 %v5959
    %6371 = vmatprep.subr.bf16.mxu0 %v5964
    %6372 = vmatpush1.bf16.msra.mxu0 %v5963
    %6373 = vmatprep.subr.bf16.mxu0 %v5968
    %6374 = vmatpush1.bf16.msra.mxu0 %v5967
    %6375 = vmatprep.subr.bf16.mxu0 %v5972
    %6376 = vmatpush1.bf16.msra.mxu0 %v5971
    %6377 = vmatprep.subr.bf16.mxu0 %v5976
    %6378 = vmatpush1.bf16.msra.mxu0 %v5975
    %6379 = vmatprep.mubr.bf16.mxu0 %v5321
    %6380 = vmatmul.mubr.bf16.gmra.mrb[0].mxu0 %v5318
    %v6381 = vpop.f32.mrb[0].mxu0
    %v6382 = vadd.f32 %v6329, %v6381
    %v6383 = vpop.f32.mrb[0].mxu0
    %v6384 = vadd.f32 %v6331, %v6383
    %v6385 = vpop.f32.mrb[0].mxu0
    %v6386 = vadd.f32 %v6333, %v6385
    %v6387 = vpop.f32.mrb[0].mxu0
    %v6388 = vadd.f32 %v6335, %v6387
    %6389 = vmatprep.mubr.bf16.mxu0 %v5420
    %6390 = vmatmul.mubr.bf16.gmra.mrb[0].mxu0 %v5417
    %v6391 = vpop.f32.mrb[0].mxu0
    %v6392 = vadd.f32 %v6339, %v6391
    %v6393 = vpop.f32.mrb[0].mxu0
    %v6394 = vadd.f32 %v6341, %v6393
    %v6395 = vpop.f32.mrb[0].mxu0
    %v6396 = vadd.f32 %v6343, %v6395
    %v6397 = vpop.f32.mrb[0].mxu0
    %v6398 = vadd.f32 %v6345, %v6397
    %6399 = vdwg.mxu0
    %6400 = vmatprep.subr.bf16.mxu0 %v5980
    %6401 = vmatpush1.bf16.msra.mxu0 %v5979
    %6402 = vmatprep.subr.bf16.mxu0 %v5984
    %6403 = vmatpush1.bf16.msra.mxu0 %v5983
    %6404 = vmatprep.subr.bf16.mxu0 %v5988
    %6405 = vmatpush1.bf16.msra.mxu0 %v5987
    %6406 = vmatprep.subr.bf16.mxu0 0
    %6407 = vmatpush1.bf16.msra.mxu0 0
    %6408 = vmatprep.subr.bf16.mxu0 0
    %6409 = vmatpush1.bf16.msra.mxu0 0
    %6410 = vmatprep.subr.bf16.mxu0 0
    %6411 = vmatpush1.bf16.msra.mxu0 0
    %6412 = vmatprep.subr.bf16.mxu0 0
    %6413 = vmatpush1.bf16.msra.mxu0 0
    %6414 = vmatprep.subr.bf16.mxu0 0
    %6415 = vmatpush1.bf16.msra.mxu0 0
    %6416 = vmatprep.subr.bf16.mxu0 0
    %6417 = vmatpush1.bf16.msra.mxu0 0
    %6418 = vmatprep.subr.bf16.mxu0 0
    %6419 = vmatpush1.bf16.msra.mxu0 0
    %6420 = vmatprep.subr.bf16.mxu0 0
    %6421 = vmatpush1.bf16.msra.mxu0 0
    %6422 = vmatprep.subr.bf16.mxu0 0
    %6423 = vmatpush1.bf16.msra.mxu0 0
    %6424 = vmatprep.subr.bf16.mxu0 0
    %6425 = vmatpush1.bf16.msra.mxu0 0
    %6426 = vmatprep.subr.bf16.mxu0 0
    %6427 = vmatpush1.bf16.msra.mxu0 0
    %6428 = vmatprep.subr.bf16.mxu0 0
    %6429 = vmatpush1.bf16.msra.mxu0 0
    %6430 = vmatprep.subr.bf16.mxu0 0
    %6431 = vmatpush1.bf16.msra.mxu0 0
    %6432 = vmatprep.mubr.bf16.mxu0 0
    %6433 = vmatmul.mubr.bf16.gmra.mrb[0].mxu0 %v6130
    %v6434 = vpop.f32.mrb[0].mxu0
    %v6435 = vadd.f32 %v6382, %v6434
    %v6436 = vpop.f32.mrb[0].mxu0
    %v6437 = vadd.f32 %v6384, %v6436
    %v6438 = vpop.f32.mrb[0].mxu0
    %v6439 = vadd.f32 %v6386, %v6438
    %v6440 = vpop.f32.mrb[0].mxu0
    %v6441 = vadd.f32 %v6388, %v6440
    %6442 = vmatprep.mubr.bf16.mxu0 0
    %6443 = vmatmul.mubr.bf16.gmra.mrb[0].mxu0 %v6133
    %v6444 = vpop.f32.mrb[0].mxu0
    %v6445 = vadd.f32 %v6392, %v6444
    %v6446 = vpop.f32.mrb[0].mxu0
    %v6447 = vadd.f32 %v6394, %v6446
    %v6448 = vpop.f32.mrb[0].mxu0
    %v6449 = vadd.f32 %v6396, %v6448
    %v6450 = vpop.f32.mrb[0].mxu0
    %v6451 = vadd.f32 %v6398, %v6450
    %6452 = vdwg.mxu0
    %s6453 = scalar_lea.vmem [#allocation7], 2240
    %v6454 = vld [vmem:[%s6453] sm:$0xff]
    %v6455 = vld [vmem:[%s6453 + $0x8] sm:$0xff]
    %v6456 = vld [vmem:[%s6453 + $0x10] sm:$0xff]
    %v6457 = vld [vmem:[%s6453 + $0x18] sm:$0xff]
    %v6458 = vld [vmem:[%s6453 + $0x20] sm:$0xff]
    %v6459 = vld [vmem:[%s6453 + $0x28] sm:$0xff]
    %v6460 = vld [vmem:[%s6453 + $0x30] sm:$0xff]
    %v6461 = vld [vmem:[%s6453 + $0x38] sm:$0xff]
    %v6462 = vld [vmem:[%s6453 + $0x40] sm:$0xff]
    %v6463 = vld [vmem:[%s6453 + $0x48] sm:$0xff]
    %v6464 = vld [vmem:[%s6453 + $0x50] sm:$0xff]
    %v6465 = vld [vmem:[%s6453 + $0x58] sm:$0xff]
    %v6466 = vld [vmem:[%s6453 + $0x60] sm:$0xff]
    %v6467 = vld [vmem:[%s6453 + $0x68] sm:$0xff]
    %v6468 = vld [vmem:[%s6453 + $0x70] sm:$0xff]
    %v6469 = vld [vmem:[%s6453 + $0x78] sm:$0xff]
    %v6470 = vld [vmem:[%s6453 + $0x80] sm:$0xff]
    %v6471 = vld [vmem:[%s6453 + $0x88] sm:$0xff]
    %v6472 = vld [vmem:[%s6453 + $0x90] sm:$0xff]
    %v6473 = vld [vmem:[%s6453 + $0x98] sm:$0xff]
    %v6474 = vld [vmem:[%s6453 + $0xa0] sm:$0xff]
    %v6475 = vld [vmem:[%s6453 + $0xa8] sm:$0xff]
    %v6476 = vld [vmem:[%s6453 + $0xb0] sm:$0xff]
    %v6477 = vld [vmem:[%s6453 + $0xb8] sm:$0xff]
    %v6478 = vld [vmem:[%s6453 + $0xc0] sm:$0xff]
    %v6479 = vld [vmem:[%s6453 + $0xc8] sm:$0xff]
    %v6480 = vld [vmem:[%s6453 + $0xd0] sm:$0xff]
    %v6481 = vld [vmem:[%s6453 + $0xd8] sm:$0xff]
    %v6482 = vld [vmem:[%s6453 + $0xe0] sm:$0xff]
    %v6483 = vld [vmem:[%s6453 + $0xe8] sm:$0xff]
    %v6484 = vld [vmem:[%s6453 + $0xf0] sm:$0xff]
    %v6485 = vld [vmem:[%s6453 + $0xf8] sm:$0xff]
    %v6486 = vld [vmem:[%s6453 + $0x100] sm:$0xff]
    %v6487 = vld [vmem:[%s6453 + $0x108] sm:$0xff]
    %v6488 = vld [vmem:[%s6453 + $0x110] sm:$0xff]
    %v6489 = vld [vmem:[%s6453 + $0x118] sm:$0xff]
    %v6490 = vld [vmem:[%s6453 + $0x120] sm:$0xff]
    %v6491 = vld [vmem:[%s6453 + $0x128] sm:$0xff]
    %v6492 = vld [vmem:[%s6453 + $0x130] sm:$0xff]
    %v6493 = vld [vmem:[%s6453 + $0x138] sm:$0xff]
    %v6494 = vld [vmem:[%s6453 + $0x140] sm:$0xff]
    %v6495 = vld [vmem:[%s6453 + $0x148] sm:$0xff]
    %v6496 = vld [vmem:[%s6453 + $0x150] sm:$0xff]
    %v6497 = vld [vmem:[%s6453 + $0x158] sm:$0xff]
    %v6498 = vld [vmem:[%s6453 + $0x160] sm:$0xff]
    %v6499 = vld [vmem:[%s6453 + $0x168] sm:$0xff]
    %v6500 = vld [vmem:[%s6453 + $0x170] sm:$0xff]
    %v6501 = vld [vmem:[%s6453 + $0x178] sm:$0xff]
    %v6502 = vld [vmem:[%s6453 + $0x180] sm:$0xff]
    %v6503 = vld [vmem:[%s6453 + $0x188] sm:$0xff]
    %v6504 = vld [vmem:[%s6453 + $0x190] sm:$0xff]
    %v6505 = vld [vmem:[%s6453 + $0x198] sm:$0xff]
    %v6506 = vld [vmem:[%s6453 + $0x1a0] sm:$0xff]
    %v6507 = vld [vmem:[%s6453 + $0x1a8] sm:$0xff]
    %v6508 = vld [vmem:[%s6453 + $0x1b0] sm:$0xff]
    %v6509 = vld [vmem:[%s6453 + $0x1b8] sm:$0xff]
    %v6510 = vld [vmem:[%s6453 + $0x1c0] sm:$0xff]
    %v6511 = vld [vmem:[%s6453 + $0x1c8] sm:$0xff]
    %v6512 = vld [vmem:[%s6453 + $0x1d0] sm:$0xff]
    %v6513 = vld [vmem:[%s6453 + $0x1d8] sm:$0xff]
    %v6514 = vld [vmem:[%s6453 + $0x1e0] sm:$0xff]
    %v6515 = vld [vmem:[%s6453 + $0x1e8] sm:$0xff]
    %v6516 = vld [vmem:[%s6453 + $0x1f0] sm:$0xff]
    %v6517 = vld [vmem:[%s6453 + $0x1f8] sm:$0xff]
    %v6518 = vld [vmem:[%s6453 + $0x200] sm:$0xff]
    %v6519 = vld [vmem:[%s6453 + $0x208] sm:$0xff]
    %v6520 = vld [vmem:[%s6453 + $0x210] sm:$0xff]
    %v6521 = vld [vmem:[%s6453 + $0x218] sm:$0xff]
    %v6522 = vld [vmem:[%s6453 + $0x220] sm:$0xff]
    %v6523 = vld [vmem:[%s6453 + $0x228] sm:$0xff]
    %v6524 = vld [vmem:[%s6453 + $0x230] sm:$0xff]
    %v6525 = vld [vmem:[%s6453 + $0x238] sm:$0xff]
    %v6526 = vld [vmem:[%s6453 + $0x240] sm:$0xff]
    %v6527 = vld [vmem:[%s6453 + $0x248] sm:$0xff]
    %v6528 = vld [vmem:[%s6453 + $0x250] sm:$0xff]
    %v6529 = vld [vmem:[%s6453 + $0x258] sm:$0xff]
    %v6530 = vld [vmem:[%s6453 + $0x260] sm:$0xff]
    %v6531 = vld [vmem:[%s6453 + $0x268] sm:$0xff]
    %v6532 = vld [vmem:[%s6453 + $0x270] sm:$0xff]
    %v6533 = vld [vmem:[%s6453 + $0x278] sm:$0xff]
    %v6534 = vld [vmem:[%s6453 + $0x280] sm:$0xff]
    %v6535 = vld [vmem:[%s6453 + $0x288] sm:$0xff]
    %v6536 = vld [vmem:[%s6453 + $0x290] sm:$0xff]
    %v6537 = vld [vmem:[%s6453 + $0x298] sm:$0xff]
    %v6538 = vld [vmem:[%s6453 + $0x2a0] sm:$0xff]
    %v6539 = vld [vmem:[%s6453 + $0x2a8] sm:$0xff]
    %v6540 = vld [vmem:[%s6453 + $0x2b0] sm:$0xff]
    %v6541 = vld [vmem:[%s6453 + $0x2b8] sm:$0xff]
    %v6542 = vld [vmem:[%s6453 + $0x2c0] sm:$0xff]
    %v6543 = vld [vmem:[%s6453 + $0x2c8] sm:$0xff]
    %v6544 = vld [vmem:[%s6453 + $0x2d0] sm:$0xff]
    %v6545 = vld [vmem:[%s6453 + $0x2d8] sm:$0xff]
    %v6546 = vld [vmem:[%s6453 + $0x2e0] sm:$0xff]
    %v6547 = vld [vmem:[%s6453 + $0x2e8] sm:$0xff]
    %v6548 = vld [vmem:[%s6453 + $0x2f0] sm:$0xff]
    %v6549 = vld [vmem:[%s6453 + $0x2f8] sm:$0xff]
    %v6550 = vld [vmem:[%s6453 + $0x300] sm:$0xff]
    %v6551 = vld [vmem:[%s6453 + $0x308] sm:$0xff]
    %v6552 = vld [vmem:[%s6453 + $0x310] sm:$0xff]
    %v6553 = vld [vmem:[%s6453 + $0x318] sm:$0xff]
    %v6554 = vld [vmem:[%s6453 + $0x320] sm:$0xff]
    %v6555 = vld [vmem:[%s6453 + $0x328] sm:$0xff]
    %v6556 = vld [vmem:[%s6453 + $0x330] sm:$0xff]
    %v6557 = vld [vmem:[%s6453 + $0x338] sm:$0xff]
    %v6558 = vld [vmem:[%s6453 + $0x340] sm:$0xff]
    %v6559 = vld [vmem:[%s6453 + $0x348] sm:$0xff]
    %v6560 = vld [vmem:[%s6453 + $0x350] sm:$0xff]
    %v6561 = vld [vmem:[%s6453 + $0x358] sm:$0xff]
    %v6562 = vld [vmem:[%s6453 + $0x360] sm:$0xff]
    %v6563 = vld [vmem:[%s6453 + $0x368] sm:$0xff]
    %v6564 = vld [vmem:[%s6453 + $0x370] sm:$0xff]
    %v6565 = vld [vmem:[%s6453 + $0x378] sm:$0xff]
    %v6566 = vld [vmem:[%s6453 + $0x380] sm:$0xff]
    %v6567 = vld [vmem:[%s6453 + $0x388] sm:$0xff]
    %v6568 = vld [vmem:[%s6453 + $0x390] sm:$0xff]
    %v6569 = vld [vmem:[%s6453 + $0x398] sm:$0xff]
    %v6570 = vld [vmem:[%s6453 + $0x3a0] sm:$0xff]
    %v6571 = vld [vmem:[%s6453 + $0x3a8] sm:$0xff]
    %v6572 = vld [vmem:[%s6453 + $0x3b0] sm:$0xff]
    %v6573 = vld [vmem:[%s6453 + $0x3b8] sm:$0xff]
    %v6574 = vld [vmem:[%s6453 + $0x3c0] sm:$0xff]
    %v6575 = vld [vmem:[%s6453 + $0x3c8] sm:$0xff]
    %v6576 = vld [vmem:[%s6453 + $0x3d0] sm:$0xff]
    %v6577 = vld [vmem:[%s6453 + $0x3d8] sm:$0xff]
    %v6578 = vld [vmem:[%s6453 + $0x3e0] sm:$0xff]
    %v6579 = vld [vmem:[%s6453 + $0x3e8] sm:$0xff]
    %v6580 = vld [vmem:[%s6453 + $0x3f0] sm:$0xff]
    %v6581 = vld [vmem:[%s6453 + $0x3f8] sm:$0xff]
    %v6582 = vld [vmem:[%s6453 + $0x400] sm:$0xff]
    %v6583 = vld [vmem:[%s6453 + $0x408] sm:$0xff]
    %v6584 = vld [vmem:[%s6453 + $0x410] sm:$0xff]
    %v6585 = vld [vmem:[%s6453 + $0x418] sm:$0xff]
    %v6586 = vld [vmem:[%s6453 + $0x420] sm:$0xff]
    %v6587 = vld [vmem:[%s6453 + $0x428] sm:$0xff]
    %v6588 = vld [vmem:[%s6453 + $0x430] sm:$0xff]
    %v6589 = vld [vmem:[%s6453 + $0x438] sm:$0xff]
    %v6590 = vld [vmem:[%s6453 + $0x440] sm:$0xff]
    %v6591 = vld [vmem:[%s6453 + $0x448] sm:$0xff]
    %v6592 = vld [vmem:[%s6453 + $0x450] sm:$0xff]
    %v6593 = vld [vmem:[%s6453 + $0x458] sm:$0xff]
    %v6594 = vcombine.low %v3474, %v3471
    %v6595 = vcombine.high %v3474, %v3471
    %v6596 = vcombine.low %v3475, %v3472
    %v6597 = vcombine.high %v3475, %v3472
    %v6598 = vcombine.low %v3476, %v3473
    %v6599 = vcombine.high %v3476, %v3473
    %v6600 = vcombine.low %v3688, %v3545
    %v6601 = vcombine.high %v3688, %v3545
    %v6603 = vunpack.c.l.s4 1966171168
    %v6604 = vunpack.c.0.s8 %v6603
    %v6605 = vlaneseq
    %v6606 = vshrl.u32 %v6605, 7
    %v6607 = vsub.s32 %v6604, %v6606
    %v6608 = vrot.slane %v6594, %v6607
    %v6610 = vunpack.c.l.s4 1966171168
    %v6611 = vunpack.c.0.s8 %v6610
    %v6612 = vlaneseq
    %v6613 = vshrl.u32 %v6612, 7
    %v6614 = vsub.s32 %v6611, %v6613
    %v6615 = vrot.slane %v6595, %v6614
    %v6617 = vunpack.c.l.s4 1966171168
    %v6618 = vunpack.c.0.s8 %v6617
    %v6619 = vlaneseq
    %v6620 = vshrl.u32 %v6619, 7
    %v6621 = vsub.s32 %v6618, %v6620
    %v6622 = vrot.slane %v6596, %v6621
    %v6624 = vunpack.c.l.s4 1966171168
    %v6625 = vunpack.c.0.s8 %v6624
    %v6626 = vlaneseq
    %v6627 = vshrl.u32 %v6626, 7
    %v6628 = vsub.s32 %v6625, %v6627
    %v6629 = vrot.slane %v6597, %v6628
    %v6631 = vunpack.c.l.s4 1966171168
    %v6632 = vunpack.c.0.s8 %v6631
    %v6633 = vlaneseq
    %v6634 = vshrl.u32 %v6633, 7
    %v6635 = vsub.s32 %v6632, %v6634
    %v6636 = vrot.slane %v6598, %v6635
    %v6638 = vunpack.c.l.s4 1966171168
    %v6639 = vunpack.c.0.s8 %v6638
    %v6640 = vlaneseq
    %v6641 = vshrl.u32 %v6640, 7
    %v6642 = vsub.s32 %v6639, %v6641
    %v6643 = vrot.slane %v6599, %v6642
    %v6645 = vunpack.c.l.s4 1966171168
    %v6646 = vunpack.c.0.s8 %v6645
    %v6647 = vlaneseq
    %v6648 = vshrl.u32 %v6647, 7
    %v6649 = vsub.s32 %v6646, %v6648
    %v6650 = vrot.slane %v6600, %v6649
    %v6652 = vunpack.c.l.s4 1966171168
    %v6653 = vunpack.c.0.s8 %v6652
    %v6654 = vlaneseq
    %v6655 = vshrl.u32 %v6654, 7
    %v6656 = vsub.s32 %v6653, %v6655
    %v6657 = vrot.slane %v6601, %v6656
    %v6658 = vcombine.low %v6608, %v6622
    %v6659 = vcombine.high %v6608, %v6622
    %v6660 = vcombine.low %v6615, %v6629
    %v6661 = vcombine.low %v6636, %v6650
    %v6662 = vcombine.high %v6636, %v6650
    %v6663 = vcombine.low %v6643, %v6657
    %v6665 = vunpack.c.l.s4 1966171168
    %v6666 = vunpack.c.0.s8 %v6665
    %v6667 = vlaneseq
    %v6668 = vshrl.u32 %v6667, 7
    %v6669 = vsub.s32 %v6666, %v6668
    %v6670 = vrot.slane %v6658, %v6669
    %v6672 = vunpack.c.l.s4 1966171168
    %v6673 = vunpack.c.0.s8 %v6672
    %v6674 = vlaneseq
    %v6675 = vshrl.u32 %v6674, 7
    %v6676 = vsub.s32 %v6673, %v6675
    %v6677 = vrot.slane %v6660, %v6676
    %v6679 = vunpack.c.l.s4 1966171168
    %v6680 = vunpack.c.0.s8 %v6679
    %v6681 = vlaneseq
    %v6682 = vshrl.u32 %v6681, 7
    %v6683 = vsub.s32 %v6680, %v6682
    %v6684 = vrot.slane %v6659, %v6683
    %v6686 = vunpack.c.l.s4 1966171168
    %v6687 = vunpack.c.0.s8 %v6686
    %v6688 = vlaneseq
    %v6689 = vshrl.u32 %v6688, 7
    %v6690 = vsub.s32 %v6687, %v6689
    %v6691 = vrot.slane %v6661, %v6690
    %v6693 = vunpack.c.l.s4 1966171168
    %v6694 = vunpack.c.0.s8 %v6693
    %v6695 = vlaneseq
    %v6696 = vshrl.u32 %v6695, 7
    %v6697 = vsub.s32 %v6694, %v6696
    %v6698 = vrot.slane %v6663, %v6697
    %v6700 = vunpack.c.l.s4 1966171168
    %v6701 = vunpack.c.0.s8 %v6700
    %v6702 = vlaneseq
    %v6703 = vshrl.u32 %v6702, 7
    %v6704 = vsub.s32 %v6701, %v6703
    %v6705 = vrot.slane %v6662, %v6704
    %v6706 = vcombine.low %v6670, %v6691
    %v6707 = vcombine.high %v6670, %v6691
    %v6708 = vcombine.low %v6677, %v6698
    %v6709 = vcombine.low %v6684, %v6705
    %v6710 = vcombine.high %v6684, %v6705
    %v6711 = vcombine.low %v3542, %v3546
    %v6712 = vcombine.high %v3542, %v3546
    %v6713 = vcombine.low %v3543, %v3547
    %v6714 = vcombine.high %v3543, %v3547
    %v6715 = vcombine.low %v3544, %v3689
    %v6716 = vcombine.high %v3544, %v3689
    %v6718 = vunpack.c.l.s4 1966171168
    %v6719 = vunpack.c.0.s8 %v6718
    %v6720 = vlaneseq
    %v6721 = vshrl.u32 %v6720, 7
    %v6722 = vsub.s32 %v6719, %v6721
    %v6723 = vrot.slane %v6711, %v6722
    %v6725 = vunpack.c.l.s4 1966171168
    %v6726 = vunpack.c.0.s8 %v6725
    %v6727 = vlaneseq
    %v6728 = vshrl.u32 %v6727, 7
    %v6729 = vsub.s32 %v6726, %v6728
    %v6730 = vrot.slane %v6712, %v6729
    %v6732 = vunpack.c.l.s4 1966171168
    %v6733 = vunpack.c.0.s8 %v6732
    %v6734 = vlaneseq
    %v6735 = vshrl.u32 %v6734, 7
    %v6736 = vsub.s32 %v6733, %v6735
    %v6737 = vrot.slane %v6713, %v6736
    %v6739 = vunpack.c.l.s4 1966171168
    %v6740 = vunpack.c.0.s8 %v6739
    %v6741 = vlaneseq
    %v6742 = vshrl.u32 %v6741, 7
    %v6743 = vsub.s32 %v6740, %v6742
    %v6744 = vrot.slane %v6714, %v6743
    %v6746 = vunpack.c.l.s4 1966171168
    %v6747 = vunpack.c.0.s8 %v6746
    %v6748 = vlaneseq
    %v6749 = vshrl.u32 %v6748, 7
    %v6750 = vsub.s32 %v6747, %v6749
    %v6751 = vrot.slane %v6715, %v6750
    %v6753 = vunpack.c.l.s4 1966171168
    %v6754 = vunpack.c.0.s8 %v6753
    %v6755 = vlaneseq
    %v6756 = vshrl.u32 %v6755, 7
    %v6757 = vsub.s32 %v6754, %v6756
    %v6758 = vrot.slane %v6716, %v6757
    %v6759 = vcombine.low %v6723, %v6737
    %v6760 = vcombine.high %v6723, %v6737
    %v6761 = vcombine.low %v6730, %v6744
    %v6762 = vcombine.high %v6751, %v6751
    %v6764 = vunpack.c.l.s4 1966171168
    %v6765 = vunpack.c.0.s8 %v6764
    %v6766 = vlaneseq
    %v6767 = vshrl.u32 %v6766, 7
    %v6768 = vsub.s32 %v6765, %v6767
    %v6769 = vrot.slane %v6759, %v6768
    %v6771 = vunpack.c.l.s4 1966171168
    %v6772 = vunpack.c.0.s8 %v6771
    %v6773 = vlaneseq
    %v6774 = vshrl.u32 %v6773, 7
    %v6775 = vsub.s32 %v6772, %v6774
    %v6776 = vrot.slane %v6761, %v6775
    %v6778 = vunpack.c.l.s4 1966171168
    %v6779 = vunpack.c.0.s8 %v6778
    %v6780 = vlaneseq
    %v6781 = vshrl.u32 %v6780, 7
    %v6782 = vsub.s32 %v6779, %v6781
    %v6783 = vrot.slane %v6760, %v6782
    %v6785 = vunpack.c.l.s4 1966171168
    %v6786 = vunpack.c.0.s8 %v6785
    %v6787 = vlaneseq
    %v6788 = vshrl.u32 %v6787, 7
    %v6789 = vsub.s32 %v6786, %v6788
    %v6790 = vrot.slane %v6751, %v6789
    %v6792 = vunpack.c.l.s4 1966171168
    %v6793 = vunpack.c.0.s8 %v6792
    %v6794 = vlaneseq
    %v6795 = vshrl.u32 %v6794, 7
    %v6796 = vsub.s32 %v6793, %v6795
    %v6797 = vrot.slane %v6758, %v6796
    %v6799 = vunpack.c.l.s4 1966171168
    %v6800 = vunpack.c.0.s8 %v6799
    %v6801 = vlaneseq
    %v6802 = vshrl.u32 %v6801, 7
    %v6803 = vsub.s32 %v6800, %v6802
    %v6804 = vrot.slane %v6762, %v6803
    %v6805 = vcombine.low %v6769, %v6790
    %v6806 = vcombine.high %v6769, %v6790
    %v6807 = vcombine.low %v6776, %v6797
    %v6808 = vcombine.low %v6783, %v6804
    %v6809 = vcombine.high %v6783, %v6804
    %v6958 = vunpack.c.l.b16 %v6454
    %v6959 = vunpack.c.h.b16 %v6454
    %v6960 = vunpack.c.l.b16 %v6455
    %v6961 = vunpack.c.h.b16 %v6455
    %v6962 = vunpack.c.l.b16 %v6456
    %v6963 = vunpack.c.h.b16 %v6456
    %v6964 = vunpack.c.l.b16 %v6457
    %v6965 = vunpack.c.h.b16 %v6457
    %v6966 = vunpack.c.l.b16 %v6458
    %v6967 = vunpack.c.h.b16 %v6458
    %v6968 = vunpack.c.l.b16 %v6459
    %v6969 = vunpack.c.h.b16 %v6459
    %v6970 = vunpack.c.l.b16 %v6460
    %v6971 = vunpack.c.h.b16 %v6460
    %v6972 = vunpack.c.l.b16 %v6461
    %v6973 = vunpack.c.h.b16 %v6461
    %v6974 = vunpack.c.l.b16 %v6462
    %v6975 = vunpack.c.h.b16 %v6462
    %v6976 = vunpack.c.l.b16 %v6463
    %v6977 = vunpack.c.h.b16 %v6463
    %v6978 = vunpack.c.l.b16 %v6464
    %v6979 = vunpack.c.h.b16 %v6464
    %v6980 = vunpack.c.l.b16 %v6465
    %v6981 = vunpack.c.h.b16 %v6465
    %v6982 = vunpack.c.l.b16 %v6466
    %v6983 = vunpack.c.h.b16 %v6466
    %v6984 = vunpack.c.l.b16 %v6467
    %v6985 = vunpack.c.h.b16 %v6467
    %v6986 = vunpack.c.l.b16 %v6468
    %v6987 = vunpack.c.h.b16 %v6468
    %v6988 = vunpack.c.l.b16 %v6469
    %v6989 = vunpack.c.h.b16 %v6469
    %v6990 = vunpack.c.l.b16 %v6470
    %v6991 = vunpack.c.h.b16 %v6470
    %v6992 = vunpack.c.l.b16 %v6471
    %v6993 = vunpack.c.h.b16 %v6471
    %v6994 = vunpack.c.l.b16 %v6472
    %v6995 = vunpack.c.h.b16 %v6472
    %v6996 = vunpack.c.l.b16 %v6473
    %v6997 = vunpack.c.h.b16 %v6473
    %v6998 = vunpack.c.l.b16 %v6474
    %v6999 = vunpack.c.h.b16 %v6474
    %v7000 = vunpack.c.l.b16 %v6475
    %v7001 = vunpack.c.h.b16 %v6475
    %v7002 = vunpack.c.l.b16 %v6476
    %v7003 = vunpack.c.h.b16 %v6476
    %v7004 = vunpack.c.l.b16 %v6477
    %v7005 = vunpack.c.h.b16 %v6477
    %v7006 = vunpack.c.l.b16 %v6478
    %v7007 = vunpack.c.h.b16 %v6478
    %v7008 = vunpack.c.l.b16 %v6479
    %v7009 = vunpack.c.h.b16 %v6479
    %v7010 = vunpack.c.l.b16 %v6480
    %v7011 = vunpack.c.h.b16 %v6480
    %v7012 = vunpack.c.l.b16 %v6481
    %v7013 = vunpack.c.h.b16 %v6481
    %v7014 = vunpack.c.l.b16 %v6482
    %v7015 = vunpack.c.h.b16 %v6482
    %v7016 = vunpack.c.l.b16 %v6483
    %v7017 = vunpack.c.h.b16 %v6483
    %v7018 = vunpack.c.l.b16 %v6484
    %v7019 = vunpack.c.h.b16 %v6484
    %v7020 = vunpack.c.l.b16 %v6485
    %v7021 = vunpack.c.h.b16 %v6485
    %v7022 = vunpack.c.l.b16 %v6486
    %v7023 = vunpack.c.h.b16 %v6486
    %v7024 = vunpack.c.l.b16 %v6487
    %v7025 = vunpack.c.h.b16 %v6487
    %v7026 = vunpack.c.l.b16 %v6488
    %v7027 = vunpack.c.h.b16 %v6488
    %v7028 = vunpack.c.l.b16 %v6489
    %v7029 = vunpack.c.h.b16 %v6489
    %v7030 = vunpack.c.l.b16 %v6490
    %v7031 = vunpack.c.h.b16 %v6490
    %v7032 = vunpack.c.l.b16 %v6491
    %v7033 = vunpack.c.h.b16 %v6491
    %v7034 = vunpack.c.l.b16 %v6492
    %v7035 = vunpack.c.h.b16 %v6492
    %v7036 = vunpack.c.l.b16 %v6493
    %v7037 = vunpack.c.h.b16 %v6493
    %v7038 = vunpack.c.l.b16 %v6494
    %v7039 = vunpack.c.h.b16 %v6494
    %v7040 = vunpack.c.l.b16 %v6495
    %v7041 = vunpack.c.h.b16 %v6495
    %v7042 = vunpack.c.l.b16 %v6496
    %v7043 = vunpack.c.h.b16 %v6496
    %v7044 = vunpack.c.l.b16 %v6497
    %v7045 = vunpack.c.h.b16 %v6497
    %v7046 = vunpack.c.l.b16 %v6498
    %v7047 = vunpack.c.h.b16 %v6498
    %v7048 = vunpack.c.l.b16 %v6499
    %v7049 = vunpack.c.h.b16 %v6499
    %v7050 = vunpack.c.l.b16 %v6500
    %v7051 = vunpack.c.h.b16 %v6500
    %v7052 = vunpack.c.l.b16 %v6501
    %v7053 = vunpack.c.h.b16 %v6501
    %v7054 = vunpack.c.l.b16 %v6502
    %v7055 = vunpack.c.h.b16 %v6502
    %v7056 = vunpack.c.l.b16 %v6503
    %v7057 = vunpack.c.h.b16 %v6503
    %v7058 = vunpack.c.l.b16 %v6504
    %v7059 = vunpack.c.h.b16 %v6504
    %v7060 = vunpack.c.l.b16 %v6505
    %v7061 = vunpack.c.h.b16 %v6505
    %v7062 = vunpack.c.l.b16 %v6506
    %v7063 = vunpack.c.h.b16 %v6506
    %v7064 = vunpack.c.l.b16 %v6507
    %v7065 = vunpack.c.h.b16 %v6507
    %v7066 = vunpack.c.l.b16 %v6508
    %v7067 = vunpack.c.h.b16 %v6508
    %v7068 = vunpack.c.l.b16 %v6509
    %v7069 = vunpack.c.h.b16 %v6509
    %v7070 = vunpack.c.l.b16 %v6510
    %v7071 = vunpack.c.h.b16 %v6510
    %v7072 = vunpack.c.l.b16 %v6511
    %v7073 = vunpack.c.h.b16 %v6511
    %v7074 = vunpack.c.l.b16 %v6512
    %v7075 = vunpack.c.h.b16 %v6512
    %v7076 = vunpack.c.l.b16 %v6513
    %v7077 = vunpack.c.h.b16 %v6513
    %v7078 = vunpack.c.l.b16 %v6514
    %v7079 = vunpack.c.h.b16 %v6514
    %v7080 = vunpack.c.l.b16 %v6515
    %v7081 = vunpack.c.h.b16 %v6515
    %v7082 = vunpack.c.l.b16 %v6516
    %v7083 = vunpack.c.h.b16 %v6516
    %v7084 = vunpack.c.l.b16 %v6517
    %v7085 = vunpack.c.h.b16 %v6517
    %v7086 = vunpack.c.l.b16 %v6518
    %v7087 = vunpack.c.h.b16 %v6518
    %v7088 = vunpack.c.l.b16 %v6519
    %v7089 = vunpack.c.h.b16 %v6519
    %v7090 = vunpack.c.l.b16 %v6520
    %v7091 = vunpack.c.h.b16 %v6520
    %v7092 = vunpack.c.l.b16 %v6521
    %v7093 = vunpack.c.h.b16 %v6521
    %v7094 = vunpack.c.l.b16 %v6522
    %v7095 = vunpack.c.h.b16 %v6522
    %v7096 = vunpack.c.l.b16 %v6523
    %v7097 = vunpack.c.h.b16 %v6523
    %v7098 = vunpack.c.l.b16 %v6524
    %v7099 = vunpack.c.h.b16 %v6524
    %v7100 = vunpack.c.l.b16 %v6525
    %v7101 = vunpack.c.h.b16 %v6525
    %v7102 = vunpack.c.l.b16 %v6526
    %v7103 = vunpack.c.h.b16 %v6526
    %v7104 = vunpack.c.l.b16 %v6527
    %v7105 = vunpack.c.h.b16 %v6527
    %v7106 = vunpack.c.l.b16 %v6528
    %v7107 = vunpack.c.h.b16 %v6528
    %v7108 = vunpack.c.l.b16 %v6529
    %v7109 = vunpack.c.h.b16 %v6529
    %v7110 = vunpack.c.l.b16 %v6530
    %v7111 = vunpack.c.h.b16 %v6530
    %v7112 = vunpack.c.l.b16 %v6531
    %v7113 = vunpack.c.h.b16 %v6531
    %v7114 = vunpack.c.l.b16 %v6532
    %v7115 = vunpack.c.h.b16 %v6532
    %v7116 = vunpack.c.l.b16 %v6533
    %v7117 = vunpack.c.h.b16 %v6533
    %v7118 = vunpack.c.l.b16 %v6534
    %v7119 = vunpack.c.h.b16 %v6534
    %v7120 = vunpack.c.l.b16 %v6535
    %v7121 = vunpack.c.h.b16 %v6535
    %v7122 = vunpack.c.l.b16 %v6536
    %v7123 = vunpack.c.h.b16 %v6536
    %v7124 = vunpack.c.l.b16 %v6537
    %v7125 = vunpack.c.h.b16 %v6537
    %v7126 = vunpack.c.l.b16 %v6538
    %v7127 = vunpack.c.h.b16 %v6538
    %v7128 = vunpack.c.l.b16 %v6539
    %v7129 = vunpack.c.h.b16 %v6539
    %v7130 = vunpack.c.l.b16 %v6540
    %v7131 = vunpack.c.h.b16 %v6540
    %v7132 = vunpack.c.l.b16 %v6541
    %v7133 = vunpack.c.h.b16 %v6541
    %v7134 = vunpack.c.l.b16 %v6542
    %v7135 = vunpack.c.h.b16 %v6542
    %v7136 = vunpack.c.l.b16 %v6543
    %v7137 = vunpack.c.h.b16 %v6543
    %v7138 = vunpack.c.l.b16 %v6544
    %v7139 = vunpack.c.h.b16 %v6544
    %v7140 = vunpack.c.l.b16 %v6545
    %v7141 = vunpack.c.h.b16 %v6545
    %v7142 = vunpack.c.l.b16 %v6546
    %v7143 = vunpack.c.h.b16 %v6546
    %v7144 = vunpack.c.l.b16 %v6547
    %v7145 = vunpack.c.h.b16 %v6547
    %v7146 = vunpack.c.l.b16 %v6548
    %v7147 = vunpack.c.h.b16 %v6548
    %v7148 = vunpack.c.l.b16 %v6549
    %v7149 = vunpack.c.h.b16 %v6549
    %v7150 = vunpack.c.l.b16 %v6550
    %v7151 = vunpack.c.h.b16 %v6550
    %v7152 = vunpack.c.l.b16 %v6551
    %v7153 = vunpack.c.h.b16 %v6551
    %v7154 = vunpack.c.l.b16 %v6552
    %v7155 = vunpack.c.h.b16 %v6552
    %v7156 = vunpack.c.l.b16 %v6553
    %v7157 = vunpack.c.h.b16 %v6553
    %v7158 = vunpack.c.l.b16 %v6554
    %v7159 = vunpack.c.h.b16 %v6554
    %v7160 = vunpack.c.l.b16 %v6555
    %v7161 = vunpack.c.h.b16 %v6555
    %v7162 = vunpack.c.l.b16 %v6556
    %v7163 = vunpack.c.h.b16 %v6556
    %v7164 = vunpack.c.l.b16 %v6557
    %v7165 = vunpack.c.h.b16 %v6557
    %v7166 = vunpack.c.l.b16 %v6558
    %v7167 = vunpack.c.h.b16 %v6558
    %v7168 = vunpack.c.l.b16 %v6559
    %v7169 = vunpack.c.h.b16 %v6559
    %v7170 = vunpack.c.l.b16 %v6560
    %v7171 = vunpack.c.h.b16 %v6560
    %v7172 = vunpack.c.l.b16 %v6561
    %v7173 = vunpack.c.h.b16 %v6561
    %v7174 = vunpack.c.l.b16 %v6562
    %v7175 = vunpack.c.h.b16 %v6562
    %v7176 = vunpack.c.l.b16 %v6563
    %v7177 = vunpack.c.h.b16 %v6563
    %v7178 = vunpack.c.l.b16 %v6564
    %v7179 = vunpack.c.h.b16 %v6564
    %v7180 = vunpack.c.l.b16 %v6565
    %v7181 = vunpack.c.h.b16 %v6565
    %v7182 = vunpack.c.l.b16 %v6566
    %v7183 = vunpack.c.h.b16 %v6566
    %v7184 = vunpack.c.l.b16 %v6567
    %v7185 = vunpack.c.h.b16 %v6567
    %v7186 = vunpack.c.l.b16 %v6568
    %v7187 = vunpack.c.h.b16 %v6568
    %v7188 = vunpack.c.l.b16 %v6569
    %v7189 = vunpack.c.h.b16 %v6569
    %v7190 = vunpack.c.l.b16 %v6570
    %v7191 = vunpack.c.h.b16 %v6570
    %v7192 = vunpack.c.l.b16 %v6571
    %v7193 = vunpack.c.h.b16 %v6571
    %v7194 = vunpack.c.l.b16 %v6572
    %v7195 = vunpack.c.h.b16 %v6572
    %v7196 = vunpack.c.l.b16 %v6573
    %v7197 = vunpack.c.h.b16 %v6573
    %v7198 = vunpack.c.l.b16 %v6574
    %v7199 = vunpack.c.h.b16 %v6574
    %v7200 = vunpack.c.l.b16 %v6575
    %v7201 = vunpack.c.h.b16 %v6575
    %v7202 = vunpack.c.l.b16 %v6576
    %v7203 = vunpack.c.h.b16 %v6576
    %v7204 = vunpack.c.l.b16 %v6577
    %v7205 = vunpack.c.h.b16 %v6577
    %v7206 = vunpack.c.l.b16 %v6578
    %v7207 = vunpack.c.h.b16 %v6578
    %v7208 = vunpack.c.l.b16 %v6579
    %v7209 = vunpack.c.h.b16 %v6579
    %v7210 = vunpack.c.l.b16 %v6580
    %v7211 = vunpack.c.h.b16 %v6580
    %v7212 = vunpack.c.l.b16 %v6581
    %v7213 = vunpack.c.h.b16 %v6581
    %v7214 = vunpack.c.l.b16 %v6582
    %v7215 = vunpack.c.h.b16 %v6582
    %v7216 = vunpack.c.l.b16 %v6583
    %v7217 = vunpack.c.h.b16 %v6583
    %v7218 = vunpack.c.l.b16 %v6584
    %v7219 = vunpack.c.h.b16 %v6584
    %v7220 = vunpack.c.l.b16 %v6585
    %v7221 = vunpack.c.h.b16 %v6585
    %v7222 = vunpack.c.l.b16 %v6586
    %v7223 = vunpack.c.h.b16 %v6586
    %v7224 = vunpack.c.l.b16 %v6587
    %v7225 = vunpack.c.h.b16 %v6587
    %v7226 = vunpack.c.l.b16 %v6588
    %v7227 = vunpack.c.h.b16 %v6588
    %v7228 = vunpack.c.l.b16 %v6589
    %v7229 = vunpack.c.h.b16 %v6589
    %v7230 = vunpack.c.l.b16 %v6590
    %v7231 = vunpack.c.h.b16 %v6590
    %v7232 = vunpack.c.l.b16 %v6591
    %v7233 = vunpack.c.h.b16 %v6591
    %v7234 = vunpack.c.l.b16 %v6592
    %v7235 = vunpack.c.h.b16 %v6592
    %v7236 = vunpack.c.l.b16 %v6593
    %v7237 = vunpack.c.h.b16 %v6593
    %v7238 = vpack.c.b16 %v6962, %v6958
    %v7239 = vpack.c.b16 %v6963, %v6959
    %v7240 = vpack.c.b16 %v6964, %v6960
    %v7241 = vpack.c.b16 %v6965, %v6961
    %v7242 = vpack.c.b16 %v6970, %v6966
    %v7243 = vpack.c.b16 %v6971, %v6967
    %v7244 = vpack.c.b16 %v6972, %v6968
    %v7245 = vpack.c.b16 %v6973, %v6969
    %v7246 = vpack.c.b16 %v6978, %v6974
    %v7247 = vpack.c.b16 %v6979, %v6975
    %v7248 = vpack.c.b16 %v6980, %v6976
    %v7249 = vpack.c.b16 %v6981, %v6977
    %v7250 = vpack.c.b16 %v6986, %v6982
    %v7251 = vpack.c.b16 %v6987, %v6983
    %v7252 = vpack.c.b16 %v6988, %v6984
    %v7253 = vpack.c.b16 %v6989, %v6985
    %v7254 = vpack.c.b16 %v6994, %v6990
    %v7255 = vpack.c.b16 %v6995, %v6991
    %v7256 = vpack.c.b16 %v6996, %v6992
    %v7257 = vpack.c.b16 %v6997, %v6993
    %v7258 = vpack.c.b16 %v7002, %v6998
    %v7259 = vpack.c.b16 %v7003, %v6999
    %v7260 = vpack.c.b16 %v7004, %v7000
    %v7261 = vpack.c.b16 %v7005, %v7001
    %v7262 = vpack.c.b16 %v7010, %v7006
    %v7263 = vpack.c.b16 %v7011, %v7007
    %v7264 = vpack.c.b16 %v7012, %v7008
    %v7265 = vpack.c.b16 %v7013, %v7009
    %v7266 = vpack.c.b16 %v7018, %v7014
    %v7267 = vpack.c.b16 %v7019, %v7015
    %v7268 = vpack.c.b16 %v7020, %v7016
    %v7269 = vpack.c.b16 %v7021, %v7017
    %v7270 = vpack.c.b16 %v7026, %v7022
    %v7271 = vpack.c.b16 %v7027, %v7023
    %v7272 = vpack.c.b16 %v7028, %v7024
    %v7273 = vpack.c.b16 %v7029, %v7025
    %v7274 = vpack.c.b16 %v7034, %v7030
    %v7275 = vpack.c.b16 %v7035, %v7031
    %v7276 = vpack.c.b16 %v7036, %v7032
    %v7277 = vpack.c.b16 %v7037, %v7033
    %v7278 = vpack.c.b16 %v7042, %v7038
    %v7279 = vpack.c.b16 %v7043, %v7039
    %v7280 = vpack.c.b16 %v7044, %v7040
    %v7281 = vpack.c.b16 %v7045, %v7041
    %v7282 = vpack.c.b16 %v7050, %v7046
    %v7283 = vpack.c.b16 %v7051, %v7047
    %v7284 = vpack.c.b16 %v7052, %v7048
    %v7285 = vpack.c.b16 %v7053, %v7049
    %v7286 = vpack.c.b16 %v7058, %v7054
    %v7287 = vpack.c.b16 %v7059, %v7055
    %v7288 = vpack.c.b16 %v7060, %v7056
    %v7289 = vpack.c.b16 %v7061, %v7057
    %v7290 = vpack.c.b16 %v7066, %v7062
    %v7291 = vpack.c.b16 %v7067, %v7063
    %v7292 = vpack.c.b16 %v7068, %v7064
    %v7293 = vpack.c.b16 %v7069, %v7065
    %v7294 = vpack.c.b16 %v7074, %v7070
    %v7295 = vpack.c.b16 %v7075, %v7071
    %v7296 = vpack.c.b16 %v7076, %v7072
    %v7297 = vpack.c.b16 %v7077, %v7073
    %v7298 = vpack.c.b16 %v7082, %v7078
    %v7299 = vpack.c.b16 %v7083, %v7079
    %v7300 = vpack.c.b16 %v7084, %v7080
    %v7301 = vpack.c.b16 %v7085, %v7081
    %v7302 = vpack.c.b16 %v7090, %v7086
    %v7303 = vpack.c.b16 %v7091, %v7087
    %v7304 = vpack.c.b16 %v7092, %v7088
    %v7305 = vpack.c.b16 %v7093, %v7089
    %v7306 = vpack.c.b16 %v7098, %v7094
    %v7307 = vpack.c.b16 %v7099, %v7095
    %v7308 = vpack.c.b16 %v7100, %v7096
    %v7309 = vpack.c.b16 %v7101, %v7097
    %v7310 = vpack.c.b16 %v7106, %v7102
    %v7311 = vpack.c.b16 %v7107, %v7103
    %v7312 = vpack.c.b16 %v7108, %v7104
    %v7313 = vpack.c.b16 %v7109, %v7105
    %v7314 = vpack.c.b16 %v7114, %v7110
    %v7315 = vpack.c.b16 %v7115, %v7111
    %v7316 = vpack.c.b16 %v7116, %v7112
    %v7317 = vpack.c.b16 %v7117, %v7113
    %v7318 = vpack.c.b16 %v7122, %v7118
    %v7319 = vpack.c.b16 %v7123, %v7119
    %v7320 = vpack.c.b16 %v7124, %v7120
    %v7321 = vpack.c.b16 %v7125, %v7121
    %v7322 = vpack.c.b16 %v7130, %v7126
    %v7323 = vpack.c.b16 %v7131, %v7127
    %v7324 = vpack.c.b16 %v7132, %v7128
    %v7325 = vpack.c.b16 %v7133, %v7129
    %v7326 = vpack.c.b16 %v7138, %v7134
    %v7327 = vpack.c.b16 %v7139, %v7135
    %v7328 = vpack.c.b16 %v7140, %v7136
    %v7329 = vpack.c.b16 %v7141, %v7137
    %v7330 = vpack.c.b16 %v7146, %v7142
    %v7331 = vpack.c.b16 %v7147, %v7143
    %v7332 = vpack.c.b16 %v7148, %v7144
    %v7333 = vpack.c.b16 %v7149, %v7145
    %v7334 = vpack.c.b16 %v7154, %v7150
    %v7335 = vpack.c.b16 %v7155, %v7151
    %v7336 = vpack.c.b16 %v7156, %v7152
    %v7337 = vpack.c.b16 %v7157, %v7153
    %v7338 = vpack.c.b16 %v7162, %v7158
    %v7339 = vpack.c.b16 %v7163, %v7159
    %v7340 = vpack.c.b16 %v7164, %v7160
    %v7341 = vpack.c.b16 %v7165, %v7161
    %v7342 = vpack.c.b16 %v7170, %v7166
    %v7343 = vpack.c.b16 %v7171, %v7167
    %v7344 = vpack.c.b16 %v7172, %v7168
    %v7345 = vpack.c.b16 %v7173, %v7169
    %v7346 = vpack.c.b16 %v7178, %v7174
    %v7347 = vpack.c.b16 %v7179, %v7175
    %v7348 = vpack.c.b16 %v7180, %v7176
    %v7349 = vpack.c.b16 %v7181, %v7177
    %v7350 = vpack.c.b16 %v7186, %v7182
    %v7351 = vpack.c.b16 %v7187, %v7183
    %v7352 = vpack.c.b16 %v7188, %v7184
    %v7353 = vpack.c.b16 %v7189, %v7185
    %v7354 = vpack.c.b16 %v7194, %v7190
    %v7355 = vpack.c.b16 %v7195, %v7191
    %v7356 = vpack.c.b16 %v7196, %v7192
    %v7357 = vpack.c.b16 %v7197, %v7193
    %v7358 = vpack.c.b16 %v7202, %v7198
    %v7359 = vpack.c.b16 %v7203, %v7199
    %v7360 = vpack.c.b16 %v7204, %v7200
    %v7361 = vpack.c.b16 %v7205, %v7201
    %v7362 = vpack.c.b16 %v7210, %v7206
    %v7363 = vpack.c.b16 %v7211, %v7207
    %v7364 = vpack.c.b16 %v7212, %v7208
    %v7365 = vpack.c.b16 %v7213, %v7209
    %v7366 = vpack.c.b16 %v7218, %v7214
    %v7367 = vpack.c.b16 %v7219, %v7215
    %v7368 = vpack.c.b16 %v7220, %v7216
    %v7369 = vpack.c.b16 %v7221, %v7217
    %v7370 = vpack.c.b16 %v7226, %v7222
    %v7371 = vpack.c.b16 %v7227, %v7223
    %v7372 = vpack.c.b16 %v7228, %v7224
    %v7373 = vpack.c.b16 %v7229, %v7225
    %v7374 = vpack.c.b16 %v7234, %v7230
    %v7375 = vpack.c.b16 %v7235, %v7231
    %v7376 = vpack.c.b16 %v7236, %v7232
    %v7377 = vpack.c.b16 %v7237, %v7233
    %v7519 = vsel %vm4880, %v6708, 0
    %v7522 = vsel %vm4880, %v6807, 0
    %7524 = vmatprep.subr.bf16.mxu0 %v7239
    %7525 = vmatpush1.bf16.msra.mxu0 %v7238
    %7526 = vmatprep.subr.bf16.mxu0 %v7243
    %7527 = vmatpush1.bf16.msra.mxu0 %v7242
    %7528 = vmatprep.subr.bf16.mxu0 %v7247
    %7529 = vmatpush1.bf16.msra.mxu0 %v7246
    %7530 = vmatprep.subr.bf16.mxu0 %v7251
    %7531 = vmatpush1.bf16.msra.mxu0 %v7250
    %7532 = vmatprep.subr.bf16.mxu0 %v7255
    %7533 = vmatpush1.bf16.msra.mxu0 %v7254
    %7534 = vmatprep.subr.bf16.mxu0 %v7259
    %7535 = vmatpush1.bf16.msra.mxu0 %v7258
    %7536 = vmatprep.subr.bf16.mxu0 %v7263
    %7537 = vmatpush1.bf16.msra.mxu0 %v7262
    %7538 = vmatprep.subr.bf16.mxu0 %v7267
    %7539 = vmatpush1.bf16.msra.mxu0 %v7266
    %7540 = vmatprep.subr.bf16.mxu0 %v7271
    %7541 = vmatpush1.bf16.msra.mxu0 %v7270
    %7542 = vmatprep.subr.bf16.mxu0 %v7275
    %7543 = vmatpush1.bf16.msra.mxu0 %v7274
    %7544 = vmatprep.subr.bf16.mxu0 %v7279
    %7545 = vmatpush1.bf16.msra.mxu0 %v7278
    %7546 = vmatprep.subr.bf16.mxu0 %v7283
    %7547 = vmatpush1.bf16.msra.mxu0 %v7282
    %7548 = vmatprep.subr.bf16.mxu0 %v7287
    %7549 = vmatpush1.bf16.msra.mxu0 %v7286
    %7550 = vmatprep.subr.bf16.mxu0 %v7291
    %7551 = vmatpush1.bf16.msra.mxu0 %v7290
    %7552 = vmatprep.subr.bf16.mxu0 %v7295
    %7553 = vmatpush1.bf16.msra.mxu0 %v7294
    %7554 = vmatprep.subr.bf16.mxu0 %v7299
    %7555 = vmatpush1.bf16.msra.mxu0 %v7298
    %7556 = vmatprep.mubr.bf16.mxu0 %v6709
    %7557 = vmatmul.mubr.bf16.gmra.mrb[0].mxu0 %v6706
    %v7558 = vpop.f32.mrb[0].mxu0
    %v7559 = vadd.f32 0.0, %v7558
    %v7560 = vpop.f32.mrb[0].mxu0
    %v7561 = vadd.f32 0.0, %v7560
    %v7562 = vpop.f32.mrb[0].mxu0
    %v7563 = vadd.f32 0.0, %v7562
    %v7564 = vpop.f32.mrb[0].mxu0
    %v7565 = vadd.f32 0.0, %v7564
    %7566 = vmatprep.mubr.bf16.mxu0 %v6808
    %7567 = vmatmul.mubr.bf16.gmra.mrb[0].mxu0 %v6805
    %v7568 = vpop.f32.mrb[0].mxu0
    %v7569 = vadd.f32 0.0, %v7568
    %v7570 = vpop.f32.mrb[0].mxu0
    %v7571 = vadd.f32 0.0, %v7570
    %v7572 = vpop.f32.mrb[0].mxu0
    %v7573 = vadd.f32 0.0, %v7572
    %v7574 = vpop.f32.mrb[0].mxu0
    %v7575 = vadd.f32 0.0, %v7574
    %7576 = vdwg.mxu0
    %7577 = vmatprep.subr.bf16.mxu0 %v7303
    %7578 = vmatpush1.bf16.msra.mxu0 %v7302
    %7579 = vmatprep.subr.bf16.mxu0 %v7307
    %7580 = vmatpush1.bf16.msra.mxu0 %v7306
    %7581 = vmatprep.subr.bf16.mxu0 %v7311
    %7582 = vmatpush1.bf16.msra.mxu0 %v7310
    %7583 = vmatprep.subr.bf16.mxu0 %v7315
    %7584 = vmatpush1.bf16.msra.mxu0 %v7314
    %7585 = vmatprep.subr.bf16.mxu0 %v7319
    %7586 = vmatpush1.bf16.msra.mxu0 %v7318
    %7587 = vmatprep.subr.bf16.mxu0 %v7323
    %7588 = vmatpush1.bf16.msra.mxu0 %v7322
    %7589 = vmatprep.subr.bf16.mxu0 %v7327
    %7590 = vmatpush1.bf16.msra.mxu0 %v7326
    %7591 = vmatprep.subr.bf16.mxu0 %v7331
    %7592 = vmatpush1.bf16.msra.mxu0 %v7330
    %7593 = vmatprep.subr.bf16.mxu0 %v7335
    %7594 = vmatpush1.bf16.msra.mxu0 %v7334
    %7595 = vmatprep.subr.bf16.mxu0 %v7339
    %7596 = vmatpush1.bf16.msra.mxu0 %v7338
    %7597 = vmatprep.subr.bf16.mxu0 %v7343
    %7598 = vmatpush1.bf16.msra.mxu0 %v7342
    %7599 = vmatprep.subr.bf16.mxu0 %v7347
    %7600 = vmatpush1.bf16.msra.mxu0 %v7346
    %7601 = vmatprep.subr.bf16.mxu0 %v7351
    %7602 = vmatpush1.bf16.msra.mxu0 %v7350
    %7603 = vmatprep.subr.bf16.mxu0 %v7355
    %7604 = vmatpush1.bf16.msra.mxu0 %v7354
    %7605 = vmatprep.subr.bf16.mxu0 %v7359
    %7606 = vmatpush1.bf16.msra.mxu0 %v7358
    %7607 = vmatprep.subr.bf16.mxu0 %v7363
    %7608 = vmatpush1.bf16.msra.mxu0 %v7362
    %7609 = vmatprep.mubr.bf16.mxu0 %v6710
    %7610 = vmatmul.mubr.bf16.gmra.mrb[0].mxu0 %v6707
    %v7611 = vpop.f32.mrb[0].mxu0
    %v7612 = vadd.f32 %v7559, %v7611
    %v7613 = vpop.f32.mrb[0].mxu0
    %v7614 = vadd.f32 %v7561, %v7613
    %v7615 = vpop.f32.mrb[0].mxu0
    %v7616 = vadd.f32 %v7563, %v7615
    %v7617 = vpop.f32.mrb[0].mxu0
    %v7618 = vadd.f32 %v7565, %v7617
    %7619 = vmatprep.mubr.bf16.mxu0 %v6809
    %7620 = vmatmul.mubr.bf16.gmra.mrb[0].mxu0 %v6806
    %v7621 = vpop.f32.mrb[0].mxu0
    %v7622 = vadd.f32 %v7569, %v7621
    %v7623 = vpop.f32.mrb[0].mxu0
    %v7624 = vadd.f32 %v7571, %v7623
    %v7625 = vpop.f32.mrb[0].mxu0
    %v7626 = vadd.f32 %v7573, %v7625
    %v7627 = vpop.f32.mrb[0].mxu0
    %v7628 = vadd.f32 %v7575, %v7627
    %7629 = vdwg.mxu0
    %7630 = vmatprep.subr.bf16.mxu0 %v7367
    %7631 = vmatpush1.bf16.msra.mxu0 %v7366
    %7632 = vmatprep.subr.bf16.mxu0 %v7371
    %7633 = vmatpush1.bf16.msra.mxu0 %v7370
    %7634 = vmatprep.subr.bf16.mxu0 %v7375
    %7635 = vmatpush1.bf16.msra.mxu0 %v7374
    %7636 = vmatprep.subr.bf16.mxu0 0
    %7637 = vmatpush1.bf16.msra.mxu0 0
    %7638 = vmatprep.subr.bf16.mxu0 0
    %7639 = vmatpush1.bf16.msra.mxu0 0
    %7640 = vmatprep.subr.bf16.mxu0 0
    %7641 = vmatpush1.bf16.msra.mxu0 0
    %7642 = vmatprep.subr.bf16.mxu0 0
    %7643 = vmatpush1.bf16.msra.mxu0 0
    %7644 = vmatprep.subr.bf16.mxu0 0
    %7645 = vmatpush1.bf16.msra.mxu0 0
    %7646 = vmatprep.subr.bf16.mxu0 0
    %7647 = vmatpush1.bf16.msra.mxu0 0
    %7648 = vmatprep.subr.bf16.mxu0 0
    %7649 = vmatpush1.bf16.msra.mxu0 0
    %7650 = vmatprep.subr.bf16.mxu0 0
    %7651 = vmatpush1.bf16.msra.mxu0 0
    %7652 = vmatprep.subr.bf16.mxu0 0
    %7653 = vmatpush1.bf16.msra.mxu0 0
    %7654 = vmatprep.subr.bf16.mxu0 0
    %7655 = vmatpush1.bf16.msra.mxu0 0
    %7656 = vmatprep.subr.bf16.mxu0 0
    %7657 = vmatpush1.bf16.msra.mxu0 0
    %7658 = vmatprep.subr.bf16.mxu0 0
    %7659 = vmatpush1.bf16.msra.mxu0 0
    %7660 = vmatprep.subr.bf16.mxu0 0
    %7661 = vmatpush1.bf16.msra.mxu0 0
    %7662 = vmatprep.mubr.bf16.mxu0 0
    %7663 = vmatmul.mubr.bf16.gmra.mrb[0].mxu0 %v7519
    %v7664 = vpop.f32.mrb[0].mxu0
    %v7665 = vadd.f32 %v7612, %v7664
    %v7666 = vpop.f32.mrb[0].mxu0
    %v7667 = vadd.f32 %v7614, %v7666
    %v7668 = vpop.f32.mrb[0].mxu0
    %v7669 = vadd.f32 %v7616, %v7668
    %v7670 = vpop.f32.mrb[0].mxu0
    %v7671 = vadd.f32 %v7618, %v7670
    %7672 = vmatprep.mubr.bf16.mxu0 0
    %7673 = vmatmul.mubr.bf16.gmra.mrb[0].mxu0 %v7522
    %v7674 = vpop.f32.mrb[0].mxu0
    %v7675 = vadd.f32 %v7622, %v7674
    %v7676 = vpop.f32.mrb[0].mxu0
    %v7677 = vadd.f32 %v7624, %v7676
    %v7678 = vpop.f32.mrb[0].mxu0
    %v7679 = vadd.f32 %v7626, %v7678
    %v7680 = vpop.f32.mrb[0].mxu0
    %v7681 = vadd.f32 %v7628, %v7680
    %7682 = vdwg.mxu0
    %7683 = vmatprep.subr.bf16.mxu0 %v7241
    %7684 = vmatpush1.bf16.msra.mxu0 %v7240
    %7685 = vmatprep.subr.bf16.mxu0 %v7245
    %7686 = vmatpush1.bf16.msra.mxu0 %v7244
    %7687 = vmatprep.subr.bf16.mxu0 %v7249
    %7688 = vmatpush1.bf16.msra.mxu0 %v7248
    %7689 = vmatprep.subr.bf16.mxu0 %v7253
    %7690 = vmatpush1.bf16.msra.mxu0 %v7252
    %7691 = vmatprep.subr.bf16.mxu0 %v7257
    %7692 = vmatpush1.bf16.msra.mxu0 %v7256
    %7693 = vmatprep.subr.bf16.mxu0 %v7261
    %7694 = vmatpush1.bf16.msra.mxu0 %v7260
    %7695 = vmatprep.subr.bf16.mxu0 %v7265
    %7696 = vmatpush1.bf16.msra.mxu0 %v7264
    %7697 = vmatprep.subr.bf16.mxu0 %v7269
    %7698 = vmatpush1.bf16.msra.mxu0 %v7268
    %7699 = vmatprep.subr.bf16.mxu0 %v7273
    %7700 = vmatpush1.bf16.msra.mxu0 %v7272
    %7701 = vmatprep.subr.bf16.mxu0 %v7277
    %7702 = vmatpush1.bf16.msra.mxu0 %v7276
    %7703 = vmatprep.subr.bf16.mxu0 %v7281
    %7704 = vmatpush1.bf16.msra.mxu0 %v7280
    %7705 = vmatprep.subr.bf16.mxu0 %v7285
    %7706 = vmatpush1.bf16.msra.mxu0 %v7284
    %7707 = vmatprep.subr.bf16.mxu0 %v7289
    %7708 = vmatpush1.bf16.msra.mxu0 %v7288
    %7709 = vmatprep.subr.bf16.mxu0 %v7293
    %7710 = vmatpush1.bf16.msra.mxu0 %v7292
    %7711 = vmatprep.subr.bf16.mxu0 %v7297
    %7712 = vmatpush1.bf16.msra.mxu0 %v7296
    %7713 = vmatprep.subr.bf16.mxu0 %v7301
    %7714 = vmatpush1.bf16.msra.mxu0 %v7300
    %7715 = vmatprep.mubr.bf16.mxu0 %v6709
    %7716 = vmatmul.mubr.bf16.gmra.mrb[0].mxu0 %v6706
    %v7717 = vpop.f32.mrb[0].mxu0
    %v7718 = vadd.f32 0.0, %v7717
    %v7719 = vpop.f32.mrb[0].mxu0
    %v7720 = vadd.f32 0.0, %v7719
    %v7721 = vpop.f32.mrb[0].mxu0
    %v7722 = vadd.f32 0.0, %v7721
    %v7723 = vpop.f32.mrb[0].mxu0
    %v7724 = vadd.f32 0.0, %v7723
    %7725 = vmatprep.mubr.bf16.mxu0 %v6808
    %7726 = vmatmul.mubr.bf16.gmra.mrb[0].mxu0 %v6805
    %v7727 = vpop.f32.mrb[0].mxu0
    %v7728 = vadd.f32 0.0, %v7727
    %v7729 = vpop.f32.mrb[0].mxu0
    %v7730 = vadd.f32 0.0, %v7729
    %v7731 = vpop.f32.mrb[0].mxu0
    %v7732 = vadd.f32 0.0, %v7731
    %v7733 = vpop.f32.mrb[0].mxu0
    %v7734 = vadd.f32 0.0, %v7733
    %7735 = vdwg.mxu0
    %7736 = vmatprep.subr.bf16.mxu0 %v7305
    %7737 = vmatpush1.bf16.msra.mxu0 %v7304
    %7738 = vmatprep.subr.bf16.mxu0 %v7309
    %7739 = vmatpush1.bf16.msra.mxu0 %v7308
    %7740 = vmatprep.subr.bf16.mxu0 %v7313
    %7741 = vmatpush1.bf16.msra.mxu0 %v7312
    %7742 = vmatprep.subr.bf16.mxu0 %v7317
    %7743 = vmatpush1.bf16.msra.mxu0 %v7316
    %7744 = vmatprep.subr.bf16.mxu0 %v7321
    %7745 = vmatpush1.bf16.msra.mxu0 %v7320
    %7746 = vmatprep.subr.bf16.mxu0 %v7325
    %7747 = vmatpush1.bf16.msra.mxu0 %v7324
    %7748 = vmatprep.subr.bf16.mxu0 %v7329
    %7749 = vmatpush1.bf16.msra.mxu0 %v7328
    %7750 = vmatprep.subr.bf16.mxu0 %v7333
    %7751 = vmatpush1.bf16.msra.mxu0 %v7332
    %7752 = vmatprep.subr.bf16.mxu0 %v7337
    %7753 = vmatpush1.bf16.msra.mxu0 %v7336
    %7754 = vmatprep.subr.bf16.mxu0 %v7341
    %7755 = vmatpush1.bf16.msra.mxu0 %v7340
    %7756 = vmatprep.subr.bf16.mxu0 %v7345
    %7757 = vmatpush1.bf16.msra.mxu0 %v7344
    %7758 = vmatprep.subr.bf16.mxu0 %v7349
    %7759 = vmatpush1.bf16.msra.mxu0 %v7348
    %7760 = vmatprep.subr.bf16.mxu0 %v7353
    %7761 = vmatpush1.bf16.msra.mxu0 %v7352
    %7762 = vmatprep.subr.bf16.mxu0 %v7357
    %7763 = vmatpush1.bf16.msra.mxu0 %v7356
    %7764 = vmatprep.subr.bf16.mxu0 %v7361
    %7765 = vmatpush1.bf16.msra.mxu0 %v7360
    %7766 = vmatprep.subr.bf16.mxu0 %v7365
    %7767 = vmatpush1.bf16.msra.mxu0 %v7364
    %7768 = vmatprep.mubr.bf16.mxu0 %v6710
    %7769 = vmatmul.mubr.bf16.gmra.mrb[0].mxu0 %v6707
    %v7770 = vpop.f32.mrb[0].mxu0
    %v7771 = vadd.f32 %v7718, %v7770
    %v7772 = vpop.f32.mrb[0].mxu0
    %v7773 = vadd.f32 %v7720, %v7772
    %v7774 = vpop.f32.mrb[0].mxu0
    %v7775 = vadd.f32 %v7722, %v7774
    %v7776 = vpop.f32.mrb[0].mxu0
    %v7777 = vadd.f32 %v7724, %v7776
    %7778 = vmatprep.mubr.bf16.mxu0 %v6809
    %7779 = vmatmul.mubr.bf16.gmra.mrb[0].mxu0 %v6806
    %v7780 = vpop.f32.mrb[0].mxu0
    %v7781 = vadd.f32 %v7728, %v7780
    %v7782 = vpop.f32.mrb[0].mxu0
    %v7783 = vadd.f32 %v7730, %v7782
    %v7784 = vpop.f32.mrb[0].mxu0
    %v7785 = vadd.f32 %v7732, %v7784
    %v7786 = vpop.f32.mrb[0].mxu0
    %v7787 = vadd.f32 %v7734, %v7786
    %7788 = vdwg.mxu0
    %7789 = vmatprep.subr.bf16.mxu0 %v7369
    %7790 = vmatpush1.bf16.msra.mxu0 %v7368
    %7791 = vmatprep.subr.bf16.mxu0 %v7373
    %7792 = vmatpush1.bf16.msra.mxu0 %v7372
    %7793 = vmatprep.subr.bf16.mxu0 %v7377
    %7794 = vmatpush1.bf16.msra.mxu0 %v7376
    %7795 = vmatprep.subr.bf16.mxu0 0
    %7796 = vmatpush1.bf16.msra.mxu0 0
    %7797 = vmatprep.subr.bf16.mxu0 0
    %7798 = vmatpush1.bf16.msra.mxu0 0
    %7799 = vmatprep.subr.bf16.mxu0 0
    %7800 = vmatpush1.bf16.msra.mxu0 0
    %7801 = vmatprep.subr.bf16.mxu0 0
    %7802 = vmatpush1.bf16.msra.mxu0 0
    %7803 = vmatprep.subr.bf16.mxu0 0
    %7804 = vmatpush1.bf16.msra.mxu0 0
    %7805 = vmatprep.subr.bf16.mxu0 0
    %7806 = vmatpush1.bf16.msra.mxu0 0
    %7807 = vmatprep.subr.bf16.mxu0 0
    %7808 = vmatpush1.bf16.msra.mxu0 0
    %7809 = vmatprep.subr.bf16.mxu0 0
    %7810 = vmatpush1.bf16.msra.mxu0 0
    %7811 = vmatprep.subr.bf16.mxu0 0
    %7812 = vmatpush1.bf16.msra.mxu0 0
    %7813 = vmatprep.subr.bf16.mxu0 0
    %7814 = vmatpush1.bf16.msra.mxu0 0
    %7815 = vmatprep.subr.bf16.mxu0 0
    %7816 = vmatpush1.bf16.msra.mxu0 0
    %7817 = vmatprep.subr.bf16.mxu0 0
    %7818 = vmatpush1.bf16.msra.mxu0 0
    %7819 = vmatprep.subr.bf16.mxu0 0
    %7820 = vmatpush1.bf16.msra.mxu0 0
    %7821 = vmatprep.mubr.bf16.mxu0 0
    %7822 = vmatmul.mubr.bf16.gmra.mrb[0].mxu0 %v7519
    %v7823 = vpop.f32.mrb[0].mxu0
    %v7824 = vadd.f32 %v7771, %v7823
    %v7825 = vpop.f32.mrb[0].mxu0
    %v7826 = vadd.f32 %v7773, %v7825
    %v7827 = vpop.f32.mrb[0].mxu0
    %v7828 = vadd.f32 %v7775, %v7827
    %v7829 = vpop.f32.mrb[0].mxu0
    %v7830 = vadd.f32 %v7777, %v7829
    %7831 = vmatprep.mubr.bf16.mxu0 0
    %7832 = vmatmul.mubr.bf16.gmra.mrb[0].mxu0 %v7522
    %v7833 = vpop.f32.mrb[0].mxu0
    %v7834 = vadd.f32 %v7781, %v7833
    %v7835 = vpop.f32.mrb[0].mxu0
    %v7836 = vadd.f32 %v7783, %v7835
    %v7837 = vpop.f32.mrb[0].mxu0
    %v7838 = vadd.f32 %v7785, %v7837
    %v7839 = vpop.f32.mrb[0].mxu0
    %v7840 = vadd.f32 %v7787, %v7839
    %7841 = vdwg.mxu0
    %v7842 = vadd.f32 %v6276, %v7665
    %v7843 = vadd.f32 %v6278, %v7667
    %v7844 = vadd.f32 %v6435, %v7824
    %v7845 = vadd.f32 %v6437, %v7826
    %v7846 = vadd.f32 %v6280, %v7669
    %v7847 = vadd.f32 %v6282, %v7671
    %v7848 = vadd.f32 %v6439, %v7828
    %v7849 = vadd.f32 %v6441, %v7830
    %v7850 = vadd.f32 %v6286, %v7675
    %v7851 = vadd.f32 %v6288, %v7677
    %v7852 = vadd.f32 %v6445, %v7834
    %v7853 = vadd.f32 %v6447, %v7836
    %v7854 = vadd.f32 %v6290, %v7679
    %v7855 = vadd.f32 %v6292, %v7681
    %v7856 = vadd.f32 %v6449, %v7838
    %v7857 = vadd.f32 %v6451, %v7840
    %v7859 = vcombine.low %v3347, %v3347
    %v7861 = vunpack.c.l.s4 1966171168
    %v7862 = vunpack.c.0.s8 %v7861
    %v7863 = vlaneseq
    %v7864 = vshrl.u32 %v7863, 7
    %v7865 = vsub.s32 %v7862, %v7864
    %v7866 = vrot.slane %v7859, %v7865
    %v7868 = vunpack.c.l.s4 1966171168
    %v7869 = vunpack.c.0.s8 %v7868
    %v7870 = vlaneseq
    %v7871 = vshrl.u32 %v7870, 7
    %v7872 = vsub.s32 %v7869, %v7871
    %v7873 = vrot.slane %v3347, %v7872
    %v7874 = vcombine.low %v7866, %v7866
    %v7876 = vunpack.c.l.s4 1966171168
    %v7877 = vunpack.c.0.s8 %v7876
    %v7878 = vlaneseq
    %v7879 = vshrl.u32 %v7878, 7
    %v7880 = vsub.s32 %v7877, %v7879
    %v7881 = vrot.slane %v7874, %v7880
    %v7883 = vunpack.c.l.s4 1966171168
    %v7884 = vunpack.c.0.s8 %v7883
    %v7885 = vlaneseq
    %v7886 = vshrl.u32 %v7885, 7
    %v7887 = vsub.s32 %v7884, %v7886
    %v7888 = vrot.slane %v7873, %v7887
    %v7889 = vcombine.low %v7881, %v7888
    %v7890 = vshrl.u32 %v3688, 16
    %v7892 = vrot.slane %v7890, 7
    %v7893 = vrot.slane %v7892, 1
    %v7895 = vshll.u32 %v7889, 16
    %v7897 = vsel %vm3700, %v7893, %v7895
    %v7898 = vshrl.u32 %v3689, 16
    %v7900 = vrot.slane %v7898, 7
    %v7901 = vrot.slane %v7900, 1
    %v7902 = vsel %vm3700, %v7901, %v7895
    %s7903 = scalar_lea.vmem [#allocation7], 3360
    %v7904 = vld [vmem:[%s7903] sm:$0xff]
    %v7905 = vld [vmem:[%s7903 + $0x8] sm:$0xff]
    %v7906 = vld [vmem:[%s7903 + $0x10] sm:$0xff]
    %v7907 = vld [vmem:[%s7903 + $0x18] sm:$0xff]
    %v7908 = vld [vmem:[%s7903 + $0x20] sm:$0xff]
    %v7909 = vld [vmem:[%s7903 + $0x28] sm:$0xff]
    %v7910 = vld [vmem:[%s7903 + $0x30] sm:$0xff]
    %v7911 = vld [vmem:[%s7903 + $0x38] sm:$0xff]
    %v7912 = vld [vmem:[%s7903 + $0x40] sm:$0xff]
    %v7913 = vld [vmem:[%s7903 + $0x48] sm:$0xff]
    %v7914 = vld [vmem:[%s7903 + $0x50] sm:$0xff]
    %v7915 = vld [vmem:[%s7903 + $0x58] sm:$0xff]
    %v7916 = vld [vmem:[%s7903 + $0x60] sm:$0xff]
    %v7917 = vld [vmem:[%s7903 + $0x68] sm:$0xff]
    %v7918 = vld [vmem:[%s7903 + $0x70] sm:$0xff]
    %v7919 = vld [vmem:[%s7903 + $0x78] sm:$0xff]
    %v7920 = vld [vmem:[%s7903 + $0x80] sm:$0xff]
    %v7921 = vld [vmem:[%s7903 + $0x88] sm:$0xff]
    %v7922 = vld [vmem:[%s7903 + $0x90] sm:$0xff]
    %v7923 = vld [vmem:[%s7903 + $0x98] sm:$0xff]
    %v7924 = vld [vmem:[%s7903 + $0xa0] sm:$0xff]
    %v7925 = vld [vmem:[%s7903 + $0xa8] sm:$0xff]
    %v7926 = vld [vmem:[%s7903 + $0xb0] sm:$0xff]
    %v7927 = vld [vmem:[%s7903 + $0xb8] sm:$0xff]
    %v7928 = vld [vmem:[%s7903 + $0xc0] sm:$0xff]
    %v7929 = vld [vmem:[%s7903 + $0xc8] sm:$0xff]
    %v7930 = vld [vmem:[%s7903 + $0xd0] sm:$0xff]
    %v7931 = vld [vmem:[%s7903 + $0xd8] sm:$0xff]
    %v7932 = vld [vmem:[%s7903 + $0xe0] sm:$0xff]
    %v7933 = vld [vmem:[%s7903 + $0xe8] sm:$0xff]
    %v7934 = vld [vmem:[%s7903 + $0xf0] sm:$0xff]
    %v7935 = vld [vmem:[%s7903 + $0xf8] sm:$0xff]
    %v7936 = vld [vmem:[%s7903 + $0x100] sm:$0xff]
    %v7937 = vld [vmem:[%s7903 + $0x108] sm:$0xff]
    %v7938 = vld [vmem:[%s7903 + $0x110] sm:$0xff]
    %v7939 = vld [vmem:[%s7903 + $0x118] sm:$0xff]
    %v7940 = vld [vmem:[%s7903 + $0x120] sm:$0xff]
    %v7941 = vld [vmem:[%s7903 + $0x128] sm:$0xff]
    %v7942 = vld [vmem:[%s7903 + $0x130] sm:$0xff]
    %v7943 = vld [vmem:[%s7903 + $0x138] sm:$0xff]
    %v7944 = vld [vmem:[%s7903 + $0x140] sm:$0xff]
    %v7945 = vld [vmem:[%s7903 + $0x148] sm:$0xff]
    %v7946 = vld [vmem:[%s7903 + $0x150] sm:$0xff]
    %v7947 = vld [vmem:[%s7903 + $0x158] sm:$0xff]
    %v7948 = vld [vmem:[%s7903 + $0x160] sm:$0xff]
    %v7949 = vld [vmem:[%s7903 + $0x168] sm:$0xff]
    %v7950 = vld [vmem:[%s7903 + $0x170] sm:$0xff]
    %v7951 = vld [vmem:[%s7903 + $0x178] sm:$0xff]
    %v7952 = vld [vmem:[%s7903 + $0x180] sm:$0xff]
    %v7953 = vld [vmem:[%s7903 + $0x188] sm:$0xff]
    %v7954 = vld [vmem:[%s7903 + $0x190] sm:$0xff]
    %v7955 = vld [vmem:[%s7903 + $0x198] sm:$0xff]
    %v7956 = vld [vmem:[%s7903 + $0x1a0] sm:$0xff]
    %v7957 = vld [vmem:[%s7903 + $0x1a8] sm:$0xff]
    %v7958 = vld [vmem:[%s7903 + $0x1b0] sm:$0xff]
    %v7959 = vld [vmem:[%s7903 + $0x1b8] sm:$0xff]
    %v7960 = vld [vmem:[%s7903 + $0x1c0] sm:$0xff]
    %v7961 = vld [vmem:[%s7903 + $0x1c8] sm:$0xff]
    %v7962 = vld [vmem:[%s7903 + $0x1d0] sm:$0xff]
    %v7963 = vld [vmem:[%s7903 + $0x1d8] sm:$0xff]
    %v7964 = vld [vmem:[%s7903 + $0x1e0] sm:$0xff]
    %v7965 = vld [vmem:[%s7903 + $0x1e8] sm:$0xff]
    %v7966 = vld [vmem:[%s7903 + $0x1f0] sm:$0xff]
    %v7967 = vld [vmem:[%s7903 + $0x1f8] sm:$0xff]
    %v7968 = vld [vmem:[%s7903 + $0x200] sm:$0xff]
    %v7969 = vld [vmem:[%s7903 + $0x208] sm:$0xff]
    %v7970 = vld [vmem:[%s7903 + $0x210] sm:$0xff]
    %v7971 = vld [vmem:[%s7903 + $0x218] sm:$0xff]
    %v7972 = vld [vmem:[%s7903 + $0x220] sm:$0xff]
    %v7973 = vld [vmem:[%s7903 + $0x228] sm:$0xff]
    %v7974 = vld [vmem:[%s7903 + $0x230] sm:$0xff]
    %v7975 = vld [vmem:[%s7903 + $0x238] sm:$0xff]
    %v7976 = vld [vmem:[%s7903 + $0x240] sm:$0xff]
    %v7977 = vld [vmem:[%s7903 + $0x248] sm:$0xff]
    %v7978 = vld [vmem:[%s7903 + $0x250] sm:$0xff]
    %v7979 = vld [vmem:[%s7903 + $0x258] sm:$0xff]
    %v7980 = vld [vmem:[%s7903 + $0x260] sm:$0xff]
    %v7981 = vld [vmem:[%s7903 + $0x268] sm:$0xff]
    %v7982 = vld [vmem:[%s7903 + $0x270] sm:$0xff]
    %v7983 = vld [vmem:[%s7903 + $0x278] sm:$0xff]
    %v7984 = vld [vmem:[%s7903 + $0x280] sm:$0xff]
    %v7985 = vld [vmem:[%s7903 + $0x288] sm:$0xff]
    %v7986 = vld [vmem:[%s7903 + $0x290] sm:$0xff]
    %v7987 = vld [vmem:[%s7903 + $0x298] sm:$0xff]
    %v7988 = vld [vmem:[%s7903 + $0x2a0] sm:$0xff]
    %v7989 = vld [vmem:[%s7903 + $0x2a8] sm:$0xff]
    %v7990 = vld [vmem:[%s7903 + $0x2b0] sm:$0xff]
    %v7991 = vld [vmem:[%s7903 + $0x2b8] sm:$0xff]
    %v7992 = vld [vmem:[%s7903 + $0x2c0] sm:$0xff]
    %v7993 = vld [vmem:[%s7903 + $0x2c8] sm:$0xff]
    %v7994 = vld [vmem:[%s7903 + $0x2d0] sm:$0xff]
    %v7995 = vld [vmem:[%s7903 + $0x2d8] sm:$0xff]
    %v7996 = vld [vmem:[%s7903 + $0x2e0] sm:$0xff]
    %v7997 = vld [vmem:[%s7903 + $0x2e8] sm:$0xff]
    %v7998 = vld [vmem:[%s7903 + $0x2f0] sm:$0xff]
    %v7999 = vld [vmem:[%s7903 + $0x2f8] sm:$0xff]
    %v8000 = vld [vmem:[%s7903 + $0x300] sm:$0xff]
    %v8001 = vld [vmem:[%s7903 + $0x308] sm:$0xff]
    %v8002 = vld [vmem:[%s7903 + $0x310] sm:$0xff]
    %v8003 = vld [vmem:[%s7903 + $0x318] sm:$0xff]
    %v8004 = vld [vmem:[%s7903 + $0x320] sm:$0xff]
    %v8005 = vld [vmem:[%s7903 + $0x328] sm:$0xff]
    %v8006 = vld [vmem:[%s7903 + $0x330] sm:$0xff]
    %v8007 = vld [vmem:[%s7903 + $0x338] sm:$0xff]
    %v8008 = vld [vmem:[%s7903 + $0x340] sm:$0xff]
    %v8009 = vld [vmem:[%s7903 + $0x348] sm:$0xff]
    %v8010 = vld [vmem:[%s7903 + $0x350] sm:$0xff]
    %v8011 = vld [vmem:[%s7903 + $0x358] sm:$0xff]
    %v8012 = vld [vmem:[%s7903 + $0x360] sm:$0xff]
    %v8013 = vld [vmem:[%s7903 + $0x368] sm:$0xff]
    %v8014 = vld [vmem:[%s7903 + $0x370] sm:$0xff]
    %v8015 = vld [vmem:[%s7903 + $0x378] sm:$0xff]
    %v8016 = vld [vmem:[%s7903 + $0x380] sm:$0xff]
    %v8017 = vld [vmem:[%s7903 + $0x388] sm:$0xff]
    %v8018 = vld [vmem:[%s7903 + $0x390] sm:$0xff]
    %v8019 = vld [vmem:[%s7903 + $0x398] sm:$0xff]
    %v8020 = vld [vmem:[%s7903 + $0x3a0] sm:$0xff]
    %v8021 = vld [vmem:[%s7903 + $0x3a8] sm:$0xff]
    %v8022 = vld [vmem:[%s7903 + $0x3b0] sm:$0xff]
    %v8023 = vld [vmem:[%s7903 + $0x3b8] sm:$0xff]
    %v8024 = vld [vmem:[%s7903 + $0x3c0] sm:$0xff]
    %v8025 = vld [vmem:[%s7903 + $0x3c8] sm:$0xff]
    %v8026 = vld [vmem:[%s7903 + $0x3d0] sm:$0xff]
    %v8027 = vld [vmem:[%s7903 + $0x3d8] sm:$0xff]
    %v8028 = vld [vmem:[%s7903 + $0x3e0] sm:$0xff]
    %v8029 = vld [vmem:[%s7903 + $0x3e8] sm:$0xff]
    %v8030 = vld [vmem:[%s7903 + $0x3f0] sm:$0xff]
    %v8031 = vld [vmem:[%s7903 + $0x3f8] sm:$0xff]
    %v8032 = vld [vmem:[%s7903 + $0x400] sm:$0xff]
    %v8033 = vld [vmem:[%s7903 + $0x408] sm:$0xff]
    %v8034 = vld [vmem:[%s7903 + $0x410] sm:$0xff]
    %v8035 = vld [vmem:[%s7903 + $0x418] sm:$0xff]
    %v8036 = vld [vmem:[%s7903 + $0x420] sm:$0xff]
    %v8037 = vld [vmem:[%s7903 + $0x428] sm:$0xff]
    %v8038 = vld [vmem:[%s7903 + $0x430] sm:$0xff]
    %v8039 = vld [vmem:[%s7903 + $0x438] sm:$0xff]
    %v8040 = vld [vmem:[%s7903 + $0x440] sm:$0xff]
    %v8041 = vld [vmem:[%s7903 + $0x448] sm:$0xff]
    %v8042 = vld [vmem:[%s7903 + $0x450] sm:$0xff]
    %v8043 = vld [vmem:[%s7903 + $0x458] sm:$0xff]
    %v8044 = vcombine.low %v3717, %v3725
    %v8045 = vcombine.high %v3717, %v3725
    %v8046 = vcombine.low %v3733, %v3741
    %v8047 = vcombine.high %v3733, %v3741
    %v8048 = vcombine.low %v3749, %v3757
    %v8049 = vcombine.high %v3749, %v3757
    %v8050 = vcombine.low %v7897, %v3774
    %v8051 = vcombine.high %v7897, %v3774
    %v8053 = vunpack.c.l.s4 1966171168
    %v8054 = vunpack.c.0.s8 %v8053
    %v8055 = vlaneseq
    %v8056 = vshrl.u32 %v8055, 7
    %v8057 = vsub.s32 %v8054, %v8056
    %v8058 = vrot.slane %v8044, %v8057
    %v8060 = vunpack.c.l.s4 1966171168
    %v8061 = vunpack.c.0.s8 %v8060
    %v8062 = vlaneseq
    %v8063 = vshrl.u32 %v8062, 7
    %v8064 = vsub.s32 %v8061, %v8063
    %v8065 = vrot.slane %v8045, %v8064
    %v8067 = vunpack.c.l.s4 1966171168
    %v8068 = vunpack.c.0.s8 %v8067
    %v8069 = vlaneseq
    %v8070 = vshrl.u32 %v8069, 7
    %v8071 = vsub.s32 %v8068, %v8070
    %v8072 = vrot.slane %v8046, %v8071
    %v8074 = vunpack.c.l.s4 1966171168
    %v8075 = vunpack.c.0.s8 %v8074
    %v8076 = vlaneseq
    %v8077 = vshrl.u32 %v8076, 7
    %v8078 = vsub.s32 %v8075, %v8077
    %v8079 = vrot.slane %v8047, %v8078
    %v8081 = vunpack.c.l.s4 1966171168
    %v8082 = vunpack.c.0.s8 %v8081
    %v8083 = vlaneseq
    %v8084 = vshrl.u32 %v8083, 7
    %v8085 = vsub.s32 %v8082, %v8084
    %v8086 = vrot.slane %v8048, %v8085
    %v8088 = vunpack.c.l.s4 1966171168
    %v8089 = vunpack.c.0.s8 %v8088
    %v8090 = vlaneseq
    %v8091 = vshrl.u32 %v8090, 7
    %v8092 = vsub.s32 %v8089, %v8091
    %v8093 = vrot.slane %v8049, %v8092
    %v8095 = vunpack.c.l.s4 1966171168
    %v8096 = vunpack.c.0.s8 %v8095
    %v8097 = vlaneseq
    %v8098 = vshrl.u32 %v8097, 7
    %v8099 = vsub.s32 %v8096, %v8098
    %v8100 = vrot.slane %v8050, %v8099
    %v8102 = vunpack.c.l.s4 1966171168
    %v8103 = vunpack.c.0.s8 %v8102
    %v8104 = vlaneseq
    %v8105 = vshrl.u32 %v8104, 7
    %v8106 = vsub.s32 %v8103, %v8105
    %v8107 = vrot.slane %v8051, %v8106
    %v8108 = vcombine.low %v8058, %v8072
    %v8109 = vcombine.high %v8058, %v8072
    %v8110 = vcombine.low %v8065, %v8079
    %v8111 = vcombine.low %v8086, %v8100
    %v8112 = vcombine.high %v8086, %v8100
    %v8113 = vcombine.low %v8093, %v8107
    %v8115 = vunpack.c.l.s4 1966171168
    %v8116 = vunpack.c.0.s8 %v8115
    %v8117 = vlaneseq
    %v8118 = vshrl.u32 %v8117, 7
    %v8119 = vsub.s32 %v8116, %v8118
    %v8120 = vrot.slane %v8108, %v8119
    %v8122 = vunpack.c.l.s4 1966171168
    %v8123 = vunpack.c.0.s8 %v8122
    %v8124 = vlaneseq
    %v8125 = vshrl.u32 %v8124, 7
    %v8126 = vsub.s32 %v8123, %v8125
    %v8127 = vrot.slane %v8110, %v8126
    %v8129 = vunpack.c.l.s4 1966171168
    %v8130 = vunpack.c.0.s8 %v8129
    %v8131 = vlaneseq
    %v8132 = vshrl.u32 %v8131, 7
    %v8133 = vsub.s32 %v8130, %v8132
    %v8134 = vrot.slane %v8109, %v8133
    %v8136 = vunpack.c.l.s4 1966171168
    %v8137 = vunpack.c.0.s8 %v8136
    %v8138 = vlaneseq
    %v8139 = vshrl.u32 %v8138, 7
    %v8140 = vsub.s32 %v8137, %v8139
    %v8141 = vrot.slane %v8111, %v8140
    %v8143 = vunpack.c.l.s4 1966171168
    %v8144 = vunpack.c.0.s8 %v8143
    %v8145 = vlaneseq
    %v8146 = vshrl.u32 %v8145, 7
    %v8147 = vsub.s32 %v8144, %v8146
    %v8148 = vrot.slane %v8113, %v8147
    %v8150 = vunpack.c.l.s4 1966171168
    %v8151 = vunpack.c.0.s8 %v8150
    %v8152 = vlaneseq
    %v8153 = vshrl.u32 %v8152, 7
    %v8154 = vsub.s32 %v8151, %v8153
    %v8155 = vrot.slane %v8112, %v8154
    %v8156 = vcombine.low %v8120, %v8141
    %v8157 = vcombine.high %v8120, %v8141
    %v8158 = vcombine.low %v8127, %v8148
    %v8159 = vcombine.low %v8134, %v8155
    %v8160 = vcombine.high %v8134, %v8155
    %v8161 = vcombine.low %v3782, %v3790
    %v8162 = vcombine.high %v3782, %v3790
    %v8163 = vcombine.low %v3798, %v3806
    %v8164 = vcombine.high %v3798, %v3806
    %v8165 = vcombine.low %v3814, %v7902
    %v8166 = vcombine.high %v3814, %v7902
    %v8168 = vunpack.c.l.s4 1966171168
    %v8169 = vunpack.c.0.s8 %v8168
    %v8170 = vlaneseq
    %v8171 = vshrl.u32 %v8170, 7
    %v8172 = vsub.s32 %v8169, %v8171
    %v8173 = vrot.slane %v8161, %v8172
    %v8175 = vunpack.c.l.s4 1966171168
    %v8176 = vunpack.c.0.s8 %v8175
    %v8177 = vlaneseq
    %v8178 = vshrl.u32 %v8177, 7
    %v8179 = vsub.s32 %v8176, %v8178
    %v8180 = vrot.slane %v8162, %v8179
    %v8182 = vunpack.c.l.s4 1966171168
    %v8183 = vunpack.c.0.s8 %v8182
    %v8184 = vlaneseq
    %v8185 = vshrl.u32 %v8184, 7
    %v8186 = vsub.s32 %v8183, %v8185
    %v8187 = vrot.slane %v8163, %v8186
    %v8189 = vunpack.c.l.s4 1966171168
    %v8190 = vunpack.c.0.s8 %v8189
    %v8191 = vlaneseq
    %v8192 = vshrl.u32 %v8191, 7
    %v8193 = vsub.s32 %v8190, %v8192
    %v8194 = vrot.slane %v8164, %v8193
    %v8196 = vunpack.c.l.s4 1966171168
    %v8197 = vunpack.c.0.s8 %v8196
    %v8198 = vlaneseq
    %v8199 = vshrl.u32 %v8198, 7
    %v8200 = vsub.s32 %v8197, %v8199
    %v8201 = vrot.slane %v8165, %v8200
    %v8203 = vunpack.c.l.s4 1966171168
    %v8204 = vunpack.c.0.s8 %v8203
    %v8205 = vlaneseq
    %v8206 = vshrl.u32 %v8205, 7
    %v8207 = vsub.s32 %v8204, %v8206
    %v8208 = vrot.slane %v8166, %v8207
    %v8209 = vcombine.low %v8173, %v8187
    %v8210 = vcombine.high %v8173, %v8187
    %v8211 = vcombine.low %v8180, %v8194
    %v8212 = vcombine.high %v8201, %v8201
    %v8214 = vunpack.c.l.s4 1966171168
    %v8215 = vunpack.c.0.s8 %v8214
    %v8216 = vlaneseq
    %v8217 = vshrl.u32 %v8216, 7
    %v8218 = vsub.s32 %v8215, %v8217
    %v8219 = vrot.slane %v8209, %v8218
    %v8221 = vunpack.c.l.s4 1966171168
    %v8222 = vunpack.c.0.s8 %v8221
    %v8223 = vlaneseq
    %v8224 = vshrl.u32 %v8223, 7
    %v8225 = vsub.s32 %v8222, %v8224
    %v8226 = vrot.slane %v8211, %v8225
    %v8228 = vunpack.c.l.s4 1966171168
    %v8229 = vunpack.c.0.s8 %v8228
    %v8230 = vlaneseq
    %v8231 = vshrl.u32 %v8230, 7
    %v8232 = vsub.s32 %v8229, %v8231
    %v8233 = vrot.slane %v8210, %v8232
    %v8235 = vunpack.c.l.s4 1966171168
    %v8236 = vunpack.c.0.s8 %v8235
    %v8237 = vlaneseq
    %v8238 = vshrl.u32 %v8237, 7
    %v8239 = vsub.s32 %v8236, %v8238
    %v8240 = vrot.slane %v8201, %v8239
    %v8242 = vunpack.c.l.s4 1966171168
    %v8243 = vunpack.c.0.s8 %v8242
    %v8244 = vlaneseq
    %v8245 = vshrl.u32 %v8244, 7
    %v8246 = vsub.s32 %v8243, %v8245
    %v8247 = vrot.slane %v8208, %v8246
    %v8249 = vunpack.c.l.s4 1966171168
    %v8250 = vunpack.c.0.s8 %v8249
    %v8251 = vlaneseq
    %v8252 = vshrl.u32 %v8251, 7
    %v8253 = vsub.s32 %v8250, %v8252
    %v8254 = vrot.slane %v8212, %v8253
    %v8255 = vcombine.low %v8219, %v8240
    %v8256 = vcombine.high %v8219, %v8240
    %v8257 = vcombine.low %v8226, %v8247
    %v8258 = vcombine.low %v8233, %v8254
    %v8259 = vcombine.high %v8233, %v8254
    %v8408 = vunpack.c.l.b16 %v7904
    %v8409 = vunpack.c.h.b16 %v7904
    %v8410 = vunpack.c.l.b16 %v7905
    %v8411 = vunpack.c.h.b16 %v7905
    %v8412 = vunpack.c.l.b16 %v7906
    %v8413 = vunpack.c.h.b16 %v7906
    %v8414 = vunpack.c.l.b16 %v7907
    %v8415 = vunpack.c.h.b16 %v7907
    %v8416 = vunpack.c.l.b16 %v7908
    %v8417 = vunpack.c.h.b16 %v7908
    %v8418 = vunpack.c.l.b16 %v7909
    %v8419 = vunpack.c.h.b16 %v7909
    %v8420 = vunpack.c.l.b16 %v7910
    %v8421 = vunpack.c.h.b16 %v7910
    %v8422 = vunpack.c.l.b16 %v7911
    %v8423 = vunpack.c.h.b16 %v7911
    %v8424 = vunpack.c.l.b16 %v7912
    %v8425 = vunpack.c.h.b16 %v7912
    %v8426 = vunpack.c.l.b16 %v7913
    %v8427 = vunpack.c.h.b16 %v7913
    %v8428 = vunpack.c.l.b16 %v7914
    %v8429 = vunpack.c.h.b16 %v7914
    %v8430 = vunpack.c.l.b16 %v7915
    %v8431 = vunpack.c.h.b16 %v7915
    %v8432 = vunpack.c.l.b16 %v7916
    %v8433 = vunpack.c.h.b16 %v7916
    %v8434 = vunpack.c.l.b16 %v7917
    %v8435 = vunpack.c.h.b16 %v7917
    %v8436 = vunpack.c.l.b16 %v7918
    %v8437 = vunpack.c.h.b16 %v7918
    %v8438 = vunpack.c.l.b16 %v7919
    %v8439 = vunpack.c.h.b16 %v7919
    %v8440 = vunpack.c.l.b16 %v7920
    %v8441 = vunpack.c.h.b16 %v7920
    %v8442 = vunpack.c.l.b16 %v7921
    %v8443 = vunpack.c.h.b16 %v7921
    %v8444 = vunpack.c.l.b16 %v7922
    %v8445 = vunpack.c.h.b16 %v7922
    %v8446 = vunpack.c.l.b16 %v7923
    %v8447 = vunpack.c.h.b16 %v7923
    %v8448 = vunpack.c.l.b16 %v7924
    %v8449 = vunpack.c.h.b16 %v7924
    %v8450 = vunpack.c.l.b16 %v7925
    %v8451 = vunpack.c.h.b16 %v7925
    %v8452 = vunpack.c.l.b16 %v7926
    %v8453 = vunpack.c.h.b16 %v7926
    %v8454 = vunpack.c.l.b16 %v7927
    %v8455 = vunpack.c.h.b16 %v7927
    %v8456 = vunpack.c.l.b16 %v7928
    %v8457 = vunpack.c.h.b16 %v7928
    %v8458 = vunpack.c.l.b16 %v7929
    %v8459 = vunpack.c.h.b16 %v7929
    %v8460 = vunpack.c.l.b16 %v7930
    %v8461 = vunpack.c.h.b16 %v7930
    %v8462 = vunpack.c.l.b16 %v7931
    %v8463 = vunpack.c.h.b16 %v7931
    %v8464 = vunpack.c.l.b16 %v7932
    %v8465 = vunpack.c.h.b16 %v7932
    %v8466 = vunpack.c.l.b16 %v7933
    %v8467 = vunpack.c.h.b16 %v7933
    %v8468 = vunpack.c.l.b16 %v7934
    %v8469 = vunpack.c.h.b16 %v7934
    %v8470 = vunpack.c.l.b16 %v7935
    %v8471 = vunpack.c.h.b16 %v7935
    %v8472 = vunpack.c.l.b16 %v7936
    %v8473 = vunpack.c.h.b16 %v7936
    %v8474 = vunpack.c.l.b16 %v7937
    %v8475 = vunpack.c.h.b16 %v7937
    %v8476 = vunpack.c.l.b16 %v7938
    %v8477 = vunpack.c.h.b16 %v7938
    %v8478 = vunpack.c.l.b16 %v7939
    %v8479 = vunpack.c.h.b16 %v7939
    %v8480 = vunpack.c.l.b16 %v7940
    %v8481 = vunpack.c.h.b16 %v7940
    %v8482 = vunpack.c.l.b16 %v7941
    %v8483 = vunpack.c.h.b16 %v7941
    %v8484 = vunpack.c.l.b16 %v7942
    %v8485 = vunpack.c.h.b16 %v7942
    %v8486 = vunpack.c.l.b16 %v7943
    %v8487 = vunpack.c.h.b16 %v7943
    %v8488 = vunpack.c.l.b16 %v7944
    %v8489 = vunpack.c.h.b16 %v7944
    %v8490 = vunpack.c.l.b16 %v7945
    %v8491 = vunpack.c.h.b16 %v7945
    %v8492 = vunpack.c.l.b16 %v7946
    %v8493 = vunpack.c.h.b16 %v7946
    %v8494 = vunpack.c.l.b16 %v7947
    %v8495 = vunpack.c.h.b16 %v7947
    %v8496 = vunpack.c.l.b16 %v7948
    %v8497 = vunpack.c.h.b16 %v7948
    %v8498 = vunpack.c.l.b16 %v7949
    %v8499 = vunpack.c.h.b16 %v7949
    %v8500 = vunpack.c.l.b16 %v7950
    %v8501 = vunpack.c.h.b16 %v7950
    %v8502 = vunpack.c.l.b16 %v7951
    %v8503 = vunpack.c.h.b16 %v7951
    %v8504 = vunpack.c.l.b16 %v7952
    %v8505 = vunpack.c.h.b16 %v7952
    %v8506 = vunpack.c.l.b16 %v7953
    %v8507 = vunpack.c.h.b16 %v7953
    %v8508 = vunpack.c.l.b16 %v7954
    %v8509 = vunpack.c.h.b16 %v7954
    %v8510 = vunpack.c.l.b16 %v7955
    %v8511 = vunpack.c.h.b16 %v7955
    %v8512 = vunpack.c.l.b16 %v7956
    %v8513 = vunpack.c.h.b16 %v7956
    %v8514 = vunpack.c.l.b16 %v7957
    %v8515 = vunpack.c.h.b16 %v7957
    %v8516 = vunpack.c.l.b16 %v7958
    %v8517 = vunpack.c.h.b16 %v7958
    %v8518 = vunpack.c.l.b16 %v7959
    %v8519 = vunpack.c.h.b16 %v7959
    %v8520 = vunpack.c.l.b16 %v7960
    %v8521 = vunpack.c.h.b16 %v7960
    %v8522 = vunpack.c.l.b16 %v7961
    %v8523 = vunpack.c.h.b16 %v7961
    %v8524 = vunpack.c.l.b16 %v7962
    %v8525 = vunpack.c.h.b16 %v7962
    %v8526 = vunpack.c.l.b16 %v7963
    %v8527 = vunpack.c.h.b16 %v7963
    %v8528 = vunpack.c.l.b16 %v7964
    %v8529 = vunpack.c.h.b16 %v7964
    %v8530 = vunpack.c.l.b16 %v7965
    %v8531 = vunpack.c.h.b16 %v7965
    %v8532 = vunpack.c.l.b16 %v7966
    %v8533 = vunpack.c.h.b16 %v7966
    %v8534 = vunpack.c.l.b16 %v7967
    %v8535 = vunpack.c.h.b16 %v7967
    %v8536 = vunpack.c.l.b16 %v7968
    %v8537 = vunpack.c.h.b16 %v7968
    %v8538 = vunpack.c.l.b16 %v7969
    %v8539 = vunpack.c.h.b16 %v7969
    %v8540 = vunpack.c.l.b16 %v7970
    %v8541 = vunpack.c.h.b16 %v7970
    %v8542 = vunpack.c.l.b16 %v7971
    %v8543 = vunpack.c.h.b16 %v7971
    %v8544 = vunpack.c.l.b16 %v7972
    %v8545 = vunpack.c.h.b16 %v7972
    %v8546 = vunpack.c.l.b16 %v7973
    %v8547 = vunpack.c.h.b16 %v7973
    %v8548 = vunpack.c.l.b16 %v7974
    %v8549 = vunpack.c.h.b16 %v7974
    %v8550 = vunpack.c.l.b16 %v7975
    %v8551 = vunpack.c.h.b16 %v7975
    %v8552 = vunpack.c.l.b16 %v7976
    %v8553 = vunpack.c.h.b16 %v7976
    %v8554 = vunpack.c.l.b16 %v7977
    %v8555 = vunpack.c.h.b16 %v7977
    %v8556 = vunpack.c.l.b16 %v7978
    %v8557 = vunpack.c.h.b16 %v7978
    %v8558 = vunpack.c.l.b16 %v7979
    %v8559 = vunpack.c.h.b16 %v7979
    %v8560 = vunpack.c.l.b16 %v7980
    %v8561 = vunpack.c.h.b16 %v7980
    %v8562 = vunpack.c.l.b16 %v7981
    %v8563 = vunpack.c.h.b16 %v7981
    %v8564 = vunpack.c.l.b16 %v7982
    %v8565 = vunpack.c.h.b16 %v7982
    %v8566 = vunpack.c.l.b16 %v7983
    %v8567 = vunpack.c.h.b16 %v7983
    %v8568 = vunpack.c.l.b16 %v7984
    %v8569 = vunpack.c.h.b16 %v7984
    %v8570 = vunpack.c.l.b16 %v7985
    %v8571 = vunpack.c.h.b16 %v7985
    %v8572 = vunpack.c.l.b16 %v7986
    %v8573 = vunpack.c.h.b16 %v7986
    %v8574 = vunpack.c.l.b16 %v7987
    %v8575 = vunpack.c.h.b16 %v7987
    %v8576 = vunpack.c.l.b16 %v7988
    %v8577 = vunpack.c.h.b16 %v7988
    %v8578 = vunpack.c.l.b16 %v7989
    %v8579 = vunpack.c.h.b16 %v7989
    %v8580 = vunpack.c.l.b16 %v7990
    %v8581 = vunpack.c.h.b16 %v7990
    %v8582 = vunpack.c.l.b16 %v7991
    %v8583 = vunpack.c.h.b16 %v7991
    %v8584 = vunpack.c.l.b16 %v7992
    %v8585 = vunpack.c.h.b16 %v7992
    %v8586 = vunpack.c.l.b16 %v7993
    %v8587 = vunpack.c.h.b16 %v7993
    %v8588 = vunpack.c.l.b16 %v7994
    %v8589 = vunpack.c.h.b16 %v7994
    %v8590 = vunpack.c.l.b16 %v7995
    %v8591 = vunpack.c.h.b16 %v7995
    %v8592 = vunpack.c.l.b16 %v7996
    %v8593 = vunpack.c.h.b16 %v7996
    %v8594 = vunpack.c.l.b16 %v7997
    %v8595 = vunpack.c.h.b16 %v7997
    %v8596 = vunpack.c.l.b16 %v7998
    %v8597 = vunpack.c.h.b16 %v7998
    %v8598 = vunpack.c.l.b16 %v7999
    %v8599 = vunpack.c.h.b16 %v7999
    %v8600 = vunpack.c.l.b16 %v8000
    %v8601 = vunpack.c.h.b16 %v8000
    %v8602 = vunpack.c.l.b16 %v8001
    %v8603 = vunpack.c.h.b16 %v8001
    %v8604 = vunpack.c.l.b16 %v8002
    %v8605 = vunpack.c.h.b16 %v8002
    %v8606 = vunpack.c.l.b16 %v8003
    %v8607 = vunpack.c.h.b16 %v8003
    %v8608 = vunpack.c.l.b16 %v8004
    %v8609 = vunpack.c.h.b16 %v8004
    %v8610 = vunpack.c.l.b16 %v8005
    %v8611 = vunpack.c.h.b16 %v8005
    %v8612 = vunpack.c.l.b16 %v8006
    %v8613 = vunpack.c.h.b16 %v8006
    %v8614 = vunpack.c.l.b16 %v8007
    %v8615 = vunpack.c.h.b16 %v8007
    %v8616 = vunpack.c.l.b16 %v8008
    %v8617 = vunpack.c.h.b16 %v8008
    %v8618 = vunpack.c.l.b16 %v8009
    %v8619 = vunpack.c.h.b16 %v8009
    %v8620 = vunpack.c.l.b16 %v8010
    %v8621 = vunpack.c.h.b16 %v8010
    %v8622 = vunpack.c.l.b16 %v8011
    %v8623 = vunpack.c.h.b16 %v8011
    %v8624 = vunpack.c.l.b16 %v8012
    %v8625 = vunpack.c.h.b16 %v8012
    %v8626 = vunpack.c.l.b16 %v8013
    %v8627 = vunpack.c.h.b16 %v8013
    %v8628 = vunpack.c.l.b16 %v8014
    %v8629 = vunpack.c.h.b16 %v8014
    %v8630 = vunpack.c.l.b16 %v8015
    %v8631 = vunpack.c.h.b16 %v8015
    %v8632 = vunpack.c.l.b16 %v8016
    %v8633 = vunpack.c.h.b16 %v8016
    %v8634 = vunpack.c.l.b16 %v8017
    %v8635 = vunpack.c.h.b16 %v8017
    %v8636 = vunpack.c.l.b16 %v8018
    %v8637 = vunpack.c.h.b16 %v8018
    %v8638 = vunpack.c.l.b16 %v8019
    %v8639 = vunpack.c.h.b16 %v8019
    %v8640 = vunpack.c.l.b16 %v8020
    %v8641 = vunpack.c.h.b16 %v8020
    %v8642 = vunpack.c.l.b16 %v8021
    %v8643 = vunpack.c.h.b16 %v8021
    %v8644 = vunpack.c.l.b16 %v8022
    %v8645 = vunpack.c.h.b16 %v8022
    %v8646 = vunpack.c.l.b16 %v8023
    %v8647 = vunpack.c.h.b16 %v8023
    %v8648 = vunpack.c.l.b16 %v8024
    %v8649 = vunpack.c.h.b16 %v8024
    %v8650 = vunpack.c.l.b16 %v8025
    %v8651 = vunpack.c.h.b16 %v8025
    %v8652 = vunpack.c.l.b16 %v8026
    %v8653 = vunpack.c.h.b16 %v8026
    %v8654 = vunpack.c.l.b16 %v8027
    %v8655 = vunpack.c.h.b16 %v8027
    %v8656 = vunpack.c.l.b16 %v8028
    %v8657 = vunpack.c.h.b16 %v8028
    %v8658 = vunpack.c.l.b16 %v8029
    %v8659 = vunpack.c.h.b16 %v8029
    %v8660 = vunpack.c.l.b16 %v8030
    %v8661 = vunpack.c.h.b16 %v8030
    %v8662 = vunpack.c.l.b16 %v8031
    %v8663 = vunpack.c.h.b16 %v8031
    %v8664 = vunpack.c.l.b16 %v8032
    %v8665 = vunpack.c.h.b16 %v8032
    %v8666 = vunpack.c.l.b16 %v8033
    %v8667 = vunpack.c.h.b16 %v8033
    %v8668 = vunpack.c.l.b16 %v8034
    %v8669 = vunpack.c.h.b16 %v8034
    %v8670 = vunpack.c.l.b16 %v8035
    %v8671 = vunpack.c.h.b16 %v8035
    %v8672 = vunpack.c.l.b16 %v8036
    %v8673 = vunpack.c.h.b16 %v8036
    %v8674 = vunpack.c.l.b16 %v8037
    %v8675 = vunpack.c.h.b16 %v8037
    %v8676 = vunpack.c.l.b16 %v8038
    %v8677 = vunpack.c.h.b16 %v8038
    %v8678 = vunpack.c.l.b16 %v8039
    %v8679 = vunpack.c.h.b16 %v8039
    %v8680 = vunpack.c.l.b16 %v8040
    %v8681 = vunpack.c.h.b16 %v8040
    %v8682 = vunpack.c.l.b16 %v8041
    %v8683 = vunpack.c.h.b16 %v8041
    %v8684 = vunpack.c.l.b16 %v8042
    %v8685 = vunpack.c.h.b16 %v8042
    %v8686 = vunpack.c.l.b16 %v8043
    %v8687 = vunpack.c.h.b16 %v8043
    %v8688 = vpack.c.b16 %v8412, %v8408
    %v8689 = vpack.c.b16 %v8413, %v8409
    %v8690 = vpack.c.b16 %v8414, %v8410
    %v8691 = vpack.c.b16 %v8415, %v8411
    %v8692 = vpack.c.b16 %v8420, %v8416
    %v8693 = vpack.c.b16 %v8421, %v8417
    %v8694 = vpack.c.b16 %v8422, %v8418
    %v8695 = vpack.c.b16 %v8423, %v8419
    %v8696 = vpack.c.b16 %v8428, %v8424
    %v8697 = vpack.c.b16 %v8429, %v8425
    %v8698 = vpack.c.b16 %v8430, %v8426
    %v8699 = vpack.c.b16 %v8431, %v8427
    %v8700 = vpack.c.b16 %v8436, %v8432
    %v8701 = vpack.c.b16 %v8437, %v8433
    %v8702 = vpack.c.b16 %v8438, %v8434
    %v8703 = vpack.c.b16 %v8439, %v8435
    %v8704 = vpack.c.b16 %v8444, %v8440
    %v8705 = vpack.c.b16 %v8445, %v8441
    %v8706 = vpack.c.b16 %v8446, %v8442
    %v8707 = vpack.c.b16 %v8447, %v8443
    %v8708 = vpack.c.b16 %v8452, %v8448
    %v8709 = vpack.c.b16 %v8453, %v8449
    %v8710 = vpack.c.b16 %v8454, %v8450
    %v8711 = vpack.c.b16 %v8455, %v8451
    %v8712 = vpack.c.b16 %v8460, %v8456
    %v8713 = vpack.c.b16 %v8461, %v8457
    %v8714 = vpack.c.b16 %v8462, %v8458
    %v8715 = vpack.c.b16 %v8463, %v8459
    %v8716 = vpack.c.b16 %v8468, %v8464
    %v8717 = vpack.c.b16 %v8469, %v8465
    %v8718 = vpack.c.b16 %v8470, %v8466
    %v8719 = vpack.c.b16 %v8471, %v8467
    %v8720 = vpack.c.b16 %v8476, %v8472
    %v8721 = vpack.c.b16 %v8477, %v8473
    %v8722 = vpack.c.b16 %v8478, %v8474
    %v8723 = vpack.c.b16 %v8479, %v8475
    %v8724 = vpack.c.b16 %v8484, %v8480
    %v8725 = vpack.c.b16 %v8485, %v8481
    %v8726 = vpack.c.b16 %v8486, %v8482
    %v8727 = vpack.c.b16 %v8487, %v8483
    %v8728 = vpack.c.b16 %v8492, %v8488
    %v8729 = vpack.c.b16 %v8493, %v8489
    %v8730 = vpack.c.b16 %v8494, %v8490
    %v8731 = vpack.c.b16 %v8495, %v8491
    %v8732 = vpack.c.b16 %v8500, %v8496
    %v8733 = vpack.c.b16 %v8501, %v8497
    %v8734 = vpack.c.b16 %v8502, %v8498
    %v8735 = vpack.c.b16 %v8503, %v8499
    %v8736 = vpack.c.b16 %v8508, %v8504
    %v8737 = vpack.c.b16 %v8509, %v8505
    %v8738 = vpack.c.b16 %v8510, %v8506
    %v8739 = vpack.c.b16 %v8511, %v8507
    %v8740 = vpack.c.b16 %v8516, %v8512
    %v8741 = vpack.c.b16 %v8517, %v8513
    %v8742 = vpack.c.b16 %v8518, %v8514
    %v8743 = vpack.c.b16 %v8519, %v8515
    %v8744 = vpack.c.b16 %v8524, %v8520
    %v8745 = vpack.c.b16 %v8525, %v8521
    %v8746 = vpack.c.b16 %v8526, %v8522
    %v8747 = vpack.c.b16 %v8527, %v8523
    %v8748 = vpack.c.b16 %v8532, %v8528
    %v8749 = vpack.c.b16 %v8533, %v8529
    %v8750 = vpack.c.b16 %v8534, %v8530
    %v8751 = vpack.c.b16 %v8535, %v8531
    %v8752 = vpack.c.b16 %v8540, %v8536
    %v8753 = vpack.c.b16 %v8541, %v8537
    %v8754 = vpack.c.b16 %v8542, %v8538
    %v8755 = vpack.c.b16 %v8543, %v8539
    %v8756 = vpack.c.b16 %v8548, %v8544
    %v8757 = vpack.c.b16 %v8549, %v8545
    %v8758 = vpack.c.b16 %v8550, %v8546
    %v8759 = vpack.c.b16 %v8551, %v8547
    %v8760 = vpack.c.b16 %v8556, %v8552
    %v8761 = vpack.c.b16 %v8557, %v8553
    %v8762 = vpack.c.b16 %v8558, %v8554
    %v8763 = vpack.c.b16 %v8559, %v8555
    %v8764 = vpack.c.b16 %v8564, %v8560
    %v8765 = vpack.c.b16 %v8565, %v8561
    %v8766 = vpack.c.b16 %v8566, %v8562
    %v8767 = vpack.c.b16 %v8567, %v8563
    %v8768 = vpack.c.b16 %v8572, %v8568
    %v8769 = vpack.c.b16 %v8573, %v8569
    %v8770 = vpack.c.b16 %v8574, %v8570
    %v8771 = vpack.c.b16 %v8575, %v8571
    %v8772 = vpack.c.b16 %v8580, %v8576
    %v8773 = vpack.c.b16 %v8581, %v8577
    %v8774 = vpack.c.b16 %v8582, %v8578
    %v8775 = vpack.c.b16 %v8583, %v8579
    %v8776 = vpack.c.b16 %v8588, %v8584
    %v8777 = vpack.c.b16 %v8589, %v8585
    %v8778 = vpack.c.b16 %v8590, %v8586
    %v8779 = vpack.c.b16 %v8591, %v8587
    %v8780 = vpack.c.b16 %v8596, %v8592
    %v8781 = vpack.c.b16 %v8597, %v8593
    %v8782 = vpack.c.b16 %v8598, %v8594
    %v8783 = vpack.c.b16 %v8599, %v8595
    %v8784 = vpack.c.b16 %v8604, %v8600
    %v8785 = vpack.c.b16 %v8605, %v8601
    %v8786 = vpack.c.b16 %v8606, %v8602
    %v8787 = vpack.c.b16 %v8607, %v8603
    %v8788 = vpack.c.b16 %v8612, %v8608
    %v8789 = vpack.c.b16 %v8613, %v8609
    %v8790 = vpack.c.b16 %v8614, %v8610
    %v8791 = vpack.c.b16 %v8615, %v8611
    %v8792 = vpack.c.b16 %v8620, %v8616
    %v8793 = vpack.c.b16 %v8621, %v8617
    %v8794 = vpack.c.b16 %v8622, %v8618
    %v8795 = vpack.c.b16 %v8623, %v8619
    %v8796 = vpack.c.b16 %v8628, %v8624
    %v8797 = vpack.c.b16 %v8629, %v8625
    %v8798 = vpack.c.b16 %v8630, %v8626
    %v8799 = vpack.c.b16 %v8631, %v8627
    %v8800 = vpack.c.b16 %v8636, %v8632
    %v8801 = vpack.c.b16 %v8637, %v8633
    %v8802 = vpack.c.b16 %v8638, %v8634
    %v8803 = vpack.c.b16 %v8639, %v8635
    %v8804 = vpack.c.b16 %v8644, %v8640
    %v8805 = vpack.c.b16 %v8645, %v8641
    %v8806 = vpack.c.b16 %v8646, %v8642
    %v8807 = vpack.c.b16 %v8647, %v8643
    %v8808 = vpack.c.b16 %v8652, %v8648
    %v8809 = vpack.c.b16 %v8653, %v8649
    %v8810 = vpack.c.b16 %v8654, %v8650
    %v8811 = vpack.c.b16 %v8655, %v8651
    %v8812 = vpack.c.b16 %v8660, %v8656
    %v8813 = vpack.c.b16 %v8661, %v8657
    %v8814 = vpack.c.b16 %v8662, %v8658
    %v8815 = vpack.c.b16 %v8663, %v8659
    %v8816 = vpack.c.b16 %v8668, %v8664
    %v8817 = vpack.c.b16 %v8669, %v8665
    %v8818 = vpack.c.b16 %v8670, %v8666
    %v8819 = vpack.c.b16 %v8671, %v8667
    %v8820 = vpack.c.b16 %v8676, %v8672
    %v8821 = vpack.c.b16 %v8677, %v8673
    %v8822 = vpack.c.b16 %v8678, %v8674
    %v8823 = vpack.c.b16 %v8679, %v8675
    %v8824 = vpack.c.b16 %v8684, %v8680
    %v8825 = vpack.c.b16 %v8685, %v8681
    %v8826 = vpack.c.b16 %v8686, %v8682
    %v8827 = vpack.c.b16 %v8687, %v8683
    %v8969 = vsel %vm4880, %v8158, 0
    %v8972 = vsel %vm4880, %v8257, 0
    %8974 = vmatprep.subr.bf16.mxu0 %v8689
    %8975 = vmatpush1.bf16.msra.mxu0 %v8688
    %8976 = vmatprep.subr.bf16.mxu0 %v8693
    %8977 = vmatpush1.bf16.msra.mxu0 %v8692
    %8978 = vmatprep.subr.bf16.mxu0 %v8697
    %8979 = vmatpush1.bf16.msra.mxu0 %v8696
    %8980 = vmatprep.subr.bf16.mxu0 %v8701
    %8981 = vmatpush1.bf16.msra.mxu0 %v8700
    %8982 = vmatprep.subr.bf16.mxu0 %v8705
    %8983 = vmatpush1.bf16.msra.mxu0 %v8704
    %8984 = vmatprep.subr.bf16.mxu0 %v8709
    %8985 = vmatpush1.bf16.msra.mxu0 %v8708
    %8986 = vmatprep.subr.bf16.mxu0 %v8713
    %8987 = vmatpush1.bf16.msra.mxu0 %v8712
    %8988 = vmatprep.subr.bf16.mxu0 %v8717
    %8989 = vmatpush1.bf16.msra.mxu0 %v8716
    %8990 = vmatprep.subr.bf16.mxu0 %v8721
    %8991 = vmatpush1.bf16.msra.mxu0 %v8720
    %8992 = vmatprep.subr.bf16.mxu0 %v8725
    %8993 = vmatpush1.bf16.msra.mxu0 %v8724
    %8994 = vmatprep.subr.bf16.mxu0 %v8729
    %8995 = vmatpush1.bf16.msra.mxu0 %v8728
    %8996 = vmatprep.subr.bf16.mxu0 %v8733
    %8997 = vmatpush1.bf16.msra.mxu0 %v8732
    %8998 = vmatprep.subr.bf16.mxu0 %v8737
    %8999 = vmatpush1.bf16.msra.mxu0 %v8736
    %9000 = vmatprep.subr.bf16.mxu0 %v8741
    %9001 = vmatpush1.bf16.msra.mxu0 %v8740
    %9002 = vmatprep.subr.bf16.mxu0 %v8745
    %9003 = vmatpush1.bf16.msra.mxu0 %v8744
    %9004 = vmatprep.subr.bf16.mxu0 %v8749
    %9005 = vmatpush1.bf16.msra.mxu0 %v8748
    %9006 = vmatprep.mubr.bf16.mxu0 %v8159
    %9007 = vmatmul.mubr.bf16.gmra.mrb[0].mxu0 %v8156
    %v9008 = vpop.f32.mrb[0].mxu0
    %v9009 = vadd.f32 0.0, %v9008
    %v9010 = vpop.f32.mrb[0].mxu0
    %v9011 = vadd.f32 0.0, %v9010
    %v9012 = vpop.f32.mrb[0].mxu0
    %v9013 = vadd.f32 0.0, %v9012
    %v9014 = vpop.f32.mrb[0].mxu0
    %v9015 = vadd.f32 0.0, %v9014
    %9016 = vmatprep.mubr.bf16.mxu0 %v8258
    %9017 = vmatmul.mubr.bf16.gmra.mrb[0].mxu0 %v8255
    %v9018 = vpop.f32.mrb[0].mxu0
    %v9019 = vadd.f32 0.0, %v9018
    %v9020 = vpop.f32.mrb[0].mxu0
    %v9021 = vadd.f32 0.0, %v9020
    %v9022 = vpop.f32.mrb[0].mxu0
    %v9023 = vadd.f32 0.0, %v9022
    %v9024 = vpop.f32.mrb[0].mxu0
    %v9025 = vadd.f32 0.0, %v9024
    %9026 = vdwg.mxu0
    %9027 = vmatprep.subr.bf16.mxu0 %v8753
    %9028 = vmatpush1.bf16.msra.mxu0 %v8752
    %9029 = vmatprep.subr.bf16.mxu0 %v8757
    %9030 = vmatpush1.bf16.msra.mxu0 %v8756
    %9031 = vmatprep.subr.bf16.mxu0 %v8761
    %9032 = vmatpush1.bf16.msra.mxu0 %v8760
    %9033 = vmatprep.subr.bf16.mxu0 %v8765
    %9034 = vmatpush1.bf16.msra.mxu0 %v8764
    %9035 = vmatprep.subr.bf16.mxu0 %v8769
    %9036 = vmatpush1.bf16.msra.mxu0 %v8768
    %9037 = vmatprep.subr.bf16.mxu0 %v8773
    %9038 = vmatpush1.bf16.msra.mxu0 %v8772
    %9039 = vmatprep.subr.bf16.mxu0 %v8777
    %9040 = vmatpush1.bf16.msra.mxu0 %v8776
    %9041 = vmatprep.subr.bf16.mxu0 %v8781
    %9042 = vmatpush1.bf16.msra.mxu0 %v8780
    %9043 = vmatprep.subr.bf16.mxu0 %v8785
    %9044 = vmatpush1.bf16.msra.mxu0 %v8784
    %9045 = vmatprep.subr.bf16.mxu0 %v8789
    %9046 = vmatpush1.bf16.msra.mxu0 %v8788
    %9047 = vmatprep.subr.bf16.mxu0 %v8793
    %9048 = vmatpush1.bf16.msra.mxu0 %v8792
    %9049 = vmatprep.subr.bf16.mxu0 %v8797
    %9050 = vmatpush1.bf16.msra.mxu0 %v8796
    %9051 = vmatprep.subr.bf16.mxu0 %v8801
    %9052 = vmatpush1.bf16.msra.mxu0 %v8800
    %9053 = vmatprep.subr.bf16.mxu0 %v8805
    %9054 = vmatpush1.bf16.msra.mxu0 %v8804
    %9055 = vmatprep.subr.bf16.mxu0 %v8809
    %9056 = vmatpush1.bf16.msra.mxu0 %v8808
    %9057 = vmatprep.subr.bf16.mxu0 %v8813
    %9058 = vmatpush1.bf16.msra.mxu0 %v8812
    %9059 = vmatprep.mubr.bf16.mxu0 %v8160
    %9060 = vmatmul.mubr.bf16.gmra.mrb[0].mxu0 %v8157
    %v9061 = vpop.f32.mrb[0].mxu0
    %v9062 = vadd.f32 %v9009, %v9061
    %v9063 = vpop.f32.mrb[0].mxu0
    %v9064 = vadd.f32 %v9011, %v9063
    %v9065 = vpop.f32.mrb[0].mxu0
    %v9066 = vadd.f32 %v9013, %v9065
    %v9067 = vpop.f32.mrb[0].mxu0
    %v9068 = vadd.f32 %v9015, %v9067
    %9069 = vmatprep.mubr.bf16.mxu0 %v8259
    %9070 = vmatmul.mubr.bf16.gmra.mrb[0].mxu0 %v8256
    %v9071 = vpop.f32.mrb[0].mxu0
    %v9072 = vadd.f32 %v9019, %v9071
    %v9073 = vpop.f32.mrb[0].mxu0
    %v9074 = vadd.f32 %v9021, %v9073
    %v9075 = vpop.f32.mrb[0].mxu0
    %v9076 = vadd.f32 %v9023, %v9075
    %v9077 = vpop.f32.mrb[0].mxu0
    %v9078 = vadd.f32 %v9025, %v9077
    %9079 = vdwg.mxu0
    %9080 = vmatprep.subr.bf16.mxu0 %v8817
    %9081 = vmatpush1.bf16.msra.mxu0 %v8816
    %9082 = vmatprep.subr.bf16.mxu0 %v8821
    %9083 = vmatpush1.bf16.msra.mxu0 %v8820
    %9084 = vmatprep.subr.bf16.mxu0 %v8825
    %9085 = vmatpush1.bf16.msra.mxu0 %v8824
    %9086 = vmatprep.subr.bf16.mxu0 0
    %9087 = vmatpush1.bf16.msra.mxu0 0
    %9088 = vmatprep.subr.bf16.mxu0 0
    %9089 = vmatpush1.bf16.msra.mxu0 0
    %9090 = vmatprep.subr.bf16.mxu0 0
    %9091 = vmatpush1.bf16.msra.mxu0 0
    %9092 = vmatprep.subr.bf16.mxu0 0
    %9093 = vmatpush1.bf16.msra.mxu0 0
    %9094 = vmatprep.subr.bf16.mxu0 0
    %9095 = vmatpush1.bf16.msra.mxu0 0
    %9096 = vmatprep.subr.bf16.mxu0 0
    %9097 = vmatpush1.bf16.msra.mxu0 0
    %9098 = vmatprep.subr.bf16.mxu0 0
    %9099 = vmatpush1.bf16.msra.mxu0 0
    %9100 = vmatprep.subr.bf16.mxu0 0
    %9101 = vmatpush1.bf16.msra.mxu0 0
    %9102 = vmatprep.subr.bf16.mxu0 0
    %9103 = vmatpush1.bf16.msra.mxu0 0
    %9104 = vmatprep.subr.bf16.mxu0 0
    %9105 = vmatpush1.bf16.msra.mxu0 0
    %9106 = vmatprep.subr.bf16.mxu0 0
    %9107 = vmatpush1.bf16.msra.mxu0 0
    %9108 = vmatprep.subr.bf16.mxu0 0
    %9109 = vmatpush1.bf16.msra.mxu0 0
    %9110 = vmatprep.subr.bf16.mxu0 0
    %9111 = vmatpush1.bf16.msra.mxu0 0
    %9112 = vmatprep.mubr.bf16.mxu0 0
    %9113 = vmatmul.mubr.bf16.gmra.mrb[0].mxu0 %v8969
    %v9114 = vpop.f32.mrb[0].mxu0
    %v9115 = vadd.f32 %v9062, %v9114
    %v9116 = vpop.f32.mrb[0].mxu0
    %v9117 = vadd.f32 %v9064, %v9116
    %v9118 = vpop.f32.mrb[0].mxu0
    %v9119 = vadd.f32 %v9066, %v9118
    %v9120 = vpop.f32.mrb[0].mxu0
    %v9121 = vadd.f32 %v9068, %v9120
    %9122 = vmatprep.mubr.bf16.mxu0 0
    %9123 = vmatmul.mubr.bf16.gmra.mrb[0].mxu0 %v8972
    %v9124 = vpop.f32.mrb[0].mxu0
    %v9125 = vadd.f32 %v9072, %v9124
    %v9126 = vpop.f32.mrb[0].mxu0
    %v9127 = vadd.f32 %v9074, %v9126
    %v9128 = vpop.f32.mrb[0].mxu0
    %v9129 = vadd.f32 %v9076, %v9128
    %v9130 = vpop.f32.mrb[0].mxu0
    %v9131 = vadd.f32 %v9078, %v9130
    %9132 = vdwg.mxu0
    %9133 = vmatprep.subr.bf16.mxu0 %v8691
    %9134 = vmatpush1.bf16.msra.mxu0 %v8690
    %9135 = vmatprep.subr.bf16.mxu0 %v8695
    %9136 = vmatpush1.bf16.msra.mxu0 %v8694
    %9137 = vmatprep.subr.bf16.mxu0 %v8699
    %9138 = vmatpush1.bf16.msra.mxu0 %v8698
    %9139 = vmatprep.subr.bf16.mxu0 %v8703
    %9140 = vmatpush1.bf16.msra.mxu0 %v8702
    %9141 = vmatprep.subr.bf16.mxu0 %v8707
    %9142 = vmatpush1.bf16.msra.mxu0 %v8706
    %9143 = vmatprep.subr.bf16.mxu0 %v8711
    %9144 = vmatpush1.bf16.msra.mxu0 %v8710
    %9145 = vmatprep.subr.bf16.mxu0 %v8715
    %9146 = vmatpush1.bf16.msra.mxu0 %v8714
    %9147 = vmatprep.subr.bf16.mxu0 %v8719
    %9148 = vmatpush1.bf16.msra.mxu0 %v8718
    %9149 = vmatprep.subr.bf16.mxu0 %v8723
    %9150 = vmatpush1.bf16.msra.mxu0 %v8722
    %9151 = vmatprep.subr.bf16.mxu0 %v8727
    %9152 = vmatpush1.bf16.msra.mxu0 %v8726
    %9153 = vmatprep.subr.bf16.mxu0 %v8731
    %9154 = vmatpush1.bf16.msra.mxu0 %v8730
    %9155 = vmatprep.subr.bf16.mxu0 %v8735
    %9156 = vmatpush1.bf16.msra.mxu0 %v8734
    %9157 = vmatprep.subr.bf16.mxu0 %v8739
    %9158 = vmatpush1.bf16.msra.mxu0 %v8738
    %9159 = vmatprep.subr.bf16.mxu0 %v8743
    %9160 = vmatpush1.bf16.msra.mxu0 %v8742
    %9161 = vmatprep.subr.bf16.mxu0 %v8747
    %9162 = vmatpush1.bf16.msra.mxu0 %v8746
    %9163 = vmatprep.subr.bf16.mxu0 %v8751
    %9164 = vmatpush1.bf16.msra.mxu0 %v8750
    %9165 = vmatprep.mubr.bf16.mxu0 %v8159
    %9166 = vmatmul.mubr.bf16.gmra.mrb[0].mxu0 %v8156
    %v9167 = vpop.f32.mrb[0].mxu0
    %v9168 = vadd.f32 0.0, %v9167
    %v9169 = vpop.f32.mrb[0].mxu0
    %v9170 = vadd.f32 0.0, %v9169
    %v9171 = vpop.f32.mrb[0].mxu0
    %v9172 = vadd.f32 0.0, %v9171
    %v9173 = vpop.f32.mrb[0].mxu0
    %v9174 = vadd.f32 0.0, %v9173
    %9175 = vmatprep.mubr.bf16.mxu0 %v8258
    %9176 = vmatmul.mubr.bf16.gmra.mrb[0].mxu0 %v8255
    %v9177 = vpop.f32.mrb[0].mxu0
    %v9178 = vadd.f32 0.0, %v9177
    %v9179 = vpop.f32.mrb[0].mxu0
    %v9180 = vadd.f32 0.0, %v9179
    %v9181 = vpop.f32.mrb[0].mxu0
    %v9182 = vadd.f32 0.0, %v9181
    %v9183 = vpop.f32.mrb[0].mxu0
    %v9184 = vadd.f32 0.0, %v9183
    %9185 = vdwg.mxu0
    %9186 = vmatprep.subr.bf16.mxu0 %v8755
    %9187 = vmatpush1.bf16.msra.mxu0 %v8754
    %9188 = vmatprep.subr.bf16.mxu0 %v8759
    %9189 = vmatpush1.bf16.msra.mxu0 %v8758
    %9190 = vmatprep.subr.bf16.mxu0 %v8763
    %9191 = vmatpush1.bf16.msra.mxu0 %v8762
    %9192 = vmatprep.subr.bf16.mxu0 %v8767
    %9193 = vmatpush1.bf16.msra.mxu0 %v8766
    %9194 = vmatprep.subr.bf16.mxu0 %v8771
    %9195 = vmatpush1.bf16.msra.mxu0 %v8770
    %9196 = vmatprep.subr.bf16.mxu0 %v8775
    %9197 = vmatpush1.bf16.msra.mxu0 %v8774
    %9198 = vmatprep.subr.bf16.mxu0 %v8779
    %9199 = vmatpush1.bf16.msra.mxu0 %v8778
    %9200 = vmatprep.subr.bf16.mxu0 %v8783
    %9201 = vmatpush1.bf16.msra.mxu0 %v8782
    %9202 = vmatprep.subr.bf16.mxu0 %v8787
    %9203 = vmatpush1.bf16.msra.mxu0 %v8786
    %9204 = vmatprep.subr.bf16.mxu0 %v8791
    %9205 = vmatpush1.bf16.msra.mxu0 %v8790
    %9206 = vmatprep.subr.bf16.mxu0 %v8795
    %9207 = vmatpush1.bf16.msra.mxu0 %v8794
    %9208 = vmatprep.subr.bf16.mxu0 %v8799
    %9209 = vmatpush1.bf16.msra.mxu0 %v8798
    %9210 = vmatprep.subr.bf16.mxu0 %v8803
    %9211 = vmatpush1.bf16.msra.mxu0 %v8802
    %9212 = vmatprep.subr.bf16.mxu0 %v8807
    %9213 = vmatpush1.bf16.msra.mxu0 %v8806
    %9214 = vmatprep.subr.bf16.mxu0 %v8811
    %9215 = vmatpush1.bf16.msra.mxu0 %v8810
    %9216 = vmatprep.subr.bf16.mxu0 %v8815
    %9217 = vmatpush1.bf16.msra.mxu0 %v8814
    %9218 = vmatprep.mubr.bf16.mxu0 %v8160
    %9219 = vmatmul.mubr.bf16.gmra.mrb[0].mxu0 %v8157
    %v9220 = vpop.f32.mrb[0].mxu0
    %v9221 = vadd.f32 %v9168, %v9220
    %v9222 = vpop.f32.mrb[0].mxu0
    %v9223 = vadd.f32 %v9170, %v9222
    %v9224 = vpop.f32.mrb[0].mxu0
    %v9225 = vadd.f32 %v9172, %v9224
    %v9226 = vpop.f32.mrb[0].mxu0
    %v9227 = vadd.f32 %v9174, %v9226
    %9228 = vmatprep.mubr.bf16.mxu0 %v8259
    %9229 = vmatmul.mubr.bf16.gmra.mrb[0].mxu0 %v8256
    %v9230 = vpop.f32.mrb[0].mxu0
    %v9231 = vadd.f32 %v9178, %v9230
    %v9232 = vpop.f32.mrb[0].mxu0
    %v9233 = vadd.f32 %v9180, %v9232
    %v9234 = vpop.f32.mrb[0].mxu0
    %v9235 = vadd.f32 %v9182, %v9234
    %v9236 = vpop.f32.mrb[0].mxu0
    %v9237 = vadd.f32 %v9184, %v9236
    %9238 = vdwg.mxu0
    %9239 = vmatprep.subr.bf16.mxu0 %v8819
    %9240 = vmatpush1.bf16.msra.mxu0 %v8818
    %9241 = vmatprep.subr.bf16.mxu0 %v8823
    %9242 = vmatpush1.bf16.msra.mxu0 %v8822
    %9243 = vmatprep.subr.bf16.mxu0 %v8827
    %9244 = vmatpush1.bf16.msra.mxu0 %v8826
    %9245 = vmatprep.subr.bf16.mxu0 0
    %9246 = vmatpush1.bf16.msra.mxu0 0
    %9247 = vmatprep.subr.bf16.mxu0 0
    %9248 = vmatpush1.bf16.msra.mxu0 0
    %9249 = vmatprep.subr.bf16.mxu0 0
    %9250 = vmatpush1.bf16.msra.mxu0 0
    %9251 = vmatprep.subr.bf16.mxu0 0
    %9252 = vmatpush1.bf16.msra.mxu0 0
    %9253 = vmatprep.subr.bf16.mxu0 0
    %9254 = vmatpush1.bf16.msra.mxu0 0
    %9255 = vmatprep.subr.bf16.mxu0 0
    %9256 = vmatpush1.bf16.msra.mxu0 0
    %9257 = vmatprep.subr.bf16.mxu0 0
    %9258 = vmatpush1.bf16.msra.mxu0 0
    %9259 = vmatprep.subr.bf16.mxu0 0
    %9260 = vmatpush1.bf16.msra.mxu0 0
    %9261 = vmatprep.subr.bf16.mxu0 0
    %9262 = vmatpush1.bf16.msra.mxu0 0
    %9263 = vmatprep.subr.bf16.mxu0 0
    %9264 = vmatpush1.bf16.msra.mxu0 0
    %9265 = vmatprep.subr.bf16.mxu0 0
    %9266 = vmatpush1.bf16.msra.mxu0 0
    %9267 = vmatprep.subr.bf16.mxu0 0
    %9268 = vmatpush1.bf16.msra.mxu0 0
    %9269 = vmatprep.subr.bf16.mxu0 0
    %9270 = vmatpush1.bf16.msra.mxu0 0
    %9271 = vmatprep.mubr.bf16.mxu0 0
    %9272 = vmatmul.mubr.bf16.gmra.mrb[0].mxu0 %v8969
    %v9273 = vpop.f32.mrb[0].mxu0
    %v9274 = vadd.f32 %v9221, %v9273
    %v9275 = vpop.f32.mrb[0].mxu0
    %v9276 = vadd.f32 %v9223, %v9275
    %v9277 = vpop.f32.mrb[0].mxu0
    %v9278 = vadd.f32 %v9225, %v9277
    %v9279 = vpop.f32.mrb[0].mxu0
    %v9280 = vadd.f32 %v9227, %v9279
    %9281 = vmatprep.mubr.bf16.mxu0 0
    %9282 = vmatmul.mubr.bf16.gmra.mrb[0].mxu0 %v8972
    %v9283 = vpop.f32.mrb[0].mxu0
    %v9284 = vadd.f32 %v9231, %v9283
    %v9285 = vpop.f32.mrb[0].mxu0
    %v9286 = vadd.f32 %v9233, %v9285
    %v9287 = vpop.f32.mrb[0].mxu0
    %v9288 = vadd.f32 %v9235, %v9287
    %v9289 = vpop.f32.mrb[0].mxu0
    %v9290 = vadd.f32 %v9237, %v9289
    %9291 = vdwg.mxu0
    %v9292 = vadd.f32 %v7842, %v9115
    %v9293 = vadd.f32 %v7843, %v9117
    %v9294 = vadd.f32 %v7844, %v9274
    %v9295 = vadd.f32 %v7845, %v9276
    %v9296 = vadd.f32 %v7846, %v9119
    %v9297 = vadd.f32 %v7847, %v9121
    %v9298 = vadd.f32 %v7848, %v9278
    %v9299 = vadd.f32 %v7849, %v9280
    %v9300 = vadd.f32 %v7850, %v9125
    %v9301 = vadd.f32 %v7851, %v9127
    %v9302 = vadd.f32 %v7852, %v9284
    %v9303 = vadd.f32 %v7853, %v9286
    %v9304 = vadd.f32 %v7854, %v9129
    %v9305 = vadd.f32 %v7855, %v9131
    %v9306 = vadd.f32 %v7856, %v9288
    %v9307 = vadd.f32 %v7857, %v9290
    %s9308 = scalar_lea.vmem [#allocation7], 4480
    %v9309 = vld [vmem:[%s9308] sm:$0xff]
    %v9310 = vld [vmem:[%s9308 + $0x8] sm:$0xff]
    %v9311 = vld [vmem:[%s9308 + $0x10] sm:$0xff]
    %v9312 = vld [vmem:[%s9308 + $0x18] sm:$0xff]
    %v9313 = vld [vmem:[%s9308 + $0x20] sm:$0xff]
    %v9314 = vld [vmem:[%s9308 + $0x28] sm:$0xff]
    %v9315 = vld [vmem:[%s9308 + $0x30] sm:$0xff]
    %v9316 = vld [vmem:[%s9308 + $0x38] sm:$0xff]
    %v9317 = vld [vmem:[%s9308 + $0x40] sm:$0xff]
    %v9318 = vld [vmem:[%s9308 + $0x48] sm:$0xff]
    %v9319 = vld [vmem:[%s9308 + $0x50] sm:$0xff]
    %v9320 = vld [vmem:[%s9308 + $0x58] sm:$0xff]
    %v9321 = vld [vmem:[%s9308 + $0x60] sm:$0xff]
    %v9322 = vld [vmem:[%s9308 + $0x68] sm:$0xff]
    %v9323 = vld [vmem:[%s9308 + $0x70] sm:$0xff]
    %v9324 = vld [vmem:[%s9308 + $0x78] sm:$0xff]
    %v9325 = vld [vmem:[%s9308 + $0x80] sm:$0xff]
    %v9326 = vld [vmem:[%s9308 + $0x88] sm:$0xff]
    %v9327 = vld [vmem:[%s9308 + $0x90] sm:$0xff]
    %v9328 = vld [vmem:[%s9308 + $0x98] sm:$0xff]
    %v9329 = vld [vmem:[%s9308 + $0xa0] sm:$0xff]
    %v9330 = vld [vmem:[%s9308 + $0xa8] sm:$0xff]
    %v9331 = vld [vmem:[%s9308 + $0xb0] sm:$0xff]
    %v9332 = vld [vmem:[%s9308 + $0xb8] sm:$0xff]
    %v9333 = vld [vmem:[%s9308 + $0xc0] sm:$0xff]
    %v9334 = vld [vmem:[%s9308 + $0xc8] sm:$0xff]
    %v9335 = vld [vmem:[%s9308 + $0xd0] sm:$0xff]
    %v9336 = vld [vmem:[%s9308 + $0xd8] sm:$0xff]
    %v9337 = vld [vmem:[%s9308 + $0xe0] sm:$0xff]
    %v9338 = vld [vmem:[%s9308 + $0xe8] sm:$0xff]
    %v9339 = vld [vmem:[%s9308 + $0xf0] sm:$0xff]
    %v9340 = vld [vmem:[%s9308 + $0xf8] sm:$0xff]
    %v9341 = vld [vmem:[%s9308 + $0x100] sm:$0xff]
    %v9342 = vld [vmem:[%s9308 + $0x108] sm:$0xff]
    %v9343 = vld [vmem:[%s9308 + $0x110] sm:$0xff]
    %v9344 = vld [vmem:[%s9308 + $0x118] sm:$0xff]
    %v9345 = vld [vmem:[%s9308 + $0x120] sm:$0xff]
    %v9346 = vld [vmem:[%s9308 + $0x128] sm:$0xff]
    %v9347 = vld [vmem:[%s9308 + $0x130] sm:$0xff]
    %v9348 = vld [vmem:[%s9308 + $0x138] sm:$0xff]
    %v9349 = vld [vmem:[%s9308 + $0x140] sm:$0xff]
    %v9350 = vld [vmem:[%s9308 + $0x148] sm:$0xff]
    %v9351 = vld [vmem:[%s9308 + $0x150] sm:$0xff]
    %v9352 = vld [vmem:[%s9308 + $0x158] sm:$0xff]
    %v9353 = vld [vmem:[%s9308 + $0x160] sm:$0xff]
    %v9354 = vld [vmem:[%s9308 + $0x168] sm:$0xff]
    %v9355 = vld [vmem:[%s9308 + $0x170] sm:$0xff]
    %v9356 = vld [vmem:[%s9308 + $0x178] sm:$0xff]
    %v9357 = vld [vmem:[%s9308 + $0x180] sm:$0xff]
    %v9358 = vld [vmem:[%s9308 + $0x188] sm:$0xff]
    %v9359 = vld [vmem:[%s9308 + $0x190] sm:$0xff]
    %v9360 = vld [vmem:[%s9308 + $0x198] sm:$0xff]
    %v9361 = vld [vmem:[%s9308 + $0x1a0] sm:$0xff]
    %v9362 = vld [vmem:[%s9308 + $0x1a8] sm:$0xff]
    %v9363 = vld [vmem:[%s9308 + $0x1b0] sm:$0xff]
    %v9364 = vld [vmem:[%s9308 + $0x1b8] sm:$0xff]
    %v9365 = vld [vmem:[%s9308 + $0x1c0] sm:$0xff]
    %v9366 = vld [vmem:[%s9308 + $0x1c8] sm:$0xff]
    %v9367 = vld [vmem:[%s9308 + $0x1d0] sm:$0xff]
    %v9368 = vld [vmem:[%s9308 + $0x1d8] sm:$0xff]
    %v9369 = vld [vmem:[%s9308 + $0x1e0] sm:$0xff]
    %v9370 = vld [vmem:[%s9308 + $0x1e8] sm:$0xff]
    %v9371 = vld [vmem:[%s9308 + $0x1f0] sm:$0xff]
    %v9372 = vld [vmem:[%s9308 + $0x1f8] sm:$0xff]
    %v9373 = vld [vmem:[%s9308 + $0x200] sm:$0xff]
    %v9374 = vld [vmem:[%s9308 + $0x208] sm:$0xff]
    %v9375 = vld [vmem:[%s9308 + $0x210] sm:$0xff]
    %v9376 = vld [vmem:[%s9308 + $0x218] sm:$0xff]
    %v9377 = vld [vmem:[%s9308 + $0x220] sm:$0xff]
    %v9378 = vld [vmem:[%s9308 + $0x228] sm:$0xff]
    %v9379 = vld [vmem:[%s9308 + $0x230] sm:$0xff]
    %v9380 = vld [vmem:[%s9308 + $0x238] sm:$0xff]
    %v9381 = vld [vmem:[%s9308 + $0x240] sm:$0xff]
    %v9382 = vld [vmem:[%s9308 + $0x248] sm:$0xff]
    %v9383 = vld [vmem:[%s9308 + $0x250] sm:$0xff]
    %v9384 = vld [vmem:[%s9308 + $0x258] sm:$0xff]
    %v9385 = vld [vmem:[%s9308 + $0x260] sm:$0xff]
    %v9386 = vld [vmem:[%s9308 + $0x268] sm:$0xff]
    %v9387 = vld [vmem:[%s9308 + $0x270] sm:$0xff]
    %v9388 = vld [vmem:[%s9308 + $0x278] sm:$0xff]
    %v9389 = vld [vmem:[%s9308 + $0x280] sm:$0xff]
    %v9390 = vld [vmem:[%s9308 + $0x288] sm:$0xff]
    %v9391 = vld [vmem:[%s9308 + $0x290] sm:$0xff]
    %v9392 = vld [vmem:[%s9308 + $0x298] sm:$0xff]
    %v9393 = vld [vmem:[%s9308 + $0x2a0] sm:$0xff]
    %v9394 = vld [vmem:[%s9308 + $0x2a8] sm:$0xff]
    %v9395 = vld [vmem:[%s9308 + $0x2b0] sm:$0xff]
    %v9396 = vld [vmem:[%s9308 + $0x2b8] sm:$0xff]
    %v9397 = vld [vmem:[%s9308 + $0x2c0] sm:$0xff]
    %v9398 = vld [vmem:[%s9308 + $0x2c8] sm:$0xff]
    %v9399 = vld [vmem:[%s9308 + $0x2d0] sm:$0xff]
    %v9400 = vld [vmem:[%s9308 + $0x2d8] sm:$0xff]
    %v9401 = vld [vmem:[%s9308 + $0x2e0] sm:$0xff]
    %v9402 = vld [vmem:[%s9308 + $0x2e8] sm:$0xff]
    %v9403 = vld [vmem:[%s9308 + $0x2f0] sm:$0xff]
    %v9404 = vld [vmem:[%s9308 + $0x2f8] sm:$0xff]
    %v9405 = vld [vmem:[%s9308 + $0x300] sm:$0xff]
    %v9406 = vld [vmem:[%s9308 + $0x308] sm:$0xff]
    %v9407 = vld [vmem:[%s9308 + $0x310] sm:$0xff]
    %v9408 = vld [vmem:[%s9308 + $0x318] sm:$0xff]
    %v9409 = vld [vmem:[%s9308 + $0x320] sm:$0xff]
    %v9410 = vld [vmem:[%s9308 + $0x328] sm:$0xff]
    %v9411 = vld [vmem:[%s9308 + $0x330] sm:$0xff]
    %v9412 = vld [vmem:[%s9308 + $0x338] sm:$0xff]
    %v9413 = vld [vmem:[%s9308 + $0x340] sm:$0xff]
    %v9414 = vld [vmem:[%s9308 + $0x348] sm:$0xff]
    %v9415 = vld [vmem:[%s9308 + $0x350] sm:$0xff]
    %v9416 = vld [vmem:[%s9308 + $0x358] sm:$0xff]
    %v9417 = vld [vmem:[%s9308 + $0x360] sm:$0xff]
    %v9418 = vld [vmem:[%s9308 + $0x368] sm:$0xff]
    %v9419 = vld [vmem:[%s9308 + $0x370] sm:$0xff]
    %v9420 = vld [vmem:[%s9308 + $0x378] sm:$0xff]
    %v9421 = vld [vmem:[%s9308 + $0x380] sm:$0xff]
    %v9422 = vld [vmem:[%s9308 + $0x388] sm:$0xff]
    %v9423 = vld [vmem:[%s9308 + $0x390] sm:$0xff]
    %v9424 = vld [vmem:[%s9308 + $0x398] sm:$0xff]
    %v9425 = vld [vmem:[%s9308 + $0x3a0] sm:$0xff]
    %v9426 = vld [vmem:[%s9308 + $0x3a8] sm:$0xff]
    %v9427 = vld [vmem:[%s9308 + $0x3b0] sm:$0xff]
    %v9428 = vld [vmem:[%s9308 + $0x3b8] sm:$0xff]
    %v9429 = vld [vmem:[%s9308 + $0x3c0] sm:$0xff]
    %v9430 = vld [vmem:[%s9308 + $0x3c8] sm:$0xff]
    %v9431 = vld [vmem:[%s9308 + $0x3d0] sm:$0xff]
    %v9432 = vld [vmem:[%s9308 + $0x3d8] sm:$0xff]
    %v9433 = vld [vmem:[%s9308 + $0x3e0] sm:$0xff]
    %v9434 = vld [vmem:[%s9308 + $0x3e8] sm:$0xff]
    %v9435 = vld [vmem:[%s9308 + $0x3f0] sm:$0xff]
    %v9436 = vld [vmem:[%s9308 + $0x3f8] sm:$0xff]
    %v9437 = vld [vmem:[%s9308 + $0x400] sm:$0xff]
    %v9438 = vld [vmem:[%s9308 + $0x408] sm:$0xff]
    %v9439 = vld [vmem:[%s9308 + $0x410] sm:$0xff]
    %v9440 = vld [vmem:[%s9308 + $0x418] sm:$0xff]
    %v9441 = vld [vmem:[%s9308 + $0x420] sm:$0xff]
    %v9442 = vld [vmem:[%s9308 + $0x428] sm:$0xff]
    %v9443 = vld [vmem:[%s9308 + $0x430] sm:$0xff]
    %v9444 = vld [vmem:[%s9308 + $0x438] sm:$0xff]
    %v9445 = vld [vmem:[%s9308 + $0x440] sm:$0xff]
    %v9446 = vld [vmem:[%s9308 + $0x448] sm:$0xff]
    %v9447 = vld [vmem:[%s9308 + $0x450] sm:$0xff]
    %v9448 = vld [vmem:[%s9308 + $0x458] sm:$0xff]
    %v9449 = vcombine.low %v3473, %v3688
    %v9450 = vcombine.high %v3473, %v3688
    %v9451 = vcombine.low %v7889, %v3542
    %v9452 = vcombine.high %v7889, %v3542
    %v9454 = vunpack.c.l.s4 1966171168
    %v9455 = vunpack.c.0.s8 %v9454
    %v9456 = vlaneseq
    %v9457 = vshrl.u32 %v9456, 7
    %v9458 = vsub.s32 %v9455, %v9457
    %v9459 = vrot.slane %v9449, %v9458
    %v9461 = vunpack.c.l.s4 1966171168
    %v9462 = vunpack.c.0.s8 %v9461
    %v9463 = vlaneseq
    %v9464 = vshrl.u32 %v9463, 7
    %v9465 = vsub.s32 %v9462, %v9464
    %v9466 = vrot.slane %v9450, %v9465
    %v9468 = vunpack.c.l.s4 1966171168
    %v9469 = vunpack.c.0.s8 %v9468
    %v9470 = vlaneseq
    %v9471 = vshrl.u32 %v9470, 7
    %v9472 = vsub.s32 %v9469, %v9471
    %v9473 = vrot.slane %v9451, %v9472
    %v9475 = vunpack.c.l.s4 1966171168
    %v9476 = vunpack.c.0.s8 %v9475
    %v9477 = vlaneseq
    %v9478 = vshrl.u32 %v9477, 7
    %v9479 = vsub.s32 %v9476, %v9478
    %v9480 = vrot.slane %v9452, %v9479
    %v9481 = vcombine.low %v5233, %v5247
    %v9482 = vcombine.high %v5233, %v5247
    %v9483 = vcombine.low %v5240, %v5254
    %v9484 = vcombine.low %v9459, %v9473
    %v9485 = vcombine.high %v9459, %v9473
    %v9486 = vcombine.low %v9466, %v9480
    %v9488 = vunpack.c.l.s4 1966171168
    %v9489 = vunpack.c.0.s8 %v9488
    %v9490 = vlaneseq
    %v9491 = vshrl.u32 %v9490, 7
    %v9492 = vsub.s32 %v9489, %v9491
    %v9493 = vrot.slane %v9481, %v9492
    %v9495 = vunpack.c.l.s4 1966171168
    %v9496 = vunpack.c.0.s8 %v9495
    %v9497 = vlaneseq
    %v9498 = vshrl.u32 %v9497, 7
    %v9499 = vsub.s32 %v9496, %v9498
    %v9500 = vrot.slane %v9483, %v9499
    %v9502 = vunpack.c.l.s4 1966171168
    %v9503 = vunpack.c.0.s8 %v9502
    %v9504 = vlaneseq
    %v9505 = vshrl.u32 %v9504, 7
    %v9506 = vsub.s32 %v9503, %v9505
    %v9507 = vrot.slane %v9482, %v9506
    %v9509 = vunpack.c.l.s4 1966171168
    %v9510 = vunpack.c.0.s8 %v9509
    %v9511 = vlaneseq
    %v9512 = vshrl.u32 %v9511, 7
    %v9513 = vsub.s32 %v9510, %v9512
    %v9514 = vrot.slane %v9484, %v9513
    %v9516 = vunpack.c.l.s4 1966171168
    %v9517 = vunpack.c.0.s8 %v9516
    %v9518 = vlaneseq
    %v9519 = vshrl.u32 %v9518, 7
    %v9520 = vsub.s32 %v9517, %v9519
    %v9521 = vrot.slane %v9486, %v9520
    %v9523 = vunpack.c.l.s4 1966171168
    %v9524 = vunpack.c.0.s8 %v9523
    %v9525 = vlaneseq
    %v9526 = vshrl.u32 %v9525, 7
    %v9527 = vsub.s32 %v9524, %v9526
    %v9528 = vrot.slane %v9485, %v9527
    %v9529 = vcombine.low %v9493, %v9514
    %v9530 = vcombine.high %v9493, %v9514
    %v9531 = vcombine.low %v9500, %v9521
    %v9532 = vcombine.low %v9507, %v9528
    %v9533 = vcombine.high %v9507, %v9528
    %v9534 = vcombine.low %v3689, %v7889
    %v9535 = vcombine.high %v3689, %v7889
    %v9537 = vunpack.c.l.s4 1966171168
    %v9538 = vunpack.c.0.s8 %v9537
    %v9539 = vlaneseq
    %v9540 = vshrl.u32 %v9539, 7
    %v9541 = vsub.s32 %v9538, %v9540
    %v9542 = vrot.slane %v9534, %v9541
    %v9544 = vunpack.c.l.s4 1966171168
    %v9545 = vunpack.c.0.s8 %v9544
    %v9546 = vlaneseq
    %v9547 = vshrl.u32 %v9546, 7
    %v9548 = vsub.s32 %v9545, %v9547
    %v9549 = vrot.slane %v9535, %v9548
    %v9550 = vcombine.low %v5348, %v5362
    %v9551 = vcombine.high %v5348, %v5362
    %v9552 = vcombine.low %v5355, %v5369
    %v9553 = vcombine.high %v9542, %v9542
    %v9555 = vunpack.c.l.s4 1966171168
    %v9556 = vunpack.c.0.s8 %v9555
    %v9557 = vlaneseq
    %v9558 = vshrl.u32 %v9557, 7
    %v9559 = vsub.s32 %v9556, %v9558
    %v9560 = vrot.slane %v9550, %v9559
    %v9562 = vunpack.c.l.s4 1966171168
    %v9563 = vunpack.c.0.s8 %v9562
    %v9564 = vlaneseq
    %v9565 = vshrl.u32 %v9564, 7
    %v9566 = vsub.s32 %v9563, %v9565
    %v9567 = vrot.slane %v9552, %v9566
    %v9569 = vunpack.c.l.s4 1966171168
    %v9570 = vunpack.c.0.s8 %v9569
    %v9571 = vlaneseq
    %v9572 = vshrl.u32 %v9571, 7
    %v9573 = vsub.s32 %v9570, %v9572
    %v9574 = vrot.slane %v9551, %v9573
    %v9576 = vunpack.c.l.s4 1966171168
    %v9577 = vunpack.c.0.s8 %v9576
    %v9578 = vlaneseq
    %v9579 = vshrl.u32 %v9578, 7
    %v9580 = vsub.s32 %v9577, %v9579
    %v9581 = vrot.slane %v9542, %v9580
    %v9583 = vunpack.c.l.s4 1966171168
    %v9584 = vunpack.c.0.s8 %v9583
    %v9585 = vlaneseq
    %v9586 = vshrl.u32 %v9585, 7
    %v9587 = vsub.s32 %v9584, %v9586
    %v9588 = vrot.slane %v9549, %v9587
    %v9590 = vunpack.c.l.s4 1966171168
    %v9591 = vunpack.c.0.s8 %v9590
    %v9592 = vlaneseq
    %v9593 = vshrl.u32 %v9592, 7
    %v9594 = vsub.s32 %v9591, %v9593
    %v9595 = vrot.slane %v9553, %v9594
    %v9596 = vcombine.low %v9560, %v9581
    %v9597 = vcombine.high %v9560, %v9581
    %v9598 = vcombine.low %v9567, %v9588
    %v9599 = vcombine.low %v9574, %v9595
    %v9600 = vcombine.high %v9574, %v9595
    %v9749 = vunpack.c.l.b16 %v9309
    %v9750 = vunpack.c.h.b16 %v9309
    %v9751 = vunpack.c.l.b16 %v9310
    %v9752 = vunpack.c.h.b16 %v9310
    %v9753 = vunpack.c.l.b16 %v9311
    %v9754 = vunpack.c.h.b16 %v9311
    %v9755 = vunpack.c.l.b16 %v9312
    %v9756 = vunpack.c.h.b16 %v9312
    %v9757 = vunpack.c.l.b16 %v9313
    %v9758 = vunpack.c.h.b16 %v9313
    %v9759 = vunpack.c.l.b16 %v9314
    %v9760 = vunpack.c.h.b16 %v9314
    %v9761 = vunpack.c.l.b16 %v9315
    %v9762 = vunpack.c.h.b16 %v9315
    %v9763 = vunpack.c.l.b16 %v9316
    %v9764 = vunpack.c.h.b16 %v9316
    %v9765 = vunpack.c.l.b16 %v9317
    %v9766 = vunpack.c.h.b16 %v9317
    %v9767 = vunpack.c.l.b16 %v9318
    %v9768 = vunpack.c.h.b16 %v9318
    %v9769 = vunpack.c.l.b16 %v9319
    %v9770 = vunpack.c.h.b16 %v9319
    %v9771 = vunpack.c.l.b16 %v9320
    %v9772 = vunpack.c.h.b16 %v9320
    %v9773 = vunpack.c.l.b16 %v9321
    %v9774 = vunpack.c.h.b16 %v9321
    %v9775 = vunpack.c.l.b16 %v9322
    %v9776 = vunpack.c.h.b16 %v9322
    %v9777 = vunpack.c.l.b16 %v9323
    %v9778 = vunpack.c.h.b16 %v9323
    %v9779 = vunpack.c.l.b16 %v9324
    %v9780 = vunpack.c.h.b16 %v9324
    %v9781 = vunpack.c.l.b16 %v9325
    %v9782 = vunpack.c.h.b16 %v9325
    %v9783 = vunpack.c.l.b16 %v9326
    %v9784 = vunpack.c.h.b16 %v9326
    %v9785 = vunpack.c.l.b16 %v9327
    %v9786 = vunpack.c.h.b16 %v9327
    %v9787 = vunpack.c.l.b16 %v9328
    %v9788 = vunpack.c.h.b16 %v9328
    %v9789 = vunpack.c.l.b16 %v9329
    %v9790 = vunpack.c.h.b16 %v9329
    %v9791 = vunpack.c.l.b16 %v9330
    %v9792 = vunpack.c.h.b16 %v9330
    %v9793 = vunpack.c.l.b16 %v9331
    %v9794 = vunpack.c.h.b16 %v9331
    %v9795 = vunpack.c.l.b16 %v9332
    %v9796 = vunpack.c.h.b16 %v9332
    %v9797 = vunpack.c.l.b16 %v9333
    %v9798 = vunpack.c.h.b16 %v9333
    %v9799 = vunpack.c.l.b16 %v9334
    %v9800 = vunpack.c.h.b16 %v9334
    %v9801 = vunpack.c.l.b16 %v9335
    %v9802 = vunpack.c.h.b16 %v9335
    %v9803 = vunpack.c.l.b16 %v9336
    %v9804 = vunpack.c.h.b16 %v9336
    %v9805 = vunpack.c.l.b16 %v9337
    %v9806 = vunpack.c.h.b16 %v9337
    %v9807 = vunpack.c.l.b16 %v9338
    %v9808 = vunpack.c.h.b16 %v9338
    %v9809 = vunpack.c.l.b16 %v9339
    %v9810 = vunpack.c.h.b16 %v9339
    %v9811 = vunpack.c.l.b16 %v9340
    %v9812 = vunpack.c.h.b16 %v9340
    %v9813 = vunpack.c.l.b16 %v9341
    %v9814 = vunpack.c.h.b16 %v9341
    %v9815 = vunpack.c.l.b16 %v9342
    %v9816 = vunpack.c.h.b16 %v9342
    %v9817 = vunpack.c.l.b16 %v9343
    %v9818 = vunpack.c.h.b16 %v9343
    %v9819 = vunpack.c.l.b16 %v9344
    %v9820 = vunpack.c.h.b16 %v9344
    %v9821 = vunpack.c.l.b16 %v9345
    %v9822 = vunpack.c.h.b16 %v9345
    %v9823 = vunpack.c.l.b16 %v9346
    %v9824 = vunpack.c.h.b16 %v9346
    %v9825 = vunpack.c.l.b16 %v9347
    %v9826 = vunpack.c.h.b16 %v9347
    %v9827 = vunpack.c.l.b16 %v9348
    %v9828 = vunpack.c.h.b16 %v9348
    %v9829 = vunpack.c.l.b16 %v9349
    %v9830 = vunpack.c.h.b16 %v9349
    %v9831 = vunpack.c.l.b16 %v9350
    %v9832 = vunpack.c.h.b16 %v9350
    %v9833 = vunpack.c.l.b16 %v9351
    %v9834 = vunpack.c.h.b16 %v9351
    %v9835 = vunpack.c.l.b16 %v9352
    %v9836 = vunpack.c.h.b16 %v9352
    %v9837 = vunpack.c.l.b16 %v9353
    %v9838 = vunpack.c.h.b16 %v9353
    %v9839 = vunpack.c.l.b16 %v9354
    %v9840 = vunpack.c.h.b16 %v9354
    %v9841 = vunpack.c.l.b16 %v9355
    %v9842 = vunpack.c.h.b16 %v9355
    %v9843 = vunpack.c.l.b16 %v9356
    %v9844 = vunpack.c.h.b16 %v9356
    %v9845 = vunpack.c.l.b16 %v9357
    %v9846 = vunpack.c.h.b16 %v9357
    %v9847 = vunpack.c.l.b16 %v9358
    %v9848 = vunpack.c.h.b16 %v9358
    %v9849 = vunpack.c.l.b16 %v9359
    %v9850 = vunpack.c.h.b16 %v9359
    %v9851 = vunpack.c.l.b16 %v9360
    %v9852 = vunpack.c.h.b16 %v9360
    %v9853 = vunpack.c.l.b16 %v9361
    %v9854 = vunpack.c.h.b16 %v9361
    %v9855 = vunpack.c.l.b16 %v9362
    %v9856 = vunpack.c.h.b16 %v9362
    %v9857 = vunpack.c.l.b16 %v9363
    %v9858 = vunpack.c.h.b16 %v9363
    %v9859 = vunpack.c.l.b16 %v9364
    %v9860 = vunpack.c.h.b16 %v9364
    %v9861 = vunpack.c.l.b16 %v9365
    %v9862 = vunpack.c.h.b16 %v9365
    %v9863 = vunpack.c.l.b16 %v9366
    %v9864 = vunpack.c.h.b16 %v9366
    %v9865 = vunpack.c.l.b16 %v9367
    %v9866 = vunpack.c.h.b16 %v9367
    %v9867 = vunpack.c.l.b16 %v9368
    %v9868 = vunpack.c.h.b16 %v9368
    %v9869 = vunpack.c.l.b16 %v9369
    %v9870 = vunpack.c.h.b16 %v9369
    %v9871 = vunpack.c.l.b16 %v9370
    %v9872 = vunpack.c.h.b16 %v9370
    %v9873 = vunpack.c.l.b16 %v9371
    %v9874 = vunpack.c.h.b16 %v9371
    %v9875 = vunpack.c.l.b16 %v9372
    %v9876 = vunpack.c.h.b16 %v9372
    %v9877 = vunpack.c.l.b16 %v9373
    %v9878 = vunpack.c.h.b16 %v9373
    %v9879 = vunpack.c.l.b16 %v9374
    %v9880 = vunpack.c.h.b16 %v9374
    %v9881 = vunpack.c.l.b16 %v9375
    %v9882 = vunpack.c.h.b16 %v9375
    %v9883 = vunpack.c.l.b16 %v9376
    %v9884 = vunpack.c.h.b16 %v9376
    %v9885 = vunpack.c.l.b16 %v9377
    %v9886 = vunpack.c.h.b16 %v9377
    %v9887 = vunpack.c.l.b16 %v9378
    %v9888 = vunpack.c.h.b16 %v9378
    %v9889 = vunpack.c.l.b16 %v9379
    %v9890 = vunpack.c.h.b16 %v9379
    %v9891 = vunpack.c.l.b16 %v9380
    %v9892 = vunpack.c.h.b16 %v9380
    %v9893 = vunpack.c.l.b16 %v9381
    %v9894 = vunpack.c.h.b16 %v9381
    %v9895 = vunpack.c.l.b16 %v9382
    %v9896 = vunpack.c.h.b16 %v9382
    %v9897 = vunpack.c.l.b16 %v9383
    %v9898 = vunpack.c.h.b16 %v9383
    %v9899 = vunpack.c.l.b16 %v9384
    %v9900 = vunpack.c.h.b16 %v9384
    %v9901 = vunpack.c.l.b16 %v9385
    %v9902 = vunpack.c.h.b16 %v9385
    %v9903 = vunpack.c.l.b16 %v9386
    %v9904 = vunpack.c.h.b16 %v9386
    %v9905 = vunpack.c.l.b16 %v9387
    %v9906 = vunpack.c.h.b16 %v9387
    %v9907 = vunpack.c.l.b16 %v9388
    %v9908 = vunpack.c.h.b16 %v9388
    %v9909 = vunpack.c.l.b16 %v9389
    %v9910 = vunpack.c.h.b16 %v9389
    %v9911 = vunpack.c.l.b16 %v9390
    %v9912 = vunpack.c.h.b16 %v9390
    %v9913 = vunpack.c.l.b16 %v9391
    %v9914 = vunpack.c.h.b16 %v9391
    %v9915 = vunpack.c.l.b16 %v9392
    %v9916 = vunpack.c.h.b16 %v9392
    %v9917 = vunpack.c.l.b16 %v9393
    %v9918 = vunpack.c.h.b16 %v9393
    %v9919 = vunpack.c.l.b16 %v9394
    %v9920 = vunpack.c.h.b16 %v9394
    %v9921 = vunpack.c.l.b16 %v9395
    %v9922 = vunpack.c.h.b16 %v9395
    %v9923 = vunpack.c.l.b16 %v9396
    %v9924 = vunpack.c.h.b16 %v9396
    %v9925 = vunpack.c.l.b16 %v9397
    %v9926 = vunpack.c.h.b16 %v9397
    %v9927 = vunpack.c.l.b16 %v9398
    %v9928 = vunpack.c.h.b16 %v9398
    %v9929 = vunpack.c.l.b16 %v9399
    %v9930 = vunpack.c.h.b16 %v9399
    %v9931 = vunpack.c.l.b16 %v9400
    %v9932 = vunpack.c.h.b16 %v9400
    %v9933 = vunpack.c.l.b16 %v9401
    %v9934 = vunpack.c.h.b16 %v9401
    %v9935 = vunpack.c.l.b16 %v9402
    %v9936 = vunpack.c.h.b16 %v9402
    %v9937 = vunpack.c.l.b16 %v9403
    %v9938 = vunpack.c.h.b16 %v9403
    %v9939 = vunpack.c.l.b16 %v9404
    %v9940 = vunpack.c.h.b16 %v9404
    %v9941 = vunpack.c.l.b16 %v9405
    %v9942 = vunpack.c.h.b16 %v9405
    %v9943 = vunpack.c.l.b16 %v9406
    %v9944 = vunpack.c.h.b16 %v9406
    %v9945 = vunpack.c.l.b16 %v9407
    %v9946 = vunpack.c.h.b16 %v9407
    %v9947 = vunpack.c.l.b16 %v9408
    %v9948 = vunpack.c.h.b16 %v9408
    %v9949 = vunpack.c.l.b16 %v9409
    %v9950 = vunpack.c.h.b16 %v9409
    %v9951 = vunpack.c.l.b16 %v9410
    %v9952 = vunpack.c.h.b16 %v9410
    %v9953 = vunpack.c.l.b16 %v9411
    %v9954 = vunpack.c.h.b16 %v9411
    %v9955 = vunpack.c.l.b16 %v9412
    %v9956 = vunpack.c.h.b16 %v9412
    %v9957 = vunpack.c.l.b16 %v9413
    %v9958 = vunpack.c.h.b16 %v9413
    %v9959 = vunpack.c.l.b16 %v9414
    %v9960 = vunpack.c.h.b16 %v9414
    %v9961 = vunpack.c.l.b16 %v9415
    %v9962 = vunpack.c.h.b16 %v9415
    %v9963 = vunpack.c.l.b16 %v9416
    %v9964 = vunpack.c.h.b16 %v9416
    %v9965 = vunpack.c.l.b16 %v9417
    %v9966 = vunpack.c.h.b16 %v9417
    %v9967 = vunpack.c.l.b16 %v9418
    %v9968 = vunpack.c.h.b16 %v9418
    %v9969 = vunpack.c.l.b16 %v9419
    %v9970 = vunpack.c.h.b16 %v9419
    %v9971 = vunpack.c.l.b16 %v9420
    %v9972 = vunpack.c.h.b16 %v9420
    %v9973 = vunpack.c.l.b16 %v9421
    %v9974 = vunpack.c.h.b16 %v9421
    %v9975 = vunpack.c.l.b16 %v9422
    %v9976 = vunpack.c.h.b16 %v9422
    %v9977 = vunpack.c.l.b16 %v9423
    %v9978 = vunpack.c.h.b16 %v9423
    %v9979 = vunpack.c.l.b16 %v9424
    %v9980 = vunpack.c.h.b16 %v9424
    %v9981 = vunpack.c.l.b16 %v9425
    %v9982 = vunpack.c.h.b16 %v9425
    %v9983 = vunpack.c.l.b16 %v9426
    %v9984 = vunpack.c.h.b16 %v9426
    %v9985 = vunpack.c.l.b16 %v9427
    %v9986 = vunpack.c.h.b16 %v9427
    %v9987 = vunpack.c.l.b16 %v9428
    %v9988 = vunpack.c.h.b16 %v9428
    %v9989 = vunpack.c.l.b16 %v9429
    %v9990 = vunpack.c.h.b16 %v9429
    %v9991 = vunpack.c.l.b16 %v9430
    %v9992 = vunpack.c.h.b16 %v9430
    %v9993 = vunpack.c.l.b16 %v9431
    %v9994 = vunpack.c.h.b16 %v9431
    %v9995 = vunpack.c.l.b16 %v9432
    %v9996 = vunpack.c.h.b16 %v9432
    %v9997 = vunpack.c.l.b16 %v9433
    %v9998 = vunpack.c.h.b16 %v9433
    %v9999 = vunpack.c.l.b16 %v9434
    %v10000 = vunpack.c.h.b16 %v9434
    %v10001 = vunpack.c.l.b16 %v9435
    %v10002 = vunpack.c.h.b16 %v9435
    %v10003 = vunpack.c.l.b16 %v9436
    %v10004 = vunpack.c.h.b16 %v9436
    %v10005 = vunpack.c.l.b16 %v9437
    %v10006 = vunpack.c.h.b16 %v9437
    %v10007 = vunpack.c.l.b16 %v9438
    %v10008 = vunpack.c.h.b16 %v9438
    %v10009 = vunpack.c.l.b16 %v9439
    %v10010 = vunpack.c.h.b16 %v9439
    %v10011 = vunpack.c.l.b16 %v9440
    %v10012 = vunpack.c.h.b16 %v9440
    %v10013 = vunpack.c.l.b16 %v9441
    %v10014 = vunpack.c.h.b16 %v9441
    %v10015 = vunpack.c.l.b16 %v9442
    %v10016 = vunpack.c.h.b16 %v9442
    %v10017 = vunpack.c.l.b16 %v9443
    %v10018 = vunpack.c.h.b16 %v9443
    %v10019 = vunpack.c.l.b16 %v9444
    %v10020 = vunpack.c.h.b16 %v9444
    %v10021 = vunpack.c.l.b16 %v9445
    %v10022 = vunpack.c.h.b16 %v9445
    %v10023 = vunpack.c.l.b16 %v9446
    %v10024 = vunpack.c.h.b16 %v9446
    %v10025 = vunpack.c.l.b16 %v9447
    %v10026 = vunpack.c.h.b16 %v9447
    %v10027 = vunpack.c.l.b16 %v9448
    %v10028 = vunpack.c.h.b16 %v9448
    %v10029 = vpack.c.b16 %v9753, %v9749
    %v10030 = vpack.c.b16 %v9754, %v9750
    %v10031 = vpack.c.b16 %v9755, %v9751
    %v10032 = vpack.c.b16 %v9756, %v9752
    %v10033 = vpack.c.b16 %v9761, %v9757
    %v10034 = vpack.c.b16 %v9762, %v9758
    %v10035 = vpack.c.b16 %v9763, %v9759
    %v10036 = vpack.c.b16 %v9764, %v9760
    %v10037 = vpack.c.b16 %v9769, %v9765
    %v10038 = vpack.c.b16 %v9770, %v9766
    %v10039 = vpack.c.b16 %v9771, %v9767
    %v10040 = vpack.c.b16 %v9772, %v9768
    %v10041 = vpack.c.b16 %v9777, %v9773
    %v10042 = vpack.c.b16 %v9778, %v9774
    %v10043 = vpack.c.b16 %v9779, %v9775
    %v10044 = vpack.c.b16 %v9780, %v9776
    %v10045 = vpack.c.b16 %v9785, %v9781
    %v10046 = vpack.c.b16 %v9786, %v9782
    %v10047 = vpack.c.b16 %v9787, %v9783
    %v10048 = vpack.c.b16 %v9788, %v9784
    %v10049 = vpack.c.b16 %v9793, %v9789
    %v10050 = vpack.c.b16 %v9794, %v9790
    %v10051 = vpack.c.b16 %v9795, %v9791
    %v10052 = vpack.c.b16 %v9796, %v9792
    %v10053 = vpack.c.b16 %v9801, %v9797
    %v10054 = vpack.c.b16 %v9802, %v9798
    %v10055 = vpack.c.b16 %v9803, %v9799
    %v10056 = vpack.c.b16 %v9804, %v9800
    %v10057 = vpack.c.b16 %v9809, %v9805
    %v10058 = vpack.c.b16 %v9810, %v9806
    %v10059 = vpack.c.b16 %v9811, %v9807
    %v10060 = vpack.c.b16 %v9812, %v9808
    %v10061 = vpack.c.b16 %v9817, %v9813
    %v10062 = vpack.c.b16 %v9818, %v9814
    %v10063 = vpack.c.b16 %v9819, %v9815
    %v10064 = vpack.c.b16 %v9820, %v9816
    %v10065 = vpack.c.b16 %v9825, %v9821
    %v10066 = vpack.c.b16 %v9826, %v9822
    %v10067 = vpack.c.b16 %v9827, %v9823
    %v10068 = vpack.c.b16 %v9828, %v9824
    %v10069 = vpack.c.b16 %v9833, %v9829
    %v10070 = vpack.c.b16 %v9834, %v9830
    %v10071 = vpack.c.b16 %v9835, %v9831
    %v10072 = vpack.c.b16 %v9836, %v9832
    %v10073 = vpack.c.b16 %v9841, %v9837
    %v10074 = vpack.c.b16 %v9842, %v9838
    %v10075 = vpack.c.b16 %v9843, %v9839
    %v10076 = vpack.c.b16 %v9844, %v9840
    %v10077 = vpack.c.b16 %v9849, %v9845
    %v10078 = vpack.c.b16 %v9850, %v9846
    %v10079 = vpack.c.b16 %v9851, %v9847
    %v10080 = vpack.c.b16 %v9852, %v9848
    %v10081 = vpack.c.b16 %v9857, %v9853
    %v10082 = vpack.c.b16 %v9858, %v9854
    %v10083 = vpack.c.b16 %v9859, %v9855
    %v10084 = vpack.c.b16 %v9860, %v9856
    %v10085 = vpack.c.b16 %v9865, %v9861
    %v10086 = vpack.c.b16 %v9866, %v9862
    %v10087 = vpack.c.b16 %v9867, %v9863
    %v10088 = vpack.c.b16 %v9868, %v9864
    %v10089 = vpack.c.b16 %v9873, %v9869
    %v10090 = vpack.c.b16 %v9874, %v9870
    %v10091 = vpack.c.b16 %v9875, %v9871
    %v10092 = vpack.c.b16 %v9876, %v9872
    %v10093 = vpack.c.b16 %v9881, %v9877
    %v10094 = vpack.c.b16 %v9882, %v9878
    %v10095 = vpack.c.b16 %v9883, %v9879
    %v10096 = vpack.c.b16 %v9884, %v9880
    %v10097 = vpack.c.b16 %v9889, %v9885
    %v10098 = vpack.c.b16 %v9890, %v9886
    %v10099 = vpack.c.b16 %v9891, %v9887
    %v10100 = vpack.c.b16 %v9892, %v9888
    %v10101 = vpack.c.b16 %v9897, %v9893
    %v10102 = vpack.c.b16 %v9898, %v9894
    %v10103 = vpack.c.b16 %v9899, %v9895
    %v10104 = vpack.c.b16 %v9900, %v9896
    %v10105 = vpack.c.b16 %v9905, %v9901
    %v10106 = vpack.c.b16 %v9906, %v9902
    %v10107 = vpack.c.b16 %v9907, %v9903
    %v10108 = vpack.c.b16 %v9908, %v9904
    %v10109 = vpack.c.b16 %v9913, %v9909
    %v10110 = vpack.c.b16 %v9914, %v9910
    %v10111 = vpack.c.b16 %v9915, %v9911
    %v10112 = vpack.c.b16 %v9916, %v9912
    %v10113 = vpack.c.b16 %v9921, %v9917
    %v10114 = vpack.c.b16 %v9922, %v9918
    %v10115 = vpack.c.b16 %v9923, %v9919
    %v10116 = vpack.c.b16 %v9924, %v9920
    %v10117 = vpack.c.b16 %v9929, %v9925
    %v10118 = vpack.c.b16 %v9930, %v9926
    %v10119 = vpack.c.b16 %v9931, %v9927
    %v10120 = vpack.c.b16 %v9932, %v9928
    %v10121 = vpack.c.b16 %v9937, %v9933
    %v10122 = vpack.c.b16 %v9938, %v9934
    %v10123 = vpack.c.b16 %v9939, %v9935
    %v10124 = vpack.c.b16 %v9940, %v9936
    %v10125 = vpack.c.b16 %v9945, %v9941
    %v10126 = vpack.c.b16 %v9946, %v9942
    %v10127 = vpack.c.b16 %v9947, %v9943
    %v10128 = vpack.c.b16 %v9948, %v9944
    %v10129 = vpack.c.b16 %v9953, %v9949
    %v10130 = vpack.c.b16 %v9954, %v9950
    %v10131 = vpack.c.b16 %v9955, %v9951
    %v10132 = vpack.c.b16 %v9956, %v9952
    %v10133 = vpack.c.b16 %v9961, %v9957
    %v10134 = vpack.c.b16 %v9962, %v9958
    %v10135 = vpack.c.b16 %v9963, %v9959
    %v10136 = vpack.c.b16 %v9964, %v9960
    %v10137 = vpack.c.b16 %v9969, %v9965
    %v10138 = vpack.c.b16 %v9970, %v9966
    %v10139 = vpack.c.b16 %v9971, %v9967
    %v10140 = vpack.c.b16 %v9972, %v9968
    %v10141 = vpack.c.b16 %v9977, %v9973
    %v10142 = vpack.c.b16 %v9978, %v9974
    %v10143 = vpack.c.b16 %v9979, %v9975
    %v10144 = vpack.c.b16 %v9980, %v9976
    %v10145 = vpack.c.b16 %v9985, %v9981
    %v10146 = vpack.c.b16 %v9986, %v9982
    %v10147 = vpack.c.b16 %v9987, %v9983
    %v10148 = vpack.c.b16 %v9988, %v9984
    %v10149 = vpack.c.b16 %v9993, %v9989
    %v10150 = vpack.c.b16 %v9994, %v9990
    %v10151 = vpack.c.b16 %v9995, %v9991
    %v10152 = vpack.c.b16 %v9996, %v9992
    %v10153 = vpack.c.b16 %v10001, %v9997
    %v10154 = vpack.c.b16 %v10002, %v9998
    %v10155 = vpack.c.b16 %v10003, %v9999
    %v10156 = vpack.c.b16 %v10004, %v10000
    %v10157 = vpack.c.b16 %v10009, %v10005
    %v10158 = vpack.c.b16 %v10010, %v10006
    %v10159 = vpack.c.b16 %v10011, %v10007
    %v10160 = vpack.c.b16 %v10012, %v10008
    %v10161 = vpack.c.b16 %v10017, %v10013
    %v10162 = vpack.c.b16 %v10018, %v10014
    %v10163 = vpack.c.b16 %v10019, %v10015
    %v10164 = vpack.c.b16 %v10020, %v10016
    %v10165 = vpack.c.b16 %v10025, %v10021
    %v10166 = vpack.c.b16 %v10026, %v10022
    %v10167 = vpack.c.b16 %v10027, %v10023
    %v10168 = vpack.c.b16 %v10028, %v10024
    %v10310 = vsel %vm4880, %v9531, 0
    %v10313 = vsel %vm4880, %v9598, 0
    %10315 = vmatprep.subr.bf16.mxu0 %v10030
    %10316 = vmatpush1.bf16.msra.mxu0 %v10029
    %10317 = vmatprep.subr.bf16.mxu0 %v10034
    %10318 = vmatpush1.bf16.msra.mxu0 %v10033
    %10319 = vmatprep.subr.bf16.mxu0 %v10038
    %10320 = vmatpush1.bf16.msra.mxu0 %v10037
    %10321 = vmatprep.subr.bf16.mxu0 %v10042
    %10322 = vmatpush1.bf16.msra.mxu0 %v10041
    %10323 = vmatprep.subr.bf16.mxu0 %v10046
    %10324 = vmatpush1.bf16.msra.mxu0 %v10045
    %10325 = vmatprep.subr.bf16.mxu0 %v10050
    %10326 = vmatpush1.bf16.msra.mxu0 %v10049
    %10327 = vmatprep.subr.bf16.mxu0 %v10054
    %10328 = vmatpush1.bf16.msra.mxu0 %v10053
    %10329 = vmatprep.subr.bf16.mxu0 %v10058
    %10330 = vmatpush1.bf16.msra.mxu0 %v10057
    %10331 = vmatprep.subr.bf16.mxu0 %v10062
    %10332 = vmatpush1.bf16.msra.mxu0 %v10061
    %10333 = vmatprep.subr.bf16.mxu0 %v10066
    %10334 = vmatpush1.bf16.msra.mxu0 %v10065
    %10335 = vmatprep.subr.bf16.mxu0 %v10070
    %10336 = vmatpush1.bf16.msra.mxu0 %v10069
    %10337 = vmatprep.subr.bf16.mxu0 %v10074
    %10338 = vmatpush1.bf16.msra.mxu0 %v10073
    %10339 = vmatprep.subr.bf16.mxu0 %v10078
    %10340 = vmatpush1.bf16.msra.mxu0 %v10077
    %10341 = vmatprep.subr.bf16.mxu0 %v10082
    %10342 = vmatpush1.bf16.msra.mxu0 %v10081
    %10343 = vmatprep.subr.bf16.mxu0 %v10086
    %10344 = vmatpush1.bf16.msra.mxu0 %v10085
    %10345 = vmatprep.subr.bf16.mxu0 %v10090
    %10346 = vmatpush1.bf16.msra.mxu0 %v10089
    %10347 = vmatprep.mubr.bf16.mxu0 %v9532
    %10348 = vmatmul.mubr.bf16.gmra.mrb[0].mxu0 %v9529
    %v10349 = vpop.f32.mrb[0].mxu0
    %v10350 = vadd.f32 0.0, %v10349
    %v10351 = vpop.f32.mrb[0].mxu0
    %v10352 = vadd.f32 0.0, %v10351
    %v10353 = vpop.f32.mrb[0].mxu0
    %v10354 = vadd.f32 0.0, %v10353
    %v10355 = vpop.f32.mrb[0].mxu0
    %v10356 = vadd.f32 0.0, %v10355
    %10357 = vmatprep.mubr.bf16.mxu0 %v9599
    %10358 = vmatmul.mubr.bf16.gmra.mrb[0].mxu0 %v9596
    %v10359 = vpop.f32.mrb[0].mxu0
    %v10360 = vadd.f32 0.0, %v10359
    %v10361 = vpop.f32.mrb[0].mxu0
    %v10362 = vadd.f32 0.0, %v10361
    %v10363 = vpop.f32.mrb[0].mxu0
    %v10364 = vadd.f32 0.0, %v10363
    %v10365 = vpop.f32.mrb[0].mxu0
    %v10366 = vadd.f32 0.0, %v10365
    %10367 = vdwg.mxu0
    %10368 = vmatprep.subr.bf16.mxu0 %v10094
    %10369 = vmatpush1.bf16.msra.mxu0 %v10093
    %10370 = vmatprep.subr.bf16.mxu0 %v10098
    %10371 = vmatpush1.bf16.msra.mxu0 %v10097
    %10372 = vmatprep.subr.bf16.mxu0 %v10102
    %10373 = vmatpush1.bf16.msra.mxu0 %v10101
    %10374 = vmatprep.subr.bf16.mxu0 %v10106
    %10375 = vmatpush1.bf16.msra.mxu0 %v10105
    %10376 = vmatprep.subr.bf16.mxu0 %v10110
    %10377 = vmatpush1.bf16.msra.mxu0 %v10109
    %10378 = vmatprep.subr.bf16.mxu0 %v10114
    %10379 = vmatpush1.bf16.msra.mxu0 %v10113
    %10380 = vmatprep.subr.bf16.mxu0 %v10118
    %10381 = vmatpush1.bf16.msra.mxu0 %v10117
    %10382 = vmatprep.subr.bf16.mxu0 %v10122
    %10383 = vmatpush1.bf16.msra.mxu0 %v10121
    %10384 = vmatprep.subr.bf16.mxu0 %v10126
    %10385 = vmatpush1.bf16.msra.mxu0 %v10125
    %10386 = vmatprep.subr.bf16.mxu0 %v10130
    %10387 = vmatpush1.bf16.msra.mxu0 %v10129
    %10388 = vmatprep.subr.bf16.mxu0 %v10134
    %10389 = vmatpush1.bf16.msra.mxu0 %v10133
    %10390 = vmatprep.subr.bf16.mxu0 %v10138
    %10391 = vmatpush1.bf16.msra.mxu0 %v10137
    %10392 = vmatprep.subr.bf16.mxu0 %v10142
    %10393 = vmatpush1.bf16.msra.mxu0 %v10141
    %10394 = vmatprep.subr.bf16.mxu0 %v10146
    %10395 = vmatpush1.bf16.msra.mxu0 %v10145
    %10396 = vmatprep.subr.bf16.mxu0 %v10150
    %10397 = vmatpush1.bf16.msra.mxu0 %v10149
    %10398 = vmatprep.subr.bf16.mxu0 %v10154
    %10399 = vmatpush1.bf16.msra.mxu0 %v10153
    %10400 = vmatprep.mubr.bf16.mxu0 %v9533
    %10401 = vmatmul.mubr.bf16.gmra.mrb[0].mxu0 %v9530
    %v10402 = vpop.f32.mrb[0].mxu0
    %v10403 = vadd.f32 %v10350, %v10402
    %v10404 = vpop.f32.mrb[0].mxu0
    %v10405 = vadd.f32 %v10352, %v10404
    %v10406 = vpop.f32.mrb[0].mxu0
    %v10407 = vadd.f32 %v10354, %v10406
    %v10408 = vpop.f32.mrb[0].mxu0
    %v10409 = vadd.f32 %v10356, %v10408
    %10410 = vmatprep.mubr.bf16.mxu0 %v9600
    %10411 = vmatmul.mubr.bf16.gmra.mrb[0].mxu0 %v9597
    %v10412 = vpop.f32.mrb[0].mxu0
    %v10413 = vadd.f32 %v10360, %v10412
    %v10414 = vpop.f32.mrb[0].mxu0
    %v10415 = vadd.f32 %v10362, %v10414
    %v10416 = vpop.f32.mrb[0].mxu0
    %v10417 = vadd.f32 %v10364, %v10416
    %v10418 = vpop.f32.mrb[0].mxu0
    %v10419 = vadd.f32 %v10366, %v10418
    %10420 = vdwg.mxu0
    %10421 = vmatprep.subr.bf16.mxu0 %v10158
    %10422 = vmatpush1.bf16.msra.mxu0 %v10157
    %10423 = vmatprep.subr.bf16.mxu0 %v10162
    %10424 = vmatpush1.bf16.msra.mxu0 %v10161
    %10425 = vmatprep.subr.bf16.mxu0 %v10166
    %10426 = vmatpush1.bf16.msra.mxu0 %v10165
    %10427 = vmatprep.subr.bf16.mxu0 0
    %10428 = vmatpush1.bf16.msra.mxu0 0
    %10429 = vmatprep.subr.bf16.mxu0 0
    %10430 = vmatpush1.bf16.msra.mxu0 0
    %10431 = vmatprep.subr.bf16.mxu0 0
    %10432 = vmatpush1.bf16.msra.mxu0 0
    %10433 = vmatprep.subr.bf16.mxu0 0
    %10434 = vmatpush1.bf16.msra.mxu0 0
    %10435 = vmatprep.subr.bf16.mxu0 0
    %10436 = vmatpush1.bf16.msra.mxu0 0
    %10437 = vmatprep.subr.bf16.mxu0 0
    %10438 = vmatpush1.bf16.msra.mxu0 0
    %10439 = vmatprep.subr.bf16.mxu0 0
    %10440 = vmatpush1.bf16.msra.mxu0 0
    %10441 = vmatprep.subr.bf16.mxu0 0
    %10442 = vmatpush1.bf16.msra.mxu0 0
    %10443 = vmatprep.subr.bf16.mxu0 0
    %10444 = vmatpush1.bf16.msra.mxu0 0
    %10445 = vmatprep.subr.bf16.mxu0 0
    %10446 = vmatpush1.bf16.msra.mxu0 0
    %10447 = vmatprep.subr.bf16.mxu0 0
    %10448 = vmatpush1.bf16.msra.mxu0 0
    %10449 = vmatprep.subr.bf16.mxu0 0
    %10450 = vmatpush1.bf16.msra.mxu0 0
    %10451 = vmatprep.subr.bf16.mxu0 0
    %10452 = vmatpush1.bf16.msra.mxu0 0
    %10453 = vmatprep.mubr.bf16.mxu0 0
    %10454 = vmatmul.mubr.bf16.gmra.mrb[0].mxu0 %v10310
    %v10455 = vpop.f32.mrb[0].mxu0
    %v10456 = vadd.f32 %v10403, %v10455
    %v10457 = vpop.f32.mrb[0].mxu0
    %v10458 = vadd.f32 %v10405, %v10457
    %v10459 = vpop.f32.mrb[0].mxu0
    %v10460 = vadd.f32 %v10407, %v10459
    %v10461 = vpop.f32.mrb[0].mxu0
    %v10462 = vadd.f32 %v10409, %v10461
    %10463 = vmatprep.mubr.bf16.mxu0 0
    %10464 = vmatmul.mubr.bf16.gmra.mrb[0].mxu0 %v10313
    %v10465 = vpop.f32.mrb[0].mxu0
    %v10466 = vadd.f32 %v10413, %v10465
    %v10467 = vpop.f32.mrb[0].mxu0
    %v10468 = vadd.f32 %v10415, %v10467
    %v10469 = vpop.f32.mrb[0].mxu0
    %v10470 = vadd.f32 %v10417, %v10469
    %v10471 = vpop.f32.mrb[0].mxu0
    %v10472 = vadd.f32 %v10419, %v10471
    %10473 = vdwg.mxu0
    %10474 = vmatprep.subr.bf16.mxu0 %v10032
    %10475 = vmatpush1.bf16.msra.mxu0 %v10031
    %10476 = vmatprep.subr.bf16.mxu0 %v10036
    %10477 = vmatpush1.bf16.msra.mxu0 %v10035
    %10478 = vmatprep.subr.bf16.mxu0 %v10040
    %10479 = vmatpush1.bf16.msra.mxu0 %v10039
    %10480 = vmatprep.subr.bf16.mxu0 %v10044
    %10481 = vmatpush1.bf16.msra.mxu0 %v10043
    %10482 = vmatprep.subr.bf16.mxu0 %v10048
    %10483 = vmatpush1.bf16.msra.mxu0 %v10047
    %10484 = vmatprep.subr.bf16.mxu0 %v10052
    %10485 = vmatpush1.bf16.msra.mxu0 %v10051
    %10486 = vmatprep.subr.bf16.mxu0 %v10056
    %10487 = vmatpush1.bf16.msra.mxu0 %v10055
    %10488 = vmatprep.subr.bf16.mxu0 %v10060
    %10489 = vmatpush1.bf16.msra.mxu0 %v10059
    %10490 = vmatprep.subr.bf16.mxu0 %v10064
    %10491 = vmatpush1.bf16.msra.mxu0 %v10063
    %10492 = vmatprep.subr.bf16.mxu0 %v10068
    %10493 = vmatpush1.bf16.msra.mxu0 %v10067
    %10494 = vmatprep.subr.bf16.mxu0 %v10072
    %10495 = vmatpush1.bf16.msra.mxu0 %v10071
    %10496 = vmatprep.subr.bf16.mxu0 %v10076
    %10497 = vmatpush1.bf16.msra.mxu0 %v10075
    %10498 = vmatprep.subr.bf16.mxu0 %v10080
    %10499 = vmatpush1.bf16.msra.mxu0 %v10079
    %10500 = vmatprep.subr.bf16.mxu0 %v10084
    %10501 = vmatpush1.bf16.msra.mxu0 %v10083
    %10502 = vmatprep.subr.bf16.mxu0 %v10088
    %10503 = vmatpush1.bf16.msra.mxu0 %v10087
    %10504 = vmatprep.subr.bf16.mxu0 %v10092
    %10505 = vmatpush1.bf16.msra.mxu0 %v10091
    %10506 = vmatprep.mubr.bf16.mxu0 %v9532
    %10507 = vmatmul.mubr.bf16.gmra.mrb[0].mxu0 %v9529
    %v10508 = vpop.f32.mrb[0].mxu0
    %v10509 = vadd.f32 0.0, %v10508
    %v10510 = vpop.f32.mrb[0].mxu0
    %v10511 = vadd.f32 0.0, %v10510
    %v10512 = vpop.f32.mrb[0].mxu0
    %v10513 = vadd.f32 0.0, %v10512
    %v10514 = vpop.f32.mrb[0].mxu0
    %v10515 = vadd.f32 0.0, %v10514
    %10516 = vmatprep.mubr.bf16.mxu0 %v9599
    %10517 = vmatmul.mubr.bf16.gmra.mrb[0].mxu0 %v9596
    %v10518 = vpop.f32.mrb[0].mxu0
    %v10519 = vadd.f32 0.0, %v10518
    %v10520 = vpop.f32.mrb[0].mxu0
    %v10521 = vadd.f32 0.0, %v10520
    %v10522 = vpop.f32.mrb[0].mxu0
    %v10523 = vadd.f32 0.0, %v10522
    %v10524 = vpop.f32.mrb[0].mxu0
    %v10525 = vadd.f32 0.0, %v10524
    %10526 = vdwg.mxu0
    %10527 = vmatprep.subr.bf16.mxu0 %v10096
    %10528 = vmatpush1.bf16.msra.mxu0 %v10095
    %10529 = vmatprep.subr.bf16.mxu0 %v10100
    %10530 = vmatpush1.bf16.msra.mxu0 %v10099
    %10531 = vmatprep.subr.bf16.mxu0 %v10104
    %10532 = vmatpush1.bf16.msra.mxu0 %v10103
    %10533 = vmatprep.subr.bf16.mxu0 %v10108
    %10534 = vmatpush1.bf16.msra.mxu0 %v10107
    %10535 = vmatprep.subr.bf16.mxu0 %v10112
    %10536 = vmatpush1.bf16.msra.mxu0 %v10111
    %10537 = vmatprep.subr.bf16.mxu0 %v10116
    %10538 = vmatpush1.bf16.msra.mxu0 %v10115
    %10539 = vmatprep.subr.bf16.mxu0 %v10120
    %10540 = vmatpush1.bf16.msra.mxu0 %v10119
    %10541 = vmatprep.subr.bf16.mxu0 %v10124
    %10542 = vmatpush1.bf16.msra.mxu0 %v10123
    %10543 = vmatprep.subr.bf16.mxu0 %v10128
    %10544 = vmatpush1.bf16.msra.mxu0 %v10127
    %10545 = vmatprep.subr.bf16.mxu0 %v10132
    %10546 = vmatpush1.bf16.msra.mxu0 %v10131
    %10547 = vmatprep.subr.bf16.mxu0 %v10136
    %10548 = vmatpush1.bf16.msra.mxu0 %v10135
    %10549 = vmatprep.subr.bf16.mxu0 %v10140
    %10550 = vmatpush1.bf16.msra.mxu0 %v10139
    %10551 = vmatprep.subr.bf16.mxu0 %v10144
    %10552 = vmatpush1.bf16.msra.mxu0 %v10143
    %10553 = vmatprep.subr.bf16.mxu0 %v10148
    %10554 = vmatpush1.bf16.msra.mxu0 %v10147
    %10555 = vmatprep.subr.bf16.mxu0 %v10152
    %10556 = vmatpush1.bf16.msra.mxu0 %v10151
    %10557 = vmatprep.subr.bf16.mxu0 %v10156
    %10558 = vmatpush1.bf16.msra.mxu0 %v10155
    %10559 = vmatprep.mubr.bf16.mxu0 %v9533
    %10560 = vmatmul.mubr.bf16.gmra.mrb[0].mxu0 %v9530
    %v10561 = vpop.f32.mrb[0].mxu0
    %v10562 = vadd.f32 %v10509, %v10561
    %v10563 = vpop.f32.mrb[0].mxu0
    %v10564 = vadd.f32 %v10511, %v10563
    %v10565 = vpop.f32.mrb[0].mxu0
    %v10566 = vadd.f32 %v10513, %v10565
    %v10567 = vpop.f32.mrb[0].mxu0
    %v10568 = vadd.f32 %v10515, %v10567
    %10569 = vmatprep.mubr.bf16.mxu0 %v9600
    %10570 = vmatmul.mubr.bf16.gmra.mrb[0].mxu0 %v9597
    %v10571 = vpop.f32.mrb[0].mxu0
    %v10572 = vadd.f32 %v10519, %v10571
    %v10573 = vpop.f32.mrb[0].mxu0
    %v10574 = vadd.f32 %v10521, %v10573
    %v10575 = vpop.f32.mrb[0].mxu0
    %v10576 = vadd.f32 %v10523, %v10575
    %v10577 = vpop.f32.mrb[0].mxu0
    %v10578 = vadd.f32 %v10525, %v10577
    %10579 = vdwg.mxu0
    %10580 = vmatprep.subr.bf16.mxu0 %v10160
    %10581 = vmatpush1.bf16.msra.mxu0 %v10159
    %10582 = vmatprep.subr.bf16.mxu0 %v10164
    %10583 = vmatpush1.bf16.msra.mxu0 %v10163
    %10584 = vmatprep.subr.bf16.mxu0 %v10168
    %10585 = vmatpush1.bf16.msra.mxu0 %v10167
    %10586 = vmatprep.subr.bf16.mxu0 0
    %10587 = vmatpush1.bf16.msra.mxu0 0
    %10588 = vmatprep.subr.bf16.mxu0 0
    %10589 = vmatpush1.bf16.msra.mxu0 0
    %10590 = vmatprep.subr.bf16.mxu0 0
    %10591 = vmatpush1.bf16.msra.mxu0 0
    %10592 = vmatprep.subr.bf16.mxu0 0
    %10593 = vmatpush1.bf16.msra.mxu0 0
    %10594 = vmatprep.subr.bf16.mxu0 0
    %10595 = vmatpush1.bf16.msra.mxu0 0
    %10596 = vmatprep.subr.bf16.mxu0 0
    %10597 = vmatpush1.bf16.msra.mxu0 0
    %10598 = vmatprep.subr.bf16.mxu0 0
    %10599 = vmatpush1.bf16.msra.mxu0 0
    %10600 = vmatprep.subr.bf16.mxu0 0
    %10601 = vmatpush1.bf16.msra.mxu0 0
    %10602 = vmatprep.subr.bf16.mxu0 0
    %10603 = vmatpush1.bf16.msra.mxu0 0
    %10604 = vmatprep.subr.bf16.mxu0 0
    %10605 = vmatpush1.bf16.msra.mxu0 0
    %10606 = vmatprep.subr.bf16.mxu0 0
    %10607 = vmatpush1.bf16.msra.mxu0 0
    %10608 = vmatprep.subr.bf16.mxu0 0
    %10609 = vmatpush1.bf16.msra.mxu0 0
    %10610 = vmatprep.subr.bf16.mxu0 0
    %10611 = vmatpush1.bf16.msra.mxu0 0
    %10612 = vmatprep.mubr.bf16.mxu0 0
    %10613 = vmatmul.mubr.bf16.gmra.mrb[0].mxu0 %v10310
    %v10614 = vpop.f32.mrb[0].mxu0
    %v10615 = vadd.f32 %v10562, %v10614
    %v10616 = vpop.f32.mrb[0].mxu0
    %v10617 = vadd.f32 %v10564, %v10616
    %v10618 = vpop.f32.mrb[0].mxu0
    %v10619 = vadd.f32 %v10566, %v10618
    %v10620 = vpop.f32.mrb[0].mxu0
    %v10621 = vadd.f32 %v10568, %v10620
    %10622 = vmatprep.mubr.bf16.mxu0 0
    %10623 = vmatmul.mubr.bf16.gmra.mrb[0].mxu0 %v10313
    %v10624 = vpop.f32.mrb[0].mxu0
    %v10625 = vadd.f32 %v10572, %v10624
    %v10626 = vpop.f32.mrb[0].mxu0
    %v10627 = vadd.f32 %v10574, %v10626
    %v10628 = vpop.f32.mrb[0].mxu0
    %v10629 = vadd.f32 %v10576, %v10628
    %v10630 = vpop.f32.mrb[0].mxu0
    %v10631 = vadd.f32 %v10578, %v10630
    %10632 = vdwg.mxu0
    %v10633 = vadd.f32 %v9292, %v10456
    %v10634 = vadd.f32 %v9293, %v10458
    %v10635 = vadd.f32 %v9294, %v10615
    %v10636 = vadd.f32 %v9295, %v10617
    %v10637 = vadd.f32 %v9296, %v10460
    %v10638 = vadd.f32 %v9297, %v10462
    %v10639 = vadd.f32 %v9298, %v10619
    %v10640 = vadd.f32 %v9299, %v10621
    %v10641 = vadd.f32 %v9300, %v10466
    %v10642 = vadd.f32 %v9301, %v10468
    %v10643 = vadd.f32 %v9302, %v10625
    %v10644 = vadd.f32 %v9303, %v10627
    %v10645 = vadd.f32 %v9304, %v10470
    %v10646 = vadd.f32 %v9305, %v10472
    %v10647 = vadd.f32 %v9306, %v10629
    %v10648 = vadd.f32 %v9307, %v10631
    %v10649 = vld [vmem:[#allocation8] sm:$0xf]
    %v10651 = vlaneseq
    %v10652 = vshrl.u32 %v10651, 7
    %v10653 = vsub.s32 0, %v10652
    %v10654 = vrot.slane %v10649, %v10653
    %v10655 = vlaneseq
    %v10656 = vshrl.u32 %v10655, 7
    %v10657 = vsub.s32 1, %v10656
    %v10658 = vrot.slane %v10649, %v10657
    %v10659 = vlaneseq
    %v10660 = vshrl.u32 %v10659, 7
    %v10661 = vsub.s32 2, %v10660
    %v10662 = vrot.slane %v10649, %v10661
    %v10663 = vlaneseq
    %v10664 = vshrl.u32 %v10663, 7
    %v10665 = vsub.s32 3, %v10664
    %v10666 = vrot.slane %v10649, %v10665
    %v10671 = vadd.f32 %v10633, %v10654
    %v10672 = vadd.f32 %v10634, %v10658
    %v10673 = vadd.f32 %v10635, %v10662
    %v10674 = vadd.f32 %v10636, %v10666
    %v10675 = vadd.f32 %v10637, %v10654
    %v10676 = vadd.f32 %v10638, %v10658
    %v10677 = vadd.f32 %v10639, %v10662
    %v10678 = vadd.f32 %v10640, %v10666
    %v10679 = vadd.f32 %v10641, %v10654
    %v10680 = vadd.f32 %v10642, %v10658
    %v10681 = vadd.f32 %v10643, %v10662
    %v10682 = vadd.f32 %v10644, %v10666
    %v10683 = vadd.f32 %v10645, %v10654
    %v10684 = vadd.f32 %v10646, %v10658
    %v10685 = vadd.f32 %v10647, %v10662
    %v10686 = vadd.f32 %v10648, %v10666
    %v10687 = vmax.f32 %v10671, 0.0
    %v10688 = vmax.f32 %v10672, 0.0
    %v10689 = vmax.f32 %v10673, 0.0
    %v10690 = vmax.f32 %v10674, 0.0
    %v10691 = vmax.f32 %v10675, 0.0
    %v10692 = vmax.f32 %v10676, 0.0
    %v10693 = vmax.f32 %v10677, 0.0
    %v10694 = vmax.f32 %v10678, 0.0
    %v10695 = vmax.f32 %v10679, 0.0
    %v10696 = vmax.f32 %v10680, 0.0
    %v10697 = vmax.f32 %v10681, 0.0
    %v10698 = vmax.f32 %v10682, 0.0
    %v10699 = vmax.f32 %v10683, 0.0
    %v10700 = vmax.f32 %v10684, 0.0
    %v10701 = vmax.f32 %v10685, 0.0
    %v10702 = vmax.f32 %v10686, 0.0
    %v10719 = vcombine.low %v10687, %v10688
    %v10720 = vcombine.high %v10687, %v10688
    %v10721 = vcombine.low %v10689, %v10690
    %v10722 = vcombine.high %v10689, %v10690
    %v10724 = vunpack.c.l.s4 1983009808
    %v10725 = vunpack.c.0.s8 %v10724
    %v10726 = vlaneseq
    %v10727 = vshrl.u32 %v10726, 7
    %v10728 = vsub.s32 %v10725, %v10727
    %v10729 = vrot.slane %v10719, %v10728
    %v10731 = vunpack.c.l.s4 1983009808
    %v10732 = vunpack.c.0.s8 %v10731
    %v10733 = vlaneseq
    %v10734 = vshrl.u32 %v10733, 7
    %v10735 = vsub.s32 %v10732, %v10734
    %v10736 = vrot.slane %v10720, %v10735
    %v10738 = vunpack.c.l.s4 1983009808
    %v10739 = vunpack.c.0.s8 %v10738
    %v10740 = vlaneseq
    %v10741 = vshrl.u32 %v10740, 7
    %v10742 = vsub.s32 %v10739, %v10741
    %v10743 = vrot.slane %v10721, %v10742
    %v10745 = vunpack.c.l.s4 1983009808
    %v10746 = vunpack.c.0.s8 %v10745
    %v10747 = vlaneseq
    %v10748 = vshrl.u32 %v10747, 7
    %v10749 = vsub.s32 %v10746, %v10748
    %v10750 = vrot.slane %v10722, %v10749
    %v10751 = vcombine.low %v10729, %v10743
    %v10752 = vcombine.high %v10729, %v10743
    %v10753 = vcombine.low %v10736, %v10750
    %v10754 = vcombine.high %v10736, %v10750
    %v10755 = vcombine.low %v10691, %v10692
    %v10756 = vcombine.high %v10691, %v10692
    %v10757 = vcombine.low %v10693, %v10694
    %v10758 = vcombine.high %v10693, %v10694
    %v10760 = vunpack.c.l.s4 1983009808
    %v10761 = vunpack.c.0.s8 %v10760
    %v10762 = vlaneseq
    %v10763 = vshrl.u32 %v10762, 7
    %v10764 = vsub.s32 %v10761, %v10763
    %v10765 = vrot.slane %v10755, %v10764
    %v10767 = vunpack.c.l.s4 1983009808
    %v10768 = vunpack.c.0.s8 %v10767
    %v10769 = vlaneseq
    %v10770 = vshrl.u32 %v10769, 7
    %v10771 = vsub.s32 %v10768, %v10770
    %v10772 = vrot.slane %v10756, %v10771
    %v10774 = vunpack.c.l.s4 1983009808
    %v10775 = vunpack.c.0.s8 %v10774
    %v10776 = vlaneseq
    %v10777 = vshrl.u32 %v10776, 7
    %v10778 = vsub.s32 %v10775, %v10777
    %v10779 = vrot.slane %v10757, %v10778
    %v10781 = vunpack.c.l.s4 1983009808
    %v10782 = vunpack.c.0.s8 %v10781
    %v10783 = vlaneseq
    %v10784 = vshrl.u32 %v10783, 7
    %v10785 = vsub.s32 %v10782, %v10784
    %v10786 = vrot.slane %v10758, %v10785
    %v10787 = vcombine.low %v10765, %v10779
    %v10788 = vcombine.high %v10765, %v10779
    %v10789 = vcombine.low %v10772, %v10786
    %v10790 = vcombine.high %v10772, %v10786
    %v10791 = vcombine.low %v10695, %v10696
    %v10792 = vcombine.high %v10695, %v10696
    %v10793 = vcombine.low %v10697, %v10698
    %v10794 = vcombine.high %v10697, %v10698
    %v10796 = vunpack.c.l.s4 1983009808
    %v10797 = vunpack.c.0.s8 %v10796
    %v10798 = vlaneseq
    %v10799 = vshrl.u32 %v10798, 7
    %v10800 = vsub.s32 %v10797, %v10799
    %v10801 = vrot.slane %v10791, %v10800
    %v10803 = vunpack.c.l.s4 1983009808
    %v10804 = vunpack.c.0.s8 %v10803
    %v10805 = vlaneseq
    %v10806 = vshrl.u32 %v10805, 7
    %v10807 = vsub.s32 %v10804, %v10806
    %v10808 = vrot.slane %v10792, %v10807
    %v10810 = vunpack.c.l.s4 1983009808
    %v10811 = vunpack.c.0.s8 %v10810
    %v10812 = vlaneseq
    %v10813 = vshrl.u32 %v10812, 7
    %v10814 = vsub.s32 %v10811, %v10813
    %v10815 = vrot.slane %v10793, %v10814
    %v10817 = vunpack.c.l.s4 1983009808
    %v10818 = vunpack.c.0.s8 %v10817
    %v10819 = vlaneseq
    %v10820 = vshrl.u32 %v10819, 7
    %v10821 = vsub.s32 %v10818, %v10820
    %v10822 = vrot.slane %v10794, %v10821
    %v10823 = vcombine.low %v10801, %v10815
    %v10824 = vcombine.high %v10801, %v10815
    %v10825 = vcombine.low %v10808, %v10822
    %v10826 = vcombine.high %v10808, %v10822
    %v10827 = vcombine.low %v10699, %v10700
    %v10828 = vcombine.low %v10701, %v10702
    %v10830 = vunpack.c.l.s4 1983009808
    %v10831 = vunpack.c.0.s8 %v10830
    %v10832 = vlaneseq
    %v10833 = vshrl.u32 %v10832, 7
    %v10834 = vsub.s32 %v10831, %v10833
    %v10835 = vrot.slane %v10827, %v10834
    %v10837 = vunpack.c.l.s4 1983009808
    %v10838 = vunpack.c.0.s8 %v10837
    %v10839 = vlaneseq
    %v10840 = vshrl.u32 %v10839, 7
    %v10841 = vsub.s32 %v10838, %v10840
    %v10842 = vrot.slane %v10828, %v10841
    %v10843 = vcombine.low %v10835, %v10842
    %v10844 = vcombine.high %v10835, %v10842
    %v10859 = vrot.slane %v10751, 7
    %v10860 = vrot.slane %v10859, 2
    %v10861 = vrot.slane %v10752, 7
    %v10862 = vrot.slane %v10861, 2
    %v10863 = vrot.slane %v10753, 7
    %v10864 = vrot.slane %v10863, 2
    %v10865 = vrot.slane %v10754, 7
    %v10866 = vrot.slane %v10865, 2
    %v10867 = vrot.slane %v10787, 7
    %v10868 = vrot.slane %v10867, 2
    %v10869 = vrot.slane %v10788, 7
    %v10870 = vrot.slane %v10869, 2
    %v10871 = vrot.slane %v10789, 7
    %v10872 = vrot.slane %v10871, 2
    %v10873 = vrot.slane %v10790, 7
    %v10874 = vrot.slane %v10873, 2
    %v10875 = vrot.slane %v10823, 7
    %v10876 = vrot.slane %v10875, 2
    %v10877 = vrot.slane %v10824, 7
    %v10878 = vrot.slane %v10877, 2
    %v10879 = vrot.slane %v10825, 7
    %v10880 = vrot.slane %v10879, 2
    %v10881 = vrot.slane %v10826, 7
    %v10882 = vrot.slane %v10881, 2
    %v10883 = vrot.slane %v10843, 7
    %v10884 = vrot.slane %v10883, 2
    %v10885 = vrot.slane %v10844, 7
    %v10886 = vrot.slane %v10885, 2
    %v10901 = vmax.f32 %v10751, %v10860
    %v10902 = vmax.f32 %v10752, %v10862
    %v10903 = vmax.f32 %v10753, %v10864
    %v10904 = vmax.f32 %v10754, %v10866
    %v10905 = vmax.f32 %v10787, %v10868
    %v10906 = vmax.f32 %v10788, %v10870
    %v10907 = vmax.f32 %v10789, %v10872
    %v10908 = vmax.f32 %v10790, %v10874
    %v10909 = vmax.f32 %v10823, %v10876
    %v10910 = vmax.f32 %v10824, %v10878
    %v10911 = vmax.f32 %v10825, %v10880
    %v10912 = vmax.f32 %v10826, %v10882
    %v10913 = vmax.f32 %v10843, %v10884
    %v10914 = vmax.f32 %v10844, %v10886
    %10929 = vrot.lane.b32.xlu0 %v10901, 96
    %v10930 = vpop.permute.xlu0 %10929
    %10931 = vrot.lane.b32.xlu0 %v10902, 96
    %v10932 = vpop.permute.xlu0 %10931
    %10933 = vrot.lane.b32.xlu0 %v10903, 96
    %v10934 = vpop.permute.xlu0 %10933
    %10935 = vrot.lane.b32.xlu0 %v10904, 96
    %v10936 = vpop.permute.xlu0 %10935
    %10937 = vrot.lane.b32.xlu0 %v10905, 96
    %v10938 = vpop.permute.xlu0 %10937
    %10939 = vrot.lane.b32.xlu0 %v10906, 96
    %v10940 = vpop.permute.xlu0 %10939
    %10941 = vrot.lane.b32.xlu0 %v10907, 96
    %v10942 = vpop.permute.xlu0 %10941
    %10943 = vrot.lane.b32.xlu0 %v10908, 96
    %v10944 = vpop.permute.xlu0 %10943
    %10945 = vrot.lane.b32.xlu0 %v10909, 96
    %v10946 = vpop.permute.xlu0 %10945
    %10947 = vrot.lane.b32.xlu0 %v10910, 96
    %v10948 = vpop.permute.xlu0 %10947
    %10949 = vrot.lane.b32.xlu0 %v10911, 96
    %v10950 = vpop.permute.xlu0 %10949
    %10951 = vrot.lane.b32.xlu0 %v10912, 96
    %v10952 = vpop.permute.xlu0 %10951
    %10953 = vrot.lane.b32.xlu0 %v10913, 96
    %v10954 = vpop.permute.xlu0 %10953
    %10955 = vrot.lane.b32.xlu0 %v10914, 96
    %v10956 = vpop.permute.xlu0 %10955
    %v10957 = vrot.slane %v10930, 2
    %v10958 = vrot.slane %v10932, 2
    %v10959 = vrot.slane %v10934, 2
    %v10960 = vrot.slane %v10936, 2
    %v10961 = vrot.slane %v10938, 2
    %v10962 = vrot.slane %v10940, 2
    %v10963 = vrot.slane %v10942, 2
    %v10964 = vrot.slane %v10944, 2
    %v10965 = vrot.slane %v10946, 2
    %v10966 = vrot.slane %v10948, 2
    %v10967 = vrot.slane %v10950, 2
    %v10968 = vrot.slane %v10952, 2
    %v10969 = vrot.slane %v10954, 2
    %v10970 = vrot.slane %v10956, 2
    %vm10971 = vcmask 785408
    %v10972 = vsel %vm10971, %v10930, %v10957
    %v10973 = vsel %vm10971, %v10932, %v10958
    %v10974 = vsel %vm10971, %v10934, %v10959
    %v10975 = vsel %vm10971, %v10936, %v10960
    %v10976 = vsel %vm10971, %v10938, %v10961
    %v10977 = vsel %vm10971, %v10940, %v10962
    %v10978 = vsel %vm10971, %v10942, %v10963
    %v10979 = vsel %vm10971, %v10944, %v10964
    %v10980 = vsel %vm10971, %v10946, %v10965
    %v10981 = vsel %vm10971, %v10948, %v10966
    %v10982 = vsel %vm10971, %v10950, %v10967
    %v10983 = vsel %vm10971, %v10952, %v10968
    %v10984 = vsel %vm10971, %v10954, %v10969
    %v10985 = vsel %vm10971, %v10956, %v10970
    %v11000 = vmax.f32 %v10901, %v10972
    %v11001 = vmax.f32 %v10902, %v10973
    %v11002 = vmax.f32 %v10903, %v10974
    %v11003 = vmax.f32 %v10904, %v10975
    %v11004 = vmax.f32 %v10905, %v10976
    %v11005 = vmax.f32 %v10906, %v10977
    %v11006 = vmax.f32 %v10907, %v10978
    %v11007 = vmax.f32 %v10908, %v10979
    %v11008 = vmax.f32 %v10909, %v10980
    %v11009 = vmax.f32 %v10910, %v10981
    %v11010 = vmax.f32 %v10911, %v10982
    %v11011 = vmax.f32 %v10912, %v10983
    %v11012 = vmax.f32 %v10913, %v10984
    %v11013 = vmax.f32 %v10914, %v10985
    %v11028 = vlaneseq
    %v11029 = vshrl.u32 %v11028, 7
    %v11030 = vsub.s32 0, %v11029
    %v11031 = vrot.slane %v11000, %v11030
    %v11032 = vlaneseq
    %v11033 = vshrl.u32 %v11032, 7
    %v11034 = vsub.s32 2, %v11033
    %v11035 = vrot.slane %v11000, %v11034
    %v11036 = vlaneseq
    %v11037 = vshrl.u32 %v11036, 7
    %v11038 = vsub.s32 4, %v11037
    %v11039 = vrot.slane %v11000, %v11038
    %v11040 = vlaneseq
    %v11041 = vshrl.u32 %v11040, 7
    %v11042 = vsub.s32 6, %v11041
    %v11043 = vrot.slane %v11000, %v11042
    %v11044 = vlaneseq
    %v11045 = vshrl.u32 %v11044, 7
    %v11046 = vsub.s32 0, %v11045
    %v11047 = vrot.slane %v11001, %v11046
    %v11048 = vlaneseq
    %v11049 = vshrl.u32 %v11048, 7
    %v11050 = vsub.s32 2, %v11049
    %v11051 = vrot.slane %v11001, %v11050
    %v11052 = vlaneseq
    %v11053 = vshrl.u32 %v11052, 7
    %v11054 = vsub.s32 4, %v11053
    %v11055 = vrot.slane %v11001, %v11054
    %v11056 = vlaneseq
    %v11057 = vshrl.u32 %v11056, 7
    %v11058 = vsub.s32 6, %v11057
    %v11059 = vrot.slane %v11001, %v11058
    %v11060 = vlaneseq
    %v11061 = vshrl.u32 %v11060, 7
    %v11062 = vsub.s32 0, %v11061
    %v11063 = vrot.slane %v11002, %v11062
    %v11064 = vlaneseq
    %v11065 = vshrl.u32 %v11064, 7
    %v11066 = vsub.s32 2, %v11065
    %v11067 = vrot.slane %v11002, %v11066
    %v11068 = vlaneseq
    %v11069 = vshrl.u32 %v11068, 7
    %v11070 = vsub.s32 4, %v11069
    %v11071 = vrot.slane %v11002, %v11070
    %v11072 = vlaneseq
    %v11073 = vshrl.u32 %v11072, 7
    %v11074 = vsub.s32 6, %v11073
    %v11075 = vrot.slane %v11002, %v11074
    %v11076 = vlaneseq
    %v11077 = vshrl.u32 %v11076, 7
    %v11078 = vsub.s32 0, %v11077
    %v11079 = vrot.slane %v11003, %v11078
    %v11080 = vlaneseq
    %v11081 = vshrl.u32 %v11080, 7
    %v11082 = vsub.s32 2, %v11081
    %v11083 = vrot.slane %v11003, %v11082
    %v11084 = vlaneseq
    %v11085 = vshrl.u32 %v11084, 7
    %v11086 = vsub.s32 4, %v11085
    %v11087 = vrot.slane %v11003, %v11086
    %v11088 = vlaneseq
    %v11089 = vshrl.u32 %v11088, 7
    %v11090 = vsub.s32 6, %v11089
    %v11091 = vrot.slane %v11003, %v11090
    %v11092 = vlaneseq
    %v11093 = vshrl.u32 %v11092, 7
    %v11094 = vsub.s32 0, %v11093
    %v11095 = vrot.slane %v11004, %v11094
    %v11096 = vlaneseq
    %v11097 = vshrl.u32 %v11096, 7
    %v11098 = vsub.s32 2, %v11097
    %v11099 = vrot.slane %v11004, %v11098
    %v11100 = vlaneseq
    %v11101 = vshrl.u32 %v11100, 7
    %v11102 = vsub.s32 4, %v11101
    %v11103 = vrot.slane %v11004, %v11102
    %v11104 = vlaneseq
    %v11105 = vshrl.u32 %v11104, 7
    %v11106 = vsub.s32 6, %v11105
    %v11107 = vrot.slane %v11004, %v11106
    %v11108 = vlaneseq
    %v11109 = vshrl.u32 %v11108, 7
    %v11110 = vsub.s32 0, %v11109
    %v11111 = vrot.slane %v11005, %v11110
    %v11112 = vlaneseq
    %v11113 = vshrl.u32 %v11112, 7
    %v11114 = vsub.s32 2, %v11113
    %v11115 = vrot.slane %v11005, %v11114
    %v11116 = vlaneseq
    %v11117 = vshrl.u32 %v11116, 7
    %v11118 = vsub.s32 4, %v11117
    %v11119 = vrot.slane %v11005, %v11118
    %v11120 = vlaneseq
    %v11121 = vshrl.u32 %v11120, 7
    %v11122 = vsub.s32 6, %v11121
    %v11123 = vrot.slane %v11005, %v11122
    %v11124 = vlaneseq
    %v11125 = vshrl.u32 %v11124, 7
    %v11126 = vsub.s32 0, %v11125
    %v11127 = vrot.slane %v11006, %v11126
    %v11128 = vlaneseq
    %v11129 = vshrl.u32 %v11128, 7
    %v11130 = vsub.s32 2, %v11129
    %v11131 = vrot.slane %v11006, %v11130
    %v11132 = vlaneseq
    %v11133 = vshrl.u32 %v11132, 7
    %v11134 = vsub.s32 4, %v11133
    %v11135 = vrot.slane %v11006, %v11134
    %v11136 = vlaneseq
    %v11137 = vshrl.u32 %v11136, 7
    %v11138 = vsub.s32 6, %v11137
    %v11139 = vrot.slane %v11006, %v11138
    %v11140 = vlaneseq
    %v11141 = vshrl.u32 %v11140, 7
    %v11142 = vsub.s32 0, %v11141
    %v11143 = vrot.slane %v11007, %v11142
    %v11144 = vlaneseq
    %v11145 = vshrl.u32 %v11144, 7
    %v11146 = vsub.s32 2, %v11145
    %v11147 = vrot.slane %v11007, %v11146
    %v11148 = vlaneseq
    %v11149 = vshrl.u32 %v11148, 7
    %v11150 = vsub.s32 4, %v11149
    %v11151 = vrot.slane %v11007, %v11150
    %v11152 = vlaneseq
    %v11153 = vshrl.u32 %v11152, 7
    %v11154 = vsub.s32 6, %v11153
    %v11155 = vrot.slane %v11007, %v11154
    %v11156 = vlaneseq
    %v11157 = vshrl.u32 %v11156, 7
    %v11158 = vsub.s32 0, %v11157
    %v11159 = vrot.slane %v11008, %v11158
    %v11160 = vlaneseq
    %v11161 = vshrl.u32 %v11160, 7
    %v11162 = vsub.s32 2, %v11161
    %v11163 = vrot.slane %v11008, %v11162
    %v11164 = vlaneseq
    %v11165 = vshrl.u32 %v11164, 7
    %v11166 = vsub.s32 4, %v11165
    %v11167 = vrot.slane %v11008, %v11166
    %v11168 = vlaneseq
    %v11169 = vshrl.u32 %v11168, 7
    %v11170 = vsub.s32 6, %v11169
    %v11171 = vrot.slane %v11008, %v11170
    %v11172 = vlaneseq
    %v11173 = vshrl.u32 %v11172, 7
    %v11174 = vsub.s32 0, %v11173
    %v11175 = vrot.slane %v11009, %v11174
    %v11176 = vlaneseq
    %v11177 = vshrl.u32 %v11176, 7
    %v11178 = vsub.s32 2, %v11177
    %v11179 = vrot.slane %v11009, %v11178
    %v11180 = vlaneseq
    %v11181 = vshrl.u32 %v11180, 7
    %v11182 = vsub.s32 4, %v11181
    %v11183 = vrot.slane %v11009, %v11182
    %v11184 = vlaneseq
    %v11185 = vshrl.u32 %v11184, 7
    %v11186 = vsub.s32 6, %v11185
    %v11187 = vrot.slane %v11009, %v11186
    %v11188 = vlaneseq
    %v11189 = vshrl.u32 %v11188, 7
    %v11190 = vsub.s32 0, %v11189
    %v11191 = vrot.slane %v11010, %v11190
    %v11192 = vlaneseq
    %v11193 = vshrl.u32 %v11192, 7
    %v11194 = vsub.s32 2, %v11193
    %v11195 = vrot.slane %v11010, %v11194
    %v11196 = vlaneseq
    %v11197 = vshrl.u32 %v11196, 7
    %v11198 = vsub.s32 4, %v11197
    %v11199 = vrot.slane %v11010, %v11198
    %v11200 = vlaneseq
    %v11201 = vshrl.u32 %v11200, 7
    %v11202 = vsub.s32 6, %v11201
    %v11203 = vrot.slane %v11010, %v11202
    %v11204 = vlaneseq
    %v11205 = vshrl.u32 %v11204, 7
    %v11206 = vsub.s32 0, %v11205
    %v11207 = vrot.slane %v11011, %v11206
    %v11208 = vlaneseq
    %v11209 = vshrl.u32 %v11208, 7
    %v11210 = vsub.s32 2, %v11209
    %v11211 = vrot.slane %v11011, %v11210
    %v11212 = vlaneseq
    %v11213 = vshrl.u32 %v11212, 7
    %v11214 = vsub.s32 4, %v11213
    %v11215 = vrot.slane %v11011, %v11214
    %v11216 = vlaneseq
    %v11217 = vshrl.u32 %v11216, 7
    %v11218 = vsub.s32 6, %v11217
    %v11219 = vrot.slane %v11011, %v11218
    %v11220 = vlaneseq
    %v11221 = vshrl.u32 %v11220, 7
    %v11222 = vsub.s32 0, %v11221
    %v11223 = vrot.slane %v11012, %v11222
    %v11224 = vlaneseq
    %v11225 = vshrl.u32 %v11224, 7
    %v11226 = vsub.s32 2, %v11225
    %v11227 = vrot.slane %v11012, %v11226
    %v11228 = vlaneseq
    %v11229 = vshrl.u32 %v11228, 7
    %v11230 = vsub.s32 4, %v11229
    %v11231 = vrot.slane %v11012, %v11230
    %v11232 = vlaneseq
    %v11233 = vshrl.u32 %v11232, 7
    %v11234 = vsub.s32 6, %v11233
    %v11235 = vrot.slane %v11012, %v11234
    %v11236 = vlaneseq
    %v11237 = vshrl.u32 %v11236, 7
    %v11238 = vsub.s32 0, %v11237
    %v11239 = vrot.slane %v11013, %v11238
    %v11240 = vlaneseq
    %v11241 = vshrl.u32 %v11240, 7
    %v11242 = vsub.s32 2, %v11241
    %v11243 = vrot.slane %v11013, %v11242
    %v11244 = vlaneseq
    %v11245 = vshrl.u32 %v11244, 7
    %v11246 = vsub.s32 4, %v11245
    %v11247 = vrot.slane %v11013, %v11246
    %v11248 = vlaneseq
    %v11249 = vshrl.u32 %v11248, 7
    %v11250 = vsub.s32 6, %v11249
    %v11251 = vrot.slane %v11013, %v11250
    %v11252 = vsel %vm3116, %v11047, %v11031
    %v11253 = vsel %vm3118, %v11063, %v11252
    %v11254 = vsel %vm3120, %v11079, %v11253
    %v11255 = vsel %vm3122, %v11095, %v11254
    %v11256 = vsel %vm3124, %v11111, %v11255
    %v11257 = vsel %vm3126, %v11127, %v11256
    %v11258 = vsel %vm3116, %v11051, %v11035
    %v11259 = vsel %vm3118, %v11067, %v11258
    %v11260 = vsel %vm3120, %v11083, %v11259
    %v11261 = vsel %vm3122, %v11099, %v11260
    %v11262 = vsel %vm3124, %v11115, %v11261
    %v11263 = vsel %vm3126, %v11131, %v11262
    %v11264 = vsel %vm3116, %v11055, %v11039
    %v11265 = vsel %vm3118, %v11071, %v11264
    %v11266 = vsel %vm3120, %v11087, %v11265
    %v11267 = vsel %vm3122, %v11103, %v11266
    %v11268 = vsel %vm3124, %v11119, %v11267
    %v11269 = vsel %vm3126, %v11135, %v11268
    %v11270 = vsel %vm3116, %v11059, %v11043
    %v11271 = vsel %vm3118, %v11075, %v11270
    %v11272 = vsel %vm3120, %v11091, %v11271
    %v11273 = vsel %vm3122, %v11107, %v11272
    %v11274 = vsel %vm3124, %v11123, %v11273
    %v11275 = vsel %vm3126, %v11139, %v11274
    %v11276 = vsel %vm3116, %v11159, %v11143
    %v11277 = vsel %vm3118, %v11175, %v11276
    %v11278 = vsel %vm3120, %v11191, %v11277
    %v11279 = vsel %vm3122, %v11207, %v11278
    %v11280 = vsel %vm3124, %v11223, %v11279
    %v11281 = vsel %vm3126, %v11239, %v11280
    %v11282 = vsel %vm3116, %v11163, %v11147
    %v11283 = vsel %vm3118, %v11179, %v11282
    %v11284 = vsel %vm3120, %v11195, %v11283
    %v11285 = vsel %vm3122, %v11211, %v11284
    %v11286 = vsel %vm3124, %v11227, %v11285
    %v11287 = vsel %vm3126, %v11243, %v11286
    %v11288 = vsel %vm3116, %v11167, %v11151
    %v11289 = vsel %vm3118, %v11183, %v11288
    %v11290 = vsel %vm3120, %v11199, %v11289
    %v11291 = vsel %vm3122, %v11215, %v11290
    %v11292 = vsel %vm3124, %v11231, %v11291
    %v11293 = vsel %vm3126, %v11247, %v11292
    %v11294 = vsel %vm3116, %v11171, %v11155
    %v11295 = vsel %vm3118, %v11187, %v11294
    %v11296 = vsel %vm3120, %v11203, %v11295
    %v11297 = vsel %vm3122, %v11219, %v11296
    %v11298 = vsel %vm3124, %v11235, %v11297
    %v11299 = vsel %vm3126, %v11251, %v11298
    %11308 = vst [vmem:[%s7] sm:$0x7f] %v11257
    %11309 = vst [vmem:[%s7 + $0x8] sm:$0x7f] %v11263
    %11310 = vst [vmem:[%s7 + $0x10] sm:$0x7f] %v11269
    %vm11311 = vcmask 260096
    %11312 = vst.msk [vmem:[%s7 + $0x18] sm:$0x7f] %vm11311, %v11275
    %11313 = vst [vmem:[%s7 + $0x20] sm:$0x7f] %v11281
    %11314 = vst [vmem:[%s7 + $0x28] sm:$0x7f] %v11287
    %11315 = vst [vmem:[%s7 + $0x30] sm:$0x7f] %v11293
    %11316 = vst.msk [vmem:[%s7 + $0x38] sm:$0x7f] %vm11311, %v11299
    %v11373 = vpack.c.bf16 %v11031, %v11031
    %v11374 = vpack.c.bf16 %v11035, %v11035
    %v11375 = vpack.c.bf16 %v11039, %v11039
    %v11376 = vpack.c.bf16 %v11043, %v11043
    %v11377 = vpack.c.bf16 %v11047, %v11047
    %v11378 = vpack.c.bf16 %v11051, %v11051
    %v11379 = vpack.c.bf16 %v11055, %v11055
    %v11380 = vpack.c.bf16 %v11059, %v11059
    %v11381 = vpack.c.bf16 %v11063, %v11063
    %v11382 = vpack.c.bf16 %v11067, %v11067
    %v11383 = vpack.c.bf16 %v11071, %v11071
    %v11384 = vpack.c.bf16 %v11075, %v11075
    %v11385 = vpack.c.bf16 %v11079, %v11079
    %v11386 = vpack.c.bf16 %v11083, %v11083
    %v11387 = vpack.c.bf16 %v11087, %v11087
    %v11388 = vpack.c.bf16 %v11091, %v11091
    %v11389 = vpack.c.bf16 %v11095, %v11095
    %v11390 = vpack.c.bf16 %v11099, %v11099
    %v11391 = vpack.c.bf16 %v11103, %v11103
    %v11392 = vpack.c.bf16 %v11107, %v11107
    %v11393 = vpack.c.bf16 %v11111, %v11111
    %v11394 = vpack.c.bf16 %v11115, %v11115
    %v11395 = vpack.c.bf16 %v11119, %v11119
    %v11396 = vpack.c.bf16 %v11123, %v11123
    %v11397 = vpack.c.bf16 %v11127, %v11127
    %v11398 = vpack.c.bf16 %v11131, %v11131
    %v11399 = vpack.c.bf16 %v11135, %v11135
    %v11400 = vpack.c.bf16 %v11139, %v11139
    %v11401 = vpack.c.bf16 %v11143, %v11143
    %v11402 = vpack.c.bf16 %v11147, %v11147
    %v11403 = vpack.c.bf16 %v11151, %v11151
    %v11404 = vpack.c.bf16 %v11155, %v11155
    %v11405 = vpack.c.bf16 %v11159, %v11159
    %v11406 = vpack.c.bf16 %v11163, %v11163
    %v11407 = vpack.c.bf16 %v11167, %v11167
    %v11408 = vpack.c.bf16 %v11171, %v11171
    %v11409 = vpack.c.bf16 %v11175, %v11175
    %v11410 = vpack.c.bf16 %v11179, %v11179
    %v11411 = vpack.c.bf16 %v11183, %v11183
    %v11412 = vpack.c.bf16 %v11187, %v11187
    %v11413 = vpack.c.bf16 %v11191, %v11191
    %v11414 = vpack.c.bf16 %v11195, %v11195
    %v11415 = vpack.c.bf16 %v11199, %v11199
    %v11416 = vpack.c.bf16 %v11203, %v11203
    %v11417 = vpack.c.bf16 %v11207, %v11207
    %v11418 = vpack.c.bf16 %v11211, %v11211
    %v11419 = vpack.c.bf16 %v11215, %v11215
    %v11420 = vpack.c.bf16 %v11219, %v11219
    %v11421 = vpack.c.bf16 %v11223, %v11223
    %v11422 = vpack.c.bf16 %v11227, %v11227
    %v11423 = vpack.c.bf16 %v11231, %v11231
    %v11424 = vpack.c.bf16 %v11235, %v11235
    %v11425 = vpack.c.bf16 %v11239, %v11239
    %v11426 = vpack.c.bf16 %v11243, %v11243
    %v11427 = vpack.c.bf16 %v11247, %v11247
    %v11428 = vpack.c.bf16 %v11251, %v11251
    %v11429 = vld [vmem:[#allocation10] sm:$0xf]
    %v11430 = vld [vmem:[#allocation10 + $0x4] sm:$0xf]
    %v11431 = vld [vmem:[#allocation10 + $0x8] sm:$0xf]
    %v11432 = vld [vmem:[#allocation10 + $0xc] sm:$0xf]
    %v11433 = vld [vmem:[#allocation10 + $0x10] sm:$0xf]
    %v11434 = vld [vmem:[#allocation10 + $0x14] sm:$0xf]
    %v11435 = vld [vmem:[#allocation10 + $0x18] sm:$0xf]
    %v11436 = vld [vmem:[#allocation10 + $0x1c] sm:$0xf]
    %v11437 = vld [vmem:[#allocation10 + $0x20] sm:$0xf]
    %v11438 = vld [vmem:[#allocation10 + $0x24] sm:$0xf]
    %v11439 = vld [vmem:[#allocation10 + $0x28] sm:$0xf]
    %v11440 = vld [vmem:[#allocation10 + $0x2c] sm:$0xf]
    %v11441 = vld [vmem:[#allocation10 + $0x30] sm:$0xf]
    %v11442 = vld [vmem:[#allocation10 + $0x34] sm:$0xf]
    %v11443 = vld [vmem:[#allocation10 + $0x38] sm:$0xf]
    %v11444 = vld [vmem:[#allocation10 + $0x3c] sm:$0xf]
    %v11445 = vld [vmem:[#allocation10 + $0x40] sm:$0xf]
    %v11446 = vld [vmem:[#allocation10 + $0x44] sm:$0xf]
    %v11447 = vld [vmem:[#allocation10 + $0x48] sm:$0xf]
    %v11448 = vld [vmem:[#allocation10 + $0x4c] sm:$0xf]
    %v11449 = vld [vmem:[#allocation10 + $0x50] sm:$0xf]
    %v11450 = vld [vmem:[#allocation10 + $0x54] sm:$0xf]
    %v11451 = vld [vmem:[#allocation10 + $0x58] sm:$0xf]
    %v11452 = vld [vmem:[#allocation10 + $0x5c] sm:$0xf]
    %v11453 = vld [vmem:[#allocation10 + $0x60] sm:$0xf]
    %v11454 = vld [vmem:[#allocation10 + $0x64] sm:$0xf]
    %v11455 = vld [vmem:[#allocation10 + $0x68] sm:$0xf]
    %v11456 = vld [vmem:[#allocation10 + $0x6c] sm:$0xf]
    %v11457 = vld [vmem:[#allocation10 + $0x70] sm:$0xf]
    %v11458 = vld [vmem:[#allocation10 + $0x74] sm:$0xf]
    %v11459 = vld [vmem:[#allocation10 + $0x78] sm:$0xf]
    %v11460 = vld [vmem:[#allocation10 + $0x7c] sm:$0xf]
    %v11461 = vld [vmem:[#allocation10 + $0x80] sm:$0xf]
    %v11462 = vld [vmem:[#allocation10 + $0x84] sm:$0xf]
    %v11463 = vld [vmem:[#allocation10 + $0x88] sm:$0xf]
    %v11464 = vld [vmem:[#allocation10 + $0x8c] sm:$0xf]
    %v11465 = vld [vmem:[#allocation10 + $0x90] sm:$0xf]
    %v11466 = vld [vmem:[#allocation10 + $0x94] sm:$0xf]
    %v11467 = vld [vmem:[#allocation10 + $0x98] sm:$0xf]
    %v11468 = vld [vmem:[#allocation10 + $0x9c] sm:$0xf]
    %v11469 = vld [vmem:[#allocation10 + $0xa0] sm:$0xf]
    %v11470 = vld [vmem:[#allocation10 + $0xa4] sm:$0xf]
    %v11471 = vld [vmem:[#allocation10 + $0xa8] sm:$0xf]
    %v11472 = vld [vmem:[#allocation10 + $0xac] sm:$0xf]
    %v11473 = vld [vmem:[#allocation10 + $0xb0] sm:$0xf]
    %v11474 = vld [vmem:[#allocation10 + $0xb4] sm:$0xf]
    %v11475 = vld [vmem:[#allocation10 + $0xb8] sm:$0xf]
    %v11476 = vld [vmem:[#allocation10 + $0xbc] sm:$0xf]
    %v11477 = vld [vmem:[#allocation10 + $0xc0] sm:$0xf]
    %v11478 = vld [vmem:[#allocation10 + $0xc4] sm:$0xf]
    %v11479 = vld [vmem:[#allocation10 + $0xc8] sm:$0xf]
    %v11480 = vld [vmem:[#allocation10 + $0xcc] sm:$0xf]
    %s11481 = scalar_lea.vmem [#allocation10], 208
    %v11482 = vld [vmem:[%s11481] sm:$0xf]
    %v11483 = vld [vmem:[%s11481 + $0x4] sm:$0xf]
    %v11484 = vld [vmem:[%s11481 + $0x8] sm:$0xf]
    %v11485 = vld [vmem:[%s11481 + $0xc] sm:$0xf]
    %v11486 = vld [vmem:[%s11481 + $0x10] sm:$0xf]
    %v11487 = vld [vmem:[%s11481 + $0x14] sm:$0xf]
    %v11488 = vld [vmem:[%s11481 + $0x18] sm:$0xf]
    %v11489 = vld [vmem:[%s11481 + $0x1c] sm:$0xf]
    %v11490 = vld [vmem:[%s11481 + $0x20] sm:$0xf]
    %v11491 = vld [vmem:[%s11481 + $0x24] sm:$0xf]
    %v11492 = vld [vmem:[%s11481 + $0x28] sm:$0xf]
    %v11493 = vld [vmem:[%s11481 + $0x2c] sm:$0xf]
    %v11494 = vld [vmem:[%s11481 + $0x30] sm:$0xf]
    %v11495 = vld [vmem:[%s11481 + $0x34] sm:$0xf]
    %v11496 = vld [vmem:[%s11481 + $0x38] sm:$0xf]
    %v11497 = vld [vmem:[%s11481 + $0x3c] sm:$0xf]
    %v11498 = vld [vmem:[%s11481 + $0x40] sm:$0xf]
    %v11499 = vld [vmem:[%s11481 + $0x44] sm:$0xf]
    %v11500 = vld [vmem:[%s11481 + $0x48] sm:$0xf]
    %v11501 = vld [vmem:[%s11481 + $0x4c] sm:$0xf]
    %v11502 = vld [vmem:[%s11481 + $0x50] sm:$0xf]
    %v11503 = vld [vmem:[%s11481 + $0x54] sm:$0xf]
    %v11504 = vld [vmem:[%s11481 + $0x58] sm:$0xf]
    %v11505 = vld [vmem:[%s11481 + $0x5c] sm:$0xf]
    %v11506 = vld [vmem:[%s11481 + $0x60] sm:$0xf]
    %v11507 = vld [vmem:[%s11481 + $0x64] sm:$0xf]
    %v11508 = vld [vmem:[%s11481 + $0x68] sm:$0xf]
    %v11509 = vld [vmem:[%s11481 + $0x6c] sm:$0xf]
    %v11510 = vld [vmem:[%s11481 + $0x70] sm:$0xf]
    %v11511 = vld [vmem:[%s11481 + $0x74] sm:$0xf]
    %v11512 = vld [vmem:[%s11481 + $0x78] sm:$0xf]
    %v11513 = vld [vmem:[%s11481 + $0x7c] sm:$0xf]
    %v11514 = vld [vmem:[%s11481 + $0x80] sm:$0xf]
    %v11515 = vld [vmem:[%s11481 + $0x84] sm:$0xf]
    %v11516 = vld [vmem:[%s11481 + $0x88] sm:$0xf]
    %v11517 = vld [vmem:[%s11481 + $0x8c] sm:$0xf]
    %v11518 = vld [vmem:[%s11481 + $0x90] sm:$0xf]
    %v11519 = vld [vmem:[%s11481 + $0x94] sm:$0xf]
    %v11520 = vld [vmem:[%s11481 + $0x98] sm:$0xf]
    %v11521 = vld [vmem:[%s11481 + $0x9c] sm:$0xf]
    %v11522 = vld [vmem:[%s11481 + $0xa0] sm:$0xf]
    %v11523 = vld [vmem:[%s11481 + $0xa4] sm:$0xf]
    %v11524 = vld [vmem:[%s11481 + $0xa8] sm:$0xf]
    %v11525 = vld [vmem:[%s11481 + $0xac] sm:$0xf]
    %v11526 = vld [vmem:[%s11481 + $0xb0] sm:$0xf]
    %v11527 = vld [vmem:[%s11481 + $0xb4] sm:$0xf]
    %v11528 = vld [vmem:[%s11481 + $0xb8] sm:$0xf]
    %v11529 = vld [vmem:[%s11481 + $0xbc] sm:$0xf]
    %v11530 = vld [vmem:[%s11481 + $0xc0] sm:$0xf]
    %v11531 = vld [vmem:[%s11481 + $0xc4] sm:$0xf]
    %v11532 = vld [vmem:[%s11481 + $0xc8] sm:$0xf]
    %v11533 = vld [vmem:[%s11481 + $0xcc] sm:$0xf]
    %v11542 = vunpack.c.l.b16 %v11377
    %v11543 = vunpack.c.l.b16 %v11378
    %v11544 = vunpack.c.l.b16 %v11379
    %v11545 = vunpack.c.l.b16 %v11380
    %v11546 = vunpack.c.l.b16 %v11405
    %v11547 = vunpack.c.l.b16 %v11406
    %v11548 = vunpack.c.l.b16 %v11407
    %v11549 = vunpack.c.l.b16 %v11408
    %v11550 = vrot.slane %v11546, 7
    %v11551 = vsel %vm3116, %v11550, %v11542
    %v11552 = vrot.slane %v11547, 7
    %v11553 = vsel %vm3116, %v11552, %v11543
    %v11554 = vrot.slane %v11548, 7
    %v11555 = vsel %vm3116, %v11554, %v11544
    %v11556 = vrot.slane %v11549, 7
    %v11557 = vsel %vm3116, %v11556, %v11545
    %v11558 = vpack.c.b16 %v11551, %v11551
    %v11559 = vpack.c.b16 %v11553, %v11553
    %v11560 = vpack.c.b16 %v11555, %v11555
    %v11561 = vpack.c.b16 %v11557, %v11557
    %v11617 = vunpack.c.l.b16 %v11482
    %v11618 = vunpack.c.l.b16 %v11483
    %v11619 = vunpack.c.l.b16 %v11484
    %v11620 = vunpack.c.l.b16 %v11485
    %v11621 = vunpack.c.l.b16 %v11486
    %v11622 = vunpack.c.l.b16 %v11487
    %v11623 = vunpack.c.l.b16 %v11488
    %v11624 = vunpack.c.l.b16 %v11489
    %v11625 = vunpack.c.l.b16 %v11490
    %v11626 = vunpack.c.l.b16 %v11491
    %v11627 = vunpack.c.l.b16 %v11492
    %v11628 = vunpack.c.l.b16 %v11493
    %v11629 = vunpack.c.l.b16 %v11494
    %v11630 = vunpack.c.l.b16 %v11495
    %v11631 = vunpack.c.l.b16 %v11496
    %v11632 = vunpack.c.l.b16 %v11497
    %v11633 = vunpack.c.l.b16 %v11498
    %v11634 = vunpack.c.l.b16 %v11499
    %v11635 = vunpack.c.l.b16 %v11500
    %v11636 = vunpack.c.l.b16 %v11501
    %v11637 = vunpack.c.l.b16 %v11502
    %v11638 = vunpack.c.l.b16 %v11503
    %v11639 = vunpack.c.l.b16 %v11504
    %v11640 = vunpack.c.l.b16 %v11505
    %v11641 = vunpack.c.l.b16 %v11506
    %v11642 = vunpack.c.l.b16 %v11507
    %v11643 = vunpack.c.l.b16 %v11508
    %v11644 = vunpack.c.l.b16 %v11509
    %v11645 = vunpack.c.l.b16 %v11510
    %v11646 = vunpack.c.l.b16 %v11511
    %v11647 = vunpack.c.l.b16 %v11512
    %v11648 = vunpack.c.l.b16 %v11513
    %v11649 = vunpack.c.l.b16 %v11514
    %v11650 = vunpack.c.l.b16 %v11515
    %v11651 = vunpack.c.l.b16 %v11516
    %v11652 = vunpack.c.l.b16 %v11517
    %v11653 = vunpack.c.l.b16 %v11518
    %v11654 = vunpack.c.l.b16 %v11519
    %v11655 = vunpack.c.l.b16 %v11520
    %v11656 = vunpack.c.l.b16 %v11521
    %v11657 = vunpack.c.l.b16 %v11522
    %v11658 = vunpack.c.l.b16 %v11523
    %v11659 = vunpack.c.l.b16 %v11524
    %v11660 = vunpack.c.l.b16 %v11525
    %v11661 = vunpack.c.l.b16 %v11526
    %v11662 = vunpack.c.l.b16 %v11527
    %v11663 = vunpack.c.l.b16 %v11528
    %v11664 = vunpack.c.l.b16 %v11529
    %v11665 = vunpack.c.l.b16 %v11530
    %v11666 = vunpack.c.l.b16 %v11531
    %v11667 = vunpack.c.l.b16 %v11532
    %v11668 = vunpack.c.l.b16 %v11533
    %v11669 = vpack.c.b16 %v11618, %v11617
    %v11670 = vpack.c.b16 %v11620, %v11619
    %v11671 = vpack.c.b16 %v11622, %v11621
    %v11672 = vpack.c.b16 %v11624, %v11623
    %v11673 = vpack.c.b16 %v11626, %v11625
    %v11674 = vpack.c.b16 %v11628, %v11627
    %v11675 = vpack.c.b16 %v11630, %v11629
    %v11676 = vpack.c.b16 %v11632, %v11631
    %v11677 = vpack.c.b16 %v11634, %v11633
    %v11678 = vpack.c.b16 %v11636, %v11635
    %v11679 = vpack.c.b16 %v11638, %v11637
    %v11680 = vpack.c.b16 %v11640, %v11639
    %v11681 = vpack.c.b16 %v11642, %v11641
    %v11682 = vpack.c.b16 %v11644, %v11643
    %v11683 = vpack.c.b16 %v11646, %v11645
    %v11684 = vpack.c.b16 %v11648, %v11647
    %v11685 = vpack.c.b16 %v11650, %v11649
    %v11686 = vpack.c.b16 %v11652, %v11651
    %v11687 = vpack.c.b16 %v11654, %v11653
    %v11688 = vpack.c.b16 %v11656, %v11655
    %v11689 = vpack.c.b16 %v11658, %v11657
    %v11690 = vpack.c.b16 %v11660, %v11659
    %v11691 = vpack.c.b16 %v11662, %v11661
    %v11692 = vpack.c.b16 %v11664, %v11663
    %v11693 = vpack.c.b16 %v11666, %v11665
    %v11694 = vpack.c.b16 %v11668, %v11667
    %v11722 = vsel %vm547, %v11561, 0
    %11724 = vmatprep.subr.bf16.mxu0 0
    %11725 = vmatpush1.bf16.msra.mxu0 %v11669
    %11726 = vmatprep.subr.bf16.mxu0 0
    %11727 = vmatpush1.bf16.msra.mxu0 %v11670
    %11728 = vmatprep.subr.bf16.mxu0 0
    %11729 = vmatpush1.bf16.msra.mxu0 %v11671
    %11730 = vmatprep.subr.bf16.mxu0 0
    %11731 = vmatpush1.bf16.msra.mxu0 %v11672
    %11732 = vmatprep.subr.bf16.mxu0 0
    %11733 = vmatpush1.bf16.msra.mxu0 %v11673
    %11734 = vmatprep.subr.bf16.mxu0 0
    %11735 = vmatpush1.bf16.msra.mxu0 %v11674
    %11736 = vmatprep.subr.bf16.mxu0 0
    %11737 = vmatpush1.bf16.msra.mxu0 %v11675
    %11738 = vmatprep.subr.bf16.mxu0 0
    %11739 = vmatpush1.bf16.msra.mxu0 %v11676
    %11740 = vmatprep.subr.bf16.mxu0 0
    %11741 = vmatpush1.bf16.msra.mxu0 %v11677
    %11742 = vmatprep.subr.bf16.mxu0 0
    %11743 = vmatpush1.bf16.msra.mxu0 %v11678
    %11744 = vmatprep.subr.bf16.mxu0 0
    %11745 = vmatpush1.bf16.msra.mxu0 %v11679
    %11746 = vmatprep.subr.bf16.mxu0 0
    %11747 = vmatpush1.bf16.msra.mxu0 %v11680
    %11748 = vmatprep.subr.bf16.mxu0 0
    %11749 = vmatpush1.bf16.msra.mxu0 %v11681
    %11750 = vmatprep.subr.bf16.mxu0 0
    %11751 = vmatpush1.bf16.msra.mxu0 %v11682
    %11752 = vmatprep.subr.bf16.mxu0 0
    %11753 = vmatpush1.bf16.msra.mxu0 %v11683
    %11754 = vmatprep.subr.bf16.mxu0 0
    %11755 = vmatpush1.bf16.msra.mxu0 %v11684
    %11756 = vmatprep.mubr.bf16.mxu0 %v11559
    %11757 = vmatmul.mubr.bf16.gmra.mrb[0].mxu0 %v11558
    %v11758 = vpop.f32.mrb[0].mxu0
    %v11759 = vadd.f32 0.0, %v11758
    %v11760 = vpop.f32.mrb[0].mxu0
    %v11761 = vpop.f32.mrb[0].mxu0
    %v11762 = vpop.f32.mrb[0].mxu0
    %11763 = vdwg.mxu0
    %11764 = vmatprep.subr.bf16.mxu0 0
    %11765 = vmatpush1.bf16.msra.mxu0 %v11685
    %11766 = vmatprep.subr.bf16.mxu0 0
    %11767 = vmatpush1.bf16.msra.mxu0 %v11686
    %11768 = vmatprep.subr.bf16.mxu0 0
    %11769 = vmatpush1.bf16.msra.mxu0 %v11687
    %11770 = vmatprep.subr.bf16.mxu0 0
    %11771 = vmatpush1.bf16.msra.mxu0 %v11688
    %11772 = vmatprep.subr.bf16.mxu0 0
    %11773 = vmatpush1.bf16.msra.mxu0 %v11689
    %11774 = vmatprep.subr.bf16.mxu0 0
    %11775 = vmatpush1.bf16.msra.mxu0 %v11690
    %11776 = vmatprep.subr.bf16.mxu0 0
    %11777 = vmatpush1.bf16.msra.mxu0 %v11691
    %11778 = vmatprep.subr.bf16.mxu0 0
    %11779 = vmatpush1.bf16.msra.mxu0 %v11692
    %11780 = vmatprep.subr.bf16.mxu0 0
    %11781 = vmatpush1.bf16.msra.mxu0 %v11693
    %11782 = vmatprep.subr.bf16.mxu0 0
    %11783 = vmatpush1.bf16.msra.mxu0 %v11694
    %11784 = vmatprep.subr.bf16.mxu0 0
    %11785 = vmatpush1.bf16.msra.mxu0 0
    %11786 = vmatprep.subr.bf16.mxu0 0
    %11787 = vmatpush1.bf16.msra.mxu0 0
    %11788 = vmatprep.subr.bf16.mxu0 0
    %11789 = vmatpush1.bf16.msra.mxu0 0
    %11790 = vmatprep.subr.bf16.mxu0 0
    %11791 = vmatpush1.bf16.msra.mxu0 0
    %11792 = vmatprep.subr.bf16.mxu0 0
    %11793 = vmatpush1.bf16.msra.mxu0 0
    %11794 = vmatprep.subr.bf16.mxu0 0
    %11795 = vmatpush1.bf16.msra.mxu0 0
    %11796 = vmatprep.mubr.bf16.mxu0 %v11722
    %11797 = vmatmul.mubr.bf16.gmra.mrb[0].mxu0 %v11560
    %v11798 = vpop.f32.mrb[0].mxu0
    %v11799 = vadd.f32 %v11759, %v11798
    %v11800 = vpop.f32.mrb[0].mxu0
    %v11801 = vpop.f32.mrb[0].mxu0
    %v11802 = vpop.f32.mrb[0].mxu0
    %11803 = vdwg.mxu0
    %v11812 = vunpack.c.l.b16 %v11373
    %v11813 = vunpack.c.l.b16 %v11374
    %v11814 = vunpack.c.l.b16 %v11375
    %v11815 = vunpack.c.l.b16 %v11376
    %v11816 = vunpack.c.l.b16 %v11401
    %v11817 = vunpack.c.l.b16 %v11402
    %v11818 = vunpack.c.l.b16 %v11403
    %v11819 = vunpack.c.l.b16 %v11404
    %v11820 = vrot.slane %v11816, 7
    %v11821 = vsel %vm3116, %v11820, %v11812
    %v11822 = vrot.slane %v11817, 7
    %v11823 = vsel %vm3116, %v11822, %v11813
    %v11824 = vrot.slane %v11818, 7
    %v11825 = vsel %vm3116, %v11824, %v11814
    %v11826 = vrot.slane %v11819, 7
    %v11827 = vsel %vm3116, %v11826, %v11815
    %v11828 = vpack.c.b16 %v11821, %v11821
    %v11829 = vpack.c.b16 %v11823, %v11823
    %v11830 = vpack.c.b16 %v11825, %v11825
    %v11831 = vpack.c.b16 %v11827, %v11827
    %v11887 = vunpack.c.l.b16 %v11429
    %v11888 = vunpack.c.l.b16 %v11430
    %v11889 = vunpack.c.l.b16 %v11431
    %v11890 = vunpack.c.l.b16 %v11432
    %v11891 = vunpack.c.l.b16 %v11433
    %v11892 = vunpack.c.l.b16 %v11434
    %v11893 = vunpack.c.l.b16 %v11435
    %v11894 = vunpack.c.l.b16 %v11436
    %v11895 = vunpack.c.l.b16 %v11437
    %v11896 = vunpack.c.l.b16 %v11438
    %v11897 = vunpack.c.l.b16 %v11439
    %v11898 = vunpack.c.l.b16 %v11440
    %v11899 = vunpack.c.l.b16 %v11441
    %v11900 = vunpack.c.l.b16 %v11442
    %v11901 = vunpack.c.l.b16 %v11443
    %v11902 = vunpack.c.l.b16 %v11444
    %v11903 = vunpack.c.l.b16 %v11445
    %v11904 = vunpack.c.l.b16 %v11446
    %v11905 = vunpack.c.l.b16 %v11447
    %v11906 = vunpack.c.l.b16 %v11448
    %v11907 = vunpack.c.l.b16 %v11449
    %v11908 = vunpack.c.l.b16 %v11450
    %v11909 = vunpack.c.l.b16 %v11451
    %v11910 = vunpack.c.l.b16 %v11452
    %v11911 = vunpack.c.l.b16 %v11453
    %v11912 = vunpack.c.l.b16 %v11454
    %v11913 = vunpack.c.l.b16 %v11455
    %v11914 = vunpack.c.l.b16 %v11456
    %v11915 = vunpack.c.l.b16 %v11457
    %v11916 = vunpack.c.l.b16 %v11458
    %v11917 = vunpack.c.l.b16 %v11459
    %v11918 = vunpack.c.l.b16 %v11460
    %v11919 = vunpack.c.l.b16 %v11461
    %v11920 = vunpack.c.l.b16 %v11462
    %v11921 = vunpack.c.l.b16 %v11463
    %v11922 = vunpack.c.l.b16 %v11464
    %v11923 = vunpack.c.l.b16 %v11465
    %v11924 = vunpack.c.l.b16 %v11466
    %v11925 = vunpack.c.l.b16 %v11467
    %v11926 = vunpack.c.l.b16 %v11468
    %v11927 = vunpack.c.l.b16 %v11469
    %v11928 = vunpack.c.l.b16 %v11470
    %v11929 = vunpack.c.l.b16 %v11471
    %v11930 = vunpack.c.l.b16 %v11472
    %v11931 = vunpack.c.l.b16 %v11473
    %v11932 = vunpack.c.l.b16 %v11474
    %v11933 = vunpack.c.l.b16 %v11475
    %v11934 = vunpack.c.l.b16 %v11476
    %v11935 = vunpack.c.l.b16 %v11477
    %v11936 = vunpack.c.l.b16 %v11478
    %v11937 = vunpack.c.l.b16 %v11479
    %v11938 = vunpack.c.l.b16 %v11480
    %v11939 = vpack.c.b16 %v11888, %v11887
    %v11940 = vpack.c.b16 %v11890, %v11889
    %v11941 = vpack.c.b16 %v11892, %v11891
    %v11942 = vpack.c.b16 %v11894, %v11893
    %v11943 = vpack.c.b16 %v11896, %v11895
    %v11944 = vpack.c.b16 %v11898, %v11897
    %v11945 = vpack.c.b16 %v11900, %v11899
    %v11946 = vpack.c.b16 %v11902, %v11901
    %v11947 = vpack.c.b16 %v11904, %v11903
    %v11948 = vpack.c.b16 %v11906, %v11905
    %v11949 = vpack.c.b16 %v11908, %v11907
    %v11950 = vpack.c.b16 %v11910, %v11909
    %v11951 = vpack.c.b16 %v11912, %v11911
    %v11952 = vpack.c.b16 %v11914, %v11913
    %v11953 = vpack.c.b16 %v11916, %v11915
    %v11954 = vpack.c.b16 %v11918, %v11917
    %v11955 = vpack.c.b16 %v11920, %v11919
    %v11956 = vpack.c.b16 %v11922, %v11921
    %v11957 = vpack.c.b16 %v11924, %v11923
    %v11958 = vpack.c.b16 %v11926, %v11925
    %v11959 = vpack.c.b16 %v11928, %v11927
    %v11960 = vpack.c.b16 %v11930, %v11929
    %v11961 = vpack.c.b16 %v11932, %v11931
    %v11962 = vpack.c.b16 %v11934, %v11933
    %v11963 = vpack.c.b16 %v11936, %v11935
    %v11964 = vpack.c.b16 %v11938, %v11937
    %v11992 = vsel %vm547, %v11831, 0
    %11994 = vmatprep.subr.bf16.mxu0 0
    %11995 = vmatpush1.bf16.msra.mxu0 %v11939
    %11996 = vmatprep.subr.bf16.mxu0 0
    %11997 = vmatpush1.bf16.msra.mxu0 %v11940
    %11998 = vmatprep.subr.bf16.mxu0 0
    %11999 = vmatpush1.bf16.msra.mxu0 %v11941
    %12000 = vmatprep.subr.bf16.mxu0 0
    %12001 = vmatpush1.bf16.msra.mxu0 %v11942
    %12002 = vmatprep.subr.bf16.mxu0 0
    %12003 = vmatpush1.bf16.msra.mxu0 %v11943
    %12004 = vmatprep.subr.bf16.mxu0 0
    %12005 = vmatpush1.bf16.msra.mxu0 %v11944
    %12006 = vmatprep.subr.bf16.mxu0 0
    %12007 = vmatpush1.bf16.msra.mxu0 %v11945
    %12008 = vmatprep.subr.bf16.mxu0 0
    %12009 = vmatpush1.bf16.msra.mxu0 %v11946
    %12010 = vmatprep.subr.bf16.mxu0 0
    %12011 = vmatpush1.bf16.msra.mxu0 %v11947
    %12012 = vmatprep.subr.bf16.mxu0 0
    %12013 = vmatpush1.bf16.msra.mxu0 %v11948
    %12014 = vmatprep.subr.bf16.mxu0 0
    %12015 = vmatpush1.bf16.msra.mxu0 %v11949
    %12016 = vmatprep.subr.bf16.mxu0 0
    %12017 = vmatpush1.bf16.msra.mxu0 %v11950
    %12018 = vmatprep.subr.bf16.mxu0 0
    %12019 = vmatpush1.bf16.msra.mxu0 %v11951
    %12020 = vmatprep.subr.bf16.mxu0 0
    %12021 = vmatpush1.bf16.msra.mxu0 %v11952
    %12022 = vmatprep.subr.bf16.mxu0 0
    %12023 = vmatpush1.bf16.msra.mxu0 %v11953
    %12024 = vmatprep.subr.bf16.mxu0 0
    %12025 = vmatpush1.bf16.msra.mxu0 %v11954
    %12026 = vmatprep.mubr.bf16.mxu0 %v11829
    %12027 = vmatmul.mubr.bf16.gmra.mrb[0].mxu0 %v11828
    %v12028 = vpop.f32.mrb[0].mxu0
    %v12029 = vadd.f32 %v11799, %v12028
    %v12030 = vpop.f32.mrb[0].mxu0
    %v12031 = vpop.f32.mrb[0].mxu0
    %v12032 = vpop.f32.mrb[0].mxu0
    %12033 = vdwg.mxu0
    %12034 = vmatprep.subr.bf16.mxu0 0
    %12035 = vmatpush1.bf16.msra.mxu0 %v11955
    %12036 = vmatprep.subr.bf16.mxu0 0
    %12037 = vmatpush1.bf16.msra.mxu0 %v11956
    %12038 = vmatprep.subr.bf16.mxu0 0
    %12039 = vmatpush1.bf16.msra.mxu0 %v11957
    %12040 = vmatprep.subr.bf16.mxu0 0
    %12041 = vmatpush1.bf16.msra.mxu0 %v11958
    %12042 = vmatprep.subr.bf16.mxu0 0
    %12043 = vmatpush1.bf16.msra.mxu0 %v11959
    %12044 = vmatprep.subr.bf16.mxu0 0
    %12045 = vmatpush1.bf16.msra.mxu0 %v11960
    %12046 = vmatprep.subr.bf16.mxu0 0
    %12047 = vmatpush1.bf16.msra.mxu0 %v11961
    %12048 = vmatprep.subr.bf16.mxu0 0
    %12049 = vmatpush1.bf16.msra.mxu0 %v11962
    %12050 = vmatprep.subr.bf16.mxu0 0
    %12051 = vmatpush1.bf16.msra.mxu0 %v11963
    %12052 = vmatprep.subr.bf16.mxu0 0
    %12053 = vmatpush1.bf16.msra.mxu0 %v11964
    %12054 = vmatprep.subr.bf16.mxu0 0
    %12055 = vmatpush1.bf16.msra.mxu0 0
    %12056 = vmatprep.subr.bf16.mxu0 0
    %12057 = vmatpush1.bf16.msra.mxu0 0
    %12058 = vmatprep.subr.bf16.mxu0 0
    %12059 = vmatpush1.bf16.msra.mxu0 0
    %12060 = vmatprep.subr.bf16.mxu0 0
    %12061 = vmatpush1.bf16.msra.mxu0 0
    %12062 = vmatprep.subr.bf16.mxu0 0
    %12063 = vmatpush1.bf16.msra.mxu0 0
    %12064 = vmatprep.subr.bf16.mxu0 0
    %12065 = vmatpush1.bf16.msra.mxu0 0
    %12066 = vmatprep.mubr.bf16.mxu0 %v11992
    %12067 = vmatmul.mubr.bf16.gmra.mrb[0].mxu0 %v11830
    %v12068 = vpop.f32.mrb[0].mxu0
    %v12069 = vadd.f32 %v12029, %v12068
    %v12070 = vpop.f32.mrb[0].mxu0
    %v12071 = vpop.f32.mrb[0].mxu0
    %v12072 = vpop.f32.mrb[0].mxu0
    %12073 = vdwg.mxu0
    %s12074 = scalar_lea.vmem [#allocation10], 416
    %v12075 = vld [vmem:[%s12074] sm:$0xf]
    %v12076 = vld [vmem:[%s12074 + $0x4] sm:$0xf]
    %v12077 = vld [vmem:[%s12074 + $0x8] sm:$0xf]
    %v12078 = vld [vmem:[%s12074 + $0xc] sm:$0xf]
    %v12079 = vld [vmem:[%s12074 + $0x10] sm:$0xf]
    %v12080 = vld [vmem:[%s12074 + $0x14] sm:$0xf]
    %v12081 = vld [vmem:[%s12074 + $0x18] sm:$0xf]
    %v12082 = vld [vmem:[%s12074 + $0x1c] sm:$0xf]
    %v12083 = vld [vmem:[%s12074 + $0x20] sm:$0xf]
    %v12084 = vld [vmem:[%s12074 + $0x24] sm:$0xf]
    %v12085 = vld [vmem:[%s12074 + $0x28] sm:$0xf]
    %v12086 = vld [vmem:[%s12074 + $0x2c] sm:$0xf]
    %v12087 = vld [vmem:[%s12074 + $0x30] sm:$0xf]
    %v12088 = vld [vmem:[%s12074 + $0x34] sm:$0xf]
    %v12089 = vld [vmem:[%s12074 + $0x38] sm:$0xf]
    %v12090 = vld [vmem:[%s12074 + $0x3c] sm:$0xf]
    %v12091 = vld [vmem:[%s12074 + $0x40] sm:$0xf]
    %v12092 = vld [vmem:[%s12074 + $0x44] sm:$0xf]
    %v12093 = vld [vmem:[%s12074 + $0x48] sm:$0xf]
    %v12094 = vld [vmem:[%s12074 + $0x4c] sm:$0xf]
    %v12095 = vld [vmem:[%s12074 + $0x50] sm:$0xf]
    %v12096 = vld [vmem:[%s12074 + $0x54] sm:$0xf]
    %v12097 = vld [vmem:[%s12074 + $0x58] sm:$0xf]
    %v12098 = vld [vmem:[%s12074 + $0x5c] sm:$0xf]
    %v12099 = vld [vmem:[%s12074 + $0x60] sm:$0xf]
    %v12100 = vld [vmem:[%s12074 + $0x64] sm:$0xf]
    %v12101 = vld [vmem:[%s12074 + $0x68] sm:$0xf]
    %v12102 = vld [vmem:[%s12074 + $0x6c] sm:$0xf]
    %v12103 = vld [vmem:[%s12074 + $0x70] sm:$0xf]
    %v12104 = vld [vmem:[%s12074 + $0x74] sm:$0xf]
    %v12105 = vld [vmem:[%s12074 + $0x78] sm:$0xf]
    %v12106 = vld [vmem:[%s12074 + $0x7c] sm:$0xf]
    %v12107 = vld [vmem:[%s12074 + $0x80] sm:$0xf]
    %v12108 = vld [vmem:[%s12074 + $0x84] sm:$0xf]
    %v12109 = vld [vmem:[%s12074 + $0x88] sm:$0xf]
    %v12110 = vld [vmem:[%s12074 + $0x8c] sm:$0xf]
    %v12111 = vld [vmem:[%s12074 + $0x90] sm:$0xf]
    %v12112 = vld [vmem:[%s12074 + $0x94] sm:$0xf]
    %v12113 = vld [vmem:[%s12074 + $0x98] sm:$0xf]
    %v12114 = vld [vmem:[%s12074 + $0x9c] sm:$0xf]
    %v12115 = vld [vmem:[%s12074 + $0xa0] sm:$0xf]
    %v12116 = vld [vmem:[%s12074 + $0xa4] sm:$0xf]
    %v12117 = vld [vmem:[%s12074 + $0xa8] sm:$0xf]
    %v12118 = vld [vmem:[%s12074 + $0xac] sm:$0xf]
    %v12119 = vld [vmem:[%s12074 + $0xb0] sm:$0xf]
    %v12120 = vld [vmem:[%s12074 + $0xb4] sm:$0xf]
    %v12121 = vld [vmem:[%s12074 + $0xb8] sm:$0xf]
    %v12122 = vld [vmem:[%s12074 + $0xbc] sm:$0xf]
    %v12123 = vld [vmem:[%s12074 + $0xc0] sm:$0xf]
    %v12124 = vld [vmem:[%s12074 + $0xc4] sm:$0xf]
    %v12125 = vld [vmem:[%s12074 + $0xc8] sm:$0xf]
    %v12126 = vld [vmem:[%s12074 + $0xcc] sm:$0xf]
    %v12135 = vunpack.c.l.b16 %v11381
    %v12136 = vunpack.c.l.b16 %v11382
    %v12137 = vunpack.c.l.b16 %v11383
    %v12138 = vunpack.c.l.b16 %v11384
    %v12139 = vunpack.c.l.b16 %v11409
    %v12140 = vunpack.c.l.b16 %v11410
    %v12141 = vunpack.c.l.b16 %v11411
    %v12142 = vunpack.c.l.b16 %v11412
    %v12143 = vrot.slane %v12139, 7
    %v12144 = vsel %vm3116, %v12143, %v12135
    %v12145 = vrot.slane %v12140, 7
    %v12146 = vsel %vm3116, %v12145, %v12136
    %v12147 = vrot.slane %v12141, 7
    %v12148 = vsel %vm3116, %v12147, %v12137
    %v12149 = vrot.slane %v12142, 7
    %v12150 = vsel %vm3116, %v12149, %v12138
    %v12151 = vpack.c.b16 %v12144, %v12144
    %v12152 = vpack.c.b16 %v12146, %v12146
    %v12153 = vpack.c.b16 %v12148, %v12148
    %v12154 = vpack.c.b16 %v12150, %v12150
    %v12210 = vunpack.c.l.b16 %v12075
    %v12211 = vunpack.c.l.b16 %v12076
    %v12212 = vunpack.c.l.b16 %v12077
    %v12213 = vunpack.c.l.b16 %v12078
    %v12214 = vunpack.c.l.b16 %v12079
    %v12215 = vunpack.c.l.b16 %v12080
    %v12216 = vunpack.c.l.b16 %v12081
    %v12217 = vunpack.c.l.b16 %v12082
    %v12218 = vunpack.c.l.b16 %v12083
    %v12219 = vunpack.c.l.b16 %v12084
    %v12220 = vunpack.c.l.b16 %v12085
    %v12221 = vunpack.c.l.b16 %v12086
    %v12222 = vunpack.c.l.b16 %v12087
    %v12223 = vunpack.c.l.b16 %v12088
    %v12224 = vunpack.c.l.b16 %v12089
    %v12225 = vunpack.c.l.b16 %v12090
    %v12226 = vunpack.c.l.b16 %v12091
    %v12227 = vunpack.c.l.b16 %v12092
    %v12228 = vunpack.c.l.b16 %v12093
    %v12229 = vunpack.c.l.b16 %v12094
    %v12230 = vunpack.c.l.b16 %v12095
    %v12231 = vunpack.c.l.b16 %v12096
    %v12232 = vunpack.c.l.b16 %v12097
    %v12233 = vunpack.c.l.b16 %v12098
    %v12234 = vunpack.c.l.b16 %v12099
    %v12235 = vunpack.c.l.b16 %v12100
    %v12236 = vunpack.c.l.b16 %v12101
    %v12237 = vunpack.c.l.b16 %v12102
    %v12238 = vunpack.c.l.b16 %v12103
    %v12239 = vunpack.c.l.b16 %v12104
    %v12240 = vunpack.c.l.b16 %v12105
    %v12241 = vunpack.c.l.b16 %v12106
    %v12242 = vunpack.c.l.b16 %v12107
    %v12243 = vunpack.c.l.b16 %v12108
    %v12244 = vunpack.c.l.b16 %v12109
    %v12245 = vunpack.c.l.b16 %v12110
    %v12246 = vunpack.c.l.b16 %v12111
    %v12247 = vunpack.c.l.b16 %v12112
    %v12248 = vunpack.c.l.b16 %v12113
    %v12249 = vunpack.c.l.b16 %v12114
    %v12250 = vunpack.c.l.b16 %v12115
    %v12251 = vunpack.c.l.b16 %v12116
    %v12252 = vunpack.c.l.b16 %v12117
    %v12253 = vunpack.c.l.b16 %v12118
    %v12254 = vunpack.c.l.b16 %v12119
    %v12255 = vunpack.c.l.b16 %v12120
    %v12256 = vunpack.c.l.b16 %v12121
    %v12257 = vunpack.c.l.b16 %v12122
    %v12258 = vunpack.c.l.b16 %v12123
    %v12259 = vunpack.c.l.b16 %v12124
    %v12260 = vunpack.c.l.b16 %v12125
    %v12261 = vunpack.c.l.b16 %v12126
    %v12262 = vpack.c.b16 %v12211, %v12210
    %v12263 = vpack.c.b16 %v12213, %v12212
    %v12264 = vpack.c.b16 %v12215, %v12214
    %v12265 = vpack.c.b16 %v12217, %v12216
    %v12266 = vpack.c.b16 %v12219, %v12218
    %v12267 = vpack.c.b16 %v12221, %v12220
    %v12268 = vpack.c.b16 %v12223, %v12222
    %v12269 = vpack.c.b16 %v12225, %v12224
    %v12270 = vpack.c.b16 %v12227, %v12226
    %v12271 = vpack.c.b16 %v12229, %v12228
    %v12272 = vpack.c.b16 %v12231, %v12230
    %v12273 = vpack.c.b16 %v12233, %v12232
    %v12274 = vpack.c.b16 %v12235, %v12234
    %v12275 = vpack.c.b16 %v12237, %v12236
    %v12276 = vpack.c.b16 %v12239, %v12238
    %v12277 = vpack.c.b16 %v12241, %v12240
    %v12278 = vpack.c.b16 %v12243, %v12242
    %v12279 = vpack.c.b16 %v12245, %v12244
    %v12280 = vpack.c.b16 %v12247, %v12246
    %v12281 = vpack.c.b16 %v12249, %v12248
    %v12282 = vpack.c.b16 %v12251, %v12250
    %v12283 = vpack.c.b16 %v12253, %v12252
    %v12284 = vpack.c.b16 %v12255, %v12254
    %v12285 = vpack.c.b16 %v12257, %v12256
    %v12286 = vpack.c.b16 %v12259, %v12258
    %v12287 = vpack.c.b16 %v12261, %v12260
    %v12315 = vsel %vm547, %v12154, 0
    %12317 = vmatprep.subr.bf16.mxu0 0
    %12318 = vmatpush1.bf16.msra.mxu0 %v12262
    %12319 = vmatprep.subr.bf16.mxu0 0
    %12320 = vmatpush1.bf16.msra.mxu0 %v12263
    %12321 = vmatprep.subr.bf16.mxu0 0
    %12322 = vmatpush1.bf16.msra.mxu0 %v12264
    %12323 = vmatprep.subr.bf16.mxu0 0
    %12324 = vmatpush1.bf16.msra.mxu0 %v12265
    %12325 = vmatprep.subr.bf16.mxu0 0
    %12326 = vmatpush1.bf16.msra.mxu0 %v12266
    %12327 = vmatprep.subr.bf16.mxu0 0
    %12328 = vmatpush1.bf16.msra.mxu0 %v12267
    %12329 = vmatprep.subr.bf16.mxu0 0
    %12330 = vmatpush1.bf16.msra.mxu0 %v12268
    %12331 = vmatprep.subr.bf16.mxu0 0
    %12332 = vmatpush1.bf16.msra.mxu0 %v12269
    %12333 = vmatprep.subr.bf16.mxu0 0
    %12334 = vmatpush1.bf16.msra.mxu0 %v12270
    %12335 = vmatprep.subr.bf16.mxu0 0
    %12336 = vmatpush1.bf16.msra.mxu0 %v12271
    %12337 = vmatprep.subr.bf16.mxu0 0
    %12338 = vmatpush1.bf16.msra.mxu0 %v12272
    %12339 = vmatprep.subr.bf16.mxu0 0
    %12340 = vmatpush1.bf16.msra.mxu0 %v12273
    %12341 = vmatprep.subr.bf16.mxu0 0
    %12342 = vmatpush1.bf16.msra.mxu0 %v12274
    %12343 = vmatprep.subr.bf16.mxu0 0
    %12344 = vmatpush1.bf16.msra.mxu0 %v12275
    %12345 = vmatprep.subr.bf16.mxu0 0
    %12346 = vmatpush1.bf16.msra.mxu0 %v12276
    %12347 = vmatprep.subr.bf16.mxu0 0
    %12348 = vmatpush1.bf16.msra.mxu0 %v12277
    %12349 = vmatprep.mubr.bf16.mxu0 %v12152
    %12350 = vmatmul.mubr.bf16.gmra.mrb[0].mxu0 %v12151
    %v12351 = vpop.f32.mrb[0].mxu0
    %v12352 = vadd.f32 0.0, %v12351
    %v12353 = vpop.f32.mrb[0].mxu0
    %v12354 = vpop.f32.mrb[0].mxu0
    %v12355 = vpop.f32.mrb[0].mxu0
    %12356 = vdwg.mxu0
    %12357 = vmatprep.subr.bf16.mxu0 0
    %12358 = vmatpush1.bf16.msra.mxu0 %v12278
    %12359 = vmatprep.subr.bf16.mxu0 0
    %12360 = vmatpush1.bf16.msra.mxu0 %v12279
    %12361 = vmatprep.subr.bf16.mxu0 0
    %12362 = vmatpush1.bf16.msra.mxu0 %v12280
    %12363 = vmatprep.subr.bf16.mxu0 0
    %12364 = vmatpush1.bf16.msra.mxu0 %v12281
    %12365 = vmatprep.subr.bf16.mxu0 0
    %12366 = vmatpush1.bf16.msra.mxu0 %v12282
    %12367 = vmatprep.subr.bf16.mxu0 0
    %12368 = vmatpush1.bf16.msra.mxu0 %v12283
    %12369 = vmatprep.subr.bf16.mxu0 0
    %12370 = vmatpush1.bf16.msra.mxu0 %v12284
    %12371 = vmatprep.subr.bf16.mxu0 0
    %12372 = vmatpush1.bf16.msra.mxu0 %v12285
    %12373 = vmatprep.subr.bf16.mxu0 0
    %12374 = vmatpush1.bf16.msra.mxu0 %v12286
    %12375 = vmatprep.subr.bf16.mxu0 0
    %12376 = vmatpush1.bf16.msra.mxu0 %v12287
    %12377 = vmatprep.subr.bf16.mxu0 0
    %12378 = vmatpush1.bf16.msra.mxu0 0
    %12379 = vmatprep.subr.bf16.mxu0 0
    %12380 = vmatpush1.bf16.msra.mxu0 0
    %12381 = vmatprep.subr.bf16.mxu0 0
    %12382 = vmatpush1.bf16.msra.mxu0 0
    %12383 = vmatprep.subr.bf16.mxu0 0
    %12384 = vmatpush1.bf16.msra.mxu0 0
    %12385 = vmatprep.subr.bf16.mxu0 0
    %12386 = vmatpush1.bf16.msra.mxu0 0
    %12387 = vmatprep.subr.bf16.mxu0 0
    %12388 = vmatpush1.bf16.msra.mxu0 0
    %12389 = vmatprep.mubr.bf16.mxu0 %v12315
    %12390 = vmatmul.mubr.bf16.gmra.mrb[0].mxu0 %v12153
    %v12391 = vpop.f32.mrb[0].mxu0
    %v12392 = vadd.f32 %v12352, %v12391
    %v12393 = vpop.f32.mrb[0].mxu0
    %v12394 = vpop.f32.mrb[0].mxu0
    %v12395 = vpop.f32.mrb[0].mxu0
    %12396 = vdwg.mxu0
    %v12397 = vadd.f32 %v12069, %v12392
    %s12398 = scalar_lea.vmem [#allocation10], 624
    %v12399 = vld [vmem:[%s12398] sm:$0xf]
    %v12400 = vld [vmem:[%s12398 + $0x4] sm:$0xf]
    %v12401 = vld [vmem:[%s12398 + $0x8] sm:$0xf]
    %v12402 = vld [vmem:[%s12398 + $0xc] sm:$0xf]
    %v12403 = vld [vmem:[%s12398 + $0x10] sm:$0xf]
    %v12404 = vld [vmem:[%s12398 + $0x14] sm:$0xf]
    %v12405 = vld [vmem:[%s12398 + $0x18] sm:$0xf]
    %v12406 = vld [vmem:[%s12398 + $0x1c] sm:$0xf]
    %v12407 = vld [vmem:[%s12398 + $0x20] sm:$0xf]
    %v12408 = vld [vmem:[%s12398 + $0x24] sm:$0xf]
    %v12409 = vld [vmem:[%s12398 + $0x28] sm:$0xf]
    %v12410 = vld [vmem:[%s12398 + $0x2c] sm:$0xf]
    %v12411 = vld [vmem:[%s12398 + $0x30] sm:$0xf]
    %v12412 = vld [vmem:[%s12398 + $0x34] sm:$0xf]
    %v12413 = vld [vmem:[%s12398 + $0x38] sm:$0xf]
    %v12414 = vld [vmem:[%s12398 + $0x3c] sm:$0xf]
    %v12415 = vld [vmem:[%s12398 + $0x40] sm:$0xf]
    %v12416 = vld [vmem:[%s12398 + $0x44] sm:$0xf]
    %v12417 = vld [vmem:[%s12398 + $0x48] sm:$0xf]
    %v12418 = vld [vmem:[%s12398 + $0x4c] sm:$0xf]
    %v12419 = vld [vmem:[%s12398 + $0x50] sm:$0xf]
    %v12420 = vld [vmem:[%s12398 + $0x54] sm:$0xf]
    %v12421 = vld [vmem:[%s12398 + $0x58] sm:$0xf]
    %v12422 = vld [vmem:[%s12398 + $0x5c] sm:$0xf]
    %v12423 = vld [vmem:[%s12398 + $0x60] sm:$0xf]
    %v12424 = vld [vmem:[%s12398 + $0x64] sm:$0xf]
    %v12425 = vld [vmem:[%s12398 + $0x68] sm:$0xf]
    %v12426 = vld [vmem:[%s12398 + $0x6c] sm:$0xf]
    %v12427 = vld [vmem:[%s12398 + $0x70] sm:$0xf]
    %v12428 = vld [vmem:[%s12398 + $0x74] sm:$0xf]
    %v12429 = vld [vmem:[%s12398 + $0x78] sm:$0xf]
    %v12430 = vld [vmem:[%s12398 + $0x7c] sm:$0xf]
    %v12431 = vld [vmem:[%s12398 + $0x80] sm:$0xf]
    %v12432 = vld [vmem:[%s12398 + $0x84] sm:$0xf]
    %v12433 = vld [vmem:[%s12398 + $0x88] sm:$0xf]
    %v12434 = vld [vmem:[%s12398 + $0x8c] sm:$0xf]
    %v12435 = vld [vmem:[%s12398 + $0x90] sm:$0xf]
    %v12436 = vld [vmem:[%s12398 + $0x94] sm:$0xf]
    %v12437 = vld [vmem:[%s12398 + $0x98] sm:$0xf]
    %v12438 = vld [vmem:[%s12398 + $0x9c] sm:$0xf]
    %v12439 = vld [vmem:[%s12398 + $0xa0] sm:$0xf]
    %v12440 = vld [vmem:[%s12398 + $0xa4] sm:$0xf]
    %v12441 = vld [vmem:[%s12398 + $0xa8] sm:$0xf]
    %v12442 = vld [vmem:[%s12398 + $0xac] sm:$0xf]
    %v12443 = vld [vmem:[%s12398 + $0xb0] sm:$0xf]
    %v12444 = vld [vmem:[%s12398 + $0xb4] sm:$0xf]
    %v12445 = vld [vmem:[%s12398 + $0xb8] sm:$0xf]
    %v12446 = vld [vmem:[%s12398 + $0xbc] sm:$0xf]
    %v12447 = vld [vmem:[%s12398 + $0xc0] sm:$0xf]
    %v12448 = vld [vmem:[%s12398 + $0xc4] sm:$0xf]
    %v12449 = vld [vmem:[%s12398 + $0xc8] sm:$0xf]
    %v12450 = vld [vmem:[%s12398 + $0xcc] sm:$0xf]
    %v12459 = vunpack.c.l.b16 %v11385
    %v12460 = vunpack.c.l.b16 %v11386
    %v12461 = vunpack.c.l.b16 %v11387
    %v12462 = vunpack.c.l.b16 %v11388
    %v12463 = vunpack.c.l.b16 %v11413
    %v12464 = vunpack.c.l.b16 %v11414
    %v12465 = vunpack.c.l.b16 %v11415
    %v12466 = vunpack.c.l.b16 %v11416
    %v12467 = vrot.slane %v12463, 7
    %v12468 = vsel %vm3116, %v12467, %v12459
    %v12469 = vrot.slane %v12464, 7
    %v12470 = vsel %vm3116, %v12469, %v12460
    %v12471 = vrot.slane %v12465, 7
    %v12472 = vsel %vm3116, %v12471, %v12461
    %v12473 = vrot.slane %v12466, 7
    %v12474 = vsel %vm3116, %v12473, %v12462
    %v12475 = vpack.c.b16 %v12468, %v12468
    %v12476 = vpack.c.b16 %v12470, %v12470
    %v12477 = vpack.c.b16 %v12472, %v12472
    %v12478 = vpack.c.b16 %v12474, %v12474
    %v12534 = vunpack.c.l.b16 %v12399
    %v12535 = vunpack.c.l.b16 %v12400
    %v12536 = vunpack.c.l.b16 %v12401
    %v12537 = vunpack.c.l.b16 %v12402
    %v12538 = vunpack.c.l.b16 %v12403
    %v12539 = vunpack.c.l.b16 %v12404
    %v12540 = vunpack.c.l.b16 %v12405
    %v12541 = vunpack.c.l.b16 %v12406
    %v12542 = vunpack.c.l.b16 %v12407
    %v12543 = vunpack.c.l.b16 %v12408
    %v12544 = vunpack.c.l.b16 %v12409
    %v12545 = vunpack.c.l.b16 %v12410
    %v12546 = vunpack.c.l.b16 %v12411
    %v12547 = vunpack.c.l.b16 %v12412
    %v12548 = vunpack.c.l.b16 %v12413
    %v12549 = vunpack.c.l.b16 %v12414
    %v12550 = vunpack.c.l.b16 %v12415
    %v12551 = vunpack.c.l.b16 %v12416
    %v12552 = vunpack.c.l.b16 %v12417
    %v12553 = vunpack.c.l.b16 %v12418
    %v12554 = vunpack.c.l.b16 %v12419
    %v12555 = vunpack.c.l.b16 %v12420
    %v12556 = vunpack.c.l.b16 %v12421
    %v12557 = vunpack.c.l.b16 %v12422
    %v12558 = vunpack.c.l.b16 %v12423
    %v12559 = vunpack.c.l.b16 %v12424
    %v12560 = vunpack.c.l.b16 %v12425
    %v12561 = vunpack.c.l.b16 %v12426
    %v12562 = vunpack.c.l.b16 %v12427
    %v12563 = vunpack.c.l.b16 %v12428
    %v12564 = vunpack.c.l.b16 %v12429
    %v12565 = vunpack.c.l.b16 %v12430
    %v12566 = vunpack.c.l.b16 %v12431
    %v12567 = vunpack.c.l.b16 %v12432
    %v12568 = vunpack.c.l.b16 %v12433
    %v12569 = vunpack.c.l.b16 %v12434
    %v12570 = vunpack.c.l.b16 %v12435
    %v12571 = vunpack.c.l.b16 %v12436
    %v12572 = vunpack.c.l.b16 %v12437
    %v12573 = vunpack.c.l.b16 %v12438
    %v12574 = vunpack.c.l.b16 %v12439
    %v12575 = vunpack.c.l.b16 %v12440
    %v12576 = vunpack.c.l.b16 %v12441
    %v12577 = vunpack.c.l.b16 %v12442
    %v12578 = vunpack.c.l.b16 %v12443
    %v12579 = vunpack.c.l.b16 %v12444
    %v12580 = vunpack.c.l.b16 %v12445
    %v12581 = vunpack.c.l.b16 %v12446
    %v12582 = vunpack.c.l.b16 %v12447
    %v12583 = vunpack.c.l.b16 %v12448
    %v12584 = vunpack.c.l.b16 %v12449
    %v12585 = vunpack.c.l.b16 %v12450
    %v12586 = vpack.c.b16 %v12535, %v12534
    %v12587 = vpack.c.b16 %v12537, %v12536
    %v12588 = vpack.c.b16 %v12539, %v12538
    %v12589 = vpack.c.b16 %v12541, %v12540
    %v12590 = vpack.c.b16 %v12543, %v12542
    %v12591 = vpack.c.b16 %v12545, %v12544
    %v12592 = vpack.c.b16 %v12547, %v12546
    %v12593 = vpack.c.b16 %v12549, %v12548
    %v12594 = vpack.c.b16 %v12551, %v12550
    %v12595 = vpack.c.b16 %v12553, %v12552
    %v12596 = vpack.c.b16 %v12555, %v12554
    %v12597 = vpack.c.b16 %v12557, %v12556
    %v12598 = vpack.c.b16 %v12559, %v12558
    %v12599 = vpack.c.b16 %v12561, %v12560
    %v12600 = vpack.c.b16 %v12563, %v12562
    %v12601 = vpack.c.b16 %v12565, %v12564
    %v12602 = vpack.c.b16 %v12567, %v12566
    %v12603 = vpack.c.b16 %v12569, %v12568
    %v12604 = vpack.c.b16 %v12571, %v12570
    %v12605 = vpack.c.b16 %v12573, %v12572
    %v12606 = vpack.c.b16 %v12575, %v12574
    %v12607 = vpack.c.b16 %v12577, %v12576
    %v12608 = vpack.c.b16 %v12579, %v12578
    %v12609 = vpack.c.b16 %v12581, %v12580
    %v12610 = vpack.c.b16 %v12583, %v12582
    %v12611 = vpack.c.b16 %v12585, %v12584
    %v12639 = vsel %vm547, %v12478, 0
    %12641 = vmatprep.subr.bf16.mxu0 0
    %12642 = vmatpush1.bf16.msra.mxu0 %v12586
    %12643 = vmatprep.subr.bf16.mxu0 0
    %12644 = vmatpush1.bf16.msra.mxu0 %v12587
    %12645 = vmatprep.subr.bf16.mxu0 0
    %12646 = vmatpush1.bf16.msra.mxu0 %v12588
    %12647 = vmatprep.subr.bf16.mxu0 0
    %12648 = vmatpush1.bf16.msra.mxu0 %v12589
    %12649 = vmatprep.subr.bf16.mxu0 0
    %12650 = vmatpush1.bf16.msra.mxu0 %v12590
    %12651 = vmatprep.subr.bf16.mxu0 0
    %12652 = vmatpush1.bf16.msra.mxu0 %v12591
    %12653 = vmatprep.subr.bf16.mxu0 0
    %12654 = vmatpush1.bf16.msra.mxu0 %v12592
    %12655 = vmatprep.subr.bf16.mxu0 0
    %12656 = vmatpush1.bf16.msra.mxu0 %v12593
    %12657 = vmatprep.subr.bf16.mxu0 0
    %12658 = vmatpush1.bf16.msra.mxu0 %v12594
    %12659 = vmatprep.subr.bf16.mxu0 0
    %12660 = vmatpush1.bf16.msra.mxu0 %v12595
    %12661 = vmatprep.subr.bf16.mxu0 0
    %12662 = vmatpush1.bf16.msra.mxu0 %v12596
    %12663 = vmatprep.subr.bf16.mxu0 0
    %12664 = vmatpush1.bf16.msra.mxu0 %v12597
    %12665 = vmatprep.subr.bf16.mxu0 0
    %12666 = vmatpush1.bf16.msra.mxu0 %v12598
    %12667 = vmatprep.subr.bf16.mxu0 0
    %12668 = vmatpush1.bf16.msra.mxu0 %v12599
    %12669 = vmatprep.subr.bf16.mxu0 0
    %12670 = vmatpush1.bf16.msra.mxu0 %v12600
    %12671 = vmatprep.subr.bf16.mxu0 0
    %12672 = vmatpush1.bf16.msra.mxu0 %v12601
    %12673 = vmatprep.mubr.bf16.mxu0 %v12476
    %12674 = vmatmul.mubr.bf16.gmra.mrb[0].mxu0 %v12475
    %v12675 = vpop.f32.mrb[0].mxu0
    %v12676 = vadd.f32 0.0, %v12675
    %v12677 = vpop.f32.mrb[0].mxu0
    %v12678 = vpop.f32.mrb[0].mxu0
    %v12679 = vpop.f32.mrb[0].mxu0
    %12680 = vdwg.mxu0
    %12681 = vmatprep.subr.bf16.mxu0 0
    %12682 = vmatpush1.bf16.msra.mxu0 %v12602
    %12683 = vmatprep.subr.bf16.mxu0 0
    %12684 = vmatpush1.bf16.msra.mxu0 %v12603
    %12685 = vmatprep.subr.bf16.mxu0 0
    %12686 = vmatpush1.bf16.msra.mxu0 %v12604
    %12687 = vmatprep.subr.bf16.mxu0 0
    %12688 = vmatpush1.bf16.msra.mxu0 %v12605
    %12689 = vmatprep.subr.bf16.mxu0 0
    %12690 = vmatpush1.bf16.msra.mxu0 %v12606
    %12691 = vmatprep.subr.bf16.mxu0 0
    %12692 = vmatpush1.bf16.msra.mxu0 %v12607
    %12693 = vmatprep.subr.bf16.mxu0 0
    %12694 = vmatpush1.bf16.msra.mxu0 %v12608
    %12695 = vmatprep.subr.bf16.mxu0 0
    %12696 = vmatpush1.bf16.msra.mxu0 %v12609
    %12697 = vmatprep.subr.bf16.mxu0 0
    %12698 = vmatpush1.bf16.msra.mxu0 %v12610
    %12699 = vmatprep.subr.bf16.mxu0 0
    %12700 = vmatpush1.bf16.msra.mxu0 %v12611
    %12701 = vmatprep.subr.bf16.mxu0 0
    %12702 = vmatpush1.bf16.msra.mxu0 0
    %12703 = vmatprep.subr.bf16.mxu0 0
    %12704 = vmatpush1.bf16.msra.mxu0 0
    %12705 = vmatprep.subr.bf16.mxu0 0
    %12706 = vmatpush1.bf16.msra.mxu0 0
    %12707 = vmatprep.subr.bf16.mxu0 0
    %12708 = vmatpush1.bf16.msra.mxu0 0
    %12709 = vmatprep.subr.bf16.mxu0 0
    %12710 = vmatpush1.bf16.msra.mxu0 0
    %12711 = vmatprep.subr.bf16.mxu0 0
    %12712 = vmatpush1.bf16.msra.mxu0 0
    %12713 = vmatprep.mubr.bf16.mxu0 %v12639
    %12714 = vmatmul.mubr.bf16.gmra.mrb[0].mxu0 %v12477
    %v12715 = vpop.f32.mrb[0].mxu0
    %v12716 = vadd.f32 %v12676, %v12715
    %v12717 = vpop.f32.mrb[0].mxu0
    %v12718 = vpop.f32.mrb[0].mxu0
    %v12719 = vpop.f32.mrb[0].mxu0
    %12720 = vdwg.mxu0
    %v12721 = vadd.f32 %v12397, %v12716
    %s12722 = scalar_lea.vmem [#allocation10], 832
    %v12723 = vld [vmem:[%s12722] sm:$0xf]
    %v12724 = vld [vmem:[%s12722 + $0x4] sm:$0xf]
    %v12725 = vld [vmem:[%s12722 + $0x8] sm:$0xf]
    %v12726 = vld [vmem:[%s12722 + $0xc] sm:$0xf]
    %v12727 = vld [vmem:[%s12722 + $0x10] sm:$0xf]
    %v12728 = vld [vmem:[%s12722 + $0x14] sm:$0xf]
    %v12729 = vld [vmem:[%s12722 + $0x18] sm:$0xf]
    %v12730 = vld [vmem:[%s12722 + $0x1c] sm:$0xf]
    %v12731 = vld [vmem:[%s12722 + $0x20] sm:$0xf]
    %v12732 = vld [vmem:[%s12722 + $0x24] sm:$0xf]
    %v12733 = vld [vmem:[%s12722 + $0x28] sm:$0xf]
    %v12734 = vld [vmem:[%s12722 + $0x2c] sm:$0xf]
    %v12735 = vld [vmem:[%s12722 + $0x30] sm:$0xf]
    %v12736 = vld [vmem:[%s12722 + $0x34] sm:$0xf]
    %v12737 = vld [vmem:[%s12722 + $0x38] sm:$0xf]
    %v12738 = vld [vmem:[%s12722 + $0x3c] sm:$0xf]
    %v12739 = vld [vmem:[%s12722 + $0x40] sm:$0xf]
    %v12740 = vld [vmem:[%s12722 + $0x44] sm:$0xf]
    %v12741 = vld [vmem:[%s12722 + $0x48] sm:$0xf]
    %v12742 = vld [vmem:[%s12722 + $0x4c] sm:$0xf]
    %v12743 = vld [vmem:[%s12722 + $0x50] sm:$0xf]
    %v12744 = vld [vmem:[%s12722 + $0x54] sm:$0xf]
    %v12745 = vld [vmem:[%s12722 + $0x58] sm:$0xf]
    %v12746 = vld [vmem:[%s12722 + $0x5c] sm:$0xf]
    %v12747 = vld [vmem:[%s12722 + $0x60] sm:$0xf]
    %v12748 = vld [vmem:[%s12722 + $0x64] sm:$0xf]
    %v12749 = vld [vmem:[%s12722 + $0x68] sm:$0xf]
    %v12750 = vld [vmem:[%s12722 + $0x6c] sm:$0xf]
    %v12751 = vld [vmem:[%s12722 + $0x70] sm:$0xf]
    %v12752 = vld [vmem:[%s12722 + $0x74] sm:$0xf]
    %v12753 = vld [vmem:[%s12722 + $0x78] sm:$0xf]
    %v12754 = vld [vmem:[%s12722 + $0x7c] sm:$0xf]
    %v12755 = vld [vmem:[%s12722 + $0x80] sm:$0xf]
    %v12756 = vld [vmem:[%s12722 + $0x84] sm:$0xf]
    %v12757 = vld [vmem:[%s12722 + $0x88] sm:$0xf]
    %v12758 = vld [vmem:[%s12722 + $0x8c] sm:$0xf]
    %v12759 = vld [vmem:[%s12722 + $0x90] sm:$0xf]
    %v12760 = vld [vmem:[%s12722 + $0x94] sm:$0xf]
    %v12761 = vld [vmem:[%s12722 + $0x98] sm:$0xf]
    %v12762 = vld [vmem:[%s12722 + $0x9c] sm:$0xf]
    %v12763 = vld [vmem:[%s12722 + $0xa0] sm:$0xf]
    %v12764 = vld [vmem:[%s12722 + $0xa4] sm:$0xf]
    %v12765 = vld [vmem:[%s12722 + $0xa8] sm:$0xf]
    %v12766 = vld [vmem:[%s12722 + $0xac] sm:$0xf]
    %v12767 = vld [vmem:[%s12722 + $0xb0] sm:$0xf]
    %v12768 = vld [vmem:[%s12722 + $0xb4] sm:$0xf]
    %v12769 = vld [vmem:[%s12722 + $0xb8] sm:$0xf]
    %v12770 = vld [vmem:[%s12722 + $0xbc] sm:$0xf]
    %v12771 = vld [vmem:[%s12722 + $0xc0] sm:$0xf]
    %v12772 = vld [vmem:[%s12722 + $0xc4] sm:$0xf]
    %v12773 = vld [vmem:[%s12722 + $0xc8] sm:$0xf]
    %v12774 = vld [vmem:[%s12722 + $0xcc] sm:$0xf]
    %v12783 = vunpack.c.l.b16 %v11389
    %v12784 = vunpack.c.l.b16 %v11390
    %v12785 = vunpack.c.l.b16 %v11391
    %v12786 = vunpack.c.l.b16 %v11392
    %v12787 = vunpack.c.l.b16 %v11417
    %v12788 = vunpack.c.l.b16 %v11418
    %v12789 = vunpack.c.l.b16 %v11419
    %v12790 = vunpack.c.l.b16 %v11420
    %v12791 = vrot.slane %v12787, 7
    %v12792 = vsel %vm3116, %v12791, %v12783
    %v12793 = vrot.slane %v12788, 7
    %v12794 = vsel %vm3116, %v12793, %v12784
    %v12795 = vrot.slane %v12789, 7
    %v12796 = vsel %vm3116, %v12795, %v12785
    %v12797 = vrot.slane %v12790, 7
    %v12798 = vsel %vm3116, %v12797, %v12786
    %v12799 = vpack.c.b16 %v12792, %v12792
    %v12800 = vpack.c.b16 %v12794, %v12794
    %v12801 = vpack.c.b16 %v12796, %v12796
    %v12802 = vpack.c.b16 %v12798, %v12798
    %v12858 = vunpack.c.l.b16 %v12723
    %v12859 = vunpack.c.l.b16 %v12724
    %v12860 = vunpack.c.l.b16 %v12725
    %v12861 = vunpack.c.l.b16 %v12726
    %v12862 = vunpack.c.l.b16 %v12727
    %v12863 = vunpack.c.l.b16 %v12728
    %v12864 = vunpack.c.l.b16 %v12729
    %v12865 = vunpack.c.l.b16 %v12730
    %v12866 = vunpack.c.l.b16 %v12731
    %v12867 = vunpack.c.l.b16 %v12732
    %v12868 = vunpack.c.l.b16 %v12733
    %v12869 = vunpack.c.l.b16 %v12734
    %v12870 = vunpack.c.l.b16 %v12735
    %v12871 = vunpack.c.l.b16 %v12736
    %v12872 = vunpack.c.l.b16 %v12737
    %v12873 = vunpack.c.l.b16 %v12738
    %v12874 = vunpack.c.l.b16 %v12739
    %v12875 = vunpack.c.l.b16 %v12740
    %v12876 = vunpack.c.l.b16 %v12741
    %v12877 = vunpack.c.l.b16 %v12742
    %v12878 = vunpack.c.l.b16 %v12743
    %v12879 = vunpack.c.l.b16 %v12744
    %v12880 = vunpack.c.l.b16 %v12745
    %v12881 = vunpack.c.l.b16 %v12746
    %v12882 = vunpack.c.l.b16 %v12747
    %v12883 = vunpack.c.l.b16 %v12748
    %v12884 = vunpack.c.l.b16 %v12749
    %v12885 = vunpack.c.l.b16 %v12750
    %v12886 = vunpack.c.l.b16 %v12751
    %v12887 = vunpack.c.l.b16 %v12752
    %v12888 = vunpack.c.l.b16 %v12753
    %v12889 = vunpack.c.l.b16 %v12754
    %v12890 = vunpack.c.l.b16 %v12755
    %v12891 = vunpack.c.l.b16 %v12756
    %v12892 = vunpack.c.l.b16 %v12757
    %v12893 = vunpack.c.l.b16 %v12758
    %v12894 = vunpack.c.l.b16 %v12759
    %v12895 = vunpack.c.l.b16 %v12760
    %v12896 = vunpack.c.l.b16 %v12761
    %v12897 = vunpack.c.l.b16 %v12762
    %v12898 = vunpack.c.l.b16 %v12763
    %v12899 = vunpack.c.l.b16 %v12764
    %v12900 = vunpack.c.l.b16 %v12765
    %v12901 = vunpack.c.l.b16 %v12766
    %v12902 = vunpack.c.l.b16 %v12767
    %v12903 = vunpack.c.l.b16 %v12768
    %v12904 = vunpack.c.l.b16 %v12769
    %v12905 = vunpack.c.l.b16 %v12770
    %v12906 = vunpack.c.l.b16 %v12771
    %v12907 = vunpack.c.l.b16 %v12772
    %v12908 = vunpack.c.l.b16 %v12773
    %v12909 = vunpack.c.l.b16 %v12774
    %v12910 = vpack.c.b16 %v12859, %v12858
    %v12911 = vpack.c.b16 %v12861, %v12860
    %v12912 = vpack.c.b16 %v12863, %v12862
    %v12913 = vpack.c.b16 %v12865, %v12864
    %v12914 = vpack.c.b16 %v12867, %v12866
    %v12915 = vpack.c.b16 %v12869, %v12868
    %v12916 = vpack.c.b16 %v12871, %v12870
    %v12917 = vpack.c.b16 %v12873, %v12872
    %v12918 = vpack.c.b16 %v12875, %v12874
    %v12919 = vpack.c.b16 %v12877, %v12876
    %v12920 = vpack.c.b16 %v12879, %v12878
    %v12921 = vpack.c.b16 %v12881, %v12880
    %v12922 = vpack.c.b16 %v12883, %v12882
    %v12923 = vpack.c.b16 %v12885, %v12884
    %v12924 = vpack.c.b16 %v12887, %v12886
    %v12925 = vpack.c.b16 %v12889, %v12888
    %v12926 = vpack.c.b16 %v12891, %v12890
    %v12927 = vpack.c.b16 %v12893, %v12892
    %v12928 = vpack.c.b16 %v12895, %v12894
    %v12929 = vpack.c.b16 %v12897, %v12896
    %v12930 = vpack.c.b16 %v12899, %v12898
    %v12931 = vpack.c.b16 %v12901, %v12900
    %v12932 = vpack.c.b16 %v12903, %v12902
    %v12933 = vpack.c.b16 %v12905, %v12904
    %v12934 = vpack.c.b16 %v12907, %v12906
    %v12935 = vpack.c.b16 %v12909, %v12908
    %v12963 = vsel %vm547, %v12802, 0
    %12965 = vmatprep.subr.bf16.mxu0 0
    %12966 = vmatpush1.bf16.msra.mxu0 %v12910
    %12967 = vmatprep.subr.bf16.mxu0 0
    %12968 = vmatpush1.bf16.msra.mxu0 %v12911
    %12969 = vmatprep.subr.bf16.mxu0 0
    %12970 = vmatpush1.bf16.msra.mxu0 %v12912
    %12971 = vmatprep.subr.bf16.mxu0 0
    %12972 = vmatpush1.bf16.msra.mxu0 %v12913
    %12973 = vmatprep.subr.bf16.mxu0 0
    %12974 = vmatpush1.bf16.msra.mxu0 %v12914
    %12975 = vmatprep.subr.bf16.mxu0 0
    %12976 = vmatpush1.bf16.msra.mxu0 %v12915
    %12977 = vmatprep.subr.bf16.mxu0 0
    %12978 = vmatpush1.bf16.msra.mxu0 %v12916
    %12979 = vmatprep.subr.bf16.mxu0 0
    %12980 = vmatpush1.bf16.msra.mxu0 %v12917
    %12981 = vmatprep.subr.bf16.mxu0 0
    %12982 = vmatpush1.bf16.msra.mxu0 %v12918
    %12983 = vmatprep.subr.bf16.mxu0 0
    %12984 = vmatpush1.bf16.msra.mxu0 %v12919
    %12985 = vmatprep.subr.bf16.mxu0 0
    %12986 = vmatpush1.bf16.msra.mxu0 %v12920
    %12987 = vmatprep.subr.bf16.mxu0 0
    %12988 = vmatpush1.bf16.msra.mxu0 %v12921
    %12989 = vmatprep.subr.bf16.mxu0 0
    %12990 = vmatpush1.bf16.msra.mxu0 %v12922
    %12991 = vmatprep.subr.bf16.mxu0 0
    %12992 = vmatpush1.bf16.msra.mxu0 %v12923
    %12993 = vmatprep.subr.bf16.mxu0 0
    %12994 = vmatpush1.bf16.msra.mxu0 %v12924
    %12995 = vmatprep.subr.bf16.mxu0 0
    %12996 = vmatpush1.bf16.msra.mxu0 %v12925
    %12997 = vmatprep.mubr.bf16.mxu0 %v12800
    %12998 = vmatmul.mubr.bf16.gmra.mrb[0].mxu0 %v12799
    %v12999 = vpop.f32.mrb[0].mxu0
    %v13000 = vadd.f32 0.0, %v12999
    %v13001 = vpop.f32.mrb[0].mxu0
    %v13002 = vpop.f32.mrb[0].mxu0
    %v13003 = vpop.f32.mrb[0].mxu0
    %13004 = vdwg.mxu0
    %13005 = vmatprep.subr.bf16.mxu0 0
    %13006 = vmatpush1.bf16.msra.mxu0 %v12926
    %13007 = vmatprep.subr.bf16.mxu0 0
    %13008 = vmatpush1.bf16.msra.mxu0 %v12927
    %13009 = vmatprep.subr.bf16.mxu0 0
    %13010 = vmatpush1.bf16.msra.mxu0 %v12928
    %13011 = vmatprep.subr.bf16.mxu0 0
    %13012 = vmatpush1.bf16.msra.mxu0 %v12929
    %13013 = vmatprep.subr.bf16.mxu0 0
    %13014 = vmatpush1.bf16.msra.mxu0 %v12930
    %13015 = vmatprep.subr.bf16.mxu0 0
    %13016 = vmatpush1.bf16.msra.mxu0 %v12931
    %13017 = vmatprep.subr.bf16.mxu0 0
    %13018 = vmatpush1.bf16.msra.mxu0 %v12932
    %13019 = vmatprep.subr.bf16.mxu0 0
    %13020 = vmatpush1.bf16.msra.mxu0 %v12933
    %13021 = vmatprep.subr.bf16.mxu0 0
    %13022 = vmatpush1.bf16.msra.mxu0 %v12934
    %13023 = vmatprep.subr.bf16.mxu0 0
    %13024 = vmatpush1.bf16.msra.mxu0 %v12935
    %13025 = vmatprep.subr.bf16.mxu0 0
    %13026 = vmatpush1.bf16.msra.mxu0 0
    %13027 = vmatprep.subr.bf16.mxu0 0
    %13028 = vmatpush1.bf16.msra.mxu0 0
    %13029 = vmatprep.subr.bf16.mxu0 0
    %13030 = vmatpush1.bf16.msra.mxu0 0
    %13031 = vmatprep.subr.bf16.mxu0 0
    %13032 = vmatpush1.bf16.msra.mxu0 0
    %13033 = vmatprep.subr.bf16.mxu0 0
    %13034 = vmatpush1.bf16.msra.mxu0 0
    %13035 = vmatprep.subr.bf16.mxu0 0
    %13036 = vmatpush1.bf16.msra.mxu0 0
    %13037 = vmatprep.mubr.bf16.mxu0 %v12963
    %13038 = vmatmul.mubr.bf16.gmra.mrb[0].mxu0 %v12801
    %v13039 = vpop.f32.mrb[0].mxu0
    %v13040 = vadd.f32 %v13000, %v13039
    %v13041 = vpop.f32.mrb[0].mxu0
    %v13042 = vpop.f32.mrb[0].mxu0
    %v13043 = vpop.f32.mrb[0].mxu0
    %13044 = vdwg.mxu0
    %v13045 = vadd.f32 %v12721, %v13040
    %s13046 = scalar_lea.vmem [#allocation10], 1040
    %v13047 = vld [vmem:[%s13046] sm:$0xf]
    %v13048 = vld [vmem:[%s13046 + $0x4] sm:$0xf]
    %v13049 = vld [vmem:[%s13046 + $0x8] sm:$0xf]
    %v13050 = vld [vmem:[%s13046 + $0xc] sm:$0xf]
    %v13051 = vld [vmem:[%s13046 + $0x10] sm:$0xf]
    %v13052 = vld [vmem:[%s13046 + $0x14] sm:$0xf]
    %v13053 = vld [vmem:[%s13046 + $0x18] sm:$0xf]
    %v13054 = vld [vmem:[%s13046 + $0x1c] sm:$0xf]
    %v13055 = vld [vmem:[%s13046 + $0x20] sm:$0xf]
    %v13056 = vld [vmem:[%s13046 + $0x24] sm:$0xf]
    %v13057 = vld [vmem:[%s13046 + $0x28] sm:$0xf]
    %v13058 = vld [vmem:[%s13046 + $0x2c] sm:$0xf]
    %v13059 = vld [vmem:[%s13046 + $0x30] sm:$0xf]
    %v13060 = vld [vmem:[%s13046 + $0x34] sm:$0xf]
    %v13061 = vld [vmem:[%s13046 + $0x38] sm:$0xf]
    %v13062 = vld [vmem:[%s13046 + $0x3c] sm:$0xf]
    %v13063 = vld [vmem:[%s13046 + $0x40] sm:$0xf]
    %v13064 = vld [vmem:[%s13046 + $0x44] sm:$0xf]
    %v13065 = vld [vmem:[%s13046 + $0x48] sm:$0xf]
    %v13066 = vld [vmem:[%s13046 + $0x4c] sm:$0xf]
    %v13067 = vld [vmem:[%s13046 + $0x50] sm:$0xf]
    %v13068 = vld [vmem:[%s13046 + $0x54] sm:$0xf]
    %v13069 = vld [vmem:[%s13046 + $0x58] sm:$0xf]
    %v13070 = vld [vmem:[%s13046 + $0x5c] sm:$0xf]
    %v13071 = vld [vmem:[%s13046 + $0x60] sm:$0xf]
    %v13072 = vld [vmem:[%s13046 + $0x64] sm:$0xf]
    %v13073 = vld [vmem:[%s13046 + $0x68] sm:$0xf]
    %v13074 = vld [vmem:[%s13046 + $0x6c] sm:$0xf]
    %v13075 = vld [vmem:[%s13046 + $0x70] sm:$0xf]
    %v13076 = vld [vmem:[%s13046 + $0x74] sm:$0xf]
    %v13077 = vld [vmem:[%s13046 + $0x78] sm:$0xf]
    %v13078 = vld [vmem:[%s13046 + $0x7c] sm:$0xf]
    %v13079 = vld [vmem:[%s13046 + $0x80] sm:$0xf]
    %v13080 = vld [vmem:[%s13046 + $0x84] sm:$0xf]
    %v13081 = vld [vmem:[%s13046 + $0x88] sm:$0xf]
    %v13082 = vld [vmem:[%s13046 + $0x8c] sm:$0xf]
    %v13083 = vld [vmem:[%s13046 + $0x90] sm:$0xf]
    %v13084 = vld [vmem:[%s13046 + $0x94] sm:$0xf]
    %v13085 = vld [vmem:[%s13046 + $0x98] sm:$0xf]
    %v13086 = vld [vmem:[%s13046 + $0x9c] sm:$0xf]
    %v13087 = vld [vmem:[%s13046 + $0xa0] sm:$0xf]
    %v13088 = vld [vmem:[%s13046 + $0xa4] sm:$0xf]
    %v13089 = vld [vmem:[%s13046 + $0xa8] sm:$0xf]
    %v13090 = vld [vmem:[%s13046 + $0xac] sm:$0xf]
    %v13091 = vld [vmem:[%s13046 + $0xb0] sm:$0xf]
    %v13092 = vld [vmem:[%s13046 + $0xb4] sm:$0xf]
    %v13093 = vld [vmem:[%s13046 + $0xb8] sm:$0xf]
    %v13094 = vld [vmem:[%s13046 + $0xbc] sm:$0xf]
    %v13095 = vld [vmem:[%s13046 + $0xc0] sm:$0xf]
    %v13096 = vld [vmem:[%s13046 + $0xc4] sm:$0xf]
    %v13097 = vld [vmem:[%s13046 + $0xc8] sm:$0xf]
    %v13098 = vld [vmem:[%s13046 + $0xcc] sm:$0xf]
    %v13107 = vunpack.c.l.b16 %v11393
    %v13108 = vunpack.c.l.b16 %v11394
    %v13109 = vunpack.c.l.b16 %v11395
    %v13110 = vunpack.c.l.b16 %v11396
    %v13111 = vunpack.c.l.b16 %v11421
    %v13112 = vunpack.c.l.b16 %v11422
    %v13113 = vunpack.c.l.b16 %v11423
    %v13114 = vunpack.c.l.b16 %v11424
    %v13115 = vrot.slane %v13111, 7
    %v13116 = vsel %vm3116, %v13115, %v13107
    %v13117 = vrot.slane %v13112, 7
    %v13118 = vsel %vm3116, %v13117, %v13108
    %v13119 = vrot.slane %v13113, 7
    %v13120 = vsel %vm3116, %v13119, %v13109
    %v13121 = vrot.slane %v13114, 7
    %v13122 = vsel %vm3116, %v13121, %v13110
    %v13123 = vpack.c.b16 %v13116, %v13116
    %v13124 = vpack.c.b16 %v13118, %v13118
    %v13125 = vpack.c.b16 %v13120, %v13120
    %v13126 = vpack.c.b16 %v13122, %v13122
    %v13182 = vunpack.c.l.b16 %v13047
    %v13183 = vunpack.c.l.b16 %v13048
    %v13184 = vunpack.c.l.b16 %v13049
    %v13185 = vunpack.c.l.b16 %v13050
    %v13186 = vunpack.c.l.b16 %v13051
    %v13187 = vunpack.c.l.b16 %v13052
    %v13188 = vunpack.c.l.b16 %v13053
    %v13189 = vunpack.c.l.b16 %v13054
    %v13190 = vunpack.c.l.b16 %v13055
    %v13191 = vunpack.c.l.b16 %v13056
    %v13192 = vunpack.c.l.b16 %v13057
    %v13193 = vunpack.c.l.b16 %v13058
    %v13194 = vunpack.c.l.b16 %v13059
    %v13195 = vunpack.c.l.b16 %v13060
    %v13196 = vunpack.c.l.b16 %v13061
    %v13197 = vunpack.c.l.b16 %v13062
    %v13198 = vunpack.c.l.b16 %v13063
    %v13199 = vunpack.c.l.b16 %v13064
    %v13200 = vunpack.c.l.b16 %v13065
    %v13201 = vunpack.c.l.b16 %v13066
    %v13202 = vunpack.c.l.b16 %v13067
    %v13203 = vunpack.c.l.b16 %v13068
    %v13204 = vunpack.c.l.b16 %v13069
    %v13205 = vunpack.c.l.b16 %v13070
    %v13206 = vunpack.c.l.b16 %v13071
    %v13207 = vunpack.c.l.b16 %v13072
    %v13208 = vunpack.c.l.b16 %v13073
    %v13209 = vunpack.c.l.b16 %v13074
    %v13210 = vunpack.c.l.b16 %v13075
    %v13211 = vunpack.c.l.b16 %v13076
    %v13212 = vunpack.c.l.b16 %v13077
    %v13213 = vunpack.c.l.b16 %v13078
    %v13214 = vunpack.c.l.b16 %v13079
    %v13215 = vunpack.c.l.b16 %v13080
    %v13216 = vunpack.c.l.b16 %v13081
    %v13217 = vunpack.c.l.b16 %v13082
    %v13218 = vunpack.c.l.b16 %v13083
    %v13219 = vunpack.c.l.b16 %v13084
    %v13220 = vunpack.c.l.b16 %v13085
    %v13221 = vunpack.c.l.b16 %v13086
    %v13222 = vunpack.c.l.b16 %v13087
    %v13223 = vunpack.c.l.b16 %v13088
    %v13224 = vunpack.c.l.b16 %v13089
    %v13225 = vunpack.c.l.b16 %v13090
    %v13226 = vunpack.c.l.b16 %v13091
    %v13227 = vunpack.c.l.b16 %v13092
    %v13228 = vunpack.c.l.b16 %v13093
    %v13229 = vunpack.c.l.b16 %v13094
    %v13230 = vunpack.c.l.b16 %v13095
    %v13231 = vunpack.c.l.b16 %v13096
    %v13232 = vunpack.c.l.b16 %v13097
    %v13233 = vunpack.c.l.b16 %v13098
    %v13234 = vpack.c.b16 %v13183, %v13182
    %v13235 = vpack.c.b16 %v13185, %v13184
    %v13236 = vpack.c.b16 %v13187, %v13186
    %v13237 = vpack.c.b16 %v13189, %v13188
    %v13238 = vpack.c.b16 %v13191, %v13190
    %v13239 = vpack.c.b16 %v13193, %v13192
    %v13240 = vpack.c.b16 %v13195, %v13194
    %v13241 = vpack.c.b16 %v13197, %v13196
    %v13242 = vpack.c.b16 %v13199, %v13198
    %v13243 = vpack.c.b16 %v13201, %v13200
    %v13244 = vpack.c.b16 %v13203, %v13202
    %v13245 = vpack.c.b16 %v13205, %v13204
    %v13246 = vpack.c.b16 %v13207, %v13206
    %v13247 = vpack.c.b16 %v13209, %v13208
    %v13248 = vpack.c.b16 %v13211, %v13210
    %v13249 = vpack.c.b16 %v13213, %v13212
    %v13250 = vpack.c.b16 %v13215, %v13214
    %v13251 = vpack.c.b16 %v13217, %v13216
    %v13252 = vpack.c.b16 %v13219, %v13218
    %v13253 = vpack.c.b16 %v13221, %v13220
    %v13254 = vpack.c.b16 %v13223, %v13222
    %v13255 = vpack.c.b16 %v13225, %v13224
    %v13256 = vpack.c.b16 %v13227, %v13226
    %v13257 = vpack.c.b16 %v13229, %v13228
    %v13258 = vpack.c.b16 %v13231, %v13230
    %v13259 = vpack.c.b16 %v13233, %v13232
    %v13287 = vsel %vm547, %v13126, 0
    %13289 = vmatprep.subr.bf16.mxu0 0
    %13290 = vmatpush1.bf16.msra.mxu0 %v13234
    %13291 = vmatprep.subr.bf16.mxu0 0
    %13292 = vmatpush1.bf16.msra.mxu0 %v13235
    %13293 = vmatprep.subr.bf16.mxu0 0
    %13294 = vmatpush1.bf16.msra.mxu0 %v13236
    %13295 = vmatprep.subr.bf16.mxu0 0
    %13296 = vmatpush1.bf16.msra.mxu0 %v13237
    %13297 = vmatprep.subr.bf16.mxu0 0
    %13298 = vmatpush1.bf16.msra.mxu0 %v13238
    %13299 = vmatprep.subr.bf16.mxu0 0
    %13300 = vmatpush1.bf16.msra.mxu0 %v13239
    %13301 = vmatprep.subr.bf16.mxu0 0
    %13302 = vmatpush1.bf16.msra.mxu0 %v13240
    %13303 = vmatprep.subr.bf16.mxu0 0
    %13304 = vmatpush1.bf16.msra.mxu0 %v13241
    %13305 = vmatprep.subr.bf16.mxu0 0
    %13306 = vmatpush1.bf16.msra.mxu0 %v13242
    %13307 = vmatprep.subr.bf16.mxu0 0
    %13308 = vmatpush1.bf16.msra.mxu0 %v13243
    %13309 = vmatprep.subr.bf16.mxu0 0
    %13310 = vmatpush1.bf16.msra.mxu0 %v13244
    %13311 = vmatprep.subr.bf16.mxu0 0
    %13312 = vmatpush1.bf16.msra.mxu0 %v13245
    %13313 = vmatprep.subr.bf16.mxu0 0
    %13314 = vmatpush1.bf16.msra.mxu0 %v13246
    %13315 = vmatprep.subr.bf16.mxu0 0
    %13316 = vmatpush1.bf16.msra.mxu0 %v13247
    %13317 = vmatprep.subr.bf16.mxu0 0
    %13318 = vmatpush1.bf16.msra.mxu0 %v13248
    %13319 = vmatprep.subr.bf16.mxu0 0
    %13320 = vmatpush1.bf16.msra.mxu0 %v13249
    %13321 = vmatprep.mubr.bf16.mxu0 %v13124
    %13322 = vmatmul.mubr.bf16.gmra.mrb[0].mxu0 %v13123
    %v13323 = vpop.f32.mrb[0].mxu0
    %v13324 = vadd.f32 0.0, %v13323
    %v13325 = vpop.f32.mrb[0].mxu0
    %v13326 = vpop.f32.mrb[0].mxu0
    %v13327 = vpop.f32.mrb[0].mxu0
    %13328 = vdwg.mxu0
    %13329 = vmatprep.subr.bf16.mxu0 0
    %13330 = vmatpush1.bf16.msra.mxu0 %v13250
    %13331 = vmatprep.subr.bf16.mxu0 0
    %13332 = vmatpush1.bf16.msra.mxu0 %v13251
    %13333 = vmatprep.subr.bf16.mxu0 0
    %13334 = vmatpush1.bf16.msra.mxu0 %v13252
    %13335 = vmatprep.subr.bf16.mxu0 0
    %13336 = vmatpush1.bf16.msra.mxu0 %v13253
    %13337 = vmatprep.subr.bf16.mxu0 0
    %13338 = vmatpush1.bf16.msra.mxu0 %v13254
    %13339 = vmatprep.subr.bf16.mxu0 0
    %13340 = vmatpush1.bf16.msra.mxu0 %v13255
    %13341 = vmatprep.subr.bf16.mxu0 0
    %13342 = vmatpush1.bf16.msra.mxu0 %v13256
    %13343 = vmatprep.subr.bf16.mxu0 0
    %13344 = vmatpush1.bf16.msra.mxu0 %v13257
    %13345 = vmatprep.subr.bf16.mxu0 0
    %13346 = vmatpush1.bf16.msra.mxu0 %v13258
    %13347 = vmatprep.subr.bf16.mxu0 0
    %13348 = vmatpush1.bf16.msra.mxu0 %v13259
    %13349 = vmatprep.subr.bf16.mxu0 0
    %13350 = vmatpush1.bf16.msra.mxu0 0
    %13351 = vmatprep.subr.bf16.mxu0 0
    %13352 = vmatpush1.bf16.msra.mxu0 0
    %13353 = vmatprep.subr.bf16.mxu0 0
    %13354 = vmatpush1.bf16.msra.mxu0 0
    %13355 = vmatprep.subr.bf16.mxu0 0
    %13356 = vmatpush1.bf16.msra.mxu0 0
    %13357 = vmatprep.subr.bf16.mxu0 0
    %13358 = vmatpush1.bf16.msra.mxu0 0
    %13359 = vmatprep.subr.bf16.mxu0 0
    %13360 = vmatpush1.bf16.msra.mxu0 0
    %13361 = vmatprep.mubr.bf16.mxu0 %v13287
    %13362 = vmatmul.mubr.bf16.gmra.mrb[0].mxu0 %v13125
    %v13363 = vpop.f32.mrb[0].mxu0
    %v13364 = vadd.f32 %v13324, %v13363
    %v13365 = vpop.f32.mrb[0].mxu0
    %v13366 = vpop.f32.mrb[0].mxu0
    %v13367 = vpop.f32.mrb[0].mxu0
    %13368 = vdwg.mxu0
    %v13369 = vadd.f32 %v13045, %v13364
    %s13370 = scalar_lea.vmem [#allocation10], 1248
    %v13371 = vld [vmem:[%s13370] sm:$0xf]
    %v13372 = vld [vmem:[%s13370 + $0x4] sm:$0xf]
    %v13373 = vld [vmem:[%s13370 + $0x8] sm:$0xf]
    %v13374 = vld [vmem:[%s13370 + $0xc] sm:$0xf]
    %v13375 = vld [vmem:[%s13370 + $0x10] sm:$0xf]
    %v13376 = vld [vmem:[%s13370 + $0x14] sm:$0xf]
    %v13377 = vld [vmem:[%s13370 + $0x18] sm:$0xf]
    %v13378 = vld [vmem:[%s13370 + $0x1c] sm:$0xf]
    %v13379 = vld [vmem:[%s13370 + $0x20] sm:$0xf]
    %v13380 = vld [vmem:[%s13370 + $0x24] sm:$0xf]
    %v13381 = vld [vmem:[%s13370 + $0x28] sm:$0xf]
    %v13382 = vld [vmem:[%s13370 + $0x2c] sm:$0xf]
    %v13383 = vld [vmem:[%s13370 + $0x30] sm:$0xf]
    %v13384 = vld [vmem:[%s13370 + $0x34] sm:$0xf]
    %v13385 = vld [vmem:[%s13370 + $0x38] sm:$0xf]
    %v13386 = vld [vmem:[%s13370 + $0x3c] sm:$0xf]
    %v13387 = vld [vmem:[%s13370 + $0x40] sm:$0xf]
    %v13388 = vld [vmem:[%s13370 + $0x44] sm:$0xf]
    %v13389 = vld [vmem:[%s13370 + $0x48] sm:$0xf]
    %v13390 = vld [vmem:[%s13370 + $0x4c] sm:$0xf]
    %v13391 = vld [vmem:[%s13370 + $0x50] sm:$0xf]
    %v13392 = vld [vmem:[%s13370 + $0x54] sm:$0xf]
    %v13393 = vld [vmem:[%s13370 + $0x58] sm:$0xf]
    %v13394 = vld [vmem:[%s13370 + $0x5c] sm:$0xf]
    %v13395 = vld [vmem:[%s13370 + $0x60] sm:$0xf]
    %v13396 = vld [vmem:[%s13370 + $0x64] sm:$0xf]
    %v13397 = vld [vmem:[%s13370 + $0x68] sm:$0xf]
    %v13398 = vld [vmem:[%s13370 + $0x6c] sm:$0xf]
    %v13399 = vld [vmem:[%s13370 + $0x70] sm:$0xf]
    %v13400 = vld [vmem:[%s13370 + $0x74] sm:$0xf]
    %v13401 = vld [vmem:[%s13370 + $0x78] sm:$0xf]
    %v13402 = vld [vmem:[%s13370 + $0x7c] sm:$0xf]
    %v13403 = vld [vmem:[%s13370 + $0x80] sm:$0xf]
    %v13404 = vld [vmem:[%s13370 + $0x84] sm:$0xf]
    %v13405 = vld [vmem:[%s13370 + $0x88] sm:$0xf]
    %v13406 = vld [vmem:[%s13370 + $0x8c] sm:$0xf]
    %v13407 = vld [vmem:[%s13370 + $0x90] sm:$0xf]
    %v13408 = vld [vmem:[%s13370 + $0x94] sm:$0xf]
    %v13409 = vld [vmem:[%s13370 + $0x98] sm:$0xf]
    %v13410 = vld [vmem:[%s13370 + $0x9c] sm:$0xf]
    %v13411 = vld [vmem:[%s13370 + $0xa0] sm:$0xf]
    %v13412 = vld [vmem:[%s13370 + $0xa4] sm:$0xf]
    %v13413 = vld [vmem:[%s13370 + $0xa8] sm:$0xf]
    %v13414 = vld [vmem:[%s13370 + $0xac] sm:$0xf]
    %v13415 = vld [vmem:[%s13370 + $0xb0] sm:$0xf]
    %v13416 = vld [vmem:[%s13370 + $0xb4] sm:$0xf]
    %v13417 = vld [vmem:[%s13370 + $0xb8] sm:$0xf]
    %v13418 = vld [vmem:[%s13370 + $0xbc] sm:$0xf]
    %v13419 = vld [vmem:[%s13370 + $0xc0] sm:$0xf]
    %v13420 = vld [vmem:[%s13370 + $0xc4] sm:$0xf]
    %v13421 = vld [vmem:[%s13370 + $0xc8] sm:$0xf]
    %v13422 = vld [vmem:[%s13370 + $0xcc] sm:$0xf]
    %v13431 = vunpack.c.l.b16 %v11397
    %v13432 = vunpack.c.l.b16 %v11398
    %v13433 = vunpack.c.l.b16 %v11399
    %v13434 = vunpack.c.l.b16 %v11400
    %v13435 = vunpack.c.l.b16 %v11425
    %v13436 = vunpack.c.l.b16 %v11426
    %v13437 = vunpack.c.l.b16 %v11427
    %v13438 = vunpack.c.l.b16 %v11428
    %v13439 = vrot.slane %v13435, 7
    %v13440 = vsel %vm3116, %v13439, %v13431
    %v13441 = vrot.slane %v13436, 7
    %v13442 = vsel %vm3116, %v13441, %v13432
    %v13443 = vrot.slane %v13437, 7
    %v13444 = vsel %vm3116, %v13443, %v13433
    %v13445 = vrot.slane %v13438, 7
    %v13446 = vsel %vm3116, %v13445, %v13434
    %v13447 = vpack.c.b16 %v13440, %v13440
    %v13448 = vpack.c.b16 %v13442, %v13442
    %v13449 = vpack.c.b16 %v13444, %v13444
    %v13450 = vpack.c.b16 %v13446, %v13446
    %v13506 = vunpack.c.l.b16 %v13371
    %v13507 = vunpack.c.l.b16 %v13372
    %v13508 = vunpack.c.l.b16 %v13373
    %v13509 = vunpack.c.l.b16 %v13374
    %v13510 = vunpack.c.l.b16 %v13375
    %v13511 = vunpack.c.l.b16 %v13376
    %v13512 = vunpack.c.l.b16 %v13377
    %v13513 = vunpack.c.l.b16 %v13378
    %v13514 = vunpack.c.l.b16 %v13379
    %v13515 = vunpack.c.l.b16 %v13380
    %v13516 = vunpack.c.l.b16 %v13381
    %v13517 = vunpack.c.l.b16 %v13382
    %v13518 = vunpack.c.l.b16 %v13383
    %v13519 = vunpack.c.l.b16 %v13384
    %v13520 = vunpack.c.l.b16 %v13385
    %v13521 = vunpack.c.l.b16 %v13386
    %v13522 = vunpack.c.l.b16 %v13387
    %v13523 = vunpack.c.l.b16 %v13388
    %v13524 = vunpack.c.l.b16 %v13389
    %v13525 = vunpack.c.l.b16 %v13390
    %v13526 = vunpack.c.l.b16 %v13391
    %v13527 = vunpack.c.l.b16 %v13392
    %v13528 = vunpack.c.l.b16 %v13393
    %v13529 = vunpack.c.l.b16 %v13394
    %v13530 = vunpack.c.l.b16 %v13395
    %v13531 = vunpack.c.l.b16 %v13396
    %v13532 = vunpack.c.l.b16 %v13397
    %v13533 = vunpack.c.l.b16 %v13398
    %v13534 = vunpack.c.l.b16 %v13399
    %v13535 = vunpack.c.l.b16 %v13400
    %v13536 = vunpack.c.l.b16 %v13401
    %v13537 = vunpack.c.l.b16 %v13402
    %v13538 = vunpack.c.l.b16 %v13403
    %v13539 = vunpack.c.l.b16 %v13404
    %v13540 = vunpack.c.l.b16 %v13405
    %v13541 = vunpack.c.l.b16 %v13406
    %v13542 = vunpack.c.l.b16 %v13407
    %v13543 = vunpack.c.l.b16 %v13408
    %v13544 = vunpack.c.l.b16 %v13409
    %v13545 = vunpack.c.l.b16 %v13410
    %v13546 = vunpack.c.l.b16 %v13411
    %v13547 = vunpack.c.l.b16 %v13412
    %v13548 = vunpack.c.l.b16 %v13413
    %v13549 = vunpack.c.l.b16 %v13414
    %v13550 = vunpack.c.l.b16 %v13415
    %v13551 = vunpack.c.l.b16 %v13416
    %v13552 = vunpack.c.l.b16 %v13417
    %v13553 = vunpack.c.l.b16 %v13418
    %v13554 = vunpack.c.l.b16 %v13419
    %v13555 = vunpack.c.l.b16 %v13420
    %v13556 = vunpack.c.l.b16 %v13421
    %v13557 = vunpack.c.l.b16 %v13422
    %v13558 = vpack.c.b16 %v13507, %v13506
    %v13559 = vpack.c.b16 %v13509, %v13508
    %v13560 = vpack.c.b16 %v13511, %v13510
    %v13561 = vpack.c.b16 %v13513, %v13512
    %v13562 = vpack.c.b16 %v13515, %v13514
    %v13563 = vpack.c.b16 %v13517, %v13516
    %v13564 = vpack.c.b16 %v13519, %v13518
    %v13565 = vpack.c.b16 %v13521, %v13520
    %v13566 = vpack.c.b16 %v13523, %v13522
    %v13567 = vpack.c.b16 %v13525, %v13524
    %v13568 = vpack.c.b16 %v13527, %v13526
    %v13569 = vpack.c.b16 %v13529, %v13528
    %v13570 = vpack.c.b16 %v13531, %v13530
    %v13571 = vpack.c.b16 %v13533, %v13532
    %v13572 = vpack.c.b16 %v13535, %v13534
    %v13573 = vpack.c.b16 %v13537, %v13536
    %v13574 = vpack.c.b16 %v13539, %v13538
    %v13575 = vpack.c.b16 %v13541, %v13540
    %v13576 = vpack.c.b16 %v13543, %v13542
    %v13577 = vpack.c.b16 %v13545, %v13544
    %v13578 = vpack.c.b16 %v13547, %v13546
    %v13579 = vpack.c.b16 %v13549, %v13548
    %v13580 = vpack.c.b16 %v13551, %v13550
    %v13581 = vpack.c.b16 %v13553, %v13552
    %v13582 = vpack.c.b16 %v13555, %v13554
    %v13583 = vpack.c.b16 %v13557, %v13556
    %v13611 = vsel %vm547, %v13450, 0
    %13613 = vmatprep.subr.bf16.mxu0 0
    %13614 = vmatpush1.bf16.msra.mxu0 %v13558
    %13615 = vmatprep.subr.bf16.mxu0 0
    %13616 = vmatpush1.bf16.msra.mxu0 %v13559
    %13617 = vmatprep.subr.bf16.mxu0 0
    %13618 = vmatpush1.bf16.msra.mxu0 %v13560
    %13619 = vmatprep.subr.bf16.mxu0 0
    %13620 = vmatpush1.bf16.msra.mxu0 %v13561
    %13621 = vmatprep.subr.bf16.mxu0 0
    %13622 = vmatpush1.bf16.msra.mxu0 %v13562
    %13623 = vmatprep.subr.bf16.mxu0 0
    %13624 = vmatpush1.bf16.msra.mxu0 %v13563
    %13625 = vmatprep.subr.bf16.mxu0 0
    %13626 = vmatpush1.bf16.msra.mxu0 %v13564
    %13627 = vmatprep.subr.bf16.mxu0 0
    %13628 = vmatpush1.bf16.msra.mxu0 %v13565
    %13629 = vmatprep.subr.bf16.mxu0 0
    %13630 = vmatpush1.bf16.msra.mxu0 %v13566
    %13631 = vmatprep.subr.bf16.mxu0 0
    %13632 = vmatpush1.bf16.msra.mxu0 %v13567
    %13633 = vmatprep.subr.bf16.mxu0 0
    %13634 = vmatpush1.bf16.msra.mxu0 %v13568
    %13635 = vmatprep.subr.bf16.mxu0 0
    %13636 = vmatpush1.bf16.msra.mxu0 %v13569
    %13637 = vmatprep.subr.bf16.mxu0 0
    %13638 = vmatpush1.bf16.msra.mxu0 %v13570
    %13639 = vmatprep.subr.bf16.mxu0 0
    %13640 = vmatpush1.bf16.msra.mxu0 %v13571
    %13641 = vmatprep.subr.bf16.mxu0 0
    %13642 = vmatpush1.bf16.msra.mxu0 %v13572
    %13643 = vmatprep.subr.bf16.mxu0 0
    %13644 = vmatpush1.bf16.msra.mxu0 %v13573
    %13645 = vmatprep.mubr.bf16.mxu0 %v13448
    %13646 = vmatmul.mubr.bf16.gmra.mrb[0].mxu0 %v13447
    %v13647 = vpop.f32.mrb[0].mxu0
    %v13648 = vadd.f32 0.0, %v13647
    %v13649 = vpop.f32.mrb[0].mxu0
    %v13650 = vpop.f32.mrb[0].mxu0
    %v13651 = vpop.f32.mrb[0].mxu0
    %13652 = vdwg.mxu0
    %13653 = vmatprep.subr.bf16.mxu0 0
    %13654 = vmatpush1.bf16.msra.mxu0 %v13574
    %13655 = vmatprep.subr.bf16.mxu0 0
    %13656 = vmatpush1.bf16.msra.mxu0 %v13575
    %13657 = vmatprep.subr.bf16.mxu0 0
    %13658 = vmatpush1.bf16.msra.mxu0 %v13576
    %13659 = vmatprep.subr.bf16.mxu0 0
    %13660 = vmatpush1.bf16.msra.mxu0 %v13577
    %13661 = vmatprep.subr.bf16.mxu0 0
    %13662 = vmatpush1.bf16.msra.mxu0 %v13578
    %13663 = vmatprep.subr.bf16.mxu0 0
    %13664 = vmatpush1.bf16.msra.mxu0 %v13579
    %13665 = vmatprep.subr.bf16.mxu0 0
    %13666 = vmatpush1.bf16.msra.mxu0 %v13580
    %13667 = vmatprep.subr.bf16.mxu0 0
    %13668 = vmatpush1.bf16.msra.mxu0 %v13581
    %13669 = vmatprep.subr.bf16.mxu0 0
    %13670 = vmatpush1.bf16.msra.mxu0 %v13582
    %13671 = vmatprep.subr.bf16.mxu0 0
    %13672 = vmatpush1.bf16.msra.mxu0 %v13583
    %13673 = vmatprep.subr.bf16.mxu0 0
    %13674 = vmatpush1.bf16.msra.mxu0 0
    %13675 = vmatprep.subr.bf16.mxu0 0
    %13676 = vmatpush1.bf16.msra.mxu0 0
    %13677 = vmatprep.subr.bf16.mxu0 0
    %13678 = vmatpush1.bf16.msra.mxu0 0
    %13679 = vmatprep.subr.bf16.mxu0 0
    %13680 = vmatpush1.bf16.msra.mxu0 0
    %13681 = vmatprep.subr.bf16.mxu0 0
    %13682 = vmatpush1.bf16.msra.mxu0 0
    %13683 = vmatprep.subr.bf16.mxu0 0
    %13684 = vmatpush1.bf16.msra.mxu0 0
    %13685 = vmatprep.mubr.bf16.mxu0 %v13611
    %13686 = vmatmul.mubr.bf16.gmra.mrb[0].mxu0 %v13449
    %v13687 = vpop.f32.mrb[0].mxu0
    %v13688 = vadd.f32 %v13648, %v13687
    %v13689 = vpop.f32.mrb[0].mxu0
    %v13690 = vpop.f32.mrb[0].mxu0
    %v13691 = vpop.f32.mrb[0].mxu0
    %13692 = vdwg.mxu0
    %v13693 = vadd.f32 %v13369, %v13688
    %v13694 = vld [vmem:[#allocation11] sm:$0x1]
    %v13696 = vlaneseq
    %v13697 = vshrl.u32 %v13696, 7
    %v13698 = vsub.s32 0, %v13697
    %v13699 = vrot.slane %v13694, %v13698
    %v13701 = vadd.f32 %v13693, %v13699
    %13702 = vst [vmem:[#allocation13] sm:$0x3] %v13701
    // Predicated region
    $region54: #{cnn_forward.1} parent=1 // pred_check
      _
    $region55: #{cnn_forward.1} parent=1 // pred_check_branch
      %13704 = sbr.rel (0) target = $region57
    $region56: #{cnn_forward.1} parent=1 // pred_region
      _
    $region57: #{cnn_forward.1} parent=1 // pred_fallthru
      _
    // Predicated region
    $region58: #{cnn_forward.1} parent=1 // pred_check
      _
    $region59: #{cnn_forward.1} parent=1 // pred_check_branch
      %13706 = sbr.rel (0) target = $region61
    $region60: #{cnn_forward.1} parent=1 // pred_region
      %s13708 = ssub.s32 32, 32
      %13709 = vsyncadd [#allocation4], %s13708
      %s13711 = sshll.u32 [#allocation13], 4
      %s13712 = int_to_ptr.vmem [resolvable:$true] %s13711
      %13714 = dma.vmem_to_hbm [thread:$0]  %s13712, 32, %s8, [#allocation4]
    $region61: #{cnn_forward.1} parent=1 // pred_fallthru
      _
    // Predicated region
    $region62: #{cnn_forward.1} parent=1 // pred_check
      _
    $region63: #{cnn_forward.1} parent=1 // pred_check_branch
      %13716 = sbr.rel (0) target = $region65
    $region64: #{cnn_forward.1} parent=1 // pred_region
      _
    $region65: #{cnn_forward.1} parent=1 // pred_fallthru
      _
    // Predicated region
    $region66: #{cnn_forward.1} parent=1 // pred_check
      _
    $region67: #{cnn_forward.1} parent=1 // pred_check_branch
      %13718 = sbr.rel (0) target = $region69
    $region68: #{cnn_forward.1} parent=1 // pred_region
      %13719 = dma.done [#allocation4], 32
    $region69: #{cnn_forward.1} parent=1 // pred_fallthru
      _
    %13720 = vsyncpa [#allocation3], 1
    %13721 = vsyncpa [#allocation6], 1
    %13722 = vsyncpa [#allocation9], 1
    %13723 = vsyncpa [#allocation12], 1
    %13724 = vsyncpa [#allocation4], 1

</llo_original>
